<compile_context>
chip_gen: v7x
topology: tpu7x:2x2x1
jax: 0.10.0
libtpu: 0.0.40
codegen_flags: <defaults>
</compile_context>

<pallas_src>
import numpy as np
import jax
import jax.numpy as jnp
from jax.experimental import pallas as pl
from jax.experimental.pallas import tpu as pltpu

BN_EPS = 1e-5
FORGET_BIAS = 1.0
_COMPILER_PARAMS = pltpu.CompilerParams(vmem_limit_bytes=32 * 1024 * 1024)


# ----------------------------------------------------------------------------
# Pallas kernels
# ----------------------------------------------------------------------------
def conv_bn_relu_kernel(w_ref, p_ref, b_ref, sc_ref, sh_ref, o_ref):
    """out^T = bn(relu(W2d @ patches^T + b)); channels on sublanes, spatial on lanes."""
    acc = jnp.dot(w_ref[...], p_ref[...], preferred_element_type=jnp.float32)
    acc = jnp.maximum(acc + b_ref[...], 0.0)                 # bias + ReLU
    o_ref[...] = (acc * sc_ref[...] + sh_ref[...]).astype(o_ref.dtype)  # BN (eval)


def conv3_convlstm_kernel(w3_ref, p3_ref, b3_ref, sc3_ref, sh3_ref,
                          wl_ref, bl_ref, shift_ref, c0_ref, h0_ref,
                          newh_ref, newc_ref):
    """Fused: conv3 + ReLU + BN3, ConvLSTM 5x5 'same' conv, LSTM gate math.

    Layout: every activation is (channels, B*H*W) with flattened spatial on
    lanes.  The ConvLSTM conv is  sum_t W_t @ (xcat @ S_t)  where S_t is a
    0/1 matrix realizing the spatial shift (+ zero padding) of tap t.
    """
    # conv3 + ReLU + BN3 ------------------------------------------------------
    a3 = jnp.dot(w3_ref[...], p3_ref[...], preferred_element_type=jnp.float32)
    a3 = jnp.maximum(a3 + b3_ref[...], 0.0)
    a3 = a3 * sc3_ref[...] + sh3_ref[...]                    # (HL, M)

    # ConvLSTM conv over cat(feat, h) -----------------------------------------
    xcat = jnp.concatenate([a3, h0_ref[...]], axis=0)        # (2*HL, M): (inputs, h)
    n_taps = wl_ref.shape[0]
    gates = jnp.zeros((wl_ref.shape[1], xcat.shape[1]), jnp.float32)
    for t in range(n_taps):                                  # static unroll (25 taps)
        xt = jnp.dot(xcat, shift_ref[t], preferred_element_type=jnp.float32)
        gates = gates + jnp.dot(wl_ref[t], xt, preferred_element_type=jnp.float32)
    gates = gates + bl_ref[...]                              # (4*HL, M)

    # gate math ---------------------------------------------------------------
    hl = newh_ref.shape[0]
    i_g = gates[0 * hl:1 * hl]
    j_g = gates[1 * hl:2 * hl]
    f_g = gates[2 * hl:3 * hl]
    o_g = gates[3 * hl:4 * hl]
    new_c = (c0_ref[...] * jax.nn.sigmoid(f_g + FORGET_BIAS)
             + jax.nn.sigmoid(i_g) * jnp.tanh(j_g))
    new_h = jnp.tanh(new_c) * jax.nn.sigmoid(o_g)
    newc_ref[...] = new_c
    newh_ref[...] = new_h


# ----------------------------------------------------------------------------
# JAX glue (pure data movement / parameter folding)
# ----------------------------------------------------------------------------
def _fold_bn(gamma, beta, mean, var):
    scale = gamma / jnp.sqrt(var + BN_EPS)
    shift = beta - mean * scale
    return scale, shift


def _im2col_T(x_nchw, kh, kw, stride):
    """patches^T (K, B*OH*OW) with K ordered (cin, ki, kj) to match W.reshape(Cout,-1)."""
    B, C, H, W = x_nchw.shape
    oh = (H - kh) // stride + 1
    ow = (W - kw) // stride + 1
    taps = []
    for i in range(kh):
        for j in range(kw):
            taps.append(x_nchw[:, :, i:i + stride * oh:stride,
                               j:j + stride * ow:stride])       # (B,C,oh,ow)
    pat = jnp.stack(taps, axis=2)                               # (B,C,kh*kw,oh,ow)
    pat = pat.reshape(B, C * kh * kw, oh * ow)
    p_t = jnp.transpose(pat, (1, 0, 2)).reshape(C * kh * kw, B * oh * ow)
    return p_t, oh, ow


def _conv_bn_relu(x_nchw, w, b, scale, shift, stride):
    """NCHW conv(+bias) + ReLU + folded-BN through the Pallas kernel."""
    cout, cin, kh, kw = w.shape
    B = x_nchw.shape[0]
    p_t, oh, ow = _im2col_T(x_nchw, kh, kw, stride)
    w2d = w.reshape(cout, cin * kh * kw)
    out_t = pl.pallas_call(
        conv_bn_relu_kernel,
        out_shape=jax.ShapeDtypeStruct((cout, B * oh * ow), jnp.float32),
        compiler_params=_COMPILER_PARAMS,
    )(w2d, p_t, b.reshape(cout, 1), scale.reshape(cout, 1), shift.reshape(cout, 1))
    return jnp.transpose(out_t.reshape(cout, B, oh, ow), (1, 0, 2, 3))   # NCHW


def _build_shift_matrices(B, H, W, kh, kw, ph, pw):
    """S[t, m_in, m_out] = 1 iff flattened input position m_in feeds tap t of
    output position m_out for a stride-1 'same'-padded conv on a (B,H,W) grid
    flattened as m = b*H*W + r*W + c.  Built with numpy at trace time."""
    M = B * H * W
    S = np.zeros((kh * kw, M, M), np.float32)
    for b in range(B):
        for r in range(H):
            for c in range(W):
                mo = b * H * W + r * W + c
                for i in range(kh):
                    for j in range(kw):
                        rr, cc = r + i - ph, c + j - pw
                        if 0 <= rr < H and 0 <= cc < W:
                            S[i * kw + j, b * H * W + rr * W + cc, mo] = 1.0
    return jnp.asarray(S)


# ----------------------------------------------------------------------------
# haptic_feat forward
# ----------------------------------------------------------------------------
def _forward_impl(haptic, params, c0, h0):
    B = haptic.shape[0]
    hl = params["w3"].shape[0]

    # Repeat(dim=1, 48) + Permute([0, 3, 1, 2])  (pure data movement)
    x = jnp.tile(haptic.astype(jnp.float32), (1, 48, 1, 1))
    x = jnp.transpose(x, (0, 3, 1, 2))                       # NCHW

    s1, t1 = _fold_bn(params["bn1_g"], params["bn1_b"], params["bn1_m"], params["bn1_v"])
    x = _conv_bn_relu(x, params["w1"], params["b1"], s1, t1, stride=2)
    s2, t2 = _fold_bn(params["bn2_g"], params["bn2_b"], params["bn2_m"], params["bn2_v"])
    x = _conv_bn_relu(x, params["w2"], params["b2"], s2, t2, stride=2)

    # conv3 + ConvLSTM fused kernel
    s3, t3 = _fold_bn(params["bn3_g"], params["bn3_b"], params["bn3_m"], params["bn3_v"])
    p3_t, oh, ow = _im2col_T(x, 3, 3, 1)
    w3_2d = params["w3"].reshape(hl, -1)
    wl_taps = jnp.transpose(params["wl"], (2, 3, 0, 1)).reshape(25, 4 * hl, 2 * hl)
    shift_mats = _build_shift_matrices(B, oh, ow, 5, 5, 2, 2)
    c0_t = jnp.transpose(c0, (1, 0, 2, 3)).reshape(hl, B * oh * ow)
    h0_t = jnp.transpose(h0, (1, 0, 2, 3)).reshape(hl, B * oh * ow)

    newh_t, newc_t = pl.pallas_call(
        conv3_convlstm_kernel,
        out_shape=(jax.ShapeDtypeStruct((hl, B * oh * ow), jnp.float32),
                   jax.ShapeDtypeStruct((hl, B * oh * ow), jnp.float32)),
        compiler_params=_COMPILER_PARAMS,
    )(w3_2d, p3_t, params["b3"].reshape(hl, 1), s3.reshape(hl, 1), t3.reshape(hl, 1),
      wl_taps, params["bl"].reshape(4 * hl, 1), shift_mats, c0_t, h0_t)

    new_h = jnp.transpose(newh_t.reshape(hl, B, oh, ow), (1, 0, 2, 3))
    new_c = jnp.transpose(newc_t.reshape(hl, B, oh, ow), (1, 0, 2, 3))
    return new_h, (new_c, new_h)


_forward_jit = jax.jit(_forward_impl)


def _feat_spatial(haptic_shape):
    h, w = 48 * haptic_shape[1], haptic_shape[2]
    h, w = (h - 5) // 2 + 1, (w - 5) // 2 + 1
    h, w = (h - 3) // 2 + 1, (w - 3) // 2 + 1
    h, w = h - 2, w - 2
    return h, w


def haptic_feat_forward(haptic, params, state=None):
    hl = params["w3"].shape[0]
    if state is None:
        fh, fw = _feat_spatial(haptic.shape)
        z = jnp.zeros((haptic.shape[0], hl, fh, fw), jnp.float32)
        state = (z, z)
    if not isinstance(state, tuple):
        raise TypeError("states type is not right")
    c, h = state
    return _forward_jit(haptic, params, c, h)


# ----------------------------------------------------------------------------
# Parameters (deterministic synthetic, same shapes as the nn.Module)
# ----------------------------------------------------------------------------
def init_haptic_feat_params(key, haptic_layer):
    def conv_init(k, cout, cin, kh, kw):
        kw_, kb_ = jax.random.split(k)
        s = 1.0 / np.sqrt(cin * kh * kw)
        return (jax.random.uniform(kw_, (cout, cin, kh, kw), jnp.float32, -s, s),
                jax.random.uniform(kb_, (cout,), jnp.float32, -s, s))

    def bn_init(k, c):
        k1, k2, k3, k4 = jax.random.split(k, 4)
        return (jax.random.uniform(k1, (c,), jnp.float32, 0.5, 1.5),    # gamma
                jax.random.uniform(k2, (c,), jnp.float32, -0.5, 0.5),   # beta
                jax.random.uniform(k3, (c,), jnp.float32, -0.5, 0.5),   # running mean
                jax.random.uniform(k4, (c,), jnp.float32, 0.5, 1.5))    # running var

    hl = haptic_layer
    keys = jax.random.split(key, 7)
    w1, b1 = conv_init(keys[0], 16, 10, 5, 5)
    g1, be1, m1, v1 = bn_init(keys[1], 16)
    w2, b2 = conv_init(keys[2], 16, 16, 3, 3)
    g2, be2, m2, v2 = bn_init(keys[3], 16)
    w3, b3 = conv_init(keys[4], hl, 16, 3, 3)
    g3, be3, m3, v3 = bn_init(keys[5], hl)
    wl, bl = conv_init(keys[6], 4 * hl, 2 * hl, 5, 5)
    return dict(w1=w1, b1=b1, bn1_g=g1, bn1_b=be1, bn1_m=m1, bn1_v=v1,
                w2=w2, b2=b2, bn2_g=g2, bn2_b=be2, bn2_m=m2, bn2_v=v2,
                w3=w3, b3=b3, bn3_g=g3, bn3_b=be3, bn3_m=m3, bn3_v=v3,
                wl=wl, bl=bl)


# ----------------------------------------------------------------------------
# Pure-JAX (XLA) reference of the same module, for correctness checking
# ----------------------------------------------------------------------------
def _reference_forward(haptic, params, state=None):
    hl = params["w3"].shape[0]
    x = jnp.tile(haptic.astype(jnp.float32), (1, 48, 1, 1))
    x = jnp.transpose(x, (0, 3, 1, 2))

    def conv(x, w, b, stride, pad):
        y = jax.lax.conv_general_dilated(
            x, w, (stride, stride), [(pad, pad), (pad, pad)],
            dimension_numbers=("NCHW", "OIHW", "NCHW"),
            precision=jax.lax.Precision.HIGHEST)
        return y + b.reshape(1, -1, 1, 1)

    def bn(x, g, bt, m, v):
        rs = lambda a: a.reshape(1, -1, 1, 1)
        return (x - rs(m)) / jnp.sqrt(rs(v) + BN_EPS) * rs(g) + rs(bt)

    x = bn(jnp.maximum(conv(x, params["w1"], params["b1"], 2, 0), 0.0),
           params["bn1_g"], params["bn1_b"], params["bn1_m"], params["bn1_v"])
    x = bn(jnp.maximum(conv(x, params["w2"], params["b2"], 2, 0), 0.0),
           params["bn2_g"], params["bn2_b"], params["bn2_m"], params["bn2_v"])
    x = bn(jnp.maximum(conv(x, params["w3"], params["b3"], 1, 0), 0.0),
           params["bn3_g"], params["bn3_b"], params["bn3_m"], params["bn3_v"])

    if state is None:
        z = jnp.zeros((x.shape[0], hl, x.shape[2], x.shape[3]), jnp.float32)
        state = (z, z)
    c, h = state
    g = conv(jnp.concatenate([x, h], axis=1), params["wl"], params["bl"], 1, 2)
    i, j, f, o = jnp.split(g, 4, axis=1)
    new_c = c * jax.nn.sigmoid(f + FORGET_BIAS) + jax.nn.sigmoid(i) * jnp.tanh(j)
    new_h = jnp.tanh(new_c) * jax.nn.sigmoid(o)
    return new_h, (new_c, new_h)


if __name__ == "__main__":
    key = jax.random.PRNGKey(0)
    k_x, k_p = jax.random.split(key)

    B, HAPTIC_LAYER = 2, 16
    haptic = jax.random.normal(k_x, (B, 1, 48, 10), jnp.float32)   # (B,1,48,10)
    params = init_haptic_feat_params(k_p, HAPTIC_LAYER)

    # step 1: no incoming state (module builds zeros); step 2: recurrent state.
    feat1, state1 = haptic_feat_forward(haptic, params, None)
    feat2, state2 = haptic_feat_forward(haptic, params, state1)
    jax.block_until_ready((feat2, state2))

    assert feat1.shape == (B, HAPTIC_LAYER, 8, 8), feat1.shape
    assert state2[0].shape == (B, HAPTIC_LAYER, 8, 8), state2[0].shape
    assert bool(jnp.all(jnp.isfinite(feat2)))

    # cross-check against a pure-JAX reference of the same module
    rfeat1, rstate1 = _reference_forward(haptic, params, None)
    rfeat2, rstate2 = _reference_forward(haptic, params, rstate1)
    for got, want in [(feat1, rfeat1), (state1[0], rstate1[0]),
                      (feat2, rfeat2), (state2[0], rstate2[0])]:
        err = float(jnp.max(jnp.abs(got - want)))
        assert err < 2e-3, f"mismatch vs reference: {err}"

    print("KERNEL_OK")
</pallas_src>

<mosaic_0001>
module attributes {stable_mosaic.version = 11 : i64} {
  func.func @conv_bn_relu_kernel(%arg0: memref<16x250xf32, #tpu.memory_space<vmem>>, %arg1: memref<250x968xf32, #tpu.memory_space<vmem>>, %arg2: memref<16x1xf32, #tpu.memory_space<vmem>>, %arg3: memref<16x1xf32, #tpu.memory_space<vmem>>, %arg4: memref<16x1xf32, #tpu.memory_space<vmem>>, %arg5: memref<16x968xf32, #tpu.memory_space<vmem>>) attributes {dimension_semantics = [], scalar_prefetch = 0 : i64, scratch_operands = 0 : i64, tpu.core_type = #tpu.core_type<tc>} {
    %c0 = arith.constant 0 : index
    %c0_0 = arith.constant 0 : index
    %0 = vector.load %arg0[%c0, %c0_0] : memref<16x250xf32, #tpu.memory_space<vmem>>, vector<16x250xf32>
    %c0_1 = arith.constant 0 : index
    %c0_2 = arith.constant 0 : index
    %1 = vector.load %arg1[%c0_1, %c0_2] : memref<250x968xf32, #tpu.memory_space<vmem>>, vector<250x968xf32>
    %cst = arith.constant dense<0.000000e+00> : vector<16x968xf32>
    %2 = tpu.matmul %0, %1, %cst {dimension_numbers = #tpu.dot_dimension_numbers<[1], [0], [0], [1], [0, 0, 1, 1], [], []>} : vector<16x250xf32>, vector<250x968xf32>, vector<16x968xf32> -> vector<16x968xf32>
    %c0_3 = arith.constant 0 : index
    %c0_4 = arith.constant 0 : index
    %3 = vector.load %arg2[%c0_3, %c0_4] : memref<16x1xf32, #tpu.memory_space<vmem>>, vector<16x1xf32>
    %4 = vector.broadcast %3 : vector<16x1xf32> to vector<16x968xf32>
    %5 = arith.addf %2, %4 : vector<16x968xf32>
    %cst_5 = arith.constant 0.000000e+00 : f32
    %6 = vector.broadcast %cst_5 : f32 to vector<16x968xf32>
    %7 = arith.maximumf %5, %6 : vector<16x968xf32>
    %c0_6 = arith.constant 0 : index
    %c0_7 = arith.constant 0 : index
    %8 = vector.load %arg3[%c0_6, %c0_7] : memref<16x1xf32, #tpu.memory_space<vmem>>, vector<16x1xf32>
    %9 = vector.broadcast %8 : vector<16x1xf32> to vector<16x968xf32>
    %10 = arith.mulf %7, %9 : vector<16x968xf32>
    %c0_8 = arith.constant 0 : index
    %c0_9 = arith.constant 0 : index
    %11 = vector.load %arg4[%c0_8, %c0_9] : memref<16x1xf32, #tpu.memory_space<vmem>>, vector<16x1xf32>
    %12 = vector.broadcast %11 : vector<16x1xf32> to vector<16x968xf32>
    %13 = arith.addf %10, %12 : vector<16x968xf32>
    %c0_10 = arith.constant 0 : index
    %c0_11 = arith.constant 0 : index
    %14 = vector.load %arg5[%c0_10, %c0_11] : memref<16x968xf32, #tpu.memory_space<vmem>>, vector<16x968xf32>
    tpu.vector_store %arg5[%c0_10, %c0_11], %13 {strides = array<i32>} : memref<16x968xf32, #tpu.memory_space<vmem>>, vector<16x968xf32>,
    return
  }
}

module attributes {stable_mosaic.version = 11 : i64} {
  func.func @conv_bn_relu_kernel(%arg0: memref<16x144xf32, #tpu.memory_space<vmem>>, %arg1: memref<144x200xf32, #tpu.memory_space<vmem>>, %arg2: memref<16x1xf32, #tpu.memory_space<vmem>>, %arg3: memref<16x1xf32, #tpu.memory_space<vmem>>, %arg4: memref<16x1xf32, #tpu.memory_space<vmem>>, %arg5: memref<16x200xf32, #tpu.memory_space<vmem>>) attributes {dimension_semantics = [], scalar_prefetch = 0 : i64, scratch_operands = 0 : i64, tpu.core_type = #tpu.core_type<tc>} {
    %c0 = arith.constant 0 : index
    %c0_0 = arith.constant 0 : index
    %0 = vector.load %arg0[%c0, %c0_0] : memref<16x144xf32, #tpu.memory_space<vmem>>, vector<16x144xf32>
    %c0_1 = arith.constant 0 : index
    %c0_2 = arith.constant 0 : index
    %1 = vector.load %arg1[%c0_1, %c0_2] : memref<144x200xf32, #tpu.memory_space<vmem>>, vector<144x200xf32>
    %cst = arith.constant dense<0.000000e+00> : vector<16x200xf32>
    %2 = tpu.matmul %0, %1, %cst {dimension_numbers = #tpu.dot_dimension_numbers<[1], [0], [0], [1], [0, 0, 1, 1], [], []>} : vector<16x144xf32>, vector<144x200xf32>, vector<16x200xf32> -> vector<16x200xf32>
    %c0_3 = arith.constant 0 : index
    %c0_4 = arith.constant 0 : index
    %3 = vector.load %arg2[%c0_3, %c0_4] : memref<16x1xf32, #tpu.memory_space<vmem>>, vector<16x1xf32>
    %4 = vector.broadcast %3 : vector<16x1xf32> to vector<16x200xf32>
    %5 = arith.addf %2, %4 : vector<16x200xf32>
    %cst_5 = arith.constant 0.000000e+00 : f32
    %6 = vector.broadcast %cst_5 : f32 to vector<16x200xf32>
    %7 = arith.maximumf %5, %6 : vector<16x200xf32>
    %c0_6 = arith.constant 0 : index
    %c0_7 = arith.constant 0 : index
    %8 = vector.load %arg3[%c0_6, %c0_7] : memref<16x1xf32, #tpu.memory_space<vmem>>, vector<16x1xf32>
    %9 = vector.broadcast %8 : vector<16x1xf32> to vector<16x200xf32>
    %10 = arith.mulf %7, %9 : vector<16x200xf32>
    %c0_8 = arith.constant 0 : index
    %c0_9 = arith.constant 0 : index
    %11 = vector.load %arg4[%c0_8, %c0_9] : memref<16x1xf32, #tpu.memory_space<vmem>>, vector<16x1xf32>
    %12 = vector.broadcast %11 : vector<16x1xf32> to vector<16x200xf32>
    %13 = arith.addf %10, %12 : vector<16x200xf32>
    %c0_10 = arith.constant 0 : index
    %c0_11 = arith.constant 0 : index
    %14 = vector.load %arg5[%c0_10, %c0_11] : memref<16x200xf32, #tpu.memory_space<vmem>>, vector<16x200xf32>
    tpu.vector_store %arg5[%c0_10, %c0_11], %13 {strides = array<i32>} : memref<16x200xf32, #tpu.memory_space<vmem>>, vector<16x200xf32>,
    return
  }
}

module attributes {stable_mosaic.version = 11 : i64} {
  func.func @conv3_convlstm_kernel(%arg0: memref<16x144xf32, #tpu.memory_space<vmem>>, %arg1: memref<144x128xf32, #tpu.memory_space<vmem>>, %arg2: memref<16x1xf32, #tpu.memory_space<vmem>>, %arg3: memref<16x1xf32, #tpu.memory_space<vmem>>, %arg4: memref<16x1xf32, #tpu.memory_space<vmem>>, %arg5: memref<25x64x32xf32, #tpu.memory_space<vmem>>, %arg6: memref<64x1xf32, #tpu.memory_space<vmem>>, %arg7: memref<25x128x128xf32, #tpu.memory_space<vmem>>, %arg8: memref<16x128xf32, #tpu.memory_space<vmem>>, %arg9: memref<16x128xf32, #tpu.memory_space<vmem>>, %arg10: memref<16x128xf32, #tpu.memory_space<vmem>>, %arg11: memref<16x128xf32, #tpu.memory_space<vmem>>) attributes {dimension_semantics = [], scalar_prefetch = 0 : i64, scratch_operands = 0 : i64, tpu.core_type = #tpu.core_type<tc>} {
    %c0 = arith.constant 0 : index
    %c0_0 = arith.constant 0 : index
    %0 = vector.load %arg0[%c0, %c0_0] : memref<16x144xf32, #tpu.memory_space<vmem>>, vector<16x144xf32>
    %c0_1 = arith.constant 0 : index
    %c0_2 = arith.constant 0 : index
    %1 = vector.load %arg1[%c0_1, %c0_2] : memref<144x128xf32, #tpu.memory_space<vmem>>, vector<144x128xf32>
    %cst = arith.constant dense<0.000000e+00> : vector<16x128xf32>
    %2 = tpu.matmul %0, %1, %cst {dimension_numbers = #tpu.dot_dimension_numbers<[1], [0], [0], [1], [0, 0, 1, 1], [], []>} : vector<16x144xf32>, vector<144x128xf32>, vector<16x128xf32> -> vector<16x128xf32>
    %c0_3 = arith.constant 0 : index
    %c0_4 = arith.constant 0 : index
    %3 = vector.load %arg2[%c0_3, %c0_4] : memref<16x1xf32, #tpu.memory_space<vmem>>, vector<16x1xf32>
    %4 = vector.broadcast %3 : vector<16x1xf32> to vector<16x128xf32>
    %5 = arith.addf %2, %4 : vector<16x128xf32>
    %cst_5 = arith.constant 0.000000e+00 : f32
    %6 = vector.broadcast %cst_5 : f32 to vector<16x128xf32>
    %7 = arith.maximumf %5, %6 : vector<16x128xf32>
    %c0_6 = arith.constant 0 : index
    %c0_7 = arith.constant 0 : index
    %8 = vector.load %arg3[%c0_6, %c0_7] : memref<16x1xf32, #tpu.memory_space<vmem>>, vector<16x1xf32>
    %9 = vector.broadcast %8 : vector<16x1xf32> to vector<16x128xf32>
    %10 = arith.mulf %7, %9 : vector<16x128xf32>
    %c0_8 = arith.constant 0 : index
    %c0_9 = arith.constant 0 : index
    %11 = vector.load %arg4[%c0_8, %c0_9] : memref<16x1xf32, #tpu.memory_space<vmem>>, vector<16x1xf32>
    %12 = vector.broadcast %11 : vector<16x1xf32> to vector<16x128xf32>
    %13 = arith.addf %10, %12 : vector<16x128xf32>
    %c0_10 = arith.constant 0 : index
    %c0_11 = arith.constant 0 : index
    %14 = vector.load %arg9[%c0_10, %c0_11] : memref<16x128xf32, #tpu.memory_space<vmem>>, vector<16x128xf32>
    %15 = tpu.concatenate %13, %14 in 0 : vector<16x128xf32>, vector<16x128xf32> -> vector<32x128xf32>
    %cst_12 = arith.constant 0.000000e+00 : f32
    %16 = vector.broadcast %cst_12 : f32 to vector<64x128xf32>
    %c0_13 = arith.constant 0 : index
    %c0_14 = arith.constant 0 : index
    %c0_15 = arith.constant 0 : index
    %17 = vector.load %arg7[%c0_13, %c0_14, %c0_15] : memref<25x128x128xf32, #tpu.memory_space<vmem>>, vector<1x128x128xf32>
    %18 = vector.shape_cast %17 : vector<1x128x128xf32> to vector<128x128xf32>
    %cst_16 = arith.constant dense<0.000000e+00> : vector<32x128xf32>
    %19 = tpu.matmul %15, %18, %cst_16 {dimension_numbers = #tpu.dot_dimension_numbers<[1], [0], [0], [1], [0, 0, 1, 1], [], []>} : vector<32x128xf32>, vector<128x128xf32>, vector<32x128xf32> -> vector<32x128xf32>
    %c0_17 = arith.constant 0 : index
    %c0_18 = arith.constant 0 : index
    %c0_19 = arith.constant 0 : index
    %20 = vector.load %arg5[%c0_17, %c0_18, %c0_19] : memref<25x64x32xf32, #tpu.memory_space<vmem>>, vector<1x64x32xf32>
    %21 = vector.shape_cast %20 : vector<1x64x32xf32> to vector<64x32xf32>
    %cst_20 = arith.constant dense<0.000000e+00> : vector<64x128xf32>
    %22 = tpu.matmul %21, %19, %cst_20 {dimension_numbers = #tpu.dot_dimension_numbers<[1], [0], [0], [1], [0, 0, 1, 1], [], []>} : vector<64x32xf32>, vector<32x128xf32>, vector<64x128xf32> -> vector<64x128xf32>
    %23 = arith.addf %16, %22 : vector<64x128xf32>
    %c1 = arith.constant 1 : index
    %c0_21 = arith.constant 0 : index
    %c0_22 = arith.constant 0 : index
    %24 = vector.load %arg7[%c1, %c0_21, %c0_22] : memref<25x128x128xf32, #tpu.memory_space<vmem>>, vector<1x128x128xf32>
    %25 = vector.shape_cast %24 : vector<1x128x128xf32> to vector<128x128xf32>
    %cst_23 = arith.constant dense<0.000000e+00> : vector<32x128xf32>
    %26 = tpu.matmul %15, %25, %cst_23 {dimension_numbers = #tpu.dot_dimension_numbers<[1], [0], [0], [1], [0, 0, 1, 1], [], []>} : vector<32x128xf32>, vector<128x128xf32>, vector<32x128xf32> -> vector<32x128xf32>
    %c1_24 = arith.constant 1 : index
    %c0_25 = arith.constant 0 : index
    %c0_26 = arith.constant 0 : index
    %27 = vector.load %arg5[%c1_24, %c0_25, %c0_26] : memref<25x64x32xf32, #tpu.memory_space<vmem>>, vector<1x64x32xf32>
    %28 = vector.shape_cast %27 : vector<1x64x32xf32> to vector<64x32xf32>
    %cst_27 = arith.constant dense<0.000000e+00> : vector<64x128xf32>
    %29 = tpu.matmul %28, %26, %cst_27 {dimension_numbers = #tpu.dot_dimension_numbers<[1], [0], [0], [1], [0, 0, 1, 1], [], []>} : vector<64x32xf32>, vector<32x128xf32>, vector<64x128xf32> -> vector<64x128xf32>
    %30 = arith.addf %23, %29 : vector<64x128xf32>
    %c2 = arith.constant 2 : index
    %c0_28 = arith.constant 0 : index
    %c0_29 = arith.constant 0 : index
    %31 = vector.load %arg7[%c2, %c0_28, %c0_29] : memref<25x128x128xf32, #tpu.memory_space<vmem>>, vector<1x128x128xf32>
    %32 = vector.shape_cast %31 : vector<1x128x128xf32> to vector<128x128xf32>
    %cst_30 = arith.constant dense<0.000000e+00> : vector<32x128xf32>
    %33 = tpu.matmul %15, %32, %cst_30 {dimension_numbers = #tpu.dot_dimension_numbers<[1], [0], [0], [1], [0, 0, 1, 1], [], []>} : vector<32x128xf32>, vector<128x128xf32>, vector<32x128xf32> -> vector<32x128xf32>
    %c2_31 = arith.constant 2 : index
    %c0_32 = arith.constant 0 : index
    %c0_33 = arith.constant 0 : index
    %34 = vector.load %arg5[%c2_31, %c0_32, %c0_33] : memref<25x64x32xf32, #tpu.memory_space<vmem>>, vector<1x64x32xf32>
    %35 = vector.shape_cast %34 : vector<1x64x32xf32> to vector<64x32xf32>
    %cst_34 = arith.constant dense<0.000000e+00> : vector<64x128xf32>
    %36 = tpu.matmul %35, %33, %cst_34 {dimension_numbers = #tpu.dot_dimension_numbers<[1], [0], [0], [1], [0, 0, 1, 1], [], []>} : vector<64x32xf32>, vector<32x128xf32>, vector<64x128xf32> -> vector<64x128xf32>
    %37 = arith.addf %30, %36 : vector<64x128xf32>
    %c3 = arith.constant 3 : index
    %c0_35 = arith.constant 0 : index
    %c0_36 = arith.constant 0 : index
    %38 = vector.load %arg7[%c3, %c0_35, %c0_36] : memref<25x128x128xf32, #tpu.memory_space<vmem>>, vector<1x128x128xf32>
    %39 = vector.shape_cast %38 : vector<1x128x128xf32> to vector<128x128xf32>
    %cst_37 = arith.constant dense<0.000000e+00> : vector<32x128xf32>
    %40 = tpu.matmul %15, %39, %cst_37 {dimension_numbers = #tpu.dot_dimension_numbers<[1], [0], [0], [1], [0, 0, 1, 1], [], []>} : vector<32x128xf32>, vector<128x128xf32>, vector<32x128xf32> -> vector<32x128xf32>
    %c3_38 = arith.constant 3 : index
    %c0_39 = arith.constant 0 : index
    %c0_40 = arith.constant 0 : index
    %41 = vector.load %arg5[%c3_38, %c0_39, %c0_40] : memref<25x64x32xf32, #tpu.memory_space<vmem>>, vector<1x64x32xf32>
    %42 = vector.shape_cast %41 : vector<1x64x32xf32> to vector<64x32xf32>
    %cst_41 = arith.constant dense<0.000000e+00> : vector<64x128xf32>
    %43 = tpu.matmul %42, %40, %cst_41 {dimension_numbers = #tpu.dot_dimension_numbers<[1], [0], [0], [1], [0, 0, 1, 1], [], []>} : vector<64x32xf32>, vector<32x128xf32>, vector<64x128xf32> -> vector<64x128xf32>
    %44 = arith.addf %37, %43 : vector<64x128xf32>
    %c4 = arith.constant 4 : index
    %c0_42 = arith.constant 0 : index
    %c0_43 = arith.constant 0 : index
    %45 = vector.load %arg7[%c4, %c0_42, %c0_43] : memref<25x128x128xf32, #tpu.memory_space<vmem>>, vector<1x128x128xf32>
    %46 = vector.shape_cast %45 : vector<1x128x128xf32> to vector<128x128xf32>
    %cst_44 = arith.constant dense<0.000000e+00> : vector<32x128xf32>
    %47 = tpu.matmul %15, %46, %cst_44 {dimension_numbers = #tpu.dot_dimension_numbers<[1], [0], [0], [1], [0, 0, 1, 1], [], []>} : vector<32x128xf32>, vector<128x128xf32>, vector<32x128xf32> -> vector<32x128xf32>
    %c4_45 = arith.constant 4 : index
    %c0_46 = arith.constant 0 : index
    %c0_47 = arith.constant 0 : index
    %48 = vector.load %arg5[%c4_45, %c0_46, %c0_47] : memref<25x64x32xf32, #tpu.memory_space<vmem>>, vector<1x64x32xf32>
    %49 = vector.shape_cast %48 : vector<1x64x32xf32> to vector<64x32xf32>
    %cst_48 = arith.constant dense<0.000000e+00> : vector<64x128xf32>
    %50 = tpu.matmul %49, %47, %cst_48 {dimension_numbers = #tpu.dot_dimension_numbers<[1], [0], [0], [1], [0, 0, 1, 1], [], []>} : vector<64x32xf32>, vector<32x128xf32>, vector<64x128xf32> -> vector<64x128xf32>
    %51 = arith.addf %44, %50 : vector<64x128xf32>
    %c5 = arith.constant 5 : index
    %c0_49 = arith.constant 0 : index
    %c0_50 = arith.constant 0 : index
    %52 = vector.load %arg7[%c5, %c0_49, %c0_50] : memref<25x128x128xf32, #tpu.memory_space<vmem>>, vector<1x128x128xf32>
    %53 = vector.shape_cast %52 : vector<1x128x128xf32> to vector<128x128xf32>
    %cst_51 = arith.constant dense<0.000000e+00> : vector<32x128xf32>
    %54 = tpu.matmul %15, %53, %cst_51 {dimension_numbers = #tpu.dot_dimension_numbers<[1], [0], [0], [1], [0, 0, 1, 1], [], []>} : vector<32x128xf32>, vector<128x128xf32>, vector<32x128xf32> -> vector<32x128xf32>
    %c5_52 = arith.constant 5 : index
    %c0_53 = arith.constant 0 : index
    %c0_54 = arith.constant 0 : index
    %55 = vector.load %arg5[%c5_52, %c0_53, %c0_54] : memref<25x64x32xf32, #tpu.memory_space<vmem>>, vector<1x64x32xf32>
    %56 = vector.shape_cast %55 : vector<1x64x32xf32> to vector<64x32xf32>
    %cst_55 = arith.constant dense<0.000000e+00> : vector<64x128xf32>
    %57 = tpu.matmul %56, %54, %cst_55 {dimension_numbers = #tpu.dot_dimension_numbers<[1], [0], [0], [1], [0, 0, 1, 1], [], []>} : vector<64x32xf32>, vector<32x128xf32>, vector<64x128xf32> -> vector<64x128xf32>
    %58 = arith.addf %51, %57 : vector<64x128xf32>
    %c6 = arith.constant 6 : index
    %c0_56 = arith.constant 0 : index
    %c0_57 = arith.constant 0 : index
    %59 = vector.load %arg7[%c6, %c0_56, %c0_57] : memref<25x128x128xf32, #tpu.memory_space<vmem>>, vector<1x128x128xf32>
    %60 = vector.shape_cast %59 : vector<1x128x128xf32> to vector<128x128xf32>
    %cst_58 = arith.constant dense<0.000000e+00> : vector<32x128xf32>
    %61 = tpu.matmul %15, %60, %cst_58 {dimension_numbers = #tpu.dot_dimension_numbers<[1], [0], [0], [1], [0, 0, 1, 1], [], []>} : vector<32x128xf32>, vector<128x128xf32>, vector<32x128xf32> -> vector<32x128xf32>
    %c6_59 = arith.constant 6 : index
    %c0_60 = arith.constant 0 : index
    %c0_61 = arith.constant 0 : index
    %62 = vector.load %arg5[%c6_59, %c0_60, %c0_61] : memref<25x64x32xf32, #tpu.memory_space<vmem>>, vector<1x64x32xf32>
    %63 = vector.shape_cast %62 : vector<1x64x32xf32> to vector<64x32xf32>
    %cst_62 = arith.constant dense<0.000000e+00> : vector<64x128xf32>
    %64 = tpu.matmul %63, %61, %cst_62 {dimension_numbers = #tpu.dot_dimension_numbers<[1], [0], [0], [1], [0, 0, 1, 1], [], []>} : vector<64x32xf32>, vector<32x128xf32>, vector<64x128xf32> -> vector<64x128xf32>
    %65 = arith.addf %58, %64 : vector<64x128xf32>
    %c7 = arith.constant 7 : index
    %c0_63 = arith.constant 0 : index
    %c0_64 = arith.constant 0 : index
    %66 = vector.load %arg7[%c7, %c0_63, %c0_64] : memref<25x128x128xf32, #tpu.memory_space<vmem>>, vector<1x128x128xf32>
    %67 = vector.shape_cast %66 : vector<1x128x128xf32> to vector<128x128xf32>
    %cst_65 = arith.constant dense<0.000000e+00> : vector<32x128xf32>
    %68 = tpu.matmul %15, %67, %cst_65 {dimension_numbers = #tpu.dot_dimension_numbers<[1], [0], [0], [1], [0, 0, 1, 1], [], []>} : vector<32x128xf32>, vector<128x128xf32>, vector<32x128xf32> -> vector<32x128xf32>
    %c7_66 = arith.constant 7 : index
    %c0_67 = arith.constant 0 : index
    %c0_68 = arith.constant 0 : index
    %69 = vector.load %arg5[%c7_66, %c0_67, %c0_68] : memref<25x64x32xf32, #tpu.memory_space<vmem>>, vector<1x64x32xf32>
    %70 = vector.shape_cast %69 : vector<1x64x32xf32> to vector<64x32xf32>
    %cst_69 = arith.constant dense<0.000000e+00> : vector<64x128xf32>
    %71 = tpu.matmul %70, %68, %cst_69 {dimension_numbers = #tpu.dot_dimension_numbers<[1], [0], [0], [1], [0, 0, 1, 1], [], []>} : vector<64x32xf32>, vector<32x128xf32>, vector<64x128xf32> -> vector<64x128xf32>
    %72 = arith.addf %65, %71 : vector<64x128xf32>
    %c8 = arith.constant 8 : index
    %c0_70 = arith.constant 0 : index
    %c0_71 = arith.constant 0 : index
    %73 = vector.load %arg7[%c8, %c0_70, %c0_71] : memref<25x128x128xf32, #tpu.memory_space<vmem>>, vector<1x128x128xf32>
    %74 = vector.shape_cast %73 : vector<1x128x128xf32> to vector<128x128xf32>
    %cst_72 = arith.constant dense<0.000000e+00> : vector<32x128xf32>
    %75 = tpu.matmul %15, %74, %cst_72 {dimension_numbers = #tpu.dot_dimension_numbers<[1], [0], [0], [1], [0, 0, 1, 1], [], []>} : vector<32x128xf32>, vector<128x128xf32>, vector<32x128xf32> -> vector<32x128xf32>
    %c8_73 = arith.constant 8 : index
    %c0_74 = arith.constant 0 : index
    %c0_75 = arith.constant 0 : index
    %76 = vector.load %arg5[%c8_73, %c0_74, %c0_75] : memref<25x64x32xf32, #tpu.memory_space<vmem>>, vector<1x64x32xf32>
    %77 = vector.shape_cast %76 : vector<1x64x32xf32> to vector<64x32xf32>
    %cst_76 = arith.constant dense<0.000000e+00> : vector<64x128xf32>
    %78 = tpu.matmul %77, %75, %cst_76 {dimension_numbers = #tpu.dot_dimension_numbers<[1], [0], [0], [1], [0, 0, 1, 1], [], []>} : vector<64x32xf32>, vector<32x128xf32>, vector<64x128xf32> -> vector<64x128xf32>
    %79 = arith.addf %72, %78 : vector<64x128xf32>
    %c9 = arith.constant 9 : index
    %c0_77 = arith.constant 0 : index
    %c0_78 = arith.constant 0 : index
    %80 = vector.load %arg7[%c9, %c0_77, %c0_78] : memref<25x128x128xf32, #tpu.memory_space<vmem>>, vector<1x128x128xf32>
    %81 = vector.shape_cast %80 : vector<1x128x128xf32> to vector<128x128xf32>
    %cst_79 = arith.constant dense<0.000000e+00> : vector<32x128xf32>
    %82 = tpu.matmul %15, %81, %cst_79 {dimension_numbers = #tpu.dot_dimension_numbers<[1], [0], [0], [1], [0, 0, 1, 1], [], []>} : vector<32x128xf32>, vector<128x128xf32>, vector<32x128xf32> -> vector<32x128xf32>
    %c9_80 = arith.constant 9 : index
    %c0_81 = arith.constant 0 : index
    %c0_82 = arith.constant 0 : index
    %83 = vector.load %arg5[%c9_80, %c0_81, %c0_82] : memref<25x64x32xf32, #tpu.memory_space<vmem>>, vector<1x64x32xf32>
    %84 = vector.shape_cast %83 : vector<1x64x32xf32> to vector<64x32xf32>
    %cst_83 = arith.constant dense<0.000000e+00> : vector<64x128xf32>
    %85 = tpu.matmul %84, %82, %cst_83 {dimension_numbers = #tpu.dot_dimension_numbers<[1], [0], [0], [1], [0, 0, 1, 1], [], []>} : vector<64x32xf32>, vector<32x128xf32>, vector<64x128xf32> -> vector<64x128xf32>
    %86 = arith.addf %79, %85 : vector<64x128xf32>
    %c10 = arith.constant 10 : index
    %c0_84 = arith.constant 0 : index
    %c0_85 = arith.constant 0 : index
    %87 = vector.load %arg7[%c10, %c0_84, %c0_85] : memref<25x128x128xf32, #tpu.memory_space<vmem>>, vector<1x128x128xf32>
    %88 = vector.shape_cast %87 : vector<1x128x128xf32> to vector<128x128xf32>
    %cst_86 = arith.constant dense<0.000000e+00> : vector<32x128xf32>
    %89 = tpu.matmul %15, %88, %cst_86 {dimension_numbers = #tpu.dot_dimension_numbers<[1], [0], [0], [1], [0, 0, 1, 1], [], []>} : vector<32x128xf32>, vector<128x128xf32>, vector<32x128xf32> -> vector<32x128xf32>
    %c10_87 = arith.constant 10 : index
    %c0_88 = arith.constant 0 : index
    %c0_89 = arith.constant 0 : index
    %90 = vector.load %arg5[%c10_87, %c0_88, %c0_89] : memref<25x64x32xf32, #tpu.memory_space<vmem>>, vector<1x64x32xf32>
    %91 = vector.shape_cast %90 : vector<1x64x32xf32> to vector<64x32xf32>
    %cst_90 = arith.constant dense<0.000000e+00> : vector<64x128xf32>
    %92 = tpu.matmul %91, %89, %cst_90 {dimension_numbers = #tpu.dot_dimension_numbers<[1], [0], [0], [1], [0, 0, 1, 1], [], []>} : vector<64x32xf32>, vector<32x128xf32>, vector<64x128xf32> -> vector<64x128xf32>
    %93 = arith.addf %86, %92 : vector<64x128xf32>
    %c11 = arith.constant 11 : index
    %c0_91 = arith.constant 0 : index
    %c0_92 = arith.constant 0 : index
    %94 = vector.load %arg7[%c11, %c0_91, %c0_92] : memref<25x128x128xf32, #tpu.memory_space<vmem>>, vector<1x128x128xf32>
    %95 = vector.shape_cast %94 : vector<1x128x128xf32> to vector<128x128xf32>
    %cst_93 = arith.constant dense<0.000000e+00> : vector<32x128xf32>
    %96 = tpu.matmul %15, %95, %cst_93 {dimension_numbers = #tpu.dot_dimension_numbers<[1], [0], [0], [1], [0, 0, 1, 1], [], []>} : vector<32x128xf32>, vector<128x128xf32>, vector<32x128xf32> -> vector<32x128xf32>
    %c11_94 = arith.constant 11 : index
    %c0_95 = arith.constant 0 : index
    %c0_96 = arith.constant 0 : index
    %97 = vector.load %arg5[%c11_94, %c0_95, %c0_96] : memref<25x64x32xf32, #tpu.memory_space<vmem>>, vector<1x64x32xf32>
    %98 = vector.shape_cast %97 : vector<1x64x32xf32> to vector<64x32xf32>
    %cst_97 = arith.constant dense<0.000000e+00> : vector<64x128xf32>
    %99 = tpu.matmul %98, %96, %cst_97 {dimension_numbers = #tpu.dot_dimension_numbers<[1], [0], [0], [1], [0, 0, 1, 1], [], []>} : vector<64x32xf32>, vector<32x128xf32>, vector<64x128xf32> -> vector<64x128xf32>
    %100 = arith.addf %93, %99 : vector<64x128xf32>
    %c12 = arith.constant 12 : index
    %c0_98 = arith.constant 0 : index
    %c0_99 = arith.constant 0 : index
    %101 = vector.load %arg7[%c12, %c0_98, %c0_99] : memref<25x128x128xf32, #tpu.memory_space<vmem>>, vector<1x128x128xf32>
    %102 = vector.shape_cast %101 : vector<1x128x128xf32> to vector<128x128xf32>
    %cst_100 = arith.constant dense<0.000000e+00> : vector<32x128xf32>
    %103 = tpu.matmul %15, %102, %cst_100 {dimension_numbers = #tpu.dot_dimension_numbers<[1], [0], [0], [1], [0, 0, 1, 1], [], []>} : vector<32x128xf32>, vector<128x128xf32>, vector<32x128xf32> -> vector<32x128xf32>
    %c12_101 = arith.constant 12 : index
    %c0_102 = arith.constant 0 : index
    %c0_103 = arith.constant 0 : index
    %104 = vector.load %arg5[%c12_101, %c0_102, %c0_103] : memref<25x64x32xf32, #tpu.memory_space<vmem>>, vector<1x64x32xf32>
    %105 = vector.shape_cast %104 : vector<1x64x32xf32> to vector<64x32xf32>
    %cst_104 = arith.constant dense<0.000000e+00> : vector<64x128xf32>
    %106 = tpu.matmul %105, %103, %cst_104 {dimension_numbers = #tpu.dot_dimension_numbers<[1], [0], [0], [1], [0, 0, 1, 1], [], []>} : vector<64x32xf32>, vector<32x128xf32>, vector<64x128xf32> -> vector<64x128xf32>
    %107 = arith.addf %100, %106 : vector<64x128xf32>
    %c13 = arith.constant 13 : index
    %c0_105 = arith.constant 0 : index
    %c0_106 = arith.constant 0 : index
    %108 = vector.load %arg7[%c13, %c0_105, %c0_106] : memref<25x128x128xf32, #tpu.memory_space<vmem>>, vector<1x128x128xf32>
    %109 = vector.shape_cast %108 : vector<1x128x128xf32> to vector<128x128xf32>
    %cst_107 = arith.constant dense<0.000000e+00> : vector<32x128xf32>
    %110 = tpu.matmul %15, %109, %cst_107 {dimension_numbers = #tpu.dot_dimension_numbers<[1], [0], [0], [1], [0, 0, 1, 1], [], []>} : vector<32x128xf32>, vector<128x128xf32>, vector<32x128xf32> -> vector<32x128xf32>
    %c13_108 = arith.constant 13 : index
    %c0_109 = arith.constant 0 : index
    %c0_110 = arith.constant 0 : index
    %111 = vector.load %arg5[%c13_108, %c0_109, %c0_110] : memref<25x64x32xf32, #tpu.memory_space<vmem>>, vector<1x64x32xf32>
    %112 = vector.shape_cast %111 : vector<1x64x32xf32> to vector<64x32xf32>
    %cst_111 = arith.constant dense<0.000000e+00> : vector<64x128xf32>
    %113 = tpu.matmul %112, %110, %cst_111 {dimension_numbers = #tpu.dot_dimension_numbers<[1], [0], [0], [1], [0, 0, 1, 1], [], []>} : vector<64x32xf32>, vector<32x128xf32>, vector<64x128xf32> -> vector<64x128xf32>
    %114 = arith.addf %107, %113 : vector<64x128xf32>
    %c14 = arith.constant 14 : index
    %c0_112 = arith.constant 0 : index
    %c0_113 = arith.constant 0 : index
    %115 = vector.load %arg7[%c14, %c0_112, %c0_113] : memref<25x128x128xf32, #tpu.memory_space<vmem>>, vector<1x128x128xf32>
    %116 = vector.shape_cast %115 : vector<1x128x128xf32> to vector<128x128xf32>
    %cst_114 = arith.constant dense<0.000000e+00> : vector<32x128xf32>
    %117 = tpu.matmul %15, %116, %cst_114 {dimension_numbers = #tpu.dot_dimension_numbers<[1], [0], [0], [1], [0, 0, 1, 1], [], []>} : vector<32x128xf32>, vector<128x128xf32>, vector<32x128xf32> -> vector<32x128xf32>
    %c14_115 = arith.constant 14 : index
    %c0_116 = arith.constant 0 : index
    %c0_117 = arith.constant 0 : index
    %118 = vector.load %arg5[%c14_115, %c0_116, %c0_117] : memref<25x64x32xf32, #tpu.memory_space<vmem>>, vector<1x64x32xf32>
    %119 = vector.shape_cast %118 : vector<1x64x32xf32> to vector<64x32xf32>
    %cst_118 = arith.constant dense<0.000000e+00> : vector<64x128xf32>
    %120 = tpu.matmul %119, %117, %cst_118 {dimension_numbers = #tpu.dot_dimension_numbers<[1], [0], [0], [1], [0, 0, 1, 1], [], []>} : vector<64x32xf32>, vector<32x128xf32>, vector<64x128xf32> -> vector<64x128xf32>
    %121 = arith.addf %114, %120 : vector<64x128xf32>
    %c15 = arith.constant 15 : index
    %c0_119 = arith.constant 0 : index
    %c0_120 = arith.constant 0 : index
    %122 = vector.load %arg7[%c15, %c0_119, %c0_120] : memref<25x128x128xf32, #tpu.memory_space<vmem>>, vector<1x128x128xf32>
    %123 = vector.shape_cast %122 : vector<1x128x128xf32> to vector<128x128xf32>
    %cst_121 = arith.constant dense<0.000000e+00> : vector<32x128xf32>
    %124 = tpu.matmul %15, %123, %cst_121 {dimension_numbers = #tpu.dot_dimension_numbers<[1], [0], [0], [1], [0, 0, 1, 1], [], []>} : vector<32x128xf32>, vector<128x128xf32>, vector<32x128xf32> -> vector<32x128xf32>
    %c15_122 = arith.constant 15 : index
    %c0_123 = arith.constant 0 : index
    %c0_124 = arith.constant 0 : index
    %125 = vector.load %arg5[%c15_122, %c0_123, %c0_124] : memref<25x64x32xf32, #tpu.memory_space<vmem>>, vector<1x64x32xf32>
    %126 = vector.shape_cast %125 : vector<1x64x32xf32> to vector<64x32xf32>
    %cst_125 = arith.constant dense<0.000000e+00> : vector<64x128xf32>
    %127 = tpu.matmul %126, %124, %cst_125 {dimension_numbers = #tpu.dot_dimension_numbers<[1], [0], [0], [1], [0, 0, 1, 1], [], []>} : vector<64x32xf32>, vector<32x128xf32>, vector<64x128xf32> -> vector<64x128xf32>
    %128 = arith.addf %121, %127 : vector<64x128xf32>
    %c16 = arith.constant 16 : index
    %c0_126 = arith.constant 0 : index
    %c0_127 = arith.constant 0 : index
    %129 = vector.load %arg7[%c16, %c0_126, %c0_127] : memref<25x128x128xf32, #tpu.memory_space<vmem>>, vector<1x128x128xf32>
    %130 = vector.shape_cast %129 : vector<1x128x128xf32> to vector<128x128xf32>
    %cst_128 = arith.constant dense<0.000000e+00> : vector<32x128xf32>
    %131 = tpu.matmul %15, %130, %cst_128 {dimension_numbers = #tpu.dot_dimension_numbers<[1], [0], [0], [1], [0, 0, 1, 1], [], []>} : vector<32x128xf32>, vector<128x128xf32>, vector<32x128xf32> -> vector<32x128xf32>
    %c16_129 = arith.constant 16 : index
    %c0_130 = arith.constant 0 : index
    %c0_131 = arith.constant 0 : index
    %132 = vector.load %arg5[%c16_129, %c0_130, %c0_131] : memref<25x64x32xf32, #tpu.memory_space<vmem>>, vector<1x64x32xf32>
    %133 = vector.shape_cast %132 : vector<1x64x32xf32> to vector<64x32xf32>
    %cst_132 = arith.constant dense<0.000000e+00> : vector<64x128xf32>
    %134 = tpu.matmul %133, %131, %cst_132 {dimension_numbers = #tpu.dot_dimension_numbers<[1], [0], [0], [1], [0, 0, 1, 1], [], []>} : vector<64x32xf32>, vector<32x128xf32>, vector<64x128xf32> -> vector<64x128xf32>
    %135 = arith.addf %128, %134 : vector<64x128xf32>
    %c17 = arith.constant 17 : index
    %c0_133 = arith.constant 0 : index
    %c0_134 = arith.constant 0 : index
    %136 = vector.load %arg7[%c17, %c0_133, %c0_134] : memref<25x128x128xf32, #tpu.memory_space<vmem>>, vector<1x128x128xf32>
    %137 = vector.shape_cast %136 : vector<1x128x128xf32> to vector<128x128xf32>
    %cst_135 = arith.constant dense<0.000000e+00> : vector<32x128xf32>
    %138 = tpu.matmul %15, %137, %cst_135 {dimension_numbers = #tpu.dot_dimension_numbers<[1], [0], [0], [1], [0, 0, 1, 1], [], []>} : vector<32x128xf32>, vector<128x128xf32>, vector<32x128xf32> -> vector<32x128xf32>
    %c17_136 = arith.constant 17 : index
    %c0_137 = arith.constant 0 : index
    %c0_138 = arith.constant 0 : index
    %139 = vector.load %arg5[%c17_136, %c0_137, %c0_138] : memref<25x64x32xf32, #tpu.memory_space<vmem>>, vector<1x64x32xf32>
    %140 = vector.shape_cast %139 : vector<1x64x32xf32> to vector<64x32xf32>
    %cst_139 = arith.constant dense<0.000000e+00> : vector<64x128xf32>
    %141 = tpu.matmul %140, %138, %cst_139 {dimension_numbers = #tpu.dot_dimension_numbers<[1], [0], [0], [1], [0, 0, 1, 1], [], []>} : vector<64x32xf32>, vector<32x128xf32>, vector<64x128xf32> -> vector<64x128xf32>
    %142 = arith.addf %135, %141 : vector<64x128xf32>
    %c18 = arith.constant 18 : index
    %c0_140 = arith.constant 0 : index
    %c0_141 = arith.constant 0 : index
    %143 = vector.load %arg7[%c18, %c0_140, %c0_141] : memref<25x128x128xf32, #tpu.memory_space<vmem>>, vector<1x128x128xf32>
    %144 = vector.shape_cast %143 : vector<1x128x128xf32> to vector<128x128xf32>
    %cst_142 = arith.constant dense<0.000000e+00> : vector<32x128xf32>
    %145 = tpu.matmul %15, %144, %cst_142 {dimension_numbers = #tpu.dot_dimension_numbers<[1], [0], [0], [1], [0, 0, 1, 1], [], []>} : vector<32x128xf32>, vector<128x128xf32>, vector<32x128xf32> -> vector<32x128xf32>
    %c18_143 = arith.constant 18 : index
    %c0_144 = arith.constant 0 : index
    %c0_145 = arith.constant 0 : index
    %146 = vector.load %arg5[%c18_143, %c0_144, %c0_145] : memref<25x64x32xf32, #tpu.memory_space<vmem>>, vector<1x64x32xf32>
    %147 = vector.shape_cast %146 : vector<1x64x32xf32> to vector<64x32xf32>
    %cst_146 = arith.constant dense<0.000000e+00> : vector<64x128xf32>
    %148 = tpu.matmul %147, %145, %cst_146 {dimension_numbers = #tpu.dot_dimension_numbers<[1], [0], [0], [1], [0, 0, 1, 1], [], []>} : vector<64x32xf32>, vector<32x128xf32>, vector<64x128xf32> -> vector<64x128xf32>
    %149 = arith.addf %142, %148 : vector<64x128xf32>
    %c19 = arith.constant 19 : index
    %c0_147 = arith.constant 0 : index
    %c0_148 = arith.constant 0 : index
    %150 = vector.load %arg7[%c19, %c0_147, %c0_148] : memref<25x128x128xf32, #tpu.memory_space<vmem>>, vector<1x128x128xf32>
    %151 = vector.shape_cast %150 : vector<1x128x128xf32> to vector<128x128xf32>
    %cst_149 = arith.constant dense<0.000000e+00> : vector<32x128xf32>
    %152 = tpu.matmul %15, %151, %cst_149 {dimension_numbers = #tpu.dot_dimension_numbers<[1], [0], [0], [1], [0, 0, 1, 1], [], []>} : vector<32x128xf32>, vector<128x128xf32>, vector<32x128xf32> -> vector<32x128xf32>
    %c19_150 = arith.constant 19 : index
    %c0_151 = arith.constant 0 : index
    %c0_152 = arith.constant 0 : index
    %153 = vector.load %arg5[%c19_150, %c0_151, %c0_152] : memref<25x64x32xf32, #tpu.memory_space<vmem>>, vector<1x64x32xf32>
    %154 = vector.shape_cast %153 : vector<1x64x32xf32> to vector<64x32xf32>
    %cst_153 = arith.constant dense<0.000000e+00> : vector<64x128xf32>
    %155 = tpu.matmul %154, %152, %cst_153 {dimension_numbers = #tpu.dot_dimension_numbers<[1], [0], [0], [1], [0, 0, 1, 1], [], []>} : vector<64x32xf32>, vector<32x128xf32>, vector<64x128xf32> -> vector<64x128xf32>
    %156 = arith.addf %149, %155 : vector<64x128xf32>
    %c20 = arith.constant 20 : index
    %c0_154 = arith.constant 0 : index
    %c0_155 = arith.constant 0 : index
    %157 = vector.load %arg7[%c20, %c0_154, %c0_155] : memref<25x128x128xf32, #tpu.memory_space<vmem>>, vector<1x128x128xf32>
    %158 = vector.shape_cast %157 : vector<1x128x128xf32> to vector<128x128xf32>
    %cst_156 = arith.constant dense<0.000000e+00> : vector<32x128xf32>
    %159 = tpu.matmul %15, %158, %cst_156 {dimension_numbers = #tpu.dot_dimension_numbers<[1], [0], [0], [1], [0, 0, 1, 1], [], []>} : vector<32x128xf32>, vector<128x128xf32>, vector<32x128xf32> -> vector<32x128xf32>
    %c20_157 = arith.constant 20 : index
    %c0_158 = arith.constant 0 : index
    %c0_159 = arith.constant 0 : index
    %160 = vector.load %arg5[%c20_157, %c0_158, %c0_159] : memref<25x64x32xf32, #tpu.memory_space<vmem>>, vector<1x64x32xf32>
    %161 = vector.shape_cast %160 : vector<1x64x32xf32> to vector<64x32xf32>
    %cst_160 = arith.constant dense<0.000000e+00> : vector<64x128xf32>
    %162 = tpu.matmul %161, %159, %cst_160 {dimension_numbers = #tpu.dot_dimension_numbers<[1], [0], [0], [1], [0, 0, 1, 1], [], []>} : vector<64x32xf32>, vector<32x128xf32>, vector<64x128xf32> -> vector<64x128xf32>
    %163 = arith.addf %156, %162 : vector<64x128xf32>
    %c21 = arith.constant 21 : index
    %c0_161 = arith.constant 0 : index
    %c0_162 = arith.constant 0 : index
    %164 = vector.load %arg7[%c21, %c0_161, %c0_162] : memref<25x128x128xf32, #tpu.memory_space<vmem>>, vector<1x128x128xf32>
    %165 = vector.shape_cast %164 : vector<1x128x128xf32> to vector<128x128xf32>
    %cst_163 = arith.constant dense<0.000000e+00> : vector<32x128xf32>
    %166 = tpu.matmul %15, %165, %cst_163 {dimension_numbers = #tpu.dot_dimension_numbers<[1], [0], [0], [1], [0, 0, 1, 1], [], []>} : vector<32x128xf32>, vector<128x128xf32>, vector<32x128xf32> -> vector<32x128xf32>
    %c21_164 = arith.constant 21 : index
    %c0_165 = arith.constant 0 : index
    %c0_166 = arith.constant 0 : index
    %167 = vector.load %arg5[%c21_164, %c0_165, %c0_166] : memref<25x64x32xf32, #tpu.memory_space<vmem>>, vector<1x64x32xf32>
    %168 = vector.shape_cast %167 : vector<1x64x32xf32> to vector<64x32xf32>
    %cst_167 = arith.constant dense<0.000000e+00> : vector<64x128xf32>
    %169 = tpu.matmul %168, %166, %cst_167 {dimension_numbers = #tpu.dot_dimension_numbers<[1], [0], [0], [1], [0, 0, 1, 1], [], []>} : vector<64x32xf32>, vector<32x128xf32>, vector<64x128xf32> -> vector<64x128xf32>
    %170 = arith.addf %163, %169 : vector<64x128xf32>
    %c22 = arith.constant 22 : index
    %c0_168 = arith.constant 0 : index
    %c0_169 = arith.constant 0 : index
    %171 = vector.load %arg7[%c22, %c0_168, %c0_169] : memref<25x128x128xf32, #tpu.memory_space<vmem>>, vector<1x128x128xf32>
    %172 = vector.shape_cast %171 : vector<1x128x128xf32> to vector<128x128xf32>
    %cst_170 = arith.constant dense<0.000000e+00> : vector<32x128xf32>
    %173 = tpu.matmul %15, %172, %cst_170 {dimension_numbers = #tpu.dot_dimension_numbers<[1], [0], [0], [1], [0, 0, 1, 1], [], []>} : vector<32x128xf32>, vector<128x128xf32>, vector<32x128xf32> -> vector<32x128xf32>
    %c22_171 = arith.constant 22 : index
    %c0_172 = arith.constant 0 : index
    %c0_173 = arith.constant 0 : index
    %174 = vector.load %arg5[%c22_171, %c0_172, %c0_173] : memref<25x64x32xf32, #tpu.memory_space<vmem>>, vector<1x64x32xf32>
    %175 = vector.shape_cast %174 : vector<1x64x32xf32> to vector<64x32xf32>
    %cst_174 = arith.constant dense<0.000000e+00> : vector<64x128xf32>
    %176 = tpu.matmul %175, %173, %cst_174 {dimension_numbers = #tpu.dot_dimension_numbers<[1], [0], [0], [1], [0, 0, 1, 1], [], []>} : vector<64x32xf32>, vector<32x128xf32>, vector<64x128xf32> -> vector<64x128xf32>
    %177 = arith.addf %170, %176 : vector<64x128xf32>
    %c23 = arith.constant 23 : index
    %c0_175 = arith.constant 0 : index
    %c0_176 = arith.constant 0 : index
    %178 = vector.load %arg7[%c23, %c0_175, %c0_176] : memref<25x128x128xf32, #tpu.memory_space<vmem>>, vector<1x128x128xf32>
    %179 = vector.shape_cast %178 : vector<1x128x128xf32> to vector<128x128xf32>
    %cst_177 = arith.constant dense<0.000000e+00> : vector<32x128xf32>
    %180 = tpu.matmul %15, %179, %cst_177 {dimension_numbers = #tpu.dot_dimension_numbers<[1], [0], [0], [1], [0, 0, 1, 1], [], []>} : vector<32x128xf32>, vector<128x128xf32>, vector<32x128xf32> -> vector<32x128xf32>
    %c23_178 = arith.constant 23 : index
    %c0_179 = arith.constant 0 : index
    %c0_180 = arith.constant 0 : index
    %181 = vector.load %arg5[%c23_178, %c0_179, %c0_180] : memref<25x64x32xf32, #tpu.memory_space<vmem>>, vector<1x64x32xf32>
    %182 = vector.shape_cast %181 : vector<1x64x32xf32> to vector<64x32xf32>
    %cst_181 = arith.constant dense<0.000000e+00> : vector<64x128xf32>
    %183 = tpu.matmul %182, %180, %cst_181 {dimension_numbers = #tpu.dot_dimension_numbers<[1], [0], [0], [1], [0, 0, 1, 1], [], []>} : vector<64x32xf32>, vector<32x128xf32>, vector<64x128xf32> -> vector<64x128xf32>
    %184 = arith.addf %177, %183 : vector<64x128xf32>
    %c24 = arith.constant 24 : index
    %c0_182 = arith.constant 0 : index
    %c0_183 = arith.constant 0 : index
    %185 = vector.load %arg7[%c24, %c0_182, %c0_183] : memref<25x128x128xf32, #tpu.memory_space<vmem>>, vector<1x128x128xf32>
    %186 = vector.shape_cast %185 : vector<1x128x128xf32> to vector<128x128xf32>
    %cst_184 = arith.constant dense<0.000000e+00> : vector<32x128xf32>
    %187 = tpu.matmul %15, %186, %cst_184 {dimension_numbers = #tpu.dot_dimension_numbers<[1], [0], [0], [1], [0, 0, 1, 1], [], []>} : vector<32x128xf32>, vector<128x128xf32>, vector<32x128xf32> -> vector<32x128xf32>
    %c24_185 = arith.constant 24 : index
    %c0_186 = arith.constant 0 : index
    %c0_187 = arith.constant 0 : index
    %188 = vector.load %arg5[%c24_185, %c0_186, %c0_187] : memref<25x64x32xf32, #tpu.memory_space<vmem>>, vector<1x64x32xf32>
    %189 = vector.shape_cast %188 : vector<1x64x32xf32> to vector<64x32xf32>
    %cst_188 = arith.constant dense<0.000000e+00> : vector<64x128xf32>
    %190 = tpu.matmul %189, %187, %cst_188 {dimension_numbers = #tpu.dot_dimension_numbers<[1], [0], [0], [1], [0, 0, 1, 1], [], []>} : vector<64x32xf32>, vector<32x128xf32>, vector<64x128xf32> -> vector<64x128xf32>
    %191 = arith.addf %184, %190 : vector<64x128xf32>
    %c0_189 = arith.constant 0 : index
    %c0_190 = arith.constant 0 : index
    %192 = vector.load %arg6[%c0_189, %c0_190] : memref<64x1xf32, #tpu.memory_space<vmem>>, vector<64x1xf32>
    %193 = vector.broadcast %192 : vector<64x1xf32> to vector<64x128xf32>
    %194 = arith.addf %191, %193 : vector<64x128xf32>
    %195 = vector.extract_strided_slice %194 {offsets = [0, 0], sizes = [16, 128], strides = [1, 1]} : vector<64x128xf32> to vector<16x128xf32>
    %196 = vector.extract_strided_slice %194 {offsets = [16, 0], sizes = [16, 128], strides = [1, 1]} : vector<64x128xf32> to vector<16x128xf32>
    %197 = vector.extract_strided_slice %194 {offsets = [32, 0], sizes = [16, 128], strides = [1, 1]} : vector<64x128xf32> to vector<16x128xf32>
    %198 = vector.extract_strided_slice %194 {offsets = [48, 0], sizes = [16, 128], strides = [1, 1]} : vector<64x128xf32> to vector<16x128xf32>
    %c0_191 = arith.constant 0 : index
    %c0_192 = arith.constant 0 : index
    %199 = vector.load %arg8[%c0_191, %c0_192] : memref<16x128xf32, #tpu.memory_space<vmem>>, vector<16x128xf32>
    %cst_193 = arith.constant 1.000000e+00 : f32
    %200 = vector.broadcast %cst_193 : f32 to vector<16x128xf32>
    %201 = arith.addf %197, %200 : vector<16x128xf32>
    %202 = arith.negf %201 : vector<16x128xf32>
    %203 = math.exp %202 : vector<16x128xf32>
    %cst_194 = arith.constant 1.000000e+00 : f32
    %204 = vector.broadcast %cst_194 : f32 to vector<16x128xf32>
    %205 = arith.addf %204, %203 : vector<16x128xf32>
    %206 = arith.divf %204, %205 : vector<16x128xf32>
    %207 = arith.mulf %199, %206 : vector<16x128xf32>
    %208 = arith.negf %195 : vector<16x128xf32>
    %209 = math.exp %208 : vector<16x128xf32>
    %cst_195 = arith.constant 1.000000e+00 : f32
    %210 = vector.broadcast %cst_195 : f32 to vector<16x128xf32>
    %211 = arith.addf %210, %209 : vector<16x128xf32>
    %212 = arith.divf %210, %211 : vector<16x128xf32>
    %213 = math.tanh %196 : vector<16x128xf32>
    %214 = arith.mulf %212, %213 : vector<16x128xf32>
    %215 = arith.addf %207, %214 : vector<16x128xf32>
    %216 = math.tanh %215 : vector<16x128xf32>
    %217 = arith.negf %198 : vector<16x128xf32>
    %218 = math.exp %217 : vector<16x128xf32>
    %cst_196 = arith.constant 1.000000e+00 : f32
    %219 = vector.broadcast %cst_196 : f32 to vector<16x128xf32>
    %220 = arith.addf %219, %218 : vector<16x128xf32>
    %221 = arith.divf %219, %220 : vector<16x128xf32>
    %222 = arith.mulf %216, %221 : vector<16x128xf32>
    %c0_197 = arith.constant 0 : index
    %c0_198 = arith.constant 0 : index
    %223 = vector.load %arg11[%c0_197, %c0_198] : memref<16x128xf32, #tpu.memory_space<vmem>>, vector<16x128xf32>
    tpu.vector_store %arg11[%c0_197, %c0_198], %215 {strides = array<i32>} : memref<16x128xf32, #tpu.memory_space<vmem>>, vector<16x128xf32>,
    %c0_199 = arith.constant 0 : index
    %c0_200 = arith.constant 0 : index
    %224 = vector.load %arg10[%c0_199, %c0_200] : memref<16x128xf32, #tpu.memory_space<vmem>>, vector<16x128xf32>
    tpu.vector_store %arg10[%c0_199, %c0_200], %222 {strides = array<i32>} : memref<16x128xf32, #tpu.memory_space<vmem>>, vector<16x128xf32>,
    return
  }
}

</mosaic_0001>

<llo_original>
// kernel: _forward_impl.3
$region0: #{_forward_impl.3}
  #allocation0 [shape = 'u32[]', space=smem, size = 0x4, offset = 0x4, fixed_abs, tag = 'smem constant byte address 0x4 - core index']
  #allocation1 [shape = 'u32[144,128]{1,0:T(1,128)}', space=vmem, size = 0x12000, scoped, tag = 'internal scratch']
  %s0 = inlined_call_operand.vmem [shape: f32[16,250], index: 0, kind: input, shape index: {}]
  %s1 = inlined_call_operand.vmem [shape: f32[250,968], index: 1, kind: input, shape index: {}]
  %s2 = inlined_call_operand.vmem [shape: f32[16,1], index: 2, kind: input, shape index: {}]
  %s3 = inlined_call_operand.vmem [shape: f32[16,1], index: 3, kind: input, shape index: {}]
  %s4 = inlined_call_operand.vmem [shape: f32[16,1], index: 4, kind: input, shape index: {}]
  %s5 = inlined_call_operand.vmem [shape: f32[16,968], index: 5, kind: output, shape index: {}]
  %s6 = sld [smem:[#allocation0]]
  $region30: #{_forward_impl.3} parent=0
    _
  %s8 = ssub.s32 1, %s6
  %s9 = scalar_select 0, %s8, %s6
  // Predicated region
  $region2: #{_forward_impl.3} parent=0 // pred_check
    _
  $region3: #{_forward_impl.3} parent=0 // pred_check_branch
    %11 = sbr.rel (0) target = $region5
  $region4: #{_forward_impl.3} parent=0 // pred_region
    _
  $region5: #{_forward_impl.3} parent=0 // pred_fallthru
    _
  // Predicated region
  $region6: #{_forward_impl.3} parent=0 // pred_check
    _
  $region7: #{_forward_impl.3} parent=0 // pred_check_branch
    %13 = sbr.rel (0) target = $region9
  $region8: #{_forward_impl.3} parent=0 // pred_region
    _
  $region9: #{_forward_impl.3} parent=0 // pred_fallthru
    _
  // Predicated region
  $region10: #{_forward_impl.3} parent=0 // pred_check
    _
  $region11: #{_forward_impl.3} parent=0 // pred_check_branch
    %15 = sbr.rel (0) target = $region13
  $region12: #{_forward_impl.3} parent=0 // pred_region
    _
  $region13: #{_forward_impl.3} parent=0 // pred_fallthru
    _
  // Predicated region
  $region14: #{_forward_impl.3} parent=0 // pred_check
    _
  $region15: #{_forward_impl.3} parent=0 // pred_check_branch
    %17 = sbr.rel (0) target = $region17
  $region16: #{_forward_impl.3} parent=0 // pred_region
    _
  $region17: #{_forward_impl.3} parent=0 // pred_fallthru
    _
  // Predicated region
  $region18: #{_forward_impl.3} parent=0 // pred_check
    _
  $region19: #{_forward_impl.3} parent=0 // pred_check_branch
    %19 = sbr.rel (0) target = $region21
  $region20: #{_forward_impl.3} parent=0 // pred_region
    _
  $region21: #{_forward_impl.3} parent=0 // pred_fallthru
    _
  %v20 = vld [vmem:[%s0] sm:$0xff]
  %v21 = vld [vmem:[%s0 + $0x8] sm:$0xff]
  %v22 = vld [vmem:[%s0 + $0x10] sm:$0xff]
  %v23 = vld [vmem:[%s0 + $0x18] sm:$0xff]
  %v24 = vld [vmem:[%s1] sm:$0xff]
  %v25 = vld [vmem:[%s1 + $0x8] sm:$0xff]
  %v26 = vld [vmem:[%s1 + $0x10] sm:$0xff]
  %v27 = vld [vmem:[%s1 + $0x18] sm:$0xff]
  %v28 = vld [vmem:[%s1 + $0x20] sm:$0xff]
  %v29 = vld [vmem:[%s1 + $0x28] sm:$0xff]
  %v30 = vld [vmem:[%s1 + $0x30] sm:$0xff]
  %v31 = vld [vmem:[%s1 + $0x38] sm:$0xff]
  %v32 = vld [vmem:[%s1 + $0x40] sm:$0xff]
  %v33 = vld [vmem:[%s1 + $0x48] sm:$0xff]
  %v34 = vld [vmem:[%s1 + $0x50] sm:$0xff]
  %v35 = vld [vmem:[%s1 + $0x58] sm:$0xff]
  %v36 = vld [vmem:[%s1 + $0x60] sm:$0xff]
  %v37 = vld [vmem:[%s1 + $0x68] sm:$0xff]
  %v38 = vld [vmem:[%s1 + $0x70] sm:$0xff]
  %v39 = vld [vmem:[%s1 + $0x78] sm:$0xff]
  %v40 = vld [vmem:[%s1 + $0x80] sm:$0xff]
  %v41 = vld [vmem:[%s1 + $0x88] sm:$0xff]
  %v42 = vld [vmem:[%s1 + $0x90] sm:$0xff]
  %v43 = vld [vmem:[%s1 + $0x98] sm:$0xff]
  %v44 = vld [vmem:[%s1 + $0xa0] sm:$0xff]
  %v45 = vld [vmem:[%s1 + $0xa8] sm:$0xff]
  %v46 = vld [vmem:[%s1 + $0xb0] sm:$0xff]
  %v47 = vld [vmem:[%s1 + $0xb8] sm:$0xff]
  %v48 = vld [vmem:[%s1 + $0xc0] sm:$0xff]
  %v49 = vld [vmem:[%s1 + $0xc8] sm:$0xff]
  %v50 = vld [vmem:[%s1 + $0xd0] sm:$0xff]
  %v51 = vld [vmem:[%s1 + $0xd8] sm:$0xff]
  %v52 = vld [vmem:[%s1 + $0xe0] sm:$0xff]
  %v53 = vld [vmem:[%s1 + $0xe8] sm:$0xff]
  %v54 = vld [vmem:[%s1 + $0xf0] sm:$0xff]
  %v55 = vld [vmem:[%s1 + $0xf8] sm:$0xff]
  %v56 = vld [vmem:[%s1 + $0x100] sm:$0xff]
  %v57 = vld [vmem:[%s1 + $0x108] sm:$0xff]
  %v58 = vld [vmem:[%s1 + $0x110] sm:$0xff]
  %v59 = vld [vmem:[%s1 + $0x118] sm:$0xff]
  %v60 = vld [vmem:[%s1 + $0x120] sm:$0xff]
  %v61 = vld [vmem:[%s1 + $0x128] sm:$0xff]
  %v62 = vld [vmem:[%s1 + $0x130] sm:$0xff]
  %v63 = vld [vmem:[%s1 + $0x138] sm:$0xff]
  %v64 = vld [vmem:[%s1 + $0x140] sm:$0xff]
  %v65 = vld [vmem:[%s1 + $0x148] sm:$0xff]
  %v66 = vld [vmem:[%s1 + $0x150] sm:$0xff]
  %v67 = vld [vmem:[%s1 + $0x158] sm:$0xff]
  %v68 = vld [vmem:[%s1 + $0x160] sm:$0xff]
  %v69 = vld [vmem:[%s1 + $0x168] sm:$0xff]
  %v70 = vld [vmem:[%s1 + $0x170] sm:$0xff]
  %v71 = vld [vmem:[%s1 + $0x178] sm:$0xff]
  %v72 = vld [vmem:[%s1 + $0x180] sm:$0xff]
  %v73 = vld [vmem:[%s1 + $0x188] sm:$0xff]
  %v74 = vld [vmem:[%s1 + $0x190] sm:$0xff]
  %v75 = vld [vmem:[%s1 + $0x198] sm:$0xff]
  %v76 = vld [vmem:[%s1 + $0x1a0] sm:$0xff]
  %v77 = vld [vmem:[%s1 + $0x1a8] sm:$0xff]
  %v78 = vld [vmem:[%s1 + $0x1b0] sm:$0xff]
  %v79 = vld [vmem:[%s1 + $0x1b8] sm:$0xff]
  %v80 = vld [vmem:[%s1 + $0x1c0] sm:$0xff]
  %v81 = vld [vmem:[%s1 + $0x1c8] sm:$0xff]
  %v82 = vld [vmem:[%s1 + $0x1d0] sm:$0xff]
  %v83 = vld [vmem:[%s1 + $0x1d8] sm:$0xff]
  %v84 = vld [vmem:[%s1 + $0x1e0] sm:$0xff]
  %v85 = vld [vmem:[%s1 + $0x1e8] sm:$0xff]
  %v86 = vld [vmem:[%s1 + $0x1f0] sm:$0xff]
  %v87 = vld [vmem:[%s1 + $0x1f8] sm:$0xff]
  %v88 = vld [vmem:[%s1 + $0x200] sm:$0xff]
  %v89 = vld [vmem:[%s1 + $0x208] sm:$0xff]
  %v90 = vld [vmem:[%s1 + $0x210] sm:$0xff]
  %v91 = vld [vmem:[%s1 + $0x218] sm:$0xff]
  %v92 = vld [vmem:[%s1 + $0x220] sm:$0xff]
  %v93 = vld [vmem:[%s1 + $0x228] sm:$0xff]
  %v94 = vld [vmem:[%s1 + $0x230] sm:$0xff]
  %v95 = vld [vmem:[%s1 + $0x238] sm:$0xff]
  %v96 = vld [vmem:[%s1 + $0x240] sm:$0xff]
  %v97 = vld [vmem:[%s1 + $0x248] sm:$0xff]
  %v98 = vld [vmem:[%s1 + $0x250] sm:$0xff]
  %v99 = vld [vmem:[%s1 + $0x258] sm:$0xff]
  %v100 = vld [vmem:[%s1 + $0x260] sm:$0xff]
  %v101 = vld [vmem:[%s1 + $0x268] sm:$0xff]
  %v102 = vld [vmem:[%s1 + $0x270] sm:$0xff]
  %v103 = vld [vmem:[%s1 + $0x278] sm:$0xff]
  %v104 = vld [vmem:[%s1 + $0x280] sm:$0xff]
  %v105 = vld [vmem:[%s1 + $0x288] sm:$0xff]
  %v106 = vld [vmem:[%s1 + $0x290] sm:$0xff]
  %v107 = vld [vmem:[%s1 + $0x298] sm:$0xff]
  %v108 = vld [vmem:[%s1 + $0x2a0] sm:$0xff]
  %v109 = vld [vmem:[%s1 + $0x2a8] sm:$0xff]
  %v110 = vld [vmem:[%s1 + $0x2b0] sm:$0xff]
  %v111 = vld [vmem:[%s1 + $0x2b8] sm:$0xff]
  %v112 = vld [vmem:[%s1 + $0x2c0] sm:$0xff]
  %v113 = vld [vmem:[%s1 + $0x2c8] sm:$0xff]
  %v114 = vld [vmem:[%s1 + $0x2d0] sm:$0xff]
  %v115 = vld [vmem:[%s1 + $0x2d8] sm:$0xff]
  %v116 = vld [vmem:[%s1 + $0x2e0] sm:$0xff]
  %v117 = vld [vmem:[%s1 + $0x2e8] sm:$0xff]
  %v118 = vld [vmem:[%s1 + $0x2f0] sm:$0xff]
  %v119 = vld [vmem:[%s1 + $0x2f8] sm:$0xff]
  %v120 = vld [vmem:[%s1 + $0x300] sm:$0xff]
  %v121 = vld [vmem:[%s1 + $0x308] sm:$0xff]
  %v122 = vld [vmem:[%s1 + $0x310] sm:$0xff]
  %v123 = vld [vmem:[%s1 + $0x318] sm:$0xff]
  %v124 = vld [vmem:[%s1 + $0x320] sm:$0xff]
  %v125 = vld [vmem:[%s1 + $0x328] sm:$0xff]
  %v126 = vld [vmem:[%s1 + $0x330] sm:$0xff]
  %v127 = vld [vmem:[%s1 + $0x338] sm:$0xff]
  %v128 = vld [vmem:[%s1 + $0x340] sm:$0xff]
  %v129 = vld [vmem:[%s1 + $0x348] sm:$0xff]
  %v130 = vld [vmem:[%s1 + $0x350] sm:$0xff]
  %v131 = vld [vmem:[%s1 + $0x358] sm:$0xff]
  %v132 = vld [vmem:[%s1 + $0x360] sm:$0xff]
  %v133 = vld [vmem:[%s1 + $0x368] sm:$0xff]
  %v134 = vld [vmem:[%s1 + $0x370] sm:$0xff]
  %v135 = vld [vmem:[%s1 + $0x378] sm:$0xff]
  %v136 = vld [vmem:[%s1 + $0x380] sm:$0xff]
  %v137 = vld [vmem:[%s1 + $0x388] sm:$0xff]
  %v138 = vld [vmem:[%s1 + $0x390] sm:$0xff]
  %v139 = vld [vmem:[%s1 + $0x398] sm:$0xff]
  %v140 = vld [vmem:[%s1 + $0x3a0] sm:$0xff]
  %v141 = vld [vmem:[%s1 + $0x3a8] sm:$0xff]
  %v142 = vld [vmem:[%s1 + $0x3b0] sm:$0xff]
  %v143 = vld [vmem:[%s1 + $0x3b8] sm:$0xff]
  %v144 = vld [vmem:[%s1 + $0x3c0] sm:$0xff]
  %v145 = vld [vmem:[%s1 + $0x3c8] sm:$0xff]
  %v146 = vld [vmem:[%s1 + $0x3d0] sm:$0xff]
  %v147 = vld [vmem:[%s1 + $0x3d8] sm:$0xff]
  %v148 = vld [vmem:[%s1 + $0x3e0] sm:$0xff]
  %v149 = vld [vmem:[%s1 + $0x3e8] sm:$0xff]
  %v150 = vld [vmem:[%s1 + $0x3f0] sm:$0xff]
  %v151 = vld [vmem:[%s1 + $0x3f8] sm:$0xff]
  %v152 = vld [vmem:[%s1 + $0x400] sm:$0xff]
  %v153 = vld [vmem:[%s1 + $0x408] sm:$0xff]
  %v154 = vld [vmem:[%s1 + $0x410] sm:$0xff]
  %v155 = vld [vmem:[%s1 + $0x418] sm:$0xff]
  %v156 = vld [vmem:[%s1 + $0x420] sm:$0xff]
  %v157 = vld [vmem:[%s1 + $0x428] sm:$0xff]
  %v158 = vld [vmem:[%s1 + $0x430] sm:$0xff]
  %v159 = vld [vmem:[%s1 + $0x438] sm:$0xff]
  %v160 = vld [vmem:[%s1 + $0x440] sm:$0xff]
  %v161 = vld [vmem:[%s1 + $0x448] sm:$0xff]
  %v162 = vld [vmem:[%s1 + $0x450] sm:$0xff]
  %v163 = vld [vmem:[%s1 + $0x458] sm:$0xff]
  %v164 = vld [vmem:[%s1 + $0x460] sm:$0xff]
  %v165 = vld [vmem:[%s1 + $0x468] sm:$0xff]
  %v166 = vld [vmem:[%s1 + $0x470] sm:$0xff]
  %v167 = vld [vmem:[%s1 + $0x478] sm:$0xff]
  %v168 = vld [vmem:[%s1 + $0x480] sm:$0xff]
  %v169 = vld [vmem:[%s1 + $0x488] sm:$0xff]
  %v170 = vld [vmem:[%s1 + $0x490] sm:$0xff]
  %v171 = vld [vmem:[%s1 + $0x498] sm:$0xff]
  %v172 = vld [vmem:[%s1 + $0x4a0] sm:$0xff]
  %v173 = vld [vmem:[%s1 + $0x4a8] sm:$0xff]
  %v174 = vld [vmem:[%s1 + $0x4b0] sm:$0xff]
  %v175 = vld [vmem:[%s1 + $0x4b8] sm:$0xff]
  %v176 = vld [vmem:[%s1 + $0x4c0] sm:$0xff]
  %v177 = vld [vmem:[%s1 + $0x4c8] sm:$0xff]
  %v178 = vld [vmem:[%s1 + $0x4d0] sm:$0xff]
  %v179 = vld [vmem:[%s1 + $0x4d8] sm:$0xff]
  %v180 = vld [vmem:[%s1 + $0x4e0] sm:$0xff]
  %v181 = vld [vmem:[%s1 + $0x4e8] sm:$0xff]
  %v182 = vld [vmem:[%s1 + $0x4f0] sm:$0xff]
  %v183 = vld [vmem:[%s1 + $0x4f8] sm:$0xff]
  %v184 = vld [vmem:[%s1 + $0x500] sm:$0xff]
  %v185 = vld [vmem:[%s1 + $0x508] sm:$0xff]
  %v186 = vld [vmem:[%s1 + $0x510] sm:$0xff]
  %v187 = vld [vmem:[%s1 + $0x518] sm:$0xff]
  %v188 = vld [vmem:[%s1 + $0x520] sm:$0xff]
  %v189 = vld [vmem:[%s1 + $0x528] sm:$0xff]
  %v190 = vld [vmem:[%s1 + $0x530] sm:$0xff]
  %v191 = vld [vmem:[%s1 + $0x538] sm:$0xff]
  %v192 = vld [vmem:[%s1 + $0x540] sm:$0xff]
  %v193 = vld [vmem:[%s1 + $0x548] sm:$0xff]
  %v194 = vld [vmem:[%s1 + $0x550] sm:$0xff]
  %v195 = vld [vmem:[%s1 + $0x558] sm:$0xff]
  %v196 = vld [vmem:[%s1 + $0x560] sm:$0xff]
  %v197 = vld [vmem:[%s1 + $0x568] sm:$0xff]
  %v198 = vld [vmem:[%s1 + $0x570] sm:$0xff]
  %v199 = vld [vmem:[%s1 + $0x578] sm:$0xff]
  %v200 = vld [vmem:[%s1 + $0x580] sm:$0xff]
  %v201 = vld [vmem:[%s1 + $0x588] sm:$0xff]
  %v202 = vld [vmem:[%s1 + $0x590] sm:$0xff]
  %v203 = vld [vmem:[%s1 + $0x598] sm:$0xff]
  %v204 = vld [vmem:[%s1 + $0x5a0] sm:$0xff]
  %v205 = vld [vmem:[%s1 + $0x5a8] sm:$0xff]
  %v206 = vld [vmem:[%s1 + $0x5b0] sm:$0xff]
  %v207 = vld [vmem:[%s1 + $0x5b8] sm:$0xff]
  %v208 = vld [vmem:[%s1 + $0x5c0] sm:$0xff]
  %v209 = vld [vmem:[%s1 + $0x5c8] sm:$0xff]
  %v210 = vld [vmem:[%s1 + $0x5d0] sm:$0xff]
  %v211 = vld [vmem:[%s1 + $0x5d8] sm:$0xff]
  %v212 = vld [vmem:[%s1 + $0x5e0] sm:$0xff]
  %v213 = vld [vmem:[%s1 + $0x5e8] sm:$0xff]
  %v214 = vld [vmem:[%s1 + $0x5f0] sm:$0xff]
  %v215 = vld [vmem:[%s1 + $0x5f8] sm:$0xff]
  %v216 = vld [vmem:[%s1 + $0x600] sm:$0xff]
  %v217 = vld [vmem:[%s1 + $0x608] sm:$0xff]
  %v218 = vld [vmem:[%s1 + $0x610] sm:$0xff]
  %v219 = vld [vmem:[%s1 + $0x618] sm:$0xff]
  %v220 = vld [vmem:[%s1 + $0x620] sm:$0xff]
  %v221 = vld [vmem:[%s1 + $0x628] sm:$0xff]
  %v222 = vld [vmem:[%s1 + $0x630] sm:$0xff]
  %v223 = vld [vmem:[%s1 + $0x638] sm:$0xff]
  %v224 = vld [vmem:[%s1 + $0x640] sm:$0xff]
  %v225 = vld [vmem:[%s1 + $0x648] sm:$0xff]
  %v226 = vld [vmem:[%s1 + $0x650] sm:$0xff]
  %v227 = vld [vmem:[%s1 + $0x658] sm:$0xff]
  %v228 = vld [vmem:[%s1 + $0x660] sm:$0xff]
  %v229 = vld [vmem:[%s1 + $0x668] sm:$0xff]
  %v230 = vld [vmem:[%s1 + $0x670] sm:$0xff]
  %v231 = vld [vmem:[%s1 + $0x678] sm:$0xff]
  %v232 = vld [vmem:[%s1 + $0x680] sm:$0xff]
  %v233 = vld [vmem:[%s1 + $0x688] sm:$0xff]
  %v234 = vld [vmem:[%s1 + $0x690] sm:$0xff]
  %v235 = vld [vmem:[%s1 + $0x698] sm:$0xff]
  %v236 = vld [vmem:[%s1 + $0x6a0] sm:$0xff]
  %v237 = vld [vmem:[%s1 + $0x6a8] sm:$0xff]
  %v238 = vld [vmem:[%s1 + $0x6b0] sm:$0xff]
  %v239 = vld [vmem:[%s1 + $0x6b8] sm:$0xff]
  %v240 = vld [vmem:[%s1 + $0x6c0] sm:$0xff]
  %v241 = vld [vmem:[%s1 + $0x6c8] sm:$0xff]
  %v242 = vld [vmem:[%s1 + $0x6d0] sm:$0xff]
  %v243 = vld [vmem:[%s1 + $0x6d8] sm:$0xff]
  %v244 = vld [vmem:[%s1 + $0x6e0] sm:$0xff]
  %v245 = vld [vmem:[%s1 + $0x6e8] sm:$0xff]
  %v246 = vld [vmem:[%s1 + $0x6f0] sm:$0xff]
  %v247 = vld [vmem:[%s1 + $0x6f8] sm:$0xff]
  %v248 = vld [vmem:[%s1 + $0x700] sm:$0xff]
  %v249 = vld [vmem:[%s1 + $0x708] sm:$0xff]
  %v250 = vld [vmem:[%s1 + $0x710] sm:$0xff]
  %v251 = vld [vmem:[%s1 + $0x718] sm:$0xff]
  %v252 = vld [vmem:[%s1 + $0x720] sm:$0xff]
  %v253 = vld [vmem:[%s1 + $0x728] sm:$0xff]
  %v254 = vld [vmem:[%s1 + $0x730] sm:$0xff]
  %v255 = vld [vmem:[%s1 + $0x738] sm:$0xff]
  %v256 = vld [vmem:[%s1 + $0x740] sm:$0xff]
  %v257 = vld [vmem:[%s1 + $0x748] sm:$0xff]
  %v258 = vld [vmem:[%s1 + $0x750] sm:$0xff]
  %v259 = vld [vmem:[%s1 + $0x758] sm:$0xff]
  %v260 = vld [vmem:[%s1 + $0x760] sm:$0xff]
  %v261 = vld [vmem:[%s1 + $0x768] sm:$0xff]
  %v262 = vld [vmem:[%s1 + $0x770] sm:$0xff]
  %v263 = vld [vmem:[%s1 + $0x778] sm:$0xff]
  %v264 = vld [vmem:[%s1 + $0x780] sm:$0xff]
  %v265 = vld [vmem:[%s1 + $0x788] sm:$0xff]
  %v266 = vld [vmem:[%s1 + $0x790] sm:$0xff]
  %v267 = vld [vmem:[%s1 + $0x798] sm:$0xff]
  %v268 = vld [vmem:[%s1 + $0x7a0] sm:$0xff]
  %v269 = vld [vmem:[%s1 + $0x7a8] sm:$0xff]
  %v270 = vld [vmem:[%s1 + $0x7b0] sm:$0xff]
  %v271 = vld [vmem:[%s1 + $0x7b8] sm:$0xff]
  %v272 = vld [vmem:[%s1 + $0x7c0] sm:$0x3]
  %v273 = vld [vmem:[%s1 + $0x7c8] sm:$0x3]
  %v274 = vld [vmem:[%s1 + $0x7d0] sm:$0x3]
  %v275 = vld [vmem:[%s1 + $0x7d8] sm:$0x3]
  %v276 = vld [vmem:[%s1 + $0x7e0] sm:$0x3]
  %v277 = vld [vmem:[%s1 + $0x7e8] sm:$0x3]
  %v278 = vld [vmem:[%s1 + $0x7f0] sm:$0x3]
  %v279 = vld [vmem:[%s1 + $0x7f8] sm:$0x3]
  %v280 = vld [vmem:[%s2] sm:$0xff]
  %v281 = vld [vmem:[%s2 + $0x8] sm:$0xff]
  %283 = vset.pattern.permute.xlu0 0
  %284 = vperm.xlu0 %283, %v280
  %v285 = vpop.permute.xlu0 %284
  %288 = vset.pattern.permute.xlu0 0
  %289 = vperm.xlu0 %288, %v281
  %v290 = vpop.permute.xlu0 %289
  %vm292 = vcmask 998400
  %v294 = vsel %vm292, %v21, 0
  %v297 = vsel %vm292, %v23, 0
  %vm299 = vcmask 1041408
  %v301 = vsel %vm299, %v272, 0
  %v304 = vsel %vm299, %v273, 0
  %v307 = vsel %vm299, %v274, 0
  %v310 = vsel %vm299, %v275, 0
  %v313 = vsel %vm299, %v276, 0
  %v316 = vsel %vm299, %v277, 0
  %v319 = vsel %vm299, %v278, 0
  %v322 = vsel %vm299, %v279, 0
  %324 = vmatprep.subr.mxu0 %v25
  %325 = vmatpush1.msra.mxu0 %v24
  %326 = vmatprep.subr.mxu0 %v33
  %327 = vmatpush1.msra.mxu0 %v32
  %328 = vmatprep.subr.mxu0 %v41
  %329 = vmatpush1.msra.mxu0 %v40
  %330 = vmatprep.subr.mxu0 %v49
  %331 = vmatpush1.msra.mxu0 %v48
  %332 = vmatprep.subr.mxu0 %v57
  %333 = vmatpush1.msra.mxu0 %v56
  %334 = vmatprep.subr.mxu0 %v65
  %335 = vmatpush1.msra.mxu0 %v64
  %336 = vmatprep.subr.mxu0 %v73
  %337 = vmatpush1.msra.mxu0 %v72
  %338 = vmatprep.subr.mxu0 %v81
  %339 = vmatpush1.msra.mxu0 %v80
  %340 = vmatprep.subr.mxu0 %v89
  %341 = vmatpush1.msra.mxu0 %v88
  %342 = vmatprep.subr.mxu0 %v97
  %343 = vmatpush1.msra.mxu0 %v96
  %344 = vmatprep.subr.mxu0 %v105
  %345 = vmatpush1.msra.mxu0 %v104
  %346 = vmatprep.subr.mxu0 %v113
  %347 = vmatpush1.msra.mxu0 %v112
  %348 = vmatprep.subr.mxu0 %v121
  %349 = vmatpush1.msra.mxu0 %v120
  %350 = vmatprep.subr.mxu0 %v129
  %351 = vmatpush1.msra.mxu0 %v128
  %352 = vmatprep.subr.mxu0 %v137
  %353 = vmatpush1.msra.mxu0 %v136
  %354 = vmatprep.subr.mxu0 %v145
  %355 = vmatpush1.msra.mxu0 %v144
  %356 = vmatprep.subr.mxu0 %v153
  %357 = vmatpush1.msra.mxu0 %v152
  %358 = vmatprep.subr.mxu0 %v161
  %359 = vmatpush1.msra.mxu0 %v160
  %360 = vmatprep.subr.mxu0 %v169
  %361 = vmatpush1.msra.mxu0 %v168
  %362 = vmatprep.subr.mxu0 %v177
  %363 = vmatpush1.msra.mxu0 %v176
  %364 = vmatprep.subr.mxu0 %v185
  %365 = vmatpush1.msra.mxu0 %v184
  %366 = vmatprep.subr.mxu0 %v193
  %367 = vmatpush1.msra.mxu0 %v192
  %368 = vmatprep.subr.mxu0 %v201
  %369 = vmatpush1.msra.mxu0 %v200
  %370 = vmatprep.subr.mxu0 %v209
  %371 = vmatpush1.msra.mxu0 %v208
  %372 = vmatprep.subr.mxu0 %v217
  %373 = vmatpush1.msra.mxu0 %v216
  %374 = vmatprep.subr.mxu0 %v225
  %375 = vmatpush1.msra.mxu0 %v224
  %376 = vmatprep.subr.mxu0 %v233
  %377 = vmatpush1.msra.mxu0 %v232
  %378 = vmatprep.subr.mxu0 %v241
  %379 = vmatpush1.msra.mxu0 %v240
  %380 = vmatprep.subr.mxu0 %v249
  %381 = vmatpush1.msra.mxu0 %v248
  %382 = vmatprep.subr.mxu0 %v257
  %383 = vmatpush1.msra.mxu0 %v256
  %384 = vmatprep.subr.mxu0 %v265
  %385 = vmatpush1.msra.mxu0 %v264
  %386 = vmatprep.subr.mxu0 %v304
  %387 = vmatpush1.msra.mxu0 %v301
  %388 = vmatprep.mubr.f32.mxu0 %v294
  %389 = vmatmul.mubr.f32.gmra.mrb[0].mxu0 %v20
  %v390 = vpop.f32.mrb[0].mxu0
  %v391 = vadd.f32 %v285, %v390
  %v392 = vpop.f32.mrb[0].mxu0
  %v393 = vadd.f32 %v285, %v392
  %394 = vmatprep.mubr.f32.mxu0 %v297
  %395 = vmatmul.mubr.f32.gmra.mrb[0].mxu0 %v22
  %v396 = vpop.f32.mrb[0].mxu0
  %v397 = vadd.f32 %v290, %v396
  %v398 = vpop.f32.mrb[0].mxu0
  %v399 = vadd.f32 %v290, %v398
  %400 = vdwg.mxu0
  %401 = vmatprep.subr.mxu0 %v27
  %402 = vmatpush1.msra.mxu0 %v26
  %403 = vmatprep.subr.mxu0 %v35
  %404 = vmatpush1.msra.mxu0 %v34
  %405 = vmatprep.subr.mxu0 %v43
  %406 = vmatpush1.msra.mxu0 %v42
  %407 = vmatprep.subr.mxu0 %v51
  %408 = vmatpush1.msra.mxu0 %v50
  %409 = vmatprep.subr.mxu0 %v59
  %410 = vmatpush1.msra.mxu0 %v58
  %411 = vmatprep.subr.mxu0 %v67
  %412 = vmatpush1.msra.mxu0 %v66
  %413 = vmatprep.subr.mxu0 %v75
  %414 = vmatpush1.msra.mxu0 %v74
  %415 = vmatprep.subr.mxu0 %v83
  %416 = vmatpush1.msra.mxu0 %v82
  %417 = vmatprep.subr.mxu0 %v91
  %418 = vmatpush1.msra.mxu0 %v90
  %419 = vmatprep.subr.mxu0 %v99
  %420 = vmatpush1.msra.mxu0 %v98
  %421 = vmatprep.subr.mxu0 %v107
  %422 = vmatpush1.msra.mxu0 %v106
  %423 = vmatprep.subr.mxu0 %v115
  %424 = vmatpush1.msra.mxu0 %v114
  %425 = vmatprep.subr.mxu0 %v123
  %426 = vmatpush1.msra.mxu0 %v122
  %427 = vmatprep.subr.mxu0 %v131
  %428 = vmatpush1.msra.mxu0 %v130
  %429 = vmatprep.subr.mxu0 %v139
  %430 = vmatpush1.msra.mxu0 %v138
  %431 = vmatprep.subr.mxu0 %v147
  %432 = vmatpush1.msra.mxu0 %v146
  %433 = vmatprep.subr.mxu0 %v155
  %434 = vmatpush1.msra.mxu0 %v154
  %435 = vmatprep.subr.mxu0 %v163
  %436 = vmatpush1.msra.mxu0 %v162
  %437 = vmatprep.subr.mxu0 %v171
  %438 = vmatpush1.msra.mxu0 %v170
  %439 = vmatprep.subr.mxu0 %v179
  %440 = vmatpush1.msra.mxu0 %v178
  %441 = vmatprep.subr.mxu0 %v187
  %442 = vmatpush1.msra.mxu0 %v186
  %443 = vmatprep.subr.mxu0 %v195
  %444 = vmatpush1.msra.mxu0 %v194
  %445 = vmatprep.subr.mxu0 %v203
  %446 = vmatpush1.msra.mxu0 %v202
  %447 = vmatprep.subr.mxu0 %v211
  %448 = vmatpush1.msra.mxu0 %v210
  %449 = vmatprep.subr.mxu0 %v219
  %450 = vmatpush1.msra.mxu0 %v218
  %451 = vmatprep.subr.mxu0 %v227
  %452 = vmatpush1.msra.mxu0 %v226
  %453 = vmatprep.subr.mxu0 %v235
  %454 = vmatpush1.msra.mxu0 %v234
  %455 = vmatprep.subr.mxu0 %v243
  %456 = vmatpush1.msra.mxu0 %v242
  %457 = vmatprep.subr.mxu0 %v251
  %458 = vmatpush1.msra.mxu0 %v250
  %459 = vmatprep.subr.mxu0 %v259
  %460 = vmatpush1.msra.mxu0 %v258
  %461 = vmatprep.subr.mxu0 %v267
  %462 = vmatpush1.msra.mxu0 %v266
  %463 = vmatprep.subr.mxu0 %v310
  %464 = vmatpush1.msra.mxu0 %v307
  %465 = vmatprep.mubr.f32.mxu0 %v294
  %466 = vmatmul.mubr.f32.gmra.mrb[0].mxu0 %v20
  %v467 = vpop.f32.mrb[0].mxu0
  %v468 = vadd.f32 %v285, %v467
  %v469 = vpop.f32.mrb[0].mxu0
  %v470 = vadd.f32 %v285, %v469
  %471 = vmatprep.mubr.f32.mxu0 %v297
  %472 = vmatmul.mubr.f32.gmra.mrb[0].mxu0 %v22
  %v473 = vpop.f32.mrb[0].mxu0
  %v474 = vadd.f32 %v290, %v473
  %v475 = vpop.f32.mrb[0].mxu0
  %v476 = vadd.f32 %v290, %v475
  %477 = vdwg.mxu0
  %478 = vmatprep.subr.mxu0 %v29
  %479 = vmatpush1.msra.mxu0 %v28
  %480 = vmatprep.subr.mxu0 %v37
  %481 = vmatpush1.msra.mxu0 %v36
  %482 = vmatprep.subr.mxu0 %v45
  %483 = vmatpush1.msra.mxu0 %v44
  %484 = vmatprep.subr.mxu0 %v53
  %485 = vmatpush1.msra.mxu0 %v52
  %486 = vmatprep.subr.mxu0 %v61
  %487 = vmatpush1.msra.mxu0 %v60
  %488 = vmatprep.subr.mxu0 %v69
  %489 = vmatpush1.msra.mxu0 %v68
  %490 = vmatprep.subr.mxu0 %v77
  %491 = vmatpush1.msra.mxu0 %v76
  %492 = vmatprep.subr.mxu0 %v85
  %493 = vmatpush1.msra.mxu0 %v84
  %494 = vmatprep.subr.mxu0 %v93
  %495 = vmatpush1.msra.mxu0 %v92
  %496 = vmatprep.subr.mxu0 %v101
  %497 = vmatpush1.msra.mxu0 %v100
  %498 = vmatprep.subr.mxu0 %v109
  %499 = vmatpush1.msra.mxu0 %v108
  %500 = vmatprep.subr.mxu0 %v117
  %501 = vmatpush1.msra.mxu0 %v116
  %502 = vmatprep.subr.mxu0 %v125
  %503 = vmatpush1.msra.mxu0 %v124
  %504 = vmatprep.subr.mxu0 %v133
  %505 = vmatpush1.msra.mxu0 %v132
  %506 = vmatprep.subr.mxu0 %v141
  %507 = vmatpush1.msra.mxu0 %v140
  %508 = vmatprep.subr.mxu0 %v149
  %509 = vmatpush1.msra.mxu0 %v148
  %510 = vmatprep.subr.mxu0 %v157
  %511 = vmatpush1.msra.mxu0 %v156
  %512 = vmatprep.subr.mxu0 %v165
  %513 = vmatpush1.msra.mxu0 %v164
  %514 = vmatprep.subr.mxu0 %v173
  %515 = vmatpush1.msra.mxu0 %v172
  %516 = vmatprep.subr.mxu0 %v181
  %517 = vmatpush1.msra.mxu0 %v180
  %518 = vmatprep.subr.mxu0 %v189
  %519 = vmatpush1.msra.mxu0 %v188
  %520 = vmatprep.subr.mxu0 %v197
  %521 = vmatpush1.msra.mxu0 %v196
  %522 = vmatprep.subr.mxu0 %v205
  %523 = vmatpush1.msra.mxu0 %v204
  %524 = vmatprep.subr.mxu0 %v213
  %525 = vmatpush1.msra.mxu0 %v212
  %526 = vmatprep.subr.mxu0 %v221
  %527 = vmatpush1.msra.mxu0 %v220
  %528 = vmatprep.subr.mxu0 %v229
  %529 = vmatpush1.msra.mxu0 %v228
  %530 = vmatprep.subr.mxu0 %v237
  %531 = vmatpush1.msra.mxu0 %v236
  %532 = vmatprep.subr.mxu0 %v245
  %533 = vmatpush1.msra.mxu0 %v244
  %534 = vmatprep.subr.mxu0 %v253
  %535 = vmatpush1.msra.mxu0 %v252
  %536 = vmatprep.subr.mxu0 %v261
  %537 = vmatpush1.msra.mxu0 %v260
  %538 = vmatprep.subr.mxu0 %v269
  %539 = vmatpush1.msra.mxu0 %v268
  %540 = vmatprep.subr.mxu0 %v316
  %541 = vmatpush1.msra.mxu0 %v313
  %542 = vmatprep.mubr.f32.mxu0 %v294
  %543 = vmatmul.mubr.f32.gmra.mrb[0].mxu0 %v20
  %v544 = vpop.f32.mrb[0].mxu0
  %v545 = vadd.f32 %v285, %v544
  %v546 = vpop.f32.mrb[0].mxu0
  %v547 = vadd.f32 %v285, %v546
  %548 = vmatprep.mubr.f32.mxu0 %v297
  %549 = vmatmul.mubr.f32.gmra.mrb[0].mxu0 %v22
  %v550 = vpop.f32.mrb[0].mxu0
  %v551 = vadd.f32 %v290, %v550
  %v552 = vpop.f32.mrb[0].mxu0
  %v553 = vadd.f32 %v290, %v552
  %554 = vdwg.mxu0
  %555 = vmatprep.subr.mxu0 %v31
  %556 = vmatpush1.msra.mxu0 %v30
  %557 = vmatprep.subr.mxu0 %v39
  %558 = vmatpush1.msra.mxu0 %v38
  %559 = vmatprep.subr.mxu0 %v47
  %560 = vmatpush1.msra.mxu0 %v46
  %561 = vmatprep.subr.mxu0 %v55
  %562 = vmatpush1.msra.mxu0 %v54
  %563 = vmatprep.subr.mxu0 %v63
  %564 = vmatpush1.msra.mxu0 %v62
  %565 = vmatprep.subr.mxu0 %v71
  %566 = vmatpush1.msra.mxu0 %v70
  %567 = vmatprep.subr.mxu0 %v79
  %568 = vmatpush1.msra.mxu0 %v78
  %569 = vmatprep.subr.mxu0 %v87
  %570 = vmatpush1.msra.mxu0 %v86
  %571 = vmatprep.subr.mxu0 %v95
  %572 = vmatpush1.msra.mxu0 %v94
  %573 = vmatprep.subr.mxu0 %v103
  %574 = vmatpush1.msra.mxu0 %v102
  %575 = vmatprep.subr.mxu0 %v111
  %576 = vmatpush1.msra.mxu0 %v110
  %577 = vmatprep.subr.mxu0 %v119
  %578 = vmatpush1.msra.mxu0 %v118
  %579 = vmatprep.subr.mxu0 %v127
  %580 = vmatpush1.msra.mxu0 %v126
  %581 = vmatprep.subr.mxu0 %v135
  %582 = vmatpush1.msra.mxu0 %v134
  %583 = vmatprep.subr.mxu0 %v143
  %584 = vmatpush1.msra.mxu0 %v142
  %585 = vmatprep.subr.mxu0 %v151
  %586 = vmatpush1.msra.mxu0 %v150
  %587 = vmatprep.subr.mxu0 %v159
  %588 = vmatpush1.msra.mxu0 %v158
  %589 = vmatprep.subr.mxu0 %v167
  %590 = vmatpush1.msra.mxu0 %v166
  %591 = vmatprep.subr.mxu0 %v175
  %592 = vmatpush1.msra.mxu0 %v174
  %593 = vmatprep.subr.mxu0 %v183
  %594 = vmatpush1.msra.mxu0 %v182
  %595 = vmatprep.subr.mxu0 %v191
  %596 = vmatpush1.msra.mxu0 %v190
  %597 = vmatprep.subr.mxu0 %v199
  %598 = vmatpush1.msra.mxu0 %v198
  %599 = vmatprep.subr.mxu0 %v207
  %600 = vmatpush1.msra.mxu0 %v206
  %601 = vmatprep.subr.mxu0 %v215
  %602 = vmatpush1.msra.mxu0 %v214
  %603 = vmatprep.subr.mxu0 %v223
  %604 = vmatpush1.msra.mxu0 %v222
  %605 = vmatprep.subr.mxu0 %v231
  %606 = vmatpush1.msra.mxu0 %v230
  %607 = vmatprep.subr.mxu0 %v239
  %608 = vmatpush1.msra.mxu0 %v238
  %609 = vmatprep.subr.mxu0 %v247
  %610 = vmatpush1.msra.mxu0 %v246
  %611 = vmatprep.subr.mxu0 %v255
  %612 = vmatpush1.msra.mxu0 %v254
  %613 = vmatprep.subr.mxu0 %v263
  %614 = vmatpush1.msra.mxu0 %v262
  %615 = vmatprep.subr.mxu0 %v271
  %616 = vmatpush1.msra.mxu0 %v270
  %617 = vmatprep.subr.mxu0 %v322
  %618 = vmatpush1.msra.mxu0 %v319
  %619 = vmatprep.mubr.f32.mxu0 %v294
  %620 = vmatmul.mubr.f32.gmra.mrb[0].mxu0 %v20
  %v621 = vpop.f32.mrb[0].mxu0
  %v622 = vadd.f32 %v285, %v621
  %v623 = vpop.f32.mrb[0].mxu0
  %v624 = vadd.f32 %v285, %v623
  %625 = vmatprep.mubr.f32.mxu0 %v297
  %626 = vmatmul.mubr.f32.gmra.mrb[0].mxu0 %v22
  %v627 = vpop.f32.mrb[0].mxu0
  %v628 = vadd.f32 %v290, %v627
  %v629 = vpop.f32.mrb[0].mxu0
  %v630 = vadd.f32 %v290, %v629
  %631 = vdwg.mxu0
  %v632 = vmax.f32 %v391, 0.0
  %v633 = vmax.f32 %v393, 0.0
  %v634 = vmax.f32 %v468, 0.0
  %v635 = vmax.f32 %v470, 0.0
  %v636 = vmax.f32 %v545, 0.0
  %v637 = vmax.f32 %v547, 0.0
  %v638 = vmax.f32 %v622, 0.0
  %v639 = vmax.f32 %v624, 0.0
  %v640 = vmax.f32 %v397, 0.0
  %v641 = vmax.f32 %v399, 0.0
  %v642 = vmax.f32 %v474, 0.0
  %v643 = vmax.f32 %v476, 0.0
  %v644 = vmax.f32 %v551, 0.0
  %v645 = vmax.f32 %v553, 0.0
  %v646 = vmax.f32 %v628, 0.0
  %v647 = vmax.f32 %v630, 0.0
  %v648 = vld [vmem:[%s3] sm:$0xff]
  %v649 = vld [vmem:[%s3 + $0x8] sm:$0xff]
  %651 = vset.pattern.permute.xlu0 0
  %652 = vperm.xlu0 %651, %v648
  %v653 = vpop.permute.xlu0 %652
  %656 = vset.pattern.permute.xlu0 0
  %657 = vperm.xlu0 %656, %v649
  %v658 = vpop.permute.xlu0 %657
  %v660 = vmul.f32 %v632, %v653
  %v661 = vmul.f32 %v633, %v653
  %v662 = vmul.f32 %v634, %v653
  %v663 = vmul.f32 %v635, %v653
  %v664 = vmul.f32 %v636, %v653
  %v665 = vmul.f32 %v637, %v653
  %v666 = vmul.f32 %v638, %v653
  %v667 = vmul.f32 %v639, %v653
  %v668 = vmul.f32 %v640, %v658
  %v669 = vmul.f32 %v641, %v658
  %v670 = vmul.f32 %v642, %v658
  %v671 = vmul.f32 %v643, %v658
  %v672 = vmul.f32 %v644, %v658
  %v673 = vmul.f32 %v645, %v658
  %v674 = vmul.f32 %v646, %v658
  %v675 = vmul.f32 %v647, %v658
  %v676 = vld [vmem:[%s4] sm:$0xff]
  %v677 = vld [vmem:[%s4 + $0x8] sm:$0xff]
  %679 = vset.pattern.permute.xlu0 0
  %680 = vperm.xlu0 %679, %v676
  %v681 = vpop.permute.xlu0 %680
  %684 = vset.pattern.permute.xlu0 0
  %685 = vperm.xlu0 %684, %v677
  %v686 = vpop.permute.xlu0 %685
  %v688 = vadd.f32 %v660, %v681
  %v689 = vadd.f32 %v661, %v681
  %v690 = vadd.f32 %v662, %v681
  %v691 = vadd.f32 %v663, %v681
  %v692 = vadd.f32 %v664, %v681
  %v693 = vadd.f32 %v665, %v681
  %v694 = vadd.f32 %v666, %v681
  %v695 = vadd.f32 %v667, %v681
  %v696 = vadd.f32 %v668, %v686
  %v697 = vadd.f32 %v669, %v686
  %v698 = vadd.f32 %v670, %v686
  %v699 = vadd.f32 %v671, %v686
  %v700 = vadd.f32 %v672, %v686
  %v701 = vadd.f32 %v673, %v686
  %v702 = vadd.f32 %v674, %v686
  %v703 = vadd.f32 %v675, %v686
  %704 = vst [vmem:[%s5] sm:$0xff] %v688
  %705 = vst [vmem:[%s5 + $0x8] sm:$0xff] %v689
  %706 = vst [vmem:[%s5 + $0x10] sm:$0xff] %v690
  %707 = vst [vmem:[%s5 + $0x18] sm:$0xff] %v691
  %708 = vst [vmem:[%s5 + $0x20] sm:$0xff] %v692
  %709 = vst [vmem:[%s5 + $0x28] sm:$0xff] %v693
  %710 = vst [vmem:[%s5 + $0x30] sm:$0xff] %v694
  %vm711 = vcmask 588800
  %712 = vst.msk [vmem:[%s5 + $0x38] sm:$0xff] %vm711, %v695
  %713 = vst [vmem:[%s5 + $0x40] sm:$0xff] %v696
  %714 = vst [vmem:[%s5 + $0x48] sm:$0xff] %v697
  %715 = vst [vmem:[%s5 + $0x50] sm:$0xff] %v698
  %716 = vst [vmem:[%s5 + $0x58] sm:$0xff] %v699
  %717 = vst [vmem:[%s5 + $0x60] sm:$0xff] %v700
  %718 = vst [vmem:[%s5 + $0x68] sm:$0xff] %v701
  %719 = vst [vmem:[%s5 + $0x70] sm:$0xff] %v702
  %720 = vst.msk [vmem:[%s5 + $0x78] sm:$0xff] %vm711, %v703
  // Predicated region
  $region22: #{_forward_impl.3} parent=0 // pred_check
    _
  $region23: #{_forward_impl.3} parent=0 // pred_check_branch
    %722 = sbr.rel (0) target = $region25
  $region24: #{_forward_impl.3} parent=0 // pred_region
    _
  $region25: #{_forward_impl.3} parent=0 // pred_fallthru
    _
  // Predicated region
  $region26: #{_forward_impl.3} parent=0 // pred_check
    _
  $region27: #{_forward_impl.3} parent=0 // pred_check_branch
    %724 = sbr.rel (0) target = $region29
  $region28: #{_forward_impl.3} parent=0 // pred_region
    _
  $region29: #{_forward_impl.3} parent=0 // pred_fallthru
    _

// kernel: _forward_impl.4
$region0: #{_forward_impl.4}
  #allocation0 [shape = 'u32[]', space=smem, size = 0x4, offset = 0x4, fixed_abs, tag = 'smem constant byte address 0x4 - core index']
  #allocation1 [shape = 'u32[144,128]{1,0:T(1,128)}', space=vmem, size = 0x12000, scoped, tag = 'internal scratch']
  %s0 = inlined_call_operand.vmem [shape: f32[16,144], index: 0, kind: input, shape index: {}]
  %s1 = inlined_call_operand.vmem [shape: f32[144,200], index: 1, kind: input, shape index: {}]
  %s2 = inlined_call_operand.vmem [shape: f32[16,1], index: 2, kind: input, shape index: {}]
  %s3 = inlined_call_operand.vmem [shape: f32[16,1], index: 3, kind: input, shape index: {}]
  %s4 = inlined_call_operand.vmem [shape: f32[16,1], index: 4, kind: input, shape index: {}]
  %s5 = inlined_call_operand.vmem [shape: f32[16,200], index: 5, kind: output, shape index: {}]
  %s6 = sld [smem:[#allocation0]]
  $region30: #{_forward_impl.4} parent=0
    _
  %s8 = ssub.s32 1, %s6
  %s9 = scalar_select 0, %s8, %s6
  // Predicated region
  $region2: #{_forward_impl.4} parent=0 // pred_check
    _
  $region3: #{_forward_impl.4} parent=0 // pred_check_branch
    %11 = sbr.rel (0) target = $region5
  $region4: #{_forward_impl.4} parent=0 // pred_region
    _
  $region5: #{_forward_impl.4} parent=0 // pred_fallthru
    _
  // Predicated region
  $region6: #{_forward_impl.4} parent=0 // pred_check
    _
  $region7: #{_forward_impl.4} parent=0 // pred_check_branch
    %13 = sbr.rel (0) target = $region9
  $region8: #{_forward_impl.4} parent=0 // pred_region
    _
  $region9: #{_forward_impl.4} parent=0 // pred_fallthru
    _
  // Predicated region
  $region10: #{_forward_impl.4} parent=0 // pred_check
    _
  $region11: #{_forward_impl.4} parent=0 // pred_check_branch
    %15 = sbr.rel (0) target = $region13
  $region12: #{_forward_impl.4} parent=0 // pred_region
    _
  $region13: #{_forward_impl.4} parent=0 // pred_fallthru
    _
  // Predicated region
  $region14: #{_forward_impl.4} parent=0 // pred_check
    _
  $region15: #{_forward_impl.4} parent=0 // pred_check_branch
    %17 = sbr.rel (0) target = $region17
  $region16: #{_forward_impl.4} parent=0 // pred_region
    _
  $region17: #{_forward_impl.4} parent=0 // pred_fallthru
    _
  // Predicated region
  $region18: #{_forward_impl.4} parent=0 // pred_check
    _
  $region19: #{_forward_impl.4} parent=0 // pred_check_branch
    %19 = sbr.rel (0) target = $region21
  $region20: #{_forward_impl.4} parent=0 // pred_region
    _
  $region21: #{_forward_impl.4} parent=0 // pred_fallthru
    _
  %v20 = vld [vmem:[%s0] sm:$0xff]
  %v21 = vld [vmem:[%s0 + $0x8] sm:$0xff]
  %v22 = vld [vmem:[%s0 + $0x10] sm:$0xff]
  %v23 = vld [vmem:[%s0 + $0x18] sm:$0xff]
  %v24 = vld [vmem:[%s1] sm:$0xff]
  %v25 = vld [vmem:[%s1 + $0x8] sm:$0xff]
  %v26 = vld [vmem:[%s1 + $0x10] sm:$0xff]
  %v27 = vld [vmem:[%s1 + $0x18] sm:$0xff]
  %v28 = vld [vmem:[%s1 + $0x20] sm:$0xff]
  %v29 = vld [vmem:[%s1 + $0x28] sm:$0xff]
  %v30 = vld [vmem:[%s1 + $0x30] sm:$0xff]
  %v31 = vld [vmem:[%s1 + $0x38] sm:$0xff]
  %v32 = vld [vmem:[%s1 + $0x40] sm:$0xff]
  %v33 = vld [vmem:[%s1 + $0x48] sm:$0xff]
  %v34 = vld [vmem:[%s1 + $0x50] sm:$0xff]
  %v35 = vld [vmem:[%s1 + $0x58] sm:$0xff]
  %v36 = vld [vmem:[%s1 + $0x60] sm:$0xff]
  %v37 = vld [vmem:[%s1 + $0x68] sm:$0xff]
  %v38 = vld [vmem:[%s1 + $0x70] sm:$0xff]
  %v39 = vld [vmem:[%s1 + $0x78] sm:$0xff]
  %v40 = vld [vmem:[%s1 + $0x80] sm:$0xff]
  %v41 = vld [vmem:[%s1 + $0x88] sm:$0xff]
  %v42 = vld [vmem:[%s1 + $0x90] sm:$0xff]
  %v43 = vld [vmem:[%s1 + $0x98] sm:$0xff]
  %v44 = vld [vmem:[%s1 + $0xa0] sm:$0xff]
  %v45 = vld [vmem:[%s1 + $0xa8] sm:$0xff]
  %v46 = vld [vmem:[%s1 + $0xb0] sm:$0xff]
  %v47 = vld [vmem:[%s1 + $0xb8] sm:$0xff]
  %v48 = vld [vmem:[%s1 + $0xc0] sm:$0xff]
  %v49 = vld [vmem:[%s1 + $0xc8] sm:$0xff]
  %v50 = vld [vmem:[%s1 + $0xd0] sm:$0xff]
  %v51 = vld [vmem:[%s1 + $0xd8] sm:$0xff]
  %v52 = vld [vmem:[%s1 + $0xe0] sm:$0xff]
  %v53 = vld [vmem:[%s1 + $0xe8] sm:$0xff]
  %v54 = vld [vmem:[%s1 + $0xf0] sm:$0xff]
  %v55 = vld [vmem:[%s1 + $0xf8] sm:$0xff]
  %v56 = vld [vmem:[%s1 + $0x100] sm:$0xff]
  %v57 = vld [vmem:[%s1 + $0x108] sm:$0xff]
  %v58 = vld [vmem:[%s1 + $0x110] sm:$0xff]
  %v59 = vld [vmem:[%s1 + $0x118] sm:$0xff]
  %v60 = vld [vmem:[%s2] sm:$0xff]
  %v61 = vld [vmem:[%s2 + $0x8] sm:$0xff]
  %63 = vset.pattern.permute.xlu0 0
  %64 = vperm.xlu0 %63, %v60
  %v65 = vpop.permute.xlu0 %64
  %68 = vset.pattern.permute.xlu0 0
  %69 = vperm.xlu0 %68, %v61
  %v70 = vpop.permute.xlu0 %69
  %vm72 = vcmask 130048
  %v74 = vsel %vm72, %v21, 0
  %v77 = vsel %vm72, %v23, 0
  %79 = vmatprep.subr.mxu0 %v25
  %80 = vmatpush1.msra.mxu0 %v24
  %81 = vmatprep.subr.mxu0 %v27
  %82 = vmatpush1.msra.mxu0 %v26
  %83 = vmatprep.subr.mxu0 %v29
  %84 = vmatpush1.msra.mxu0 %v28
  %85 = vmatprep.subr.mxu0 %v31
  %86 = vmatpush1.msra.mxu0 %v30
  %87 = vmatprep.subr.mxu0 %v33
  %88 = vmatpush1.msra.mxu0 %v32
  %89 = vmatprep.subr.mxu0 %v35
  %90 = vmatpush1.msra.mxu0 %v34
  %91 = vmatprep.subr.mxu0 %v37
  %92 = vmatpush1.msra.mxu0 %v36
  %93 = vmatprep.subr.mxu0 %v39
  %94 = vmatpush1.msra.mxu0 %v38
  %95 = vmatprep.subr.mxu0 %v41
  %96 = vmatpush1.msra.mxu0 %v40
  %97 = vmatprep.subr.mxu0 %v43
  %98 = vmatpush1.msra.mxu0 %v42
  %99 = vmatprep.subr.mxu0 %v45
  %100 = vmatpush1.msra.mxu0 %v44
  %101 = vmatprep.subr.mxu0 %v47
  %102 = vmatpush1.msra.mxu0 %v46
  %103 = vmatprep.subr.mxu0 %v49
  %104 = vmatpush1.msra.mxu0 %v48
  %105 = vmatprep.subr.mxu0 %v51
  %106 = vmatpush1.msra.mxu0 %v50
  %107 = vmatprep.subr.mxu0 %v53
  %108 = vmatpush1.msra.mxu0 %v52
  %109 = vmatprep.subr.mxu0 %v55
  %110 = vmatpush1.msra.mxu0 %v54
  %111 = vmatprep.subr.mxu0 %v57
  %112 = vmatpush1.msra.mxu0 %v56
  %113 = vmatprep.subr.mxu0 %v59
  %114 = vmatpush1.msra.mxu0 %v58
  %115 = vmatprep.subr.mxu0 0.0
  %116 = vmatpush1.msra.mxu0 0.0
  %117 = vmatprep.subr.mxu0 0.0
  %118 = vmatpush1.msra.mxu0 0.0
  %119 = vmatprep.subr.mxu0 0.0
  %120 = vmatpush1.msra.mxu0 0.0
  %121 = vmatprep.subr.mxu0 0.0
  %122 = vmatpush1.msra.mxu0 0.0
  %123 = vmatprep.subr.mxu0 0.0
  %124 = vmatpush1.msra.mxu0 0.0
  %125 = vmatprep.subr.mxu0 0.0
  %126 = vmatpush1.msra.mxu0 0.0
  %127 = vmatprep.subr.mxu0 0.0
  %128 = vmatpush1.msra.mxu0 0.0
  %129 = vmatprep.subr.mxu0 0.0
  %130 = vmatpush1.msra.mxu0 0.0
  %131 = vmatprep.subr.mxu0 0.0
  %132 = vmatpush1.msra.mxu0 0.0
  %133 = vmatprep.subr.mxu0 0.0
  %134 = vmatpush1.msra.mxu0 0.0
  %135 = vmatprep.subr.mxu0 0.0
  %136 = vmatpush1.msra.mxu0 0.0
  %137 = vmatprep.subr.mxu0 0.0
  %138 = vmatpush1.msra.mxu0 0.0
  %139 = vmatprep.subr.mxu0 0.0
  %140 = vmatpush1.msra.mxu0 0.0
  %141 = vmatprep.subr.mxu0 0.0
  %142 = vmatpush1.msra.mxu0 0.0
  %143 = vmatprep.mubr.f32.mxu0 %v74
  %144 = vmatmul.mubr.f32.gmra.mrb[0].mxu0 %v20
  %v145 = vpop.f32.mrb[0].mxu0
  %v146 = vadd.f32 %v65, %v145
  %v147 = vpop.f32.mrb[0].mxu0
  %v148 = vadd.f32 %v65, %v147
  %149 = vmatprep.mubr.f32.mxu0 %v77
  %150 = vmatmul.mubr.f32.gmra.mrb[0].mxu0 %v22
  %v151 = vpop.f32.mrb[0].mxu0
  %v152 = vadd.f32 %v70, %v151
  %v153 = vpop.f32.mrb[0].mxu0
  %v154 = vadd.f32 %v70, %v153
  %155 = vdwg.mxu0
  %v156 = vmax.f32 %v146, 0.0
  %v157 = vmax.f32 %v148, 0.0
  %v158 = vmax.f32 %v152, 0.0
  %v159 = vmax.f32 %v154, 0.0
  %v160 = vld [vmem:[%s3] sm:$0xff]
  %v161 = vld [vmem:[%s3 + $0x8] sm:$0xff]
  %163 = vset.pattern.permute.xlu0 0
  %164 = vperm.xlu0 %163, %v160
  %v165 = vpop.permute.xlu0 %164
  %168 = vset.pattern.permute.xlu0 0
  %169 = vperm.xlu0 %168, %v161
  %v170 = vpop.permute.xlu0 %169
  %v172 = vmul.f32 %v156, %v165
  %v173 = vmul.f32 %v157, %v165
  %v174 = vmul.f32 %v158, %v170
  %v175 = vmul.f32 %v159, %v170
  %v176 = vld [vmem:[%s4] sm:$0xff]
  %v177 = vld [vmem:[%s4 + $0x8] sm:$0xff]
  %179 = vset.pattern.permute.xlu0 0
  %180 = vperm.xlu0 %179, %v176
  %v181 = vpop.permute.xlu0 %180
  %184 = vset.pattern.permute.xlu0 0
  %185 = vperm.xlu0 %184, %v177
  %v186 = vpop.permute.xlu0 %185
  %v188 = vadd.f32 %v172, %v181
  %v189 = vadd.f32 %v173, %v181
  %v190 = vadd.f32 %v174, %v186
  %v191 = vadd.f32 %v175, %v186
  %192 = vst [vmem:[%s5] sm:$0xff] %v188
  %vm193 = vcmask 588800
  %194 = vst.msk [vmem:[%s5 + $0x8] sm:$0xff] %vm193, %v189
  %195 = vst [vmem:[%s5 + $0x10] sm:$0xff] %v190
  %196 = vst.msk [vmem:[%s5 + $0x18] sm:$0xff] %vm193, %v191
  // Predicated region
  $region22: #{_forward_impl.4} parent=0 // pred_check
    _
  $region23: #{_forward_impl.4} parent=0 // pred_check_branch
    %198 = sbr.rel (0) target = $region25
  $region24: #{_forward_impl.4} parent=0 // pred_region
    _
  $region25: #{_forward_impl.4} parent=0 // pred_fallthru
    _
  // Predicated region
  $region26: #{_forward_impl.4} parent=0 // pred_check
    _
  $region27: #{_forward_impl.4} parent=0 // pred_check_branch
    %200 = sbr.rel (0) target = $region29
  $region28: #{_forward_impl.4} parent=0 // pred_region
    _
  $region29: #{_forward_impl.4} parent=0 // pred_fallthru
    _

// kernel: _forward_impl.5
$region0: #{_forward_impl.5}
  #allocation0 [shape = 'u32[]', space=smem, size = 0x4, offset = 0x4, fixed_abs, tag = 'smem constant byte address 0x4 - core index']
  #allocation1 [shape = 'u32[144,128]{1,0:T(1,128)}', space=vmem, size = 0x12000, scoped, tag = 'internal scratch']
  %s0 = inlined_call_operand.vmem [shape: f32[16,144], index: 0, kind: input, shape index: {}]
  %s1 = inlined_call_operand.vmem [shape: f32[144,128], index: 1, kind: input, shape index: {}]
  %s2 = inlined_call_operand.vmem [shape: f32[16,1], index: 2, kind: input, shape index: {}]
  %s3 = inlined_call_operand.vmem [shape: f32[16,1], index: 3, kind: input, shape index: {}]
  %s4 = inlined_call_operand.vmem [shape: f32[16,1], index: 4, kind: input, shape index: {}]
  %s5 = inlined_call_operand.vmem [shape: f32[25,64,32], index: 5, kind: input, shape index: {}]
  %s6 = inlined_call_operand.vmem [shape: f32[64,1], index: 6, kind: input, shape index: {}]
  %s7 = inlined_call_operand.vmem [shape: f32[25,128,128], index: 7, kind: input, shape index: {}]
  %s8 = inlined_call_operand.vmem [shape: f32[16,128], index: 8, kind: input, shape index: {}]
  %s9 = inlined_call_operand.vmem [shape: f32[16,128], index: 9, kind: input, shape index: {}]
  %s10 = inlined_call_operand.vmem [shape: f32[16,128], index: 10, kind: output, shape index: {0}]
  %s11 = inlined_call_operand.vmem [shape: f32[16,128], index: 11, kind: output, shape index: {1}]
  %12 = xla_tuple %s10, %s11
  %s13 = sld [smem:[#allocation0]]
  $region58: #{_forward_impl.5} parent=0
    _
  %s15 = ssub.s32 1, %s13
  %s16 = scalar_select 0, %s15, %s13
  // Predicated region
  $region2: #{_forward_impl.5} parent=0 // pred_check
    _
  $region3: #{_forward_impl.5} parent=0 // pred_check_branch
    %18 = sbr.rel (0) target = $region5
  $region4: #{_forward_impl.5} parent=0 // pred_region
    _
  $region5: #{_forward_impl.5} parent=0 // pred_fallthru
    _
  // Predicated region
  $region6: #{_forward_impl.5} parent=0 // pred_check
    _
  $region7: #{_forward_impl.5} parent=0 // pred_check_branch
    %20 = sbr.rel (0) target = $region9
  $region8: #{_forward_impl.5} parent=0 // pred_region
    _
  $region9: #{_forward_impl.5} parent=0 // pred_fallthru
    _
  // Predicated region
  $region10: #{_forward_impl.5} parent=0 // pred_check
    _
  $region11: #{_forward_impl.5} parent=0 // pred_check_branch
    %22 = sbr.rel (0) target = $region13
  $region12: #{_forward_impl.5} parent=0 // pred_region
    _
  $region13: #{_forward_impl.5} parent=0 // pred_fallthru
    _
  // Predicated region
  $region14: #{_forward_impl.5} parent=0 // pred_check
    _
  $region15: #{_forward_impl.5} parent=0 // pred_check_branch
    %24 = sbr.rel (0) target = $region17
  $region16: #{_forward_impl.5} parent=0 // pred_region
    _
  $region17: #{_forward_impl.5} parent=0 // pred_fallthru
    _
  // Predicated region
  $region18: #{_forward_impl.5} parent=0 // pred_check
    _
  $region19: #{_forward_impl.5} parent=0 // pred_check_branch
    %26 = sbr.rel (0) target = $region21
  $region20: #{_forward_impl.5} parent=0 // pred_region
    _
  $region21: #{_forward_impl.5} parent=0 // pred_fallthru
    _
  // Predicated region
  $region22: #{_forward_impl.5} parent=0 // pred_check
    _
  $region23: #{_forward_impl.5} parent=0 // pred_check_branch
    %28 = sbr.rel (0) target = $region25
  $region24: #{_forward_impl.5} parent=0 // pred_region
    _
  $region25: #{_forward_impl.5} parent=0 // pred_fallthru
    _
  // Predicated region
  $region26: #{_forward_impl.5} parent=0 // pred_check
    _
  $region27: #{_forward_impl.5} parent=0 // pred_check_branch
    %30 = sbr.rel (0) target = $region29
  $region28: #{_forward_impl.5} parent=0 // pred_region
    _
  $region29: #{_forward_impl.5} parent=0 // pred_fallthru
    _
  // Predicated region
  $region30: #{_forward_impl.5} parent=0 // pred_check
    _
  $region31: #{_forward_impl.5} parent=0 // pred_check_branch
    %32 = sbr.rel (0) target = $region33
  $region32: #{_forward_impl.5} parent=0 // pred_region
    _
  $region33: #{_forward_impl.5} parent=0 // pred_fallthru
    _
  // Predicated region
  $region34: #{_forward_impl.5} parent=0 // pred_check
    _
  $region35: #{_forward_impl.5} parent=0 // pred_check_branch
    %34 = sbr.rel (0) target = $region37
  $region36: #{_forward_impl.5} parent=0 // pred_region
    _
  $region37: #{_forward_impl.5} parent=0 // pred_fallthru
    _
  // Predicated region
  $region38: #{_forward_impl.5} parent=0 // pred_check
    _
  $region39: #{_forward_impl.5} parent=0 // pred_check_branch
    %36 = sbr.rel (0) target = $region41
  $region40: #{_forward_impl.5} parent=0 // pred_region
    _
  $region41: #{_forward_impl.5} parent=0 // pred_fallthru
    _
  %v37 = vld [vmem:[%s0] sm:$0xff]
  %v38 = vld [vmem:[%s0 + $0x8] sm:$0xff]
  %v39 = vld [vmem:[%s0 + $0x10] sm:$0xff]
  %v40 = vld [vmem:[%s0 + $0x18] sm:$0xff]
  %v41 = vld [vmem:[%s1] sm:$0xff]
  %v42 = vld [vmem:[%s1 + $0x8] sm:$0xff]
  %v43 = vld [vmem:[%s1 + $0x10] sm:$0xff]
  %v44 = vld [vmem:[%s1 + $0x18] sm:$0xff]
  %v45 = vld [vmem:[%s1 + $0x20] sm:$0xff]
  %v46 = vld [vmem:[%s1 + $0x28] sm:$0xff]
  %v47 = vld [vmem:[%s1 + $0x30] sm:$0xff]
  %v48 = vld [vmem:[%s1 + $0x38] sm:$0xff]
  %v49 = vld [vmem:[%s1 + $0x40] sm:$0xff]
  %v50 = vld [vmem:[%s1 + $0x48] sm:$0xff]
  %v51 = vld [vmem:[%s1 + $0x50] sm:$0xff]
  %v52 = vld [vmem:[%s1 + $0x58] sm:$0xff]
  %v53 = vld [vmem:[%s1 + $0x60] sm:$0xff]
  %v54 = vld [vmem:[%s1 + $0x68] sm:$0xff]
  %v55 = vld [vmem:[%s1 + $0x70] sm:$0xff]
  %v56 = vld [vmem:[%s1 + $0x78] sm:$0xff]
  %v57 = vld [vmem:[%s1 + $0x80] sm:$0xff]
  %v58 = vld [vmem:[%s1 + $0x88] sm:$0xff]
  %v59 = vld [vmem:[%s2] sm:$0xff]
  %v60 = vld [vmem:[%s2 + $0x8] sm:$0xff]
  %62 = vset.pattern.permute.xlu0 0
  %63 = vperm.xlu0 %62, %v59
  %v64 = vpop.permute.xlu0 %63
  %67 = vset.pattern.permute.xlu0 0
  %68 = vperm.xlu0 %67, %v60
  %v69 = vpop.permute.xlu0 %68
  %vm71 = vcmask 130048
  %v73 = vsel %vm71, %v38, 0
  %v76 = vsel %vm71, %v40, 0
  %78 = vmatprep.subr.mxu0 0.0
  %79 = vmatpush1.msra.mxu0 %v41
  %80 = vmatprep.subr.mxu0 0.0
  %81 = vmatpush1.msra.mxu0 %v42
  %82 = vmatprep.subr.mxu0 0.0
  %83 = vmatpush1.msra.mxu0 %v43
  %84 = vmatprep.subr.mxu0 0.0
  %85 = vmatpush1.msra.mxu0 %v44
  %86 = vmatprep.subr.mxu0 0.0
  %87 = vmatpush1.msra.mxu0 %v45
  %88 = vmatprep.subr.mxu0 0.0
  %89 = vmatpush1.msra.mxu0 %v46
  %90 = vmatprep.subr.mxu0 0.0
  %91 = vmatpush1.msra.mxu0 %v47
  %92 = vmatprep.subr.mxu0 0.0
  %93 = vmatpush1.msra.mxu0 %v48
  %94 = vmatprep.subr.mxu0 0.0
  %95 = vmatpush1.msra.mxu0 %v49
  %96 = vmatprep.subr.mxu0 0.0
  %97 = vmatpush1.msra.mxu0 %v50
  %98 = vmatprep.subr.mxu0 0.0
  %99 = vmatpush1.msra.mxu0 %v51
  %100 = vmatprep.subr.mxu0 0.0
  %101 = vmatpush1.msra.mxu0 %v52
  %102 = vmatprep.subr.mxu0 0.0
  %103 = vmatpush1.msra.mxu0 %v53
  %104 = vmatprep.subr.mxu0 0.0
  %105 = vmatpush1.msra.mxu0 %v54
  %106 = vmatprep.subr.mxu0 0.0
  %107 = vmatpush1.msra.mxu0 %v55
  %108 = vmatprep.subr.mxu0 0.0
  %109 = vmatpush1.msra.mxu0 %v56
  %110 = vmatprep.subr.mxu0 0.0
  %111 = vmatpush1.msra.mxu0 %v57
  %112 = vmatprep.subr.mxu0 0.0
  %113 = vmatpush1.msra.mxu0 %v58
  %114 = vmatprep.subr.mxu0 0.0
  %115 = vmatpush1.msra.mxu0 0.0
  %116 = vmatprep.subr.mxu0 0.0
  %117 = vmatpush1.msra.mxu0 0.0
  %118 = vmatprep.subr.mxu0 0.0
  %119 = vmatpush1.msra.mxu0 0.0
  %120 = vmatprep.subr.mxu0 0.0
  %121 = vmatpush1.msra.mxu0 0.0
  %122 = vmatprep.subr.mxu0 0.0
  %123 = vmatpush1.msra.mxu0 0.0
  %124 = vmatprep.subr.mxu0 0.0
  %125 = vmatpush1.msra.mxu0 0.0
  %126 = vmatprep.subr.mxu0 0.0
  %127 = vmatpush1.msra.mxu0 0.0
  %128 = vmatprep.subr.mxu0 0.0
  %129 = vmatpush1.msra.mxu0 0.0
  %130 = vmatprep.subr.mxu0 0.0
  %131 = vmatpush1.msra.mxu0 0.0
  %132 = vmatprep.subr.mxu0 0.0
  %133 = vmatpush1.msra.mxu0 0.0
  %134 = vmatprep.subr.mxu0 0.0
  %135 = vmatpush1.msra.mxu0 0.0
  %136 = vmatprep.subr.mxu0 0.0
  %137 = vmatpush1.msra.mxu0 0.0
  %138 = vmatprep.subr.mxu0 0.0
  %139 = vmatpush1.msra.mxu0 0.0
  %140 = vmatprep.subr.mxu0 0.0
  %141 = vmatpush1.msra.mxu0 0.0
  %142 = vmatprep.mubr.f32.mxu0 %v73
  %143 = vmatmul.mubr.f32.gmra.mrb[0].mxu0 %v37
  %v144 = vpop.f32.mrb[0].mxu0
  %v145 = vadd.f32 %v64, %v144
  %v146 = vpop.f32.mrb[0].mxu0
  %147 = vmatprep.mubr.f32.mxu0 %v76
  %148 = vmatmul.mubr.f32.gmra.mrb[0].mxu0 %v39
  %v149 = vpop.f32.mrb[0].mxu0
  %v150 = vadd.f32 %v69, %v149
  %v151 = vpop.f32.mrb[0].mxu0
  %152 = vdwg.mxu0
  %v153 = vmax.f32 %v145, 0.0
  %v154 = vmax.f32 %v150, 0.0
  %v155 = vld [vmem:[%s3] sm:$0xff]
  %v156 = vld [vmem:[%s3 + $0x8] sm:$0xff]
  %158 = vset.pattern.permute.xlu0 0
  %159 = vperm.xlu0 %158, %v155
  %v160 = vpop.permute.xlu0 %159
  %163 = vset.pattern.permute.xlu0 0
  %164 = vperm.xlu0 %163, %v156
  %v165 = vpop.permute.xlu0 %164
  %v167 = vmul.f32 %v153, %v160
  %v168 = vmul.f32 %v154, %v165
  %v169 = vld [vmem:[%s4] sm:$0xff]
  %v170 = vld [vmem:[%s4 + $0x8] sm:$0xff]
  %172 = vset.pattern.permute.xlu0 0
  %173 = vperm.xlu0 %172, %v169
  %v174 = vpop.permute.xlu0 %173
  %177 = vset.pattern.permute.xlu0 0
  %178 = vperm.xlu0 %177, %v170
  %v179 = vpop.permute.xlu0 %178
  %v181 = vadd.f32 %v167, %v174
  %v182 = vadd.f32 %v168, %v179
  %v183 = vld [vmem:[%s9] sm:$0xff]
  %v184 = vld [vmem:[%s9 + $0x8] sm:$0xff]
  %v185 = vld [vmem:[%s7] sm:$0xff]
  %v186 = vld [vmem:[%s7 + $0x8] sm:$0xff]
  %v187 = vld [vmem:[%s7 + $0x10] sm:$0xff]
  %v188 = vld [vmem:[%s7 + $0x18] sm:$0xff]
  %v189 = vld [vmem:[%s7 + $0x20] sm:$0xff]
  %v190 = vld [vmem:[%s7 + $0x28] sm:$0xff]
  %v191 = vld [vmem:[%s7 + $0x30] sm:$0xff]
  %v192 = vld [vmem:[%s7 + $0x38] sm:$0xff]
  %v193 = vld [vmem:[%s7 + $0x40] sm:$0xff]
  %v194 = vld [vmem:[%s7 + $0x48] sm:$0xff]
  %v195 = vld [vmem:[%s7 + $0x50] sm:$0xff]
  %v196 = vld [vmem:[%s7 + $0x58] sm:$0xff]
  %v197 = vld [vmem:[%s7 + $0x60] sm:$0xff]
  %v198 = vld [vmem:[%s7 + $0x68] sm:$0xff]
  %v199 = vld [vmem:[%s7 + $0x70] sm:$0xff]
  %v200 = vld [vmem:[%s7 + $0x78] sm:$0xff]
  %201 = vmatprep.subr.mxu0 0.0
  %202 = vmatpush1.msra.mxu0 %v185
  %203 = vmatprep.subr.mxu0 0.0
  %204 = vmatpush1.msra.mxu0 %v186
  %205 = vmatprep.subr.mxu0 0.0
  %206 = vmatpush1.msra.mxu0 %v187
  %207 = vmatprep.subr.mxu0 0.0
  %208 = vmatpush1.msra.mxu0 %v188
  %209 = vmatprep.subr.mxu0 0.0
  %210 = vmatpush1.msra.mxu0 %v189
  %211 = vmatprep.subr.mxu0 0.0
  %212 = vmatpush1.msra.mxu0 %v190
  %213 = vmatprep.subr.mxu0 0.0
  %214 = vmatpush1.msra.mxu0 %v191
  %215 = vmatprep.subr.mxu0 0.0
  %216 = vmatpush1.msra.mxu0 %v192
  %217 = vmatprep.subr.mxu0 0.0
  %218 = vmatpush1.msra.mxu0 %v193
  %219 = vmatprep.subr.mxu0 0.0
  %220 = vmatpush1.msra.mxu0 %v194
  %221 = vmatprep.subr.mxu0 0.0
  %222 = vmatpush1.msra.mxu0 %v195
  %223 = vmatprep.subr.mxu0 0.0
  %224 = vmatpush1.msra.mxu0 %v196
  %225 = vmatprep.subr.mxu0 0.0
  %226 = vmatpush1.msra.mxu0 %v197
  %227 = vmatprep.subr.mxu0 0.0
  %228 = vmatpush1.msra.mxu0 %v198
  %229 = vmatprep.subr.mxu0 0.0
  %230 = vmatpush1.msra.mxu0 %v199
  %231 = vmatprep.subr.mxu0 0.0
  %232 = vmatpush1.msra.mxu0 %v200
  %233 = vmatprep.subr.mxu0 0.0
  %234 = vmatpush1.msra.mxu0 0.0
  %235 = vmatprep.subr.mxu0 0.0
  %236 = vmatpush1.msra.mxu0 0.0
  %237 = vmatprep.subr.mxu0 0.0
  %238 = vmatpush1.msra.mxu0 0.0
  %239 = vmatprep.subr.mxu0 0.0
  %240 = vmatpush1.msra.mxu0 0.0
  %241 = vmatprep.subr.mxu0 0.0
  %242 = vmatpush1.msra.mxu0 0.0
  %243 = vmatprep.subr.mxu0 0.0
  %244 = vmatpush1.msra.mxu0 0.0
  %245 = vmatprep.subr.mxu0 0.0
  %246 = vmatpush1.msra.mxu0 0.0
  %247 = vmatprep.subr.mxu0 0.0
  %248 = vmatpush1.msra.mxu0 0.0
  %249 = vmatprep.subr.mxu0 0.0
  %250 = vmatpush1.msra.mxu0 0.0
  %251 = vmatprep.subr.mxu0 0.0
  %252 = vmatpush1.msra.mxu0 0.0
  %253 = vmatprep.subr.mxu0 0.0
  %254 = vmatpush1.msra.mxu0 0.0
  %255 = vmatprep.subr.mxu0 0.0
  %256 = vmatpush1.msra.mxu0 0.0
  %257 = vmatprep.subr.mxu0 0.0
  %258 = vmatpush1.msra.mxu0 0.0
  %259 = vmatprep.subr.mxu0 0.0
  %260 = vmatpush1.msra.mxu0 0.0
  %261 = vmatprep.subr.mxu0 0.0
  %262 = vmatpush1.msra.mxu0 0.0
  %263 = vmatprep.subr.mxu0 0.0
  %264 = vmatpush1.msra.mxu0 0.0
  %265 = vmatprep.mubr.f32.mxu0 0.0
  %266 = vmatmul.mubr.f32.gmra.mrb[0].mxu0 %v181
  %v267 = vpop.f32.mrb[0].mxu0
  %v268 = vadd.f32 0.0, %v267
  %v269 = vpop.f32.mrb[0].mxu0
  %270 = vmatprep.mubr.f32.mxu0 0.0
  %271 = vmatmul.mubr.f32.gmra.mrb[0].mxu0 %v182
  %v272 = vpop.f32.mrb[0].mxu0
  %v273 = vadd.f32 0.0, %v272
  %v274 = vpop.f32.mrb[0].mxu0
  %275 = vmatprep.mubr.f32.mxu0 0.0
  %276 = vmatmul.mubr.f32.gmra.mrb[0].mxu0 %v183
  %v277 = vpop.f32.mrb[0].mxu0
  %v278 = vadd.f32 0.0, %v277
  %v279 = vpop.f32.mrb[0].mxu0
  %280 = vmatprep.mubr.f32.mxu0 0.0
  %281 = vmatmul.mubr.f32.gmra.mrb[0].mxu0 %v184
  %v282 = vpop.f32.mrb[0].mxu0
  %v283 = vadd.f32 0.0, %v282
  %v284 = vpop.f32.mrb[0].mxu0
  %285 = vdwg.mxu0
  %v286 = vld [vmem:[%s5] sm:$0xff]
  %v287 = vld [vmem:[%s5 + $0x8] sm:$0xff]
  %v288 = vld [vmem:[%s5 + $0x10] sm:$0xff]
  %v289 = vld [vmem:[%s5 + $0x18] sm:$0xff]
  %v290 = vld [vmem:[%s5 + $0x20] sm:$0xff]
  %v291 = vld [vmem:[%s5 + $0x28] sm:$0xff]
  %v292 = vld [vmem:[%s5 + $0x30] sm:$0xff]
  %v293 = vld [vmem:[%s5 + $0x38] sm:$0xff]
  %s294 = scalar_lea.vmem %s7, 128
  %v295 = vld [vmem:[%s294] sm:$0xff]
  %v296 = vld [vmem:[%s294 + $0x8] sm:$0xff]
  %v297 = vld [vmem:[%s294 + $0x10] sm:$0xff]
  %v298 = vld [vmem:[%s294 + $0x18] sm:$0xff]
  %v299 = vld [vmem:[%s294 + $0x20] sm:$0xff]
  %v300 = vld [vmem:[%s294 + $0x28] sm:$0xff]
  %v301 = vld [vmem:[%s294 + $0x30] sm:$0xff]
  %v302 = vld [vmem:[%s294 + $0x38] sm:$0xff]
  %v303 = vld [vmem:[%s294 + $0x40] sm:$0xff]
  %v304 = vld [vmem:[%s294 + $0x48] sm:$0xff]
  %v305 = vld [vmem:[%s294 + $0x50] sm:$0xff]
  %v306 = vld [vmem:[%s294 + $0x58] sm:$0xff]
  %v307 = vld [vmem:[%s294 + $0x60] sm:$0xff]
  %v308 = vld [vmem:[%s294 + $0x68] sm:$0xff]
  %v309 = vld [vmem:[%s294 + $0x70] sm:$0xff]
  %v310 = vld [vmem:[%s294 + $0x78] sm:$0xff]
  %311 = vmatprep.subr.mxu0 0.0
  %312 = vmatpush1.msra.mxu0 %v295
  %313 = vmatprep.subr.mxu0 0.0
  %314 = vmatpush1.msra.mxu0 %v296
  %315 = vmatprep.subr.mxu0 0.0
  %316 = vmatpush1.msra.mxu0 %v297
  %317 = vmatprep.subr.mxu0 0.0
  %318 = vmatpush1.msra.mxu0 %v298
  %319 = vmatprep.subr.mxu0 0.0
  %320 = vmatpush1.msra.mxu0 %v299
  %321 = vmatprep.subr.mxu0 0.0
  %322 = vmatpush1.msra.mxu0 %v300
  %323 = vmatprep.subr.mxu0 0.0
  %324 = vmatpush1.msra.mxu0 %v301
  %325 = vmatprep.subr.mxu0 0.0
  %326 = vmatpush1.msra.mxu0 %v302
  %327 = vmatprep.subr.mxu0 0.0
  %328 = vmatpush1.msra.mxu0 %v303
  %329 = vmatprep.subr.mxu0 0.0
  %330 = vmatpush1.msra.mxu0 %v304
  %331 = vmatprep.subr.mxu0 0.0
  %332 = vmatpush1.msra.mxu0 %v305
  %333 = vmatprep.subr.mxu0 0.0
  %334 = vmatpush1.msra.mxu0 %v306
  %335 = vmatprep.subr.mxu0 0.0
  %336 = vmatpush1.msra.mxu0 %v307
  %337 = vmatprep.subr.mxu0 0.0
  %338 = vmatpush1.msra.mxu0 %v308
  %339 = vmatprep.subr.mxu0 0.0
  %340 = vmatpush1.msra.mxu0 %v309
  %341 = vmatprep.subr.mxu0 0.0
  %342 = vmatpush1.msra.mxu0 %v310
  %343 = vmatprep.subr.mxu0 0.0
  %344 = vmatpush1.msra.mxu0 0.0
  %345 = vmatprep.subr.mxu0 0.0
  %346 = vmatpush1.msra.mxu0 0.0
  %347 = vmatprep.subr.mxu0 0.0
  %348 = vmatpush1.msra.mxu0 0.0
  %349 = vmatprep.subr.mxu0 0.0
  %350 = vmatpush1.msra.mxu0 0.0
  %351 = vmatprep.subr.mxu0 0.0
  %352 = vmatpush1.msra.mxu0 0.0
  %353 = vmatprep.subr.mxu0 0.0
  %354 = vmatpush1.msra.mxu0 0.0
  %355 = vmatprep.subr.mxu0 0.0
  %356 = vmatpush1.msra.mxu0 0.0
  %357 = vmatprep.subr.mxu0 0.0
  %358 = vmatpush1.msra.mxu0 0.0
  %359 = vmatprep.subr.mxu0 0.0
  %360 = vmatpush1.msra.mxu0 0.0
  %361 = vmatprep.subr.mxu0 0.0
  %362 = vmatpush1.msra.mxu0 0.0
  %363 = vmatprep.subr.mxu0 0.0
  %364 = vmatpush1.msra.mxu0 0.0
  %365 = vmatprep.subr.mxu0 0.0
  %366 = vmatpush1.msra.mxu0 0.0
  %367 = vmatprep.subr.mxu0 0.0
  %368 = vmatpush1.msra.mxu0 0.0
  %369 = vmatprep.subr.mxu0 0.0
  %370 = vmatpush1.msra.mxu0 0.0
  %371 = vmatprep.subr.mxu0 0.0
  %372 = vmatpush1.msra.mxu0 0.0
  %373 = vmatprep.subr.mxu0 0.0
  %374 = vmatpush1.msra.mxu0 0.0
  %375 = vmatprep.mubr.f32.mxu0 0.0
  %376 = vmatmul.mubr.f32.gmra.mrb[0].mxu0 %v181
  %v377 = vpop.f32.mrb[0].mxu0
  %v378 = vadd.f32 0.0, %v377
  %v379 = vpop.f32.mrb[0].mxu0
  %380 = vmatprep.mubr.f32.mxu0 0.0
  %381 = vmatmul.mubr.f32.gmra.mrb[0].mxu0 %v182
  %v382 = vpop.f32.mrb[0].mxu0
  %v383 = vadd.f32 0.0, %v382
  %v384 = vpop.f32.mrb[0].mxu0
  %385 = vmatprep.mubr.f32.mxu0 0.0
  %386 = vmatmul.mubr.f32.gmra.mrb[0].mxu0 %v183
  %v387 = vpop.f32.mrb[0].mxu0
  %v388 = vadd.f32 0.0, %v387
  %v389 = vpop.f32.mrb[0].mxu0
  %390 = vmatprep.mubr.f32.mxu0 0.0
  %391 = vmatmul.mubr.f32.gmra.mrb[0].mxu0 %v184
  %v392 = vpop.f32.mrb[0].mxu0
  %v393 = vadd.f32 0.0, %v392
  %v394 = vpop.f32.mrb[0].mxu0
  %395 = vdwg.mxu0
  %s396 = scalar_lea.vmem %s5, 64
  %v397 = vld [vmem:[%s396] sm:$0xff]
  %v398 = vld [vmem:[%s396 + $0x8] sm:$0xff]
  %v399 = vld [vmem:[%s396 + $0x10] sm:$0xff]
  %v400 = vld [vmem:[%s396 + $0x18] sm:$0xff]
  %v401 = vld [vmem:[%s396 + $0x20] sm:$0xff]
  %v402 = vld [vmem:[%s396 + $0x28] sm:$0xff]
  %v403 = vld [vmem:[%s396 + $0x30] sm:$0xff]
  %v404 = vld [vmem:[%s396 + $0x38] sm:$0xff]
  %vm405 = vcmask 261120
  %v407 = vsel %vm405, %v397, 0
  %v410 = vsel %vm405, %v398, 0
  %v413 = vsel %vm405, %v399, 0
  %v416 = vsel %vm405, %v400, 0
  %v419 = vsel %vm405, %v401, 0
  %v422 = vsel %vm405, %v402, 0
  %v425 = vsel %vm405, %v403, 0
  %v428 = vsel %vm405, %v404, 0
  %430 = vmatprep.subr.mxu0 0.0
  %431 = vmatpush1.msra.mxu0 %v378
  %432 = vmatprep.subr.mxu0 0.0
  %433 = vmatpush1.msra.mxu0 %v383
  %434 = vmatprep.subr.mxu0 0.0
  %435 = vmatpush1.msra.mxu0 %v388
  %436 = vmatprep.subr.mxu0 0.0
  %437 = vmatpush1.msra.mxu0 %v393
  %438 = vmatprep.subr.mxu0 0.0
  %439 = vmatpush1.msra.mxu0 0.0
  %440 = vmatprep.subr.mxu0 0.0
  %441 = vmatpush1.msra.mxu0 0.0
  %442 = vmatprep.subr.mxu0 0.0
  %443 = vmatpush1.msra.mxu0 0.0
  %444 = vmatprep.subr.mxu0 0.0
  %445 = vmatpush1.msra.mxu0 0.0
  %446 = vmatprep.subr.mxu0 0.0
  %447 = vmatpush1.msra.mxu0 0.0
  %448 = vmatprep.subr.mxu0 0.0
  %449 = vmatpush1.msra.mxu0 0.0
  %450 = vmatprep.subr.mxu0 0.0
  %451 = vmatpush1.msra.mxu0 0.0
  %452 = vmatprep.subr.mxu0 0.0
  %453 = vmatpush1.msra.mxu0 0.0
  %454 = vmatprep.subr.mxu0 0.0
  %455 = vmatpush1.msra.mxu0 0.0
  %456 = vmatprep.subr.mxu0 0.0
  %457 = vmatpush1.msra.mxu0 0.0
  %458 = vmatprep.subr.mxu0 0.0
  %459 = vmatpush1.msra.mxu0 0.0
  %460 = vmatprep.subr.mxu0 0.0
  %461 = vmatpush1.msra.mxu0 0.0
  %462 = vmatprep.subr.mxu0 0.0
  %463 = vmatpush1.msra.mxu0 0.0
  %464 = vmatprep.subr.mxu0 0.0
  %465 = vmatpush1.msra.mxu0 0.0
  %466 = vmatprep.subr.mxu0 0.0
  %467 = vmatpush1.msra.mxu0 0.0
  %468 = vmatprep.subr.mxu0 0.0
  %469 = vmatpush1.msra.mxu0 0.0
  %470 = vmatprep.subr.mxu0 0.0
  %471 = vmatpush1.msra.mxu0 0.0
  %472 = vmatprep.subr.mxu0 0.0
  %473 = vmatpush1.msra.mxu0 0.0
  %474 = vmatprep.subr.mxu0 0.0
  %475 = vmatpush1.msra.mxu0 0.0
  %476 = vmatprep.subr.mxu0 0.0
  %477 = vmatpush1.msra.mxu0 0.0
  %478 = vmatprep.subr.mxu0 0.0
  %479 = vmatpush1.msra.mxu0 0.0
  %480 = vmatprep.subr.mxu0 0.0
  %481 = vmatpush1.msra.mxu0 0.0
  %482 = vmatprep.subr.mxu0 0.0
  %483 = vmatpush1.msra.mxu0 0.0
  %484 = vmatprep.subr.mxu0 0.0
  %485 = vmatpush1.msra.mxu0 0.0
  %486 = vmatprep.subr.mxu0 0.0
  %487 = vmatpush1.msra.mxu0 0.0
  %488 = vmatprep.subr.mxu0 0.0
  %489 = vmatpush1.msra.mxu0 0.0
  %490 = vmatprep.subr.mxu0 0.0
  %491 = vmatpush1.msra.mxu0 0.0
  %492 = vmatprep.subr.mxu0 0.0
  %493 = vmatpush1.msra.mxu0 0.0
  %494 = vmatprep.mubr.f32.mxu0 0.0
  %495 = vmatmul.mubr.f32.gmra.mrb[0].mxu0 %v407
  %v496 = vpop.f32.mrb[0].mxu0
  %v497 = vadd.f32 0.0, %v496
  %v498 = vpop.f32.mrb[0].mxu0
  %499 = vmatprep.mubr.f32.mxu0 0.0
  %500 = vmatmul.mubr.f32.gmra.mrb[0].mxu0 %v410
  %v501 = vpop.f32.mrb[0].mxu0
  %v502 = vadd.f32 0.0, %v501
  %v503 = vpop.f32.mrb[0].mxu0
  %504 = vmatprep.mubr.f32.mxu0 0.0
  %505 = vmatmul.mubr.f32.gmra.mrb[0].mxu0 %v413
  %v506 = vpop.f32.mrb[0].mxu0
  %v507 = vadd.f32 0.0, %v506
  %v508 = vpop.f32.mrb[0].mxu0
  %509 = vmatprep.mubr.f32.mxu0 0.0
  %510 = vmatmul.mubr.f32.gmra.mrb[0].mxu0 %v416
  %v511 = vpop.f32.mrb[0].mxu0
  %v512 = vadd.f32 0.0, %v511
  %v513 = vpop.f32.mrb[0].mxu0
  %514 = vmatprep.mubr.f32.mxu0 0.0
  %515 = vmatmul.mubr.f32.gmra.mrb[0].mxu0 %v419
  %v516 = vpop.f32.mrb[0].mxu0
  %v517 = vadd.f32 0.0, %v516
  %v518 = vpop.f32.mrb[0].mxu0
  %519 = vmatprep.mubr.f32.mxu0 0.0
  %520 = vmatmul.mubr.f32.gmra.mrb[0].mxu0 %v422
  %v521 = vpop.f32.mrb[0].mxu0
  %v522 = vadd.f32 0.0, %v521
  %v523 = vpop.f32.mrb[0].mxu0
  %524 = vmatprep.mubr.f32.mxu0 0.0
  %525 = vmatmul.mubr.f32.gmra.mrb[0].mxu0 %v425
  %v526 = vpop.f32.mrb[0].mxu0
  %v527 = vadd.f32 0.0, %v526
  %v528 = vpop.f32.mrb[0].mxu0
  %529 = vmatprep.mubr.f32.mxu0 0.0
  %530 = vmatmul.mubr.f32.gmra.mrb[0].mxu0 %v428
  %v531 = vpop.f32.mrb[0].mxu0
  %v532 = vadd.f32 0.0, %v531
  %v533 = vpop.f32.mrb[0].mxu0
  %534 = vdwg.mxu0
  %v536 = vsel %vm405, %v286, 0
  %v539 = vsel %vm405, %v287, 0
  %v542 = vsel %vm405, %v288, 0
  %v545 = vsel %vm405, %v289, 0
  %v548 = vsel %vm405, %v290, 0
  %v551 = vsel %vm405, %v291, 0
  %v554 = vsel %vm405, %v292, 0
  %v557 = vsel %vm405, %v293, 0
  %559 = vmatprep.subr.mxu0 0.0
  %560 = vmatpush1.msra.mxu0 %v268
  %561 = vmatprep.subr.mxu0 0.0
  %562 = vmatpush1.msra.mxu0 %v273
  %563 = vmatprep.subr.mxu0 0.0
  %564 = vmatpush1.msra.mxu0 %v278
  %565 = vmatprep.subr.mxu0 0.0
  %566 = vmatpush1.msra.mxu0 %v283
  %567 = vmatprep.subr.mxu0 0.0
  %568 = vmatpush1.msra.mxu0 0.0
  %569 = vmatprep.subr.mxu0 0.0
  %570 = vmatpush1.msra.mxu0 0.0
  %571 = vmatprep.subr.mxu0 0.0
  %572 = vmatpush1.msra.mxu0 0.0
  %573 = vmatprep.subr.mxu0 0.0
  %574 = vmatpush1.msra.mxu0 0.0
  %575 = vmatprep.subr.mxu0 0.0
  %576 = vmatpush1.msra.mxu0 0.0
  %577 = vmatprep.subr.mxu0 0.0
  %578 = vmatpush1.msra.mxu0 0.0
  %579 = vmatprep.subr.mxu0 0.0
  %580 = vmatpush1.msra.mxu0 0.0
  %581 = vmatprep.subr.mxu0 0.0
  %582 = vmatpush1.msra.mxu0 0.0
  %583 = vmatprep.subr.mxu0 0.0
  %584 = vmatpush1.msra.mxu0 0.0
  %585 = vmatprep.subr.mxu0 0.0
  %586 = vmatpush1.msra.mxu0 0.0
  %587 = vmatprep.subr.mxu0 0.0
  %588 = vmatpush1.msra.mxu0 0.0
  %589 = vmatprep.subr.mxu0 0.0
  %590 = vmatpush1.msra.mxu0 0.0
  %591 = vmatprep.subr.mxu0 0.0
  %592 = vmatpush1.msra.mxu0 0.0
  %593 = vmatprep.subr.mxu0 0.0
  %594 = vmatpush1.msra.mxu0 0.0
  %595 = vmatprep.subr.mxu0 0.0
  %596 = vmatpush1.msra.mxu0 0.0
  %597 = vmatprep.subr.mxu0 0.0
  %598 = vmatpush1.msra.mxu0 0.0
  %599 = vmatprep.subr.mxu0 0.0
  %600 = vmatpush1.msra.mxu0 0.0
  %601 = vmatprep.subr.mxu0 0.0
  %602 = vmatpush1.msra.mxu0 0.0
  %603 = vmatprep.subr.mxu0 0.0
  %604 = vmatpush1.msra.mxu0 0.0
  %605 = vmatprep.subr.mxu0 0.0
  %606 = vmatpush1.msra.mxu0 0.0
  %607 = vmatprep.subr.mxu0 0.0
  %608 = vmatpush1.msra.mxu0 0.0
  %609 = vmatprep.subr.mxu0 0.0
  %610 = vmatpush1.msra.mxu0 0.0
  %611 = vmatprep.subr.mxu0 0.0
  %612 = vmatpush1.msra.mxu0 0.0
  %613 = vmatprep.subr.mxu0 0.0
  %614 = vmatpush1.msra.mxu0 0.0
  %615 = vmatprep.subr.mxu0 0.0
  %616 = vmatpush1.msra.mxu0 0.0
  %617 = vmatprep.subr.mxu0 0.0
  %618 = vmatpush1.msra.mxu0 0.0
  %619 = vmatprep.subr.mxu0 0.0
  %620 = vmatpush1.msra.mxu0 0.0
  %621 = vmatprep.subr.mxu0 0.0
  %622 = vmatpush1.msra.mxu0 0.0
  %623 = vmatprep.mubr.f32.mxu0 0.0
  %624 = vmatmul.mubr.f32.gmra.mrb[0].mxu0 %v536
  %v625 = vpop.f32.mrb[0].mxu0
  %v626 = vadd.f32 %v497, %v625
  %v627 = vpop.f32.mrb[0].mxu0
  %628 = vmatprep.mubr.f32.mxu0 0.0
  %629 = vmatmul.mubr.f32.gmra.mrb[0].mxu0 %v539
  %v630 = vpop.f32.mrb[0].mxu0
  %v631 = vadd.f32 %v502, %v630
  %v632 = vpop.f32.mrb[0].mxu0
  %633 = vmatprep.mubr.f32.mxu0 0.0
  %634 = vmatmul.mubr.f32.gmra.mrb[0].mxu0 %v542
  %v635 = vpop.f32.mrb[0].mxu0
  %v636 = vadd.f32 %v507, %v635
  %v637 = vpop.f32.mrb[0].mxu0
  %638 = vmatprep.mubr.f32.mxu0 0.0
  %639 = vmatmul.mubr.f32.gmra.mrb[0].mxu0 %v545
  %v640 = vpop.f32.mrb[0].mxu0
  %v641 = vadd.f32 %v512, %v640
  %v642 = vpop.f32.mrb[0].mxu0
  %643 = vmatprep.mubr.f32.mxu0 0.0
  %644 = vmatmul.mubr.f32.gmra.mrb[0].mxu0 %v548
  %v645 = vpop.f32.mrb[0].mxu0
  %v646 = vadd.f32 %v517, %v645
  %v647 = vpop.f32.mrb[0].mxu0
  %648 = vmatprep.mubr.f32.mxu0 0.0
  %649 = vmatmul.mubr.f32.gmra.mrb[0].mxu0 %v551
  %v650 = vpop.f32.mrb[0].mxu0
  %v651 = vadd.f32 %v522, %v650
  %v652 = vpop.f32.mrb[0].mxu0
  %653 = vmatprep.mubr.f32.mxu0 0.0
  %654 = vmatmul.mubr.f32.gmra.mrb[0].mxu0 %v554
  %v655 = vpop.f32.mrb[0].mxu0
  %v656 = vadd.f32 %v527, %v655
  %v657 = vpop.f32.mrb[0].mxu0
  %658 = vmatprep.mubr.f32.mxu0 0.0
  %659 = vmatmul.mubr.f32.gmra.mrb[0].mxu0 %v557
  %v660 = vpop.f32.mrb[0].mxu0
  %v661 = vadd.f32 %v532, %v660
  %v662 = vpop.f32.mrb[0].mxu0
  %663 = vdwg.mxu0
  %s664 = scalar_lea.vmem %s7, 256
  %v665 = vld [vmem:[%s664] sm:$0xff]
  %v666 = vld [vmem:[%s664 + $0x8] sm:$0xff]
  %v667 = vld [vmem:[%s664 + $0x10] sm:$0xff]
  %v668 = vld [vmem:[%s664 + $0x18] sm:$0xff]
  %v669 = vld [vmem:[%s664 + $0x20] sm:$0xff]
  %v670 = vld [vmem:[%s664 + $0x28] sm:$0xff]
  %v671 = vld [vmem:[%s664 + $0x30] sm:$0xff]
  %v672 = vld [vmem:[%s664 + $0x38] sm:$0xff]
  %v673 = vld [vmem:[%s664 + $0x40] sm:$0xff]
  %v674 = vld [vmem:[%s664 + $0x48] sm:$0xff]
  %v675 = vld [vmem:[%s664 + $0x50] sm:$0xff]
  %v676 = vld [vmem:[%s664 + $0x58] sm:$0xff]
  %v677 = vld [vmem:[%s664 + $0x60] sm:$0xff]
  %v678 = vld [vmem:[%s664 + $0x68] sm:$0xff]
  %v679 = vld [vmem:[%s664 + $0x70] sm:$0xff]
  %v680 = vld [vmem:[%s664 + $0x78] sm:$0xff]
  %681 = vmatprep.subr.mxu0 0.0
  %682 = vmatpush1.msra.mxu0 %v665
  %683 = vmatprep.subr.mxu0 0.0
  %684 = vmatpush1.msra.mxu0 %v666
  %685 = vmatprep.subr.mxu0 0.0
  %686 = vmatpush1.msra.mxu0 %v667
  %687 = vmatprep.subr.mxu0 0.0
  %688 = vmatpush1.msra.mxu0 %v668
  %689 = vmatprep.subr.mxu0 0.0
  %690 = vmatpush1.msra.mxu0 %v669
  %691 = vmatprep.subr.mxu0 0.0
  %692 = vmatpush1.msra.mxu0 %v670
  %693 = vmatprep.subr.mxu0 0.0
  %694 = vmatpush1.msra.mxu0 %v671
  %695 = vmatprep.subr.mxu0 0.0
  %696 = vmatpush1.msra.mxu0 %v672
  %697 = vmatprep.subr.mxu0 0.0
  %698 = vmatpush1.msra.mxu0 %v673
  %699 = vmatprep.subr.mxu0 0.0
  %700 = vmatpush1.msra.mxu0 %v674
  %701 = vmatprep.subr.mxu0 0.0
  %702 = vmatpush1.msra.mxu0 %v675
  %703 = vmatprep.subr.mxu0 0.0
  %704 = vmatpush1.msra.mxu0 %v676
  %705 = vmatprep.subr.mxu0 0.0
  %706 = vmatpush1.msra.mxu0 %v677
  %707 = vmatprep.subr.mxu0 0.0
  %708 = vmatpush1.msra.mxu0 %v678
  %709 = vmatprep.subr.mxu0 0.0
  %710 = vmatpush1.msra.mxu0 %v679
  %711 = vmatprep.subr.mxu0 0.0
  %712 = vmatpush1.msra.mxu0 %v680
  %713 = vmatprep.subr.mxu0 0.0
  %714 = vmatpush1.msra.mxu0 0.0
  %715 = vmatprep.subr.mxu0 0.0
  %716 = vmatpush1.msra.mxu0 0.0
  %717 = vmatprep.subr.mxu0 0.0
  %718 = vmatpush1.msra.mxu0 0.0
  %719 = vmatprep.subr.mxu0 0.0
  %720 = vmatpush1.msra.mxu0 0.0
  %721 = vmatprep.subr.mxu0 0.0
  %722 = vmatpush1.msra.mxu0 0.0
  %723 = vmatprep.subr.mxu0 0.0
  %724 = vmatpush1.msra.mxu0 0.0
  %725 = vmatprep.subr.mxu0 0.0
  %726 = vmatpush1.msra.mxu0 0.0
  %727 = vmatprep.subr.mxu0 0.0
  %728 = vmatpush1.msra.mxu0 0.0
  %729 = vmatprep.subr.mxu0 0.0
  %730 = vmatpush1.msra.mxu0 0.0
  %731 = vmatprep.subr.mxu0 0.0
  %732 = vmatpush1.msra.mxu0 0.0
  %733 = vmatprep.subr.mxu0 0.0
  %734 = vmatpush1.msra.mxu0 0.0
  %735 = vmatprep.subr.mxu0 0.0
  %736 = vmatpush1.msra.mxu0 0.0
  %737 = vmatprep.subr.mxu0 0.0
  %738 = vmatpush1.msra.mxu0 0.0
  %739 = vmatprep.subr.mxu0 0.0
  %740 = vmatpush1.msra.mxu0 0.0
  %741 = vmatprep.subr.mxu0 0.0
  %742 = vmatpush1.msra.mxu0 0.0
  %743 = vmatprep.subr.mxu0 0.0
  %744 = vmatpush1.msra.mxu0 0.0
  %745 = vmatprep.mubr.f32.mxu0 0.0
  %746 = vmatmul.mubr.f32.gmra.mrb[0].mxu0 %v181
  %v747 = vpop.f32.mrb[0].mxu0
  %v748 = vadd.f32 0.0, %v747
  %v749 = vpop.f32.mrb[0].mxu0
  %750 = vmatprep.mubr.f32.mxu0 0.0
  %751 = vmatmul.mubr.f32.gmra.mrb[0].mxu0 %v182
  %v752 = vpop.f32.mrb[0].mxu0
  %v753 = vadd.f32 0.0, %v752
  %v754 = vpop.f32.mrb[0].mxu0
  %755 = vmatprep.mubr.f32.mxu0 0.0
  %756 = vmatmul.mubr.f32.gmra.mrb[0].mxu0 %v183
  %v757 = vpop.f32.mrb[0].mxu0
  %v758 = vadd.f32 0.0, %v757
  %v759 = vpop.f32.mrb[0].mxu0
  %760 = vmatprep.mubr.f32.mxu0 0.0
  %761 = vmatmul.mubr.f32.gmra.mrb[0].mxu0 %v184
  %v762 = vpop.f32.mrb[0].mxu0
  %v763 = vadd.f32 0.0, %v762
  %v764 = vpop.f32.mrb[0].mxu0
  %765 = vdwg.mxu0
  %s766 = scalar_lea.vmem %s5, 128
  %v767 = vld [vmem:[%s766] sm:$0xff]
  %v768 = vld [vmem:[%s766 + $0x8] sm:$0xff]
  %v769 = vld [vmem:[%s766 + $0x10] sm:$0xff]
  %v770 = vld [vmem:[%s766 + $0x18] sm:$0xff]
  %v771 = vld [vmem:[%s766 + $0x20] sm:$0xff]
  %v772 = vld [vmem:[%s766 + $0x28] sm:$0xff]
  %v773 = vld [vmem:[%s766 + $0x30] sm:$0xff]
  %v774 = vld [vmem:[%s766 + $0x38] sm:$0xff]
  %v776 = vsel %vm405, %v767, 0
  %v779 = vsel %vm405, %v768, 0
  %v782 = vsel %vm405, %v769, 0
  %v785 = vsel %vm405, %v770, 0
  %v788 = vsel %vm405, %v771, 0
  %v791 = vsel %vm405, %v772, 0
  %v794 = vsel %vm405, %v773, 0
  %v797 = vsel %vm405, %v774, 0
  %799 = vmatprep.subr.mxu0 0.0
  %800 = vmatpush1.msra.mxu0 %v748
  %801 = vmatprep.subr.mxu0 0.0
  %802 = vmatpush1.msra.mxu0 %v753
  %803 = vmatprep.subr.mxu0 0.0
  %804 = vmatpush1.msra.mxu0 %v758
  %805 = vmatprep.subr.mxu0 0.0
  %806 = vmatpush1.msra.mxu0 %v763
  %807 = vmatprep.subr.mxu0 0.0
  %808 = vmatpush1.msra.mxu0 0.0
  %809 = vmatprep.subr.mxu0 0.0
  %810 = vmatpush1.msra.mxu0 0.0
  %811 = vmatprep.subr.mxu0 0.0
  %812 = vmatpush1.msra.mxu0 0.0
  %813 = vmatprep.subr.mxu0 0.0
  %814 = vmatpush1.msra.mxu0 0.0
  %815 = vmatprep.subr.mxu0 0.0
  %816 = vmatpush1.msra.mxu0 0.0
  %817 = vmatprep.subr.mxu0 0.0
  %818 = vmatpush1.msra.mxu0 0.0
  %819 = vmatprep.subr.mxu0 0.0
  %820 = vmatpush1.msra.mxu0 0.0
  %821 = vmatprep.subr.mxu0 0.0
  %822 = vmatpush1.msra.mxu0 0.0
  %823 = vmatprep.subr.mxu0 0.0
  %824 = vmatpush1.msra.mxu0 0.0
  %825 = vmatprep.subr.mxu0 0.0
  %826 = vmatpush1.msra.mxu0 0.0
  %827 = vmatprep.subr.mxu0 0.0
  %828 = vmatpush1.msra.mxu0 0.0
  %829 = vmatprep.subr.mxu0 0.0
  %830 = vmatpush1.msra.mxu0 0.0
  %831 = vmatprep.subr.mxu0 0.0
  %832 = vmatpush1.msra.mxu0 0.0
  %833 = vmatprep.subr.mxu0 0.0
  %834 = vmatpush1.msra.mxu0 0.0
  %835 = vmatprep.subr.mxu0 0.0
  %836 = vmatpush1.msra.mxu0 0.0
  %837 = vmatprep.subr.mxu0 0.0
  %838 = vmatpush1.msra.mxu0 0.0
  %839 = vmatprep.subr.mxu0 0.0
  %840 = vmatpush1.msra.mxu0 0.0
  %841 = vmatprep.subr.mxu0 0.0
  %842 = vmatpush1.msra.mxu0 0.0
  %843 = vmatprep.subr.mxu0 0.0
  %844 = vmatpush1.msra.mxu0 0.0
  %845 = vmatprep.subr.mxu0 0.0
  %846 = vmatpush1.msra.mxu0 0.0
  %847 = vmatprep.subr.mxu0 0.0
  %848 = vmatpush1.msra.mxu0 0.0
  %849 = vmatprep.subr.mxu0 0.0
  %850 = vmatpush1.msra.mxu0 0.0
  %851 = vmatprep.subr.mxu0 0.0
  %852 = vmatpush1.msra.mxu0 0.0
  %853 = vmatprep.subr.mxu0 0.0
  %854 = vmatpush1.msra.mxu0 0.0
  %855 = vmatprep.subr.mxu0 0.0
  %856 = vmatpush1.msra.mxu0 0.0
  %857 = vmatprep.subr.mxu0 0.0
  %858 = vmatpush1.msra.mxu0 0.0
  %859 = vmatprep.subr.mxu0 0.0
  %860 = vmatpush1.msra.mxu0 0.0
  %861 = vmatprep.subr.mxu0 0.0
  %862 = vmatpush1.msra.mxu0 0.0
  %863 = vmatprep.mubr.f32.mxu0 0.0
  %864 = vmatmul.mubr.f32.gmra.mrb[0].mxu0 %v776
  %v865 = vpop.f32.mrb[0].mxu0
  %v866 = vadd.f32 0.0, %v865
  %v867 = vpop.f32.mrb[0].mxu0
  %868 = vmatprep.mubr.f32.mxu0 0.0
  %869 = vmatmul.mubr.f32.gmra.mrb[0].mxu0 %v779
  %v870 = vpop.f32.mrb[0].mxu0
  %v871 = vadd.f32 0.0, %v870
  %v872 = vpop.f32.mrb[0].mxu0
  %873 = vmatprep.mubr.f32.mxu0 0.0
  %874 = vmatmul.mubr.f32.gmra.mrb[0].mxu0 %v782
  %v875 = vpop.f32.mrb[0].mxu0
  %v876 = vadd.f32 0.0, %v875
  %v877 = vpop.f32.mrb[0].mxu0
  %878 = vmatprep.mubr.f32.mxu0 0.0
  %879 = vmatmul.mubr.f32.gmra.mrb[0].mxu0 %v785
  %v880 = vpop.f32.mrb[0].mxu0
  %v881 = vadd.f32 0.0, %v880
  %v882 = vpop.f32.mrb[0].mxu0
  %883 = vmatprep.mubr.f32.mxu0 0.0
  %884 = vmatmul.mubr.f32.gmra.mrb[0].mxu0 %v788
  %v885 = vpop.f32.mrb[0].mxu0
  %v886 = vadd.f32 0.0, %v885
  %v887 = vpop.f32.mrb[0].mxu0
  %888 = vmatprep.mubr.f32.mxu0 0.0
  %889 = vmatmul.mubr.f32.gmra.mrb[0].mxu0 %v791
  %v890 = vpop.f32.mrb[0].mxu0
  %v891 = vadd.f32 0.0, %v890
  %v892 = vpop.f32.mrb[0].mxu0
  %893 = vmatprep.mubr.f32.mxu0 0.0
  %894 = vmatmul.mubr.f32.gmra.mrb[0].mxu0 %v794
  %v895 = vpop.f32.mrb[0].mxu0
  %v896 = vadd.f32 0.0, %v895
  %v897 = vpop.f32.mrb[0].mxu0
  %898 = vmatprep.mubr.f32.mxu0 0.0
  %899 = vmatmul.mubr.f32.gmra.mrb[0].mxu0 %v797
  %v900 = vpop.f32.mrb[0].mxu0
  %v901 = vadd.f32 0.0, %v900
  %v902 = vpop.f32.mrb[0].mxu0
  %903 = vdwg.mxu0
  %v904 = vadd.f32 %v626, %v866
  %v905 = vadd.f32 %v631, %v871
  %v906 = vadd.f32 %v636, %v876
  %v907 = vadd.f32 %v641, %v881
  %v908 = vadd.f32 %v646, %v886
  %v909 = vadd.f32 %v651, %v891
  %v910 = vadd.f32 %v656, %v896
  %v911 = vadd.f32 %v661, %v901
  %s912 = scalar_lea.vmem %s7, 384
  %v913 = vld [vmem:[%s912] sm:$0xff]
  %v914 = vld [vmem:[%s912 + $0x8] sm:$0xff]
  %v915 = vld [vmem:[%s912 + $0x10] sm:$0xff]
  %v916 = vld [vmem:[%s912 + $0x18] sm:$0xff]
  %v917 = vld [vmem:[%s912 + $0x20] sm:$0xff]
  %v918 = vld [vmem:[%s912 + $0x28] sm:$0xff]
  %v919 = vld [vmem:[%s912 + $0x30] sm:$0xff]
  %v920 = vld [vmem:[%s912 + $0x38] sm:$0xff]
  %v921 = vld [vmem:[%s912 + $0x40] sm:$0xff]
  %v922 = vld [vmem:[%s912 + $0x48] sm:$0xff]
  %v923 = vld [vmem:[%s912 + $0x50] sm:$0xff]
  %v924 = vld [vmem:[%s912 + $0x58] sm:$0xff]
  %v925 = vld [vmem:[%s912 + $0x60] sm:$0xff]
  %v926 = vld [vmem:[%s912 + $0x68] sm:$0xff]
  %v927 = vld [vmem:[%s912 + $0x70] sm:$0xff]
  %v928 = vld [vmem:[%s912 + $0x78] sm:$0xff]
  %929 = vmatprep.subr.mxu0 0.0
  %930 = vmatpush1.msra.mxu0 %v913
  %931 = vmatprep.subr.mxu0 0.0
  %932 = vmatpush1.msra.mxu0 %v914
  %933 = vmatprep.subr.mxu0 0.0
  %934 = vmatpush1.msra.mxu0 %v915
  %935 = vmatprep.subr.mxu0 0.0
  %936 = vmatpush1.msra.mxu0 %v916
  %937 = vmatprep.subr.mxu0 0.0
  %938 = vmatpush1.msra.mxu0 %v917
  %939 = vmatprep.subr.mxu0 0.0
  %940 = vmatpush1.msra.mxu0 %v918
  %941 = vmatprep.subr.mxu0 0.0
  %942 = vmatpush1.msra.mxu0 %v919
  %943 = vmatprep.subr.mxu0 0.0
  %944 = vmatpush1.msra.mxu0 %v920
  %945 = vmatprep.subr.mxu0 0.0
  %946 = vmatpush1.msra.mxu0 %v921
  %947 = vmatprep.subr.mxu0 0.0
  %948 = vmatpush1.msra.mxu0 %v922
  %949 = vmatprep.subr.mxu0 0.0
  %950 = vmatpush1.msra.mxu0 %v923
  %951 = vmatprep.subr.mxu0 0.0
  %952 = vmatpush1.msra.mxu0 %v924
  %953 = vmatprep.subr.mxu0 0.0
  %954 = vmatpush1.msra.mxu0 %v925
  %955 = vmatprep.subr.mxu0 0.0
  %956 = vmatpush1.msra.mxu0 %v926
  %957 = vmatprep.subr.mxu0 0.0
  %958 = vmatpush1.msra.mxu0 %v927
  %959 = vmatprep.subr.mxu0 0.0
  %960 = vmatpush1.msra.mxu0 %v928
  %961 = vmatprep.subr.mxu0 0.0
  %962 = vmatpush1.msra.mxu0 0.0
  %963 = vmatprep.subr.mxu0 0.0
  %964 = vmatpush1.msra.mxu0 0.0
  %965 = vmatprep.subr.mxu0 0.0
  %966 = vmatpush1.msra.mxu0 0.0
  %967 = vmatprep.subr.mxu0 0.0
  %968 = vmatpush1.msra.mxu0 0.0
  %969 = vmatprep.subr.mxu0 0.0
  %970 = vmatpush1.msra.mxu0 0.0
  %971 = vmatprep.subr.mxu0 0.0
  %972 = vmatpush1.msra.mxu0 0.0
  %973 = vmatprep.subr.mxu0 0.0
  %974 = vmatpush1.msra.mxu0 0.0
  %975 = vmatprep.subr.mxu0 0.0
  %976 = vmatpush1.msra.mxu0 0.0
  %977 = vmatprep.subr.mxu0 0.0
  %978 = vmatpush1.msra.mxu0 0.0
  %979 = vmatprep.subr.mxu0 0.0
  %980 = vmatpush1.msra.mxu0 0.0
  %981 = vmatprep.subr.mxu0 0.0
  %982 = vmatpush1.msra.mxu0 0.0
  %983 = vmatprep.subr.mxu0 0.0
  %984 = vmatpush1.msra.mxu0 0.0
  %985 = vmatprep.subr.mxu0 0.0
  %986 = vmatpush1.msra.mxu0 0.0
  %987 = vmatprep.subr.mxu0 0.0
  %988 = vmatpush1.msra.mxu0 0.0
  %989 = vmatprep.subr.mxu0 0.0
  %990 = vmatpush1.msra.mxu0 0.0
  %991 = vmatprep.subr.mxu0 0.0
  %992 = vmatpush1.msra.mxu0 0.0
  %993 = vmatprep.mubr.f32.mxu0 0.0
  %994 = vmatmul.mubr.f32.gmra.mrb[0].mxu0 %v181
  %v995 = vpop.f32.mrb[0].mxu0
  %v996 = vadd.f32 0.0, %v995
  %v997 = vpop.f32.mrb[0].mxu0
  %998 = vmatprep.mubr.f32.mxu0 0.0
  %999 = vmatmul.mubr.f32.gmra.mrb[0].mxu0 %v182
  %v1000 = vpop.f32.mrb[0].mxu0
  %v1001 = vadd.f32 0.0, %v1000
  %v1002 = vpop.f32.mrb[0].mxu0
  %1003 = vmatprep.mubr.f32.mxu0 0.0
  %1004 = vmatmul.mubr.f32.gmra.mrb[0].mxu0 %v183
  %v1005 = vpop.f32.mrb[0].mxu0
  %v1006 = vadd.f32 0.0, %v1005
  %v1007 = vpop.f32.mrb[0].mxu0
  %1008 = vmatprep.mubr.f32.mxu0 0.0
  %1009 = vmatmul.mubr.f32.gmra.mrb[0].mxu0 %v184
  %v1010 = vpop.f32.mrb[0].mxu0
  %v1011 = vadd.f32 0.0, %v1010
  %v1012 = vpop.f32.mrb[0].mxu0
  %1013 = vdwg.mxu0
  %s1014 = scalar_lea.vmem %s5, 192
  %v1015 = vld [vmem:[%s1014] sm:$0xff]
  %v1016 = vld [vmem:[%s1014 + $0x8] sm:$0xff]
  %v1017 = vld [vmem:[%s1014 + $0x10] sm:$0xff]
  %v1018 = vld [vmem:[%s1014 + $0x18] sm:$0xff]
  %v1019 = vld [vmem:[%s1014 + $0x20] sm:$0xff]
  %v1020 = vld [vmem:[%s1014 + $0x28] sm:$0xff]
  %v1021 = vld [vmem:[%s1014 + $0x30] sm:$0xff]
  %v1022 = vld [vmem:[%s1014 + $0x38] sm:$0xff]
  %v1024 = vsel %vm405, %v1015, 0
  %v1027 = vsel %vm405, %v1016, 0
  %v1030 = vsel %vm405, %v1017, 0
  %v1033 = vsel %vm405, %v1018, 0
  %v1036 = vsel %vm405, %v1019, 0
  %v1039 = vsel %vm405, %v1020, 0
  %v1042 = vsel %vm405, %v1021, 0
  %v1045 = vsel %vm405, %v1022, 0
  %1047 = vmatprep.subr.mxu0 0.0
  %1048 = vmatpush1.msra.mxu0 %v996
  %1049 = vmatprep.subr.mxu0 0.0
  %1050 = vmatpush1.msra.mxu0 %v1001
  %1051 = vmatprep.subr.mxu0 0.0
  %1052 = vmatpush1.msra.mxu0 %v1006
  %1053 = vmatprep.subr.mxu0 0.0
  %1054 = vmatpush1.msra.mxu0 %v1011
  %1055 = vmatprep.subr.mxu0 0.0
  %1056 = vmatpush1.msra.mxu0 0.0
  %1057 = vmatprep.subr.mxu0 0.0
  %1058 = vmatpush1.msra.mxu0 0.0
  %1059 = vmatprep.subr.mxu0 0.0
  %1060 = vmatpush1.msra.mxu0 0.0
  %1061 = vmatprep.subr.mxu0 0.0
  %1062 = vmatpush1.msra.mxu0 0.0
  %1063 = vmatprep.subr.mxu0 0.0
  %1064 = vmatpush1.msra.mxu0 0.0
  %1065 = vmatprep.subr.mxu0 0.0
  %1066 = vmatpush1.msra.mxu0 0.0
  %1067 = vmatprep.subr.mxu0 0.0
  %1068 = vmatpush1.msra.mxu0 0.0
  %1069 = vmatprep.subr.mxu0 0.0
  %1070 = vmatpush1.msra.mxu0 0.0
  %1071 = vmatprep.subr.mxu0 0.0
  %1072 = vmatpush1.msra.mxu0 0.0
  %1073 = vmatprep.subr.mxu0 0.0
  %1074 = vmatpush1.msra.mxu0 0.0
  %1075 = vmatprep.subr.mxu0 0.0
  %1076 = vmatpush1.msra.mxu0 0.0
  %1077 = vmatprep.subr.mxu0 0.0
  %1078 = vmatpush1.msra.mxu0 0.0
  %1079 = vmatprep.subr.mxu0 0.0
  %1080 = vmatpush1.msra.mxu0 0.0
  %1081 = vmatprep.subr.mxu0 0.0
  %1082 = vmatpush1.msra.mxu0 0.0
  %1083 = vmatprep.subr.mxu0 0.0
  %1084 = vmatpush1.msra.mxu0 0.0
  %1085 = vmatprep.subr.mxu0 0.0
  %1086 = vmatpush1.msra.mxu0 0.0
  %1087 = vmatprep.subr.mxu0 0.0
  %1088 = vmatpush1.msra.mxu0 0.0
  %1089 = vmatprep.subr.mxu0 0.0
  %1090 = vmatpush1.msra.mxu0 0.0
  %1091 = vmatprep.subr.mxu0 0.0
  %1092 = vmatpush1.msra.mxu0 0.0
  %1093 = vmatprep.subr.mxu0 0.0
  %1094 = vmatpush1.msra.mxu0 0.0
  %1095 = vmatprep.subr.mxu0 0.0
  %1096 = vmatpush1.msra.mxu0 0.0
  %1097 = vmatprep.subr.mxu0 0.0
  %1098 = vmatpush1.msra.mxu0 0.0
  %1099 = vmatprep.subr.mxu0 0.0
  %1100 = vmatpush1.msra.mxu0 0.0
  %1101 = vmatprep.subr.mxu0 0.0
  %1102 = vmatpush1.msra.mxu0 0.0
  %1103 = vmatprep.subr.mxu0 0.0
  %1104 = vmatpush1.msra.mxu0 0.0
  %1105 = vmatprep.subr.mxu0 0.0
  %1106 = vmatpush1.msra.mxu0 0.0
  %1107 = vmatprep.subr.mxu0 0.0
  %1108 = vmatpush1.msra.mxu0 0.0
  %1109 = vmatprep.subr.mxu0 0.0
  %1110 = vmatpush1.msra.mxu0 0.0
  %1111 = vmatprep.mubr.f32.mxu0 0.0
  %1112 = vmatmul.mubr.f32.gmra.mrb[0].mxu0 %v1024
  %v1113 = vpop.f32.mrb[0].mxu0
  %v1114 = vadd.f32 0.0, %v1113
  %v1115 = vpop.f32.mrb[0].mxu0
  %1116 = vmatprep.mubr.f32.mxu0 0.0
  %1117 = vmatmul.mubr.f32.gmra.mrb[0].mxu0 %v1027
  %v1118 = vpop.f32.mrb[0].mxu0
  %v1119 = vadd.f32 0.0, %v1118
  %v1120 = vpop.f32.mrb[0].mxu0
  %1121 = vmatprep.mubr.f32.mxu0 0.0
  %1122 = vmatmul.mubr.f32.gmra.mrb[0].mxu0 %v1030
  %v1123 = vpop.f32.mrb[0].mxu0
  %v1124 = vadd.f32 0.0, %v1123
  %v1125 = vpop.f32.mrb[0].mxu0
  %1126 = vmatprep.mubr.f32.mxu0 0.0
  %1127 = vmatmul.mubr.f32.gmra.mrb[0].mxu0 %v1033
  %v1128 = vpop.f32.mrb[0].mxu0
  %v1129 = vadd.f32 0.0, %v1128
  %v1130 = vpop.f32.mrb[0].mxu0
  %1131 = vmatprep.mubr.f32.mxu0 0.0
  %1132 = vmatmul.mubr.f32.gmra.mrb[0].mxu0 %v1036
  %v1133 = vpop.f32.mrb[0].mxu0
  %v1134 = vadd.f32 0.0, %v1133
  %v1135 = vpop.f32.mrb[0].mxu0
  %1136 = vmatprep.mubr.f32.mxu0 0.0
  %1137 = vmatmul.mubr.f32.gmra.mrb[0].mxu0 %v1039
  %v1138 = vpop.f32.mrb[0].mxu0
  %v1139 = vadd.f32 0.0, %v1138
  %v1140 = vpop.f32.mrb[0].mxu0
  %1141 = vmatprep.mubr.f32.mxu0 0.0
  %1142 = vmatmul.mubr.f32.gmra.mrb[0].mxu0 %v1042
  %v1143 = vpop.f32.mrb[0].mxu0
  %v1144 = vadd.f32 0.0, %v1143
  %v1145 = vpop.f32.mrb[0].mxu0
  %1146 = vmatprep.mubr.f32.mxu0 0.0
  %1147 = vmatmul.mubr.f32.gmra.mrb[0].mxu0 %v1045
  %v1148 = vpop.f32.mrb[0].mxu0
  %v1149 = vadd.f32 0.0, %v1148
  %v1150 = vpop.f32.mrb[0].mxu0
  %1151 = vdwg.mxu0
  %v1152 = vadd.f32 %v904, %v1114
  %v1153 = vadd.f32 %v905, %v1119
  %v1154 = vadd.f32 %v906, %v1124
  %v1155 = vadd.f32 %v907, %v1129
  %v1156 = vadd.f32 %v908, %v1134
  %v1157 = vadd.f32 %v909, %v1139
  %v1158 = vadd.f32 %v910, %v1144
  %v1159 = vadd.f32 %v911, %v1149
  %s1160 = scalar_lea.vmem %s7, 512
  %v1161 = vld [vmem:[%s1160] sm:$0xff]
  %v1162 = vld [vmem:[%s1160 + $0x8] sm:$0xff]
  %v1163 = vld [vmem:[%s1160 + $0x10] sm:$0xff]
  %v1164 = vld [vmem:[%s1160 + $0x18] sm:$0xff]
  %v1165 = vld [vmem:[%s1160 + $0x20] sm:$0xff]
  %v1166 = vld [vmem:[%s1160 + $0x28] sm:$0xff]
  %v1167 = vld [vmem:[%s1160 + $0x30] sm:$0xff]
  %v1168 = vld [vmem:[%s1160 + $0x38] sm:$0xff]
  %v1169 = vld [vmem:[%s1160 + $0x40] sm:$0xff]
  %v1170 = vld [vmem:[%s1160 + $0x48] sm:$0xff]
  %v1171 = vld [vmem:[%s1160 + $0x50] sm:$0xff]
  %v1172 = vld [vmem:[%s1160 + $0x58] sm:$0xff]
  %v1173 = vld [vmem:[%s1160 + $0x60] sm:$0xff]
  %v1174 = vld [vmem:[%s1160 + $0x68] sm:$0xff]
  %v1175 = vld [vmem:[%s1160 + $0x70] sm:$0xff]
  %v1176 = vld [vmem:[%s1160 + $0x78] sm:$0xff]
  %1177 = vmatprep.subr.mxu0 0.0
  %1178 = vmatpush1.msra.mxu0 %v1161
  %1179 = vmatprep.subr.mxu0 0.0
  %1180 = vmatpush1.msra.mxu0 %v1162
  %1181 = vmatprep.subr.mxu0 0.0
  %1182 = vmatpush1.msra.mxu0 %v1163
  %1183 = vmatprep.subr.mxu0 0.0
  %1184 = vmatpush1.msra.mxu0 %v1164
  %1185 = vmatprep.subr.mxu0 0.0
  %1186 = vmatpush1.msra.mxu0 %v1165
  %1187 = vmatprep.subr.mxu0 0.0
  %1188 = vmatpush1.msra.mxu0 %v1166
  %1189 = vmatprep.subr.mxu0 0.0
  %1190 = vmatpush1.msra.mxu0 %v1167
  %1191 = vmatprep.subr.mxu0 0.0
  %1192 = vmatpush1.msra.mxu0 %v1168
  %1193 = vmatprep.subr.mxu0 0.0
  %1194 = vmatpush1.msra.mxu0 %v1169
  %1195 = vmatprep.subr.mxu0 0.0
  %1196 = vmatpush1.msra.mxu0 %v1170
  %1197 = vmatprep.subr.mxu0 0.0
  %1198 = vmatpush1.msra.mxu0 %v1171
  %1199 = vmatprep.subr.mxu0 0.0
  %1200 = vmatpush1.msra.mxu0 %v1172
  %1201 = vmatprep.subr.mxu0 0.0
  %1202 = vmatpush1.msra.mxu0 %v1173
  %1203 = vmatprep.subr.mxu0 0.0
  %1204 = vmatpush1.msra.mxu0 %v1174
  %1205 = vmatprep.subr.mxu0 0.0
  %1206 = vmatpush1.msra.mxu0 %v1175
  %1207 = vmatprep.subr.mxu0 0.0
  %1208 = vmatpush1.msra.mxu0 %v1176
  %1209 = vmatprep.subr.mxu0 0.0
  %1210 = vmatpush1.msra.mxu0 0.0
  %1211 = vmatprep.subr.mxu0 0.0
  %1212 = vmatpush1.msra.mxu0 0.0
  %1213 = vmatprep.subr.mxu0 0.0
  %1214 = vmatpush1.msra.mxu0 0.0
  %1215 = vmatprep.subr.mxu0 0.0
  %1216 = vmatpush1.msra.mxu0 0.0
  %1217 = vmatprep.subr.mxu0 0.0
  %1218 = vmatpush1.msra.mxu0 0.0
  %1219 = vmatprep.subr.mxu0 0.0
  %1220 = vmatpush1.msra.mxu0 0.0
  %1221 = vmatprep.subr.mxu0 0.0
  %1222 = vmatpush1.msra.mxu0 0.0
  %1223 = vmatprep.subr.mxu0 0.0
  %1224 = vmatpush1.msra.mxu0 0.0
  %1225 = vmatprep.subr.mxu0 0.0
  %1226 = vmatpush1.msra.mxu0 0.0
  %1227 = vmatprep.subr.mxu0 0.0
  %1228 = vmatpush1.msra.mxu0 0.0
  %1229 = vmatprep.subr.mxu0 0.0
  %1230 = vmatpush1.msra.mxu0 0.0
  %1231 = vmatprep.subr.mxu0 0.0
  %1232 = vmatpush1.msra.mxu0 0.0
  %1233 = vmatprep.subr.mxu0 0.0
  %1234 = vmatpush1.msra.mxu0 0.0
  %1235 = vmatprep.subr.mxu0 0.0
  %1236 = vmatpush1.msra.mxu0 0.0
  %1237 = vmatprep.subr.mxu0 0.0
  %1238 = vmatpush1.msra.mxu0 0.0
  %1239 = vmatprep.subr.mxu0 0.0
  %1240 = vmatpush1.msra.mxu0 0.0
  %1241 = vmatprep.mubr.f32.mxu0 0.0
  %1242 = vmatmul.mubr.f32.gmra.mrb[0].mxu0 %v181
  %v1243 = vpop.f32.mrb[0].mxu0
  %v1244 = vadd.f32 0.0, %v1243
  %v1245 = vpop.f32.mrb[0].mxu0
  %1246 = vmatprep.mubr.f32.mxu0 0.0
  %1247 = vmatmul.mubr.f32.gmra.mrb[0].mxu0 %v182
  %v1248 = vpop.f32.mrb[0].mxu0
  %v1249 = vadd.f32 0.0, %v1248
  %v1250 = vpop.f32.mrb[0].mxu0
  %1251 = vmatprep.mubr.f32.mxu0 0.0
  %1252 = vmatmul.mubr.f32.gmra.mrb[0].mxu0 %v183
  %v1253 = vpop.f32.mrb[0].mxu0
  %v1254 = vadd.f32 0.0, %v1253
  %v1255 = vpop.f32.mrb[0].mxu0
  %1256 = vmatprep.mubr.f32.mxu0 0.0
  %1257 = vmatmul.mubr.f32.gmra.mrb[0].mxu0 %v184
  %v1258 = vpop.f32.mrb[0].mxu0
  %v1259 = vadd.f32 0.0, %v1258
  %v1260 = vpop.f32.mrb[0].mxu0
  %1261 = vdwg.mxu0
  %s1262 = scalar_lea.vmem %s5, 256
  %v1263 = vld [vmem:[%s1262] sm:$0xff]
  %v1264 = vld [vmem:[%s1262 + $0x8] sm:$0xff]
  %v1265 = vld [vmem:[%s1262 + $0x10] sm:$0xff]
  %v1266 = vld [vmem:[%s1262 + $0x18] sm:$0xff]
  %v1267 = vld [vmem:[%s1262 + $0x20] sm:$0xff]
  %v1268 = vld [vmem:[%s1262 + $0x28] sm:$0xff]
  %v1269 = vld [vmem:[%s1262 + $0x30] sm:$0xff]
  %v1270 = vld [vmem:[%s1262 + $0x38] sm:$0xff]
  %v1272 = vsel %vm405, %v1263, 0
  %v1275 = vsel %vm405, %v1264, 0
  %v1278 = vsel %vm405, %v1265, 0
  %v1281 = vsel %vm405, %v1266, 0
  %v1284 = vsel %vm405, %v1267, 0
  %v1287 = vsel %vm405, %v1268, 0
  %v1290 = vsel %vm405, %v1269, 0
  %v1293 = vsel %vm405, %v1270, 0
  %1295 = vmatprep.subr.mxu0 0.0
  %1296 = vmatpush1.msra.mxu0 %v1244
  %1297 = vmatprep.subr.mxu0 0.0
  %1298 = vmatpush1.msra.mxu0 %v1249
  %1299 = vmatprep.subr.mxu0 0.0
  %1300 = vmatpush1.msra.mxu0 %v1254
  %1301 = vmatprep.subr.mxu0 0.0
  %1302 = vmatpush1.msra.mxu0 %v1259
  %1303 = vmatprep.subr.mxu0 0.0
  %1304 = vmatpush1.msra.mxu0 0.0
  %1305 = vmatprep.subr.mxu0 0.0
  %1306 = vmatpush1.msra.mxu0 0.0
  %1307 = vmatprep.subr.mxu0 0.0
  %1308 = vmatpush1.msra.mxu0 0.0
  %1309 = vmatprep.subr.mxu0 0.0
  %1310 = vmatpush1.msra.mxu0 0.0
  %1311 = vmatprep.subr.mxu0 0.0
  %1312 = vmatpush1.msra.mxu0 0.0
  %1313 = vmatprep.subr.mxu0 0.0
  %1314 = vmatpush1.msra.mxu0 0.0
  %1315 = vmatprep.subr.mxu0 0.0
  %1316 = vmatpush1.msra.mxu0 0.0
  %1317 = vmatprep.subr.mxu0 0.0
  %1318 = vmatpush1.msra.mxu0 0.0
  %1319 = vmatprep.subr.mxu0 0.0
  %1320 = vmatpush1.msra.mxu0 0.0
  %1321 = vmatprep.subr.mxu0 0.0
  %1322 = vmatpush1.msra.mxu0 0.0
  %1323 = vmatprep.subr.mxu0 0.0
  %1324 = vmatpush1.msra.mxu0 0.0
  %1325 = vmatprep.subr.mxu0 0.0
  %1326 = vmatpush1.msra.mxu0 0.0
  %1327 = vmatprep.subr.mxu0 0.0
  %1328 = vmatpush1.msra.mxu0 0.0
  %1329 = vmatprep.subr.mxu0 0.0
  %1330 = vmatpush1.msra.mxu0 0.0
  %1331 = vmatprep.subr.mxu0 0.0
  %1332 = vmatpush1.msra.mxu0 0.0
  %1333 = vmatprep.subr.mxu0 0.0
  %1334 = vmatpush1.msra.mxu0 0.0
  %1335 = vmatprep.subr.mxu0 0.0
  %1336 = vmatpush1.msra.mxu0 0.0
  %1337 = vmatprep.subr.mxu0 0.0
  %1338 = vmatpush1.msra.mxu0 0.0
  %1339 = vmatprep.subr.mxu0 0.0
  %1340 = vmatpush1.msra.mxu0 0.0
  %1341 = vmatprep.subr.mxu0 0.0
  %1342 = vmatpush1.msra.mxu0 0.0
  %1343 = vmatprep.subr.mxu0 0.0
  %1344 = vmatpush1.msra.mxu0 0.0
  %1345 = vmatprep.subr.mxu0 0.0
  %1346 = vmatpush1.msra.mxu0 0.0
  %1347 = vmatprep.subr.mxu0 0.0
  %1348 = vmatpush1.msra.mxu0 0.0
  %1349 = vmatprep.subr.mxu0 0.0
  %1350 = vmatpush1.msra.mxu0 0.0
  %1351 = vmatprep.subr.mxu0 0.0
  %1352 = vmatpush1.msra.mxu0 0.0
  %1353 = vmatprep.subr.mxu0 0.0
  %1354 = vmatpush1.msra.mxu0 0.0
  %1355 = vmatprep.subr.mxu0 0.0
  %1356 = vmatpush1.msra.mxu0 0.0
  %1357 = vmatprep.subr.mxu0 0.0
  %1358 = vmatpush1.msra.mxu0 0.0
  %1359 = vmatprep.mubr.f32.mxu0 0.0
  %1360 = vmatmul.mubr.f32.gmra.mrb[0].mxu0 %v1272
  %v1361 = vpop.f32.mrb[0].mxu0
  %v1362 = vadd.f32 0.0, %v1361
  %v1363 = vpop.f32.mrb[0].mxu0
  %1364 = vmatprep.mubr.f32.mxu0 0.0
  %1365 = vmatmul.mubr.f32.gmra.mrb[0].mxu0 %v1275
  %v1366 = vpop.f32.mrb[0].mxu0
  %v1367 = vadd.f32 0.0, %v1366
  %v1368 = vpop.f32.mrb[0].mxu0
  %1369 = vmatprep.mubr.f32.mxu0 0.0
  %1370 = vmatmul.mubr.f32.gmra.mrb[0].mxu0 %v1278
  %v1371 = vpop.f32.mrb[0].mxu0
  %v1372 = vadd.f32 0.0, %v1371
  %v1373 = vpop.f32.mrb[0].mxu0
  %1374 = vmatprep.mubr.f32.mxu0 0.0
  %1375 = vmatmul.mubr.f32.gmra.mrb[0].mxu0 %v1281
  %v1376 = vpop.f32.mrb[0].mxu0
  %v1377 = vadd.f32 0.0, %v1376
  %v1378 = vpop.f32.mrb[0].mxu0
  %1379 = vmatprep.mubr.f32.mxu0 0.0
  %1380 = vmatmul.mubr.f32.gmra.mrb[0].mxu0 %v1284
  %v1381 = vpop.f32.mrb[0].mxu0
  %v1382 = vadd.f32 0.0, %v1381
  %v1383 = vpop.f32.mrb[0].mxu0
  %1384 = vmatprep.mubr.f32.mxu0 0.0
  %1385 = vmatmul.mubr.f32.gmra.mrb[0].mxu0 %v1287
  %v1386 = vpop.f32.mrb[0].mxu0
  %v1387 = vadd.f32 0.0, %v1386
  %v1388 = vpop.f32.mrb[0].mxu0
  %1389 = vmatprep.mubr.f32.mxu0 0.0
  %1390 = vmatmul.mubr.f32.gmra.mrb[0].mxu0 %v1290
  %v1391 = vpop.f32.mrb[0].mxu0
  %v1392 = vadd.f32 0.0, %v1391
  %v1393 = vpop.f32.mrb[0].mxu0
  %1394 = vmatprep.mubr.f32.mxu0 0.0
  %1395 = vmatmul.mubr.f32.gmra.mrb[0].mxu0 %v1293
  %v1396 = vpop.f32.mrb[0].mxu0
  %v1397 = vadd.f32 0.0, %v1396
  %v1398 = vpop.f32.mrb[0].mxu0
  %1399 = vdwg.mxu0
  %v1400 = vadd.f32 %v1152, %v1362
  %v1401 = vadd.f32 %v1153, %v1367
  %v1402 = vadd.f32 %v1154, %v1372
  %v1403 = vadd.f32 %v1155, %v1377
  %v1404 = vadd.f32 %v1156, %v1382
  %v1405 = vadd.f32 %v1157, %v1387
  %v1406 = vadd.f32 %v1158, %v1392
  %v1407 = vadd.f32 %v1159, %v1397
  %s1408 = scalar_lea.vmem %s7, 640
  %v1409 = vld [vmem:[%s1408] sm:$0xff]
  %v1410 = vld [vmem:[%s1408 + $0x8] sm:$0xff]
  %v1411 = vld [vmem:[%s1408 + $0x10] sm:$0xff]
  %v1412 = vld [vmem:[%s1408 + $0x18] sm:$0xff]
  %v1413 = vld [vmem:[%s1408 + $0x20] sm:$0xff]
  %v1414 = vld [vmem:[%s1408 + $0x28] sm:$0xff]
  %v1415 = vld [vmem:[%s1408 + $0x30] sm:$0xff]
  %v1416 = vld [vmem:[%s1408 + $0x38] sm:$0xff]
  %v1417 = vld [vmem:[%s1408 + $0x40] sm:$0xff]
  %v1418 = vld [vmem:[%s1408 + $0x48] sm:$0xff]
  %v1419 = vld [vmem:[%s1408 + $0x50] sm:$0xff]
  %v1420 = vld [vmem:[%s1408 + $0x58] sm:$0xff]
  %v1421 = vld [vmem:[%s1408 + $0x60] sm:$0xff]
  %v1422 = vld [vmem:[%s1408 + $0x68] sm:$0xff]
  %v1423 = vld [vmem:[%s1408 + $0x70] sm:$0xff]
  %v1424 = vld [vmem:[%s1408 + $0x78] sm:$0xff]
  %1425 = vmatprep.subr.mxu0 0.0
  %1426 = vmatpush1.msra.mxu0 %v1409
  %1427 = vmatprep.subr.mxu0 0.0
  %1428 = vmatpush1.msra.mxu0 %v1410
  %1429 = vmatprep.subr.mxu0 0.0
  %1430 = vmatpush1.msra.mxu0 %v1411
  %1431 = vmatprep.subr.mxu0 0.0
  %1432 = vmatpush1.msra.mxu0 %v1412
  %1433 = vmatprep.subr.mxu0 0.0
  %1434 = vmatpush1.msra.mxu0 %v1413
  %1435 = vmatprep.subr.mxu0 0.0
  %1436 = vmatpush1.msra.mxu0 %v1414
  %1437 = vmatprep.subr.mxu0 0.0
  %1438 = vmatpush1.msra.mxu0 %v1415
  %1439 = vmatprep.subr.mxu0 0.0
  %1440 = vmatpush1.msra.mxu0 %v1416
  %1441 = vmatprep.subr.mxu0 0.0
  %1442 = vmatpush1.msra.mxu0 %v1417
  %1443 = vmatprep.subr.mxu0 0.0
  %1444 = vmatpush1.msra.mxu0 %v1418
  %1445 = vmatprep.subr.mxu0 0.0
  %1446 = vmatpush1.msra.mxu0 %v1419
  %1447 = vmatprep.subr.mxu0 0.0
  %1448 = vmatpush1.msra.mxu0 %v1420
  %1449 = vmatprep.subr.mxu0 0.0
  %1450 = vmatpush1.msra.mxu0 %v1421
  %1451 = vmatprep.subr.mxu0 0.0
  %1452 = vmatpush1.msra.mxu0 %v1422
  %1453 = vmatprep.subr.mxu0 0.0
  %1454 = vmatpush1.msra.mxu0 %v1423
  %1455 = vmatprep.subr.mxu0 0.0
  %1456 = vmatpush1.msra.mxu0 %v1424
  %1457 = vmatprep.subr.mxu0 0.0
  %1458 = vmatpush1.msra.mxu0 0.0
  %1459 = vmatprep.subr.mxu0 0.0
  %1460 = vmatpush1.msra.mxu0 0.0
  %1461 = vmatprep.subr.mxu0 0.0
  %1462 = vmatpush1.msra.mxu0 0.0
  %1463 = vmatprep.subr.mxu0 0.0
  %1464 = vmatpush1.msra.mxu0 0.0
  %1465 = vmatprep.subr.mxu0 0.0
  %1466 = vmatpush1.msra.mxu0 0.0
  %1467 = vmatprep.subr.mxu0 0.0
  %1468 = vmatpush1.msra.mxu0 0.0
  %1469 = vmatprep.subr.mxu0 0.0
  %1470 = vmatpush1.msra.mxu0 0.0
  %1471 = vmatprep.subr.mxu0 0.0
  %1472 = vmatpush1.msra.mxu0 0.0
  %1473 = vmatprep.subr.mxu0 0.0
  %1474 = vmatpush1.msra.mxu0 0.0
  %1475 = vmatprep.subr.mxu0 0.0
  %1476 = vmatpush1.msra.mxu0 0.0
  %1477 = vmatprep.subr.mxu0 0.0
  %1478 = vmatpush1.msra.mxu0 0.0
  %1479 = vmatprep.subr.mxu0 0.0
  %1480 = vmatpush1.msra.mxu0 0.0
  %1481 = vmatprep.subr.mxu0 0.0
  %1482 = vmatpush1.msra.mxu0 0.0
  %1483 = vmatprep.subr.mxu0 0.0
  %1484 = vmatpush1.msra.mxu0 0.0
  %1485 = vmatprep.subr.mxu0 0.0
  %1486 = vmatpush1.msra.mxu0 0.0
  %1487 = vmatprep.subr.mxu0 0.0
  %1488 = vmatpush1.msra.mxu0 0.0
  %1489 = vmatprep.mubr.f32.mxu0 0.0
  %1490 = vmatmul.mubr.f32.gmra.mrb[0].mxu0 %v181
  %v1491 = vpop.f32.mrb[0].mxu0
  %v1492 = vadd.f32 0.0, %v1491
  %v1493 = vpop.f32.mrb[0].mxu0
  %1494 = vmatprep.mubr.f32.mxu0 0.0
  %1495 = vmatmul.mubr.f32.gmra.mrb[0].mxu0 %v182
  %v1496 = vpop.f32.mrb[0].mxu0
  %v1497 = vadd.f32 0.0, %v1496
  %v1498 = vpop.f32.mrb[0].mxu0
  %1499 = vmatprep.mubr.f32.mxu0 0.0
  %1500 = vmatmul.mubr.f32.gmra.mrb[0].mxu0 %v183
  %v1501 = vpop.f32.mrb[0].mxu0
  %v1502 = vadd.f32 0.0, %v1501
  %v1503 = vpop.f32.mrb[0].mxu0
  %1504 = vmatprep.mubr.f32.mxu0 0.0
  %1505 = vmatmul.mubr.f32.gmra.mrb[0].mxu0 %v184
  %v1506 = vpop.f32.mrb[0].mxu0
  %v1507 = vadd.f32 0.0, %v1506
  %v1508 = vpop.f32.mrb[0].mxu0
  %1509 = vdwg.mxu0
  %s1510 = scalar_lea.vmem %s5, 320
  %v1511 = vld [vmem:[%s1510] sm:$0xff]
  %v1512 = vld [vmem:[%s1510 + $0x8] sm:$0xff]
  %v1513 = vld [vmem:[%s1510 + $0x10] sm:$0xff]
  %v1514 = vld [vmem:[%s1510 + $0x18] sm:$0xff]
  %v1515 = vld [vmem:[%s1510 + $0x20] sm:$0xff]
  %v1516 = vld [vmem:[%s1510 + $0x28] sm:$0xff]
  %v1517 = vld [vmem:[%s1510 + $0x30] sm:$0xff]
  %v1518 = vld [vmem:[%s1510 + $0x38] sm:$0xff]
  %v1520 = vsel %vm405, %v1511, 0
  %v1523 = vsel %vm405, %v1512, 0
  %v1526 = vsel %vm405, %v1513, 0
  %v1529 = vsel %vm405, %v1514, 0
  %v1532 = vsel %vm405, %v1515, 0
  %v1535 = vsel %vm405, %v1516, 0
  %v1538 = vsel %vm405, %v1517, 0
  %v1541 = vsel %vm405, %v1518, 0
  %1543 = vmatprep.subr.mxu0 0.0
  %1544 = vmatpush1.msra.mxu0 %v1492
  %1545 = vmatprep.subr.mxu0 0.0
  %1546 = vmatpush1.msra.mxu0 %v1497
  %1547 = vmatprep.subr.mxu0 0.0
  %1548 = vmatpush1.msra.mxu0 %v1502
  %1549 = vmatprep.subr.mxu0 0.0
  %1550 = vmatpush1.msra.mxu0 %v1507
  %1551 = vmatprep.subr.mxu0 0.0
  %1552 = vmatpush1.msra.mxu0 0.0
  %1553 = vmatprep.subr.mxu0 0.0
  %1554 = vmatpush1.msra.mxu0 0.0
  %1555 = vmatprep.subr.mxu0 0.0
  %1556 = vmatpush1.msra.mxu0 0.0
  %1557 = vmatprep.subr.mxu0 0.0
  %1558 = vmatpush1.msra.mxu0 0.0
  %1559 = vmatprep.subr.mxu0 0.0
  %1560 = vmatpush1.msra.mxu0 0.0
  %1561 = vmatprep.subr.mxu0 0.0
  %1562 = vmatpush1.msra.mxu0 0.0
  %1563 = vmatprep.subr.mxu0 0.0
  %1564 = vmatpush1.msra.mxu0 0.0
  %1565 = vmatprep.subr.mxu0 0.0
  %1566 = vmatpush1.msra.mxu0 0.0
  %1567 = vmatprep.subr.mxu0 0.0
  %1568 = vmatpush1.msra.mxu0 0.0
  %1569 = vmatprep.subr.mxu0 0.0
  %1570 = vmatpush1.msra.mxu0 0.0
  %1571 = vmatprep.subr.mxu0 0.0
  %1572 = vmatpush1.msra.mxu0 0.0
  %1573 = vmatprep.subr.mxu0 0.0
  %1574 = vmatpush1.msra.mxu0 0.0
  %1575 = vmatprep.subr.mxu0 0.0
  %1576 = vmatpush1.msra.mxu0 0.0
  %1577 = vmatprep.subr.mxu0 0.0
  %1578 = vmatpush1.msra.mxu0 0.0
  %1579 = vmatprep.subr.mxu0 0.0
  %1580 = vmatpush1.msra.mxu0 0.0
  %1581 = vmatprep.subr.mxu0 0.0
  %1582 = vmatpush1.msra.mxu0 0.0
  %1583 = vmatprep.subr.mxu0 0.0
  %1584 = vmatpush1.msra.mxu0 0.0
  %1585 = vmatprep.subr.mxu0 0.0
  %1586 = vmatpush1.msra.mxu0 0.0
  %1587 = vmatprep.subr.mxu0 0.0
  %1588 = vmatpush1.msra.mxu0 0.0
  %1589 = vmatprep.subr.mxu0 0.0
  %1590 = vmatpush1.msra.mxu0 0.0
  %1591 = vmatprep.subr.mxu0 0.0
  %1592 = vmatpush1.msra.mxu0 0.0
  %1593 = vmatprep.subr.mxu0 0.0
  %1594 = vmatpush1.msra.mxu0 0.0
  %1595 = vmatprep.subr.mxu0 0.0
  %1596 = vmatpush1.msra.mxu0 0.0
  %1597 = vmatprep.subr.mxu0 0.0
  %1598 = vmatpush1.msra.mxu0 0.0
  %1599 = vmatprep.subr.mxu0 0.0
  %1600 = vmatpush1.msra.mxu0 0.0
  %1601 = vmatprep.subr.mxu0 0.0
  %1602 = vmatpush1.msra.mxu0 0.0
  %1603 = vmatprep.subr.mxu0 0.0
  %1604 = vmatpush1.msra.mxu0 0.0
  %1605 = vmatprep.subr.mxu0 0.0
  %1606 = vmatpush1.msra.mxu0 0.0
  %1607 = vmatprep.mubr.f32.mxu0 0.0
  %1608 = vmatmul.mubr.f32.gmra.mrb[0].mxu0 %v1520
  %v1609 = vpop.f32.mrb[0].mxu0
  %v1610 = vadd.f32 0.0, %v1609
  %v1611 = vpop.f32.mrb[0].mxu0
  %1612 = vmatprep.mubr.f32.mxu0 0.0
  %1613 = vmatmul.mubr.f32.gmra.mrb[0].mxu0 %v1523
  %v1614 = vpop.f32.mrb[0].mxu0
  %v1615 = vadd.f32 0.0, %v1614
  %v1616 = vpop.f32.mrb[0].mxu0
  %1617 = vmatprep.mubr.f32.mxu0 0.0
  %1618 = vmatmul.mubr.f32.gmra.mrb[0].mxu0 %v1526
  %v1619 = vpop.f32.mrb[0].mxu0
  %v1620 = vadd.f32 0.0, %v1619
  %v1621 = vpop.f32.mrb[0].mxu0
  %1622 = vmatprep.mubr.f32.mxu0 0.0
  %1623 = vmatmul.mubr.f32.gmra.mrb[0].mxu0 %v1529
  %v1624 = vpop.f32.mrb[0].mxu0
  %v1625 = vadd.f32 0.0, %v1624
  %v1626 = vpop.f32.mrb[0].mxu0
  %1627 = vmatprep.mubr.f32.mxu0 0.0
  %1628 = vmatmul.mubr.f32.gmra.mrb[0].mxu0 %v1532
  %v1629 = vpop.f32.mrb[0].mxu0
  %v1630 = vadd.f32 0.0, %v1629
  %v1631 = vpop.f32.mrb[0].mxu0
  %1632 = vmatprep.mubr.f32.mxu0 0.0
  %1633 = vmatmul.mubr.f32.gmra.mrb[0].mxu0 %v1535
  %v1634 = vpop.f32.mrb[0].mxu0
  %v1635 = vadd.f32 0.0, %v1634
  %v1636 = vpop.f32.mrb[0].mxu0
  %1637 = vmatprep.mubr.f32.mxu0 0.0
  %1638 = vmatmul.mubr.f32.gmra.mrb[0].mxu0 %v1538
  %v1639 = vpop.f32.mrb[0].mxu0
  %v1640 = vadd.f32 0.0, %v1639
  %v1641 = vpop.f32.mrb[0].mxu0
  %1642 = vmatprep.mubr.f32.mxu0 0.0
  %1643 = vmatmul.mubr.f32.gmra.mrb[0].mxu0 %v1541
  %v1644 = vpop.f32.mrb[0].mxu0
  %v1645 = vadd.f32 0.0, %v1644
  %v1646 = vpop.f32.mrb[0].mxu0
  %1647 = vdwg.mxu0
  %v1648 = vadd.f32 %v1400, %v1610
  %v1649 = vadd.f32 %v1401, %v1615
  %v1650 = vadd.f32 %v1402, %v1620
  %v1651 = vadd.f32 %v1403, %v1625
  %v1652 = vadd.f32 %v1404, %v1630
  %v1653 = vadd.f32 %v1405, %v1635
  %v1654 = vadd.f32 %v1406, %v1640
  %v1655 = vadd.f32 %v1407, %v1645
  %s1656 = scalar_lea.vmem %s7, 768
  %v1657 = vld [vmem:[%s1656] sm:$0xff]
  %v1658 = vld [vmem:[%s1656 + $0x8] sm:$0xff]
  %v1659 = vld [vmem:[%s1656 + $0x10] sm:$0xff]
  %v1660 = vld [vmem:[%s1656 + $0x18] sm:$0xff]
  %v1661 = vld [vmem:[%s1656 + $0x20] sm:$0xff]
  %v1662 = vld [vmem:[%s1656 + $0x28] sm:$0xff]
  %v1663 = vld [vmem:[%s1656 + $0x30] sm:$0xff]
  %v1664 = vld [vmem:[%s1656 + $0x38] sm:$0xff]
  %v1665 = vld [vmem:[%s1656 + $0x40] sm:$0xff]
  %v1666 = vld [vmem:[%s1656 + $0x48] sm:$0xff]
  %v1667 = vld [vmem:[%s1656 + $0x50] sm:$0xff]
  %v1668 = vld [vmem:[%s1656 + $0x58] sm:$0xff]
  %v1669 = vld [vmem:[%s1656 + $0x60] sm:$0xff]
  %v1670 = vld [vmem:[%s1656 + $0x68] sm:$0xff]
  %v1671 = vld [vmem:[%s1656 + $0x70] sm:$0xff]
  %v1672 = vld [vmem:[%s1656 + $0x78] sm:$0xff]
  %1673 = vmatprep.subr.mxu0 0.0
  %1674 = vmatpush1.msra.mxu0 %v1657
  %1675 = vmatprep.subr.mxu0 0.0
  %1676 = vmatpush1.msra.mxu0 %v1658
  %1677 = vmatprep.subr.mxu0 0.0
  %1678 = vmatpush1.msra.mxu0 %v1659
  %1679 = vmatprep.subr.mxu0 0.0
  %1680 = vmatpush1.msra.mxu0 %v1660
  %1681 = vmatprep.subr.mxu0 0.0
  %1682 = vmatpush1.msra.mxu0 %v1661
  %1683 = vmatprep.subr.mxu0 0.0
  %1684 = vmatpush1.msra.mxu0 %v1662
  %1685 = vmatprep.subr.mxu0 0.0
  %1686 = vmatpush1.msra.mxu0 %v1663
  %1687 = vmatprep.subr.mxu0 0.0
  %1688 = vmatpush1.msra.mxu0 %v1664
  %1689 = vmatprep.subr.mxu0 0.0
  %1690 = vmatpush1.msra.mxu0 %v1665
  %1691 = vmatprep.subr.mxu0 0.0
  %1692 = vmatpush1.msra.mxu0 %v1666
  %1693 = vmatprep.subr.mxu0 0.0
  %1694 = vmatpush1.msra.mxu0 %v1667
  %1695 = vmatprep.subr.mxu0 0.0
  %1696 = vmatpush1.msra.mxu0 %v1668
  %1697 = vmatprep.subr.mxu0 0.0
  %1698 = vmatpush1.msra.mxu0 %v1669
  %1699 = vmatprep.subr.mxu0 0.0
  %1700 = vmatpush1.msra.mxu0 %v1670
  %1701 = vmatprep.subr.mxu0 0.0
  %1702 = vmatpush1.msra.mxu0 %v1671
  %1703 = vmatprep.subr.mxu0 0.0
  %1704 = vmatpush1.msra.mxu0 %v1672
  %1705 = vmatprep.subr.mxu0 0.0
  %1706 = vmatpush1.msra.mxu0 0.0
  %1707 = vmatprep.subr.mxu0 0.0
  %1708 = vmatpush1.msra.mxu0 0.0
  %1709 = vmatprep.subr.mxu0 0.0
  %1710 = vmatpush1.msra.mxu0 0.0
  %1711 = vmatprep.subr.mxu0 0.0
  %1712 = vmatpush1.msra.mxu0 0.0
  %1713 = vmatprep.subr.mxu0 0.0
  %1714 = vmatpush1.msra.mxu0 0.0
  %1715 = vmatprep.subr.mxu0 0.0
  %1716 = vmatpush1.msra.mxu0 0.0
  %1717 = vmatprep.subr.mxu0 0.0
  %1718 = vmatpush1.msra.mxu0 0.0
  %1719 = vmatprep.subr.mxu0 0.0
  %1720 = vmatpush1.msra.mxu0 0.0
  %1721 = vmatprep.subr.mxu0 0.0
  %1722 = vmatpush1.msra.mxu0 0.0
  %1723 = vmatprep.subr.mxu0 0.0
  %1724 = vmatpush1.msra.mxu0 0.0
  %1725 = vmatprep.subr.mxu0 0.0
  %1726 = vmatpush1.msra.mxu0 0.0
  %1727 = vmatprep.subr.mxu0 0.0
  %1728 = vmatpush1.msra.mxu0 0.0
  %1729 = vmatprep.subr.mxu0 0.0
  %1730 = vmatpush1.msra.mxu0 0.0
  %1731 = vmatprep.subr.mxu0 0.0
  %1732 = vmatpush1.msra.mxu0 0.0
  %1733 = vmatprep.subr.mxu0 0.0
  %1734 = vmatpush1.msra.mxu0 0.0
  %1735 = vmatprep.subr.mxu0 0.0
  %1736 = vmatpush1.msra.mxu0 0.0
  %1737 = vmatprep.mubr.f32.mxu0 0.0
  %1738 = vmatmul.mubr.f32.gmra.mrb[0].mxu0 %v181
  %v1739 = vpop.f32.mrb[0].mxu0
  %v1740 = vadd.f32 0.0, %v1739
  %v1741 = vpop.f32.mrb[0].mxu0
  %1742 = vmatprep.mubr.f32.mxu0 0.0
  %1743 = vmatmul.mubr.f32.gmra.mrb[0].mxu0 %v182
  %v1744 = vpop.f32.mrb[0].mxu0
  %v1745 = vadd.f32 0.0, %v1744
  %v1746 = vpop.f32.mrb[0].mxu0
  %1747 = vmatprep.mubr.f32.mxu0 0.0
  %1748 = vmatmul.mubr.f32.gmra.mrb[0].mxu0 %v183
  %v1749 = vpop.f32.mrb[0].mxu0
  %v1750 = vadd.f32 0.0, %v1749
  %v1751 = vpop.f32.mrb[0].mxu0
  %1752 = vmatprep.mubr.f32.mxu0 0.0
  %1753 = vmatmul.mubr.f32.gmra.mrb[0].mxu0 %v184
  %v1754 = vpop.f32.mrb[0].mxu0
  %v1755 = vadd.f32 0.0, %v1754
  %v1756 = vpop.f32.mrb[0].mxu0
  %1757 = vdwg.mxu0
  %s1758 = scalar_lea.vmem %s5, 384
  %v1759 = vld [vmem:[%s1758] sm:$0xff]
  %v1760 = vld [vmem:[%s1758 + $0x8] sm:$0xff]
  %v1761 = vld [vmem:[%s1758 + $0x10] sm:$0xff]
  %v1762 = vld [vmem:[%s1758 + $0x18] sm:$0xff]
  %v1763 = vld [vmem:[%s1758 + $0x20] sm:$0xff]
  %v1764 = vld [vmem:[%s1758 + $0x28] sm:$0xff]
  %v1765 = vld [vmem:[%s1758 + $0x30] sm:$0xff]
  %v1766 = vld [vmem:[%s1758 + $0x38] sm:$0xff]
  %v1768 = vsel %vm405, %v1759, 0
  %v1771 = vsel %vm405, %v1760, 0
  %v1774 = vsel %vm405, %v1761, 0
  %v1777 = vsel %vm405, %v1762, 0
  %v1780 = vsel %vm405, %v1763, 0
  %v1783 = vsel %vm405, %v1764, 0
  %v1786 = vsel %vm405, %v1765, 0
  %v1789 = vsel %vm405, %v1766, 0
  %1791 = vmatprep.subr.mxu0 0.0
  %1792 = vmatpush1.msra.mxu0 %v1740
  %1793 = vmatprep.subr.mxu0 0.0
  %1794 = vmatpush1.msra.mxu0 %v1745
  %1795 = vmatprep.subr.mxu0 0.0
  %1796 = vmatpush1.msra.mxu0 %v1750
  %1797 = vmatprep.subr.mxu0 0.0
  %1798 = vmatpush1.msra.mxu0 %v1755
  %1799 = vmatprep.subr.mxu0 0.0
  %1800 = vmatpush1.msra.mxu0 0.0
  %1801 = vmatprep.subr.mxu0 0.0
  %1802 = vmatpush1.msra.mxu0 0.0
  %1803 = vmatprep.subr.mxu0 0.0
  %1804 = vmatpush1.msra.mxu0 0.0
  %1805 = vmatprep.subr.mxu0 0.0
  %1806 = vmatpush1.msra.mxu0 0.0
  %1807 = vmatprep.subr.mxu0 0.0
  %1808 = vmatpush1.msra.mxu0 0.0
  %1809 = vmatprep.subr.mxu0 0.0
  %1810 = vmatpush1.msra.mxu0 0.0
  %1811 = vmatprep.subr.mxu0 0.0
  %1812 = vmatpush1.msra.mxu0 0.0
  %1813 = vmatprep.subr.mxu0 0.0
  %1814 = vmatpush1.msra.mxu0 0.0
  %1815 = vmatprep.subr.mxu0 0.0
  %1816 = vmatpush1.msra.mxu0 0.0
  %1817 = vmatprep.subr.mxu0 0.0
  %1818 = vmatpush1.msra.mxu0 0.0
  %1819 = vmatprep.subr.mxu0 0.0
  %1820 = vmatpush1.msra.mxu0 0.0
  %1821 = vmatprep.subr.mxu0 0.0
  %1822 = vmatpush1.msra.mxu0 0.0
  %1823 = vmatprep.subr.mxu0 0.0
  %1824 = vmatpush1.msra.mxu0 0.0
  %1825 = vmatprep.subr.mxu0 0.0
  %1826 = vmatpush1.msra.mxu0 0.0
  %1827 = vmatprep.subr.mxu0 0.0
  %1828 = vmatpush1.msra.mxu0 0.0
  %1829 = vmatprep.subr.mxu0 0.0
  %1830 = vmatpush1.msra.mxu0 0.0
  %1831 = vmatprep.subr.mxu0 0.0
  %1832 = vmatpush1.msra.mxu0 0.0
  %1833 = vmatprep.subr.mxu0 0.0
  %1834 = vmatpush1.msra.mxu0 0.0
  %1835 = vmatprep.subr.mxu0 0.0
  %1836 = vmatpush1.msra.mxu0 0.0
  %1837 = vmatprep.subr.mxu0 0.0
  %1838 = vmatpush1.msra.mxu0 0.0
  %1839 = vmatprep.subr.mxu0 0.0
  %1840 = vmatpush1.msra.mxu0 0.0
  %1841 = vmatprep.subr.mxu0 0.0
  %1842 = vmatpush1.msra.mxu0 0.0
  %1843 = vmatprep.subr.mxu0 0.0
  %1844 = vmatpush1.msra.mxu0 0.0
  %1845 = vmatprep.subr.mxu0 0.0
  %1846 = vmatpush1.msra.mxu0 0.0
  %1847 = vmatprep.subr.mxu0 0.0
  %1848 = vmatpush1.msra.mxu0 0.0
  %1849 = vmatprep.subr.mxu0 0.0
  %1850 = vmatpush1.msra.mxu0 0.0
  %1851 = vmatprep.subr.mxu0 0.0
  %1852 = vmatpush1.msra.mxu0 0.0
  %1853 = vmatprep.subr.mxu0 0.0
  %1854 = vmatpush1.msra.mxu0 0.0
  %1855 = vmatprep.mubr.f32.mxu0 0.0
  %1856 = vmatmul.mubr.f32.gmra.mrb[0].mxu0 %v1768
  %v1857 = vpop.f32.mrb[0].mxu0
  %v1858 = vadd.f32 0.0, %v1857
  %v1859 = vpop.f32.mrb[0].mxu0
  %1860 = vmatprep.mubr.f32.mxu0 0.0
  %1861 = vmatmul.mubr.f32.gmra.mrb[0].mxu0 %v1771
  %v1862 = vpop.f32.mrb[0].mxu0
  %v1863 = vadd.f32 0.0, %v1862
  %v1864 = vpop.f32.mrb[0].mxu0
  %1865 = vmatprep.mubr.f32.mxu0 0.0
  %1866 = vmatmul.mubr.f32.gmra.mrb[0].mxu0 %v1774
  %v1867 = vpop.f32.mrb[0].mxu0
  %v1868 = vadd.f32 0.0, %v1867
  %v1869 = vpop.f32.mrb[0].mxu0
  %1870 = vmatprep.mubr.f32.mxu0 0.0
  %1871 = vmatmul.mubr.f32.gmra.mrb[0].mxu0 %v1777
  %v1872 = vpop.f32.mrb[0].mxu0
  %v1873 = vadd.f32 0.0, %v1872
  %v1874 = vpop.f32.mrb[0].mxu0
  %1875 = vmatprep.mubr.f32.mxu0 0.0
  %1876 = vmatmul.mubr.f32.gmra.mrb[0].mxu0 %v1780
  %v1877 = vpop.f32.mrb[0].mxu0
  %v1878 = vadd.f32 0.0, %v1877
  %v1879 = vpop.f32.mrb[0].mxu0
  %1880 = vmatprep.mubr.f32.mxu0 0.0
  %1881 = vmatmul.mubr.f32.gmra.mrb[0].mxu0 %v1783
  %v1882 = vpop.f32.mrb[0].mxu0
  %v1883 = vadd.f32 0.0, %v1882
  %v1884 = vpop.f32.mrb[0].mxu0
  %1885 = vmatprep.mubr.f32.mxu0 0.0
  %1886 = vmatmul.mubr.f32.gmra.mrb[0].mxu0 %v1786
  %v1887 = vpop.f32.mrb[0].mxu0
  %v1888 = vadd.f32 0.0, %v1887
  %v1889 = vpop.f32.mrb[0].mxu0
  %1890 = vmatprep.mubr.f32.mxu0 0.0
  %1891 = vmatmul.mubr.f32.gmra.mrb[0].mxu0 %v1789
  %v1892 = vpop.f32.mrb[0].mxu0
  %v1893 = vadd.f32 0.0, %v1892
  %v1894 = vpop.f32.mrb[0].mxu0
  %1895 = vdwg.mxu0
  %v1896 = vadd.f32 %v1648, %v1858
  %v1897 = vadd.f32 %v1649, %v1863
  %v1898 = vadd.f32 %v1650, %v1868
  %v1899 = vadd.f32 %v1651, %v1873
  %v1900 = vadd.f32 %v1652, %v1878
  %v1901 = vadd.f32 %v1653, %v1883
  %v1902 = vadd.f32 %v1654, %v1888
  %v1903 = vadd.f32 %v1655, %v1893
  %s1904 = scalar_lea.vmem %s7, 896
  %v1905 = vld [vmem:[%s1904] sm:$0xff]
  %v1906 = vld [vmem:[%s1904 + $0x8] sm:$0xff]
  %v1907 = vld [vmem:[%s1904 + $0x10] sm:$0xff]
  %v1908 = vld [vmem:[%s1904 + $0x18] sm:$0xff]
  %v1909 = vld [vmem:[%s1904 + $0x20] sm:$0xff]
  %v1910 = vld [vmem:[%s1904 + $0x28] sm:$0xff]
  %v1911 = vld [vmem:[%s1904 + $0x30] sm:$0xff]
  %v1912 = vld [vmem:[%s1904 + $0x38] sm:$0xff]
  %v1913 = vld [vmem:[%s1904 + $0x40] sm:$0xff]
  %v1914 = vld [vmem:[%s1904 + $0x48] sm:$0xff]
  %v1915 = vld [vmem:[%s1904 + $0x50] sm:$0xff]
  %v1916 = vld [vmem:[%s1904 + $0x58] sm:$0xff]
  %v1917 = vld [vmem:[%s1904 + $0x60] sm:$0xff]
  %v1918 = vld [vmem:[%s1904 + $0x68] sm:$0xff]
  %v1919 = vld [vmem:[%s1904 + $0x70] sm:$0xff]
  %v1920 = vld [vmem:[%s1904 + $0x78] sm:$0xff]
  %1921 = vmatprep.subr.mxu0 0.0
  %1922 = vmatpush1.msra.mxu0 %v1905
  %1923 = vmatprep.subr.mxu0 0.0
  %1924 = vmatpush1.msra.mxu0 %v1906
  %1925 = vmatprep.subr.mxu0 0.0
  %1926 = vmatpush1.msra.mxu0 %v1907
  %1927 = vmatprep.subr.mxu0 0.0
  %1928 = vmatpush1.msra.mxu0 %v1908
  %1929 = vmatprep.subr.mxu0 0.0
  %1930 = vmatpush1.msra.mxu0 %v1909
  %1931 = vmatprep.subr.mxu0 0.0
  %1932 = vmatpush1.msra.mxu0 %v1910
  %1933 = vmatprep.subr.mxu0 0.0
  %1934 = vmatpush1.msra.mxu0 %v1911
  %1935 = vmatprep.subr.mxu0 0.0
  %1936 = vmatpush1.msra.mxu0 %v1912
  %1937 = vmatprep.subr.mxu0 0.0
  %1938 = vmatpush1.msra.mxu0 %v1913
  %1939 = vmatprep.subr.mxu0 0.0
  %1940 = vmatpush1.msra.mxu0 %v1914
  %1941 = vmatprep.subr.mxu0 0.0
  %1942 = vmatpush1.msra.mxu0 %v1915
  %1943 = vmatprep.subr.mxu0 0.0
  %1944 = vmatpush1.msra.mxu0 %v1916
  %1945 = vmatprep.subr.mxu0 0.0
  %1946 = vmatpush1.msra.mxu0 %v1917
  %1947 = vmatprep.subr.mxu0 0.0
  %1948 = vmatpush1.msra.mxu0 %v1918
  %1949 = vmatprep.subr.mxu0 0.0
  %1950 = vmatpush1.msra.mxu0 %v1919
  %1951 = vmatprep.subr.mxu0 0.0
  %1952 = vmatpush1.msra.mxu0 %v1920
  %1953 = vmatprep.subr.mxu0 0.0
  %1954 = vmatpush1.msra.mxu0 0.0
  %1955 = vmatprep.subr.mxu0 0.0
  %1956 = vmatpush1.msra.mxu0 0.0
  %1957 = vmatprep.subr.mxu0 0.0
  %1958 = vmatpush1.msra.mxu0 0.0
  %1959 = vmatprep.subr.mxu0 0.0
  %1960 = vmatpush1.msra.mxu0 0.0
  %1961 = vmatprep.subr.mxu0 0.0
  %1962 = vmatpush1.msra.mxu0 0.0
  %1963 = vmatprep.subr.mxu0 0.0
  %1964 = vmatpush1.msra.mxu0 0.0
  %1965 = vmatprep.subr.mxu0 0.0
  %1966 = vmatpush1.msra.mxu0 0.0
  %1967 = vmatprep.subr.mxu0 0.0
  %1968 = vmatpush1.msra.mxu0 0.0
  %1969 = vmatprep.subr.mxu0 0.0
  %1970 = vmatpush1.msra.mxu0 0.0
  %1971 = vmatprep.subr.mxu0 0.0
  %1972 = vmatpush1.msra.mxu0 0.0
  %1973 = vmatprep.subr.mxu0 0.0
  %1974 = vmatpush1.msra.mxu0 0.0
  %1975 = vmatprep.subr.mxu0 0.0
  %1976 = vmatpush1.msra.mxu0 0.0
  %1977 = vmatprep.subr.mxu0 0.0
  %1978 = vmatpush1.msra.mxu0 0.0
  %1979 = vmatprep.subr.mxu0 0.0
  %1980 = vmatpush1.msra.mxu0 0.0
  %1981 = vmatprep.subr.mxu0 0.0
  %1982 = vmatpush1.msra.mxu0 0.0
  %1983 = vmatprep.subr.mxu0 0.0
  %1984 = vmatpush1.msra.mxu0 0.0
  %1985 = vmatprep.mubr.f32.mxu0 0.0
  %1986 = vmatmul.mubr.f32.gmra.mrb[0].mxu0 %v181
  %v1987 = vpop.f32.mrb[0].mxu0
  %v1988 = vadd.f32 0.0, %v1987
  %v1989 = vpop.f32.mrb[0].mxu0
  %1990 = vmatprep.mubr.f32.mxu0 0.0
  %1991 = vmatmul.mubr.f32.gmra.mrb[0].mxu0 %v182
  %v1992 = vpop.f32.mrb[0].mxu0
  %v1993 = vadd.f32 0.0, %v1992
  %v1994 = vpop.f32.mrb[0].mxu0
  %1995 = vmatprep.mubr.f32.mxu0 0.0
  %1996 = vmatmul.mubr.f32.gmra.mrb[0].mxu0 %v183
  %v1997 = vpop.f32.mrb[0].mxu0
  %v1998 = vadd.f32 0.0, %v1997
  %v1999 = vpop.f32.mrb[0].mxu0
  %2000 = vmatprep.mubr.f32.mxu0 0.0
  %2001 = vmatmul.mubr.f32.gmra.mrb[0].mxu0 %v184
  %v2002 = vpop.f32.mrb[0].mxu0
  %v2003 = vadd.f32 0.0, %v2002
  %v2004 = vpop.f32.mrb[0].mxu0
  %2005 = vdwg.mxu0
  %s2006 = scalar_lea.vmem %s5, 448
  %v2007 = vld [vmem:[%s2006] sm:$0xff]
  %v2008 = vld [vmem:[%s2006 + $0x8] sm:$0xff]
  %v2009 = vld [vmem:[%s2006 + $0x10] sm:$0xff]
  %v2010 = vld [vmem:[%s2006 + $0x18] sm:$0xff]
  %v2011 = vld [vmem:[%s2006 + $0x20] sm:$0xff]
  %v2012 = vld [vmem:[%s2006 + $0x28] sm:$0xff]
  %v2013 = vld [vmem:[%s2006 + $0x30] sm:$0xff]
  %v2014 = vld [vmem:[%s2006 + $0x38] sm:$0xff]
  %v2016 = vsel %vm405, %v2007, 0
  %v2019 = vsel %vm405, %v2008, 0
  %v2022 = vsel %vm405, %v2009, 0
  %v2025 = vsel %vm405, %v2010, 0
  %v2028 = vsel %vm405, %v2011, 0
  %v2031 = vsel %vm405, %v2012, 0
  %v2034 = vsel %vm405, %v2013, 0
  %v2037 = vsel %vm405, %v2014, 0
  %2039 = vmatprep.subr.mxu0 0.0
  %2040 = vmatpush1.msra.mxu0 %v1988
  %2041 = vmatprep.subr.mxu0 0.0
  %2042 = vmatpush1.msra.mxu0 %v1993
  %2043 = vmatprep.subr.mxu0 0.0
  %2044 = vmatpush1.msra.mxu0 %v1998
  %2045 = vmatprep.subr.mxu0 0.0
  %2046 = vmatpush1.msra.mxu0 %v2003
  %2047 = vmatprep.subr.mxu0 0.0
  %2048 = vmatpush1.msra.mxu0 0.0
  %2049 = vmatprep.subr.mxu0 0.0
  %2050 = vmatpush1.msra.mxu0 0.0
  %2051 = vmatprep.subr.mxu0 0.0
  %2052 = vmatpush1.msra.mxu0 0.0
  %2053 = vmatprep.subr.mxu0 0.0
  %2054 = vmatpush1.msra.mxu0 0.0
  %2055 = vmatprep.subr.mxu0 0.0
  %2056 = vmatpush1.msra.mxu0 0.0
  %2057 = vmatprep.subr.mxu0 0.0
  %2058 = vmatpush1.msra.mxu0 0.0
  %2059 = vmatprep.subr.mxu0 0.0
  %2060 = vmatpush1.msra.mxu0 0.0
  %2061 = vmatprep.subr.mxu0 0.0
  %2062 = vmatpush1.msra.mxu0 0.0
  %2063 = vmatprep.subr.mxu0 0.0
  %2064 = vmatpush1.msra.mxu0 0.0
  %2065 = vmatprep.subr.mxu0 0.0
  %2066 = vmatpush1.msra.mxu0 0.0
  %2067 = vmatprep.subr.mxu0 0.0
  %2068 = vmatpush1.msra.mxu0 0.0
  %2069 = vmatprep.subr.mxu0 0.0
  %2070 = vmatpush1.msra.mxu0 0.0
  %2071 = vmatprep.subr.mxu0 0.0
  %2072 = vmatpush1.msra.mxu0 0.0
  %2073 = vmatprep.subr.mxu0 0.0
  %2074 = vmatpush1.msra.mxu0 0.0
  %2075 = vmatprep.subr.mxu0 0.0
  %2076 = vmatpush1.msra.mxu0 0.0
  %2077 = vmatprep.subr.mxu0 0.0
  %2078 = vmatpush1.msra.mxu0 0.0
  %2079 = vmatprep.subr.mxu0 0.0
  %2080 = vmatpush1.msra.mxu0 0.0
  %2081 = vmatprep.subr.mxu0 0.0
  %2082 = vmatpush1.msra.mxu0 0.0
  %2083 = vmatprep.subr.mxu0 0.0
  %2084 = vmatpush1.msra.mxu0 0.0
  %2085 = vmatprep.subr.mxu0 0.0
  %2086 = vmatpush1.msra.mxu0 0.0
  %2087 = vmatprep.subr.mxu0 0.0
  %2088 = vmatpush1.msra.mxu0 0.0
  %2089 = vmatprep.subr.mxu0 0.0
  %2090 = vmatpush1.msra.mxu0 0.0
  %2091 = vmatprep.subr.mxu0 0.0
  %2092 = vmatpush1.msra.mxu0 0.0
  %2093 = vmatprep.subr.mxu0 0.0
  %2094 = vmatpush1.msra.mxu0 0.0
  %2095 = vmatprep.subr.mxu0 0.0
  %2096 = vmatpush1.msra.mxu0 0.0
  %2097 = vmatprep.subr.mxu0 0.0
  %2098 = vmatpush1.msra.mxu0 0.0
  %2099 = vmatprep.subr.mxu0 0.0
  %2100 = vmatpush1.msra.mxu0 0.0
  %2101 = vmatprep.subr.mxu0 0.0
  %2102 = vmatpush1.msra.mxu0 0.0
  %2103 = vmatprep.mubr.f32.mxu0 0.0
  %2104 = vmatmul.mubr.f32.gmra.mrb[0].mxu0 %v2016
  %v2105 = vpop.f32.mrb[0].mxu0
  %v2106 = vadd.f32 0.0, %v2105
  %v2107 = vpop.f32.mrb[0].mxu0
  %2108 = vmatprep.mubr.f32.mxu0 0.0
  %2109 = vmatmul.mubr.f32.gmra.mrb[0].mxu0 %v2019
  %v2110 = vpop.f32.mrb[0].mxu0
  %v2111 = vadd.f32 0.0, %v2110
  %v2112 = vpop.f32.mrb[0].mxu0
  %2113 = vmatprep.mubr.f32.mxu0 0.0
  %2114 = vmatmul.mubr.f32.gmra.mrb[0].mxu0 %v2022
  %v2115 = vpop.f32.mrb[0].mxu0
  %v2116 = vadd.f32 0.0, %v2115
  %v2117 = vpop.f32.mrb[0].mxu0
  %2118 = vmatprep.mubr.f32.mxu0 0.0
  %2119 = vmatmul.mubr.f32.gmra.mrb[0].mxu0 %v2025
  %v2120 = vpop.f32.mrb[0].mxu0
  %v2121 = vadd.f32 0.0, %v2120
  %v2122 = vpop.f32.mrb[0].mxu0
  %2123 = vmatprep.mubr.f32.mxu0 0.0
  %2124 = vmatmul.mubr.f32.gmra.mrb[0].mxu0 %v2028
  %v2125 = vpop.f32.mrb[0].mxu0
  %v2126 = vadd.f32 0.0, %v2125
  %v2127 = vpop.f32.mrb[0].mxu0
  %2128 = vmatprep.mubr.f32.mxu0 0.0
  %2129 = vmatmul.mubr.f32.gmra.mrb[0].mxu0 %v2031
  %v2130 = vpop.f32.mrb[0].mxu0
  %v2131 = vadd.f32 0.0, %v2130
  %v2132 = vpop.f32.mrb[0].mxu0
  %2133 = vmatprep.mubr.f32.mxu0 0.0
  %2134 = vmatmul.mubr.f32.gmra.mrb[0].mxu0 %v2034
  %v2135 = vpop.f32.mrb[0].mxu0
  %v2136 = vadd.f32 0.0, %v2135
  %v2137 = vpop.f32.mrb[0].mxu0
  %2138 = vmatprep.mubr.f32.mxu0 0.0
  %2139 = vmatmul.mubr.f32.gmra.mrb[0].mxu0 %v2037
  %v2140 = vpop.f32.mrb[0].mxu0
  %v2141 = vadd.f32 0.0, %v2140
  %v2142 = vpop.f32.mrb[0].mxu0
  %2143 = vdwg.mxu0
  %v2144 = vadd.f32 %v1896, %v2106
  %v2145 = vadd.f32 %v1897, %v2111
  %v2146 = vadd.f32 %v1898, %v2116
  %v2147 = vadd.f32 %v1899, %v2121
  %v2148 = vadd.f32 %v1900, %v2126
  %v2149 = vadd.f32 %v1901, %v2131
  %v2150 = vadd.f32 %v1902, %v2136
  %v2151 = vadd.f32 %v1903, %v2141
  %s2152 = scalar_lea.vmem %s7, 1024
  %v2153 = vld [vmem:[%s2152] sm:$0xff]
  %v2154 = vld [vmem:[%s2152 + $0x8] sm:$0xff]
  %v2155 = vld [vmem:[%s2152 + $0x10] sm:$0xff]
  %v2156 = vld [vmem:[%s2152 + $0x18] sm:$0xff]
  %v2157 = vld [vmem:[%s2152 + $0x20] sm:$0xff]
  %v2158 = vld [vmem:[%s2152 + $0x28] sm:$0xff]
  %v2159 = vld [vmem:[%s2152 + $0x30] sm:$0xff]
  %v2160 = vld [vmem:[%s2152 + $0x38] sm:$0xff]
  %v2161 = vld [vmem:[%s2152 + $0x40] sm:$0xff]
  %v2162 = vld [vmem:[%s2152 + $0x48] sm:$0xff]
  %v2163 = vld [vmem:[%s2152 + $0x50] sm:$0xff]
  %v2164 = vld [vmem:[%s2152 + $0x58] sm:$0xff]
  %v2165 = vld [vmem:[%s2152 + $0x60] sm:$0xff]
  %v2166 = vld [vmem:[%s2152 + $0x68] sm:$0xff]
  %v2167 = vld [vmem:[%s2152 + $0x70] sm:$0xff]
  %v2168 = vld [vmem:[%s2152 + $0x78] sm:$0xff]
  %2169 = vmatprep.subr.mxu0 0.0
  %2170 = vmatpush1.msra.mxu0 %v2153
  %2171 = vmatprep.subr.mxu0 0.0
  %2172 = vmatpush1.msra.mxu0 %v2154
  %2173 = vmatprep.subr.mxu0 0.0
  %2174 = vmatpush1.msra.mxu0 %v2155
  %2175 = vmatprep.subr.mxu0 0.0
  %2176 = vmatpush1.msra.mxu0 %v2156
  %2177 = vmatprep.subr.mxu0 0.0
  %2178 = vmatpush1.msra.mxu0 %v2157
  %2179 = vmatprep.subr.mxu0 0.0
  %2180 = vmatpush1.msra.mxu0 %v2158
  %2181 = vmatprep.subr.mxu0 0.0
  %2182 = vmatpush1.msra.mxu0 %v2159
  %2183 = vmatprep.subr.mxu0 0.0
  %2184 = vmatpush1.msra.mxu0 %v2160
  %2185 = vmatprep.subr.mxu0 0.0
  %2186 = vmatpush1.msra.mxu0 %v2161
  %2187 = vmatprep.subr.mxu0 0.0
  %2188 = vmatpush1.msra.mxu0 %v2162
  %2189 = vmatprep.subr.mxu0 0.0
  %2190 = vmatpush1.msra.mxu0 %v2163
  %2191 = vmatprep.subr.mxu0 0.0
  %2192 = vmatpush1.msra.mxu0 %v2164
  %2193 = vmatprep.subr.mxu0 0.0
  %2194 = vmatpush1.msra.mxu0 %v2165
  %2195 = vmatprep.subr.mxu0 0.0
  %2196 = vmatpush1.msra.mxu0 %v2166
  %2197 = vmatprep.subr.mxu0 0.0
  %2198 = vmatpush1.msra.mxu0 %v2167
  %2199 = vmatprep.subr.mxu0 0.0
  %2200 = vmatpush1.msra.mxu0 %v2168
  %2201 = vmatprep.subr.mxu0 0.0
  %2202 = vmatpush1.msra.mxu0 0.0
  %2203 = vmatprep.subr.mxu0 0.0
  %2204 = vmatpush1.msra.mxu0 0.0
  %2205 = vmatprep.subr.mxu0 0.0
  %2206 = vmatpush1.msra.mxu0 0.0
  %2207 = vmatprep.subr.mxu0 0.0
  %2208 = vmatpush1.msra.mxu0 0.0
  %2209 = vmatprep.subr.mxu0 0.0
  %2210 = vmatpush1.msra.mxu0 0.0
  %2211 = vmatprep.subr.mxu0 0.0
  %2212 = vmatpush1.msra.mxu0 0.0
  %2213 = vmatprep.subr.mxu0 0.0
  %2214 = vmatpush1.msra.mxu0 0.0
  %2215 = vmatprep.subr.mxu0 0.0
  %2216 = vmatpush1.msra.mxu0 0.0
  %2217 = vmatprep.subr.mxu0 0.0
  %2218 = vmatpush1.msra.mxu0 0.0
  %2219 = vmatprep.subr.mxu0 0.0
  %2220 = vmatpush1.msra.mxu0 0.0
  %2221 = vmatprep.subr.mxu0 0.0
  %2222 = vmatpush1.msra.mxu0 0.0
  %2223 = vmatprep.subr.mxu0 0.0
  %2224 = vmatpush1.msra.mxu0 0.0
  %2225 = vmatprep.subr.mxu0 0.0
  %2226 = vmatpush1.msra.mxu0 0.0
  %2227 = vmatprep.subr.mxu0 0.0
  %2228 = vmatpush1.msra.mxu0 0.0
  %2229 = vmatprep.subr.mxu0 0.0
  %2230 = vmatpush1.msra.mxu0 0.0
  %2231 = vmatprep.subr.mxu0 0.0
  %2232 = vmatpush1.msra.mxu0 0.0
  %2233 = vmatprep.mubr.f32.mxu0 0.0
  %2234 = vmatmul.mubr.f32.gmra.mrb[0].mxu0 %v181
  %v2235 = vpop.f32.mrb[0].mxu0
  %v2236 = vadd.f32 0.0, %v2235
  %v2237 = vpop.f32.mrb[0].mxu0
  %2238 = vmatprep.mubr.f32.mxu0 0.0
  %2239 = vmatmul.mubr.f32.gmra.mrb[0].mxu0 %v182
  %v2240 = vpop.f32.mrb[0].mxu0
  %v2241 = vadd.f32 0.0, %v2240
  %v2242 = vpop.f32.mrb[0].mxu0
  %2243 = vmatprep.mubr.f32.mxu0 0.0
  %2244 = vmatmul.mubr.f32.gmra.mrb[0].mxu0 %v183
  %v2245 = vpop.f32.mrb[0].mxu0
  %v2246 = vadd.f32 0.0, %v2245
  %v2247 = vpop.f32.mrb[0].mxu0
  %2248 = vmatprep.mubr.f32.mxu0 0.0
  %2249 = vmatmul.mubr.f32.gmra.mrb[0].mxu0 %v184
  %v2250 = vpop.f32.mrb[0].mxu0
  %v2251 = vadd.f32 0.0, %v2250
  %v2252 = vpop.f32.mrb[0].mxu0
  %2253 = vdwg.mxu0
  %s2254 = scalar_lea.vmem %s5, 512
  %v2255 = vld [vmem:[%s2254] sm:$0xff]
  %v2256 = vld [vmem:[%s2254 + $0x8] sm:$0xff]
  %v2257 = vld [vmem:[%s2254 + $0x10] sm:$0xff]
  %v2258 = vld [vmem:[%s2254 + $0x18] sm:$0xff]
  %v2259 = vld [vmem:[%s2254 + $0x20] sm:$0xff]
  %v2260 = vld [vmem:[%s2254 + $0x28] sm:$0xff]
  %v2261 = vld [vmem:[%s2254 + $0x30] sm:$0xff]
  %v2262 = vld [vmem:[%s2254 + $0x38] sm:$0xff]
  %v2264 = vsel %vm405, %v2255, 0
  %v2267 = vsel %vm405, %v2256, 0
  %v2270 = vsel %vm405, %v2257, 0
  %v2273 = vsel %vm405, %v2258, 0
  %v2276 = vsel %vm405, %v2259, 0
  %v2279 = vsel %vm405, %v2260, 0
  %v2282 = vsel %vm405, %v2261, 0
  %v2285 = vsel %vm405, %v2262, 0
  %2287 = vmatprep.subr.mxu0 0.0
  %2288 = vmatpush1.msra.mxu0 %v2236
  %2289 = vmatprep.subr.mxu0 0.0
  %2290 = vmatpush1.msra.mxu0 %v2241
  %2291 = vmatprep.subr.mxu0 0.0
  %2292 = vmatpush1.msra.mxu0 %v2246
  %2293 = vmatprep.subr.mxu0 0.0
  %2294 = vmatpush1.msra.mxu0 %v2251
  %2295 = vmatprep.subr.mxu0 0.0
  %2296 = vmatpush1.msra.mxu0 0.0
  %2297 = vmatprep.subr.mxu0 0.0
  %2298 = vmatpush1.msra.mxu0 0.0
  %2299 = vmatprep.subr.mxu0 0.0
  %2300 = vmatpush1.msra.mxu0 0.0
  %2301 = vmatprep.subr.mxu0 0.0
  %2302 = vmatpush1.msra.mxu0 0.0
  %2303 = vmatprep.subr.mxu0 0.0
  %2304 = vmatpush1.msra.mxu0 0.0
  %2305 = vmatprep.subr.mxu0 0.0
  %2306 = vmatpush1.msra.mxu0 0.0
  %2307 = vmatprep.subr.mxu0 0.0
  %2308 = vmatpush1.msra.mxu0 0.0
  %2309 = vmatprep.subr.mxu0 0.0
  %2310 = vmatpush1.msra.mxu0 0.0
  %2311 = vmatprep.subr.mxu0 0.0
  %2312 = vmatpush1.msra.mxu0 0.0
  %2313 = vmatprep.subr.mxu0 0.0
  %2314 = vmatpush1.msra.mxu0 0.0
  %2315 = vmatprep.subr.mxu0 0.0
  %2316 = vmatpush1.msra.mxu0 0.0
  %2317 = vmatprep.subr.mxu0 0.0
  %2318 = vmatpush1.msra.mxu0 0.0
  %2319 = vmatprep.subr.mxu0 0.0
  %2320 = vmatpush1.msra.mxu0 0.0
  %2321 = vmatprep.subr.mxu0 0.0
  %2322 = vmatpush1.msra.mxu0 0.0
  %2323 = vmatprep.subr.mxu0 0.0
  %2324 = vmatpush1.msra.mxu0 0.0
  %2325 = vmatprep.subr.mxu0 0.0
  %2326 = vmatpush1.msra.mxu0 0.0
  %2327 = vmatprep.subr.mxu0 0.0
  %2328 = vmatpush1.msra.mxu0 0.0
  %2329 = vmatprep.subr.mxu0 0.0
  %2330 = vmatpush1.msra.mxu0 0.0
  %2331 = vmatprep.subr.mxu0 0.0
  %2332 = vmatpush1.msra.mxu0 0.0
  %2333 = vmatprep.subr.mxu0 0.0
  %2334 = vmatpush1.msra.mxu0 0.0
  %2335 = vmatprep.subr.mxu0 0.0
  %2336 = vmatpush1.msra.mxu0 0.0
  %2337 = vmatprep.subr.mxu0 0.0
  %2338 = vmatpush1.msra.mxu0 0.0
  %2339 = vmatprep.subr.mxu0 0.0
  %2340 = vmatpush1.msra.mxu0 0.0
  %2341 = vmatprep.subr.mxu0 0.0
  %2342 = vmatpush1.msra.mxu0 0.0
  %2343 = vmatprep.subr.mxu0 0.0
  %2344 = vmatpush1.msra.mxu0 0.0
  %2345 = vmatprep.subr.mxu0 0.0
  %2346 = vmatpush1.msra.mxu0 0.0
  %2347 = vmatprep.subr.mxu0 0.0
  %2348 = vmatpush1.msra.mxu0 0.0
  %2349 = vmatprep.subr.mxu0 0.0
  %2350 = vmatpush1.msra.mxu0 0.0
  %2351 = vmatprep.mubr.f32.mxu0 0.0
  %2352 = vmatmul.mubr.f32.gmra.mrb[0].mxu0 %v2264
  %v2353 = vpop.f32.mrb[0].mxu0
  %v2354 = vadd.f32 0.0, %v2353
  %v2355 = vpop.f32.mrb[0].mxu0
  %2356 = vmatprep.mubr.f32.mxu0 0.0
  %2357 = vmatmul.mubr.f32.gmra.mrb[0].mxu0 %v2267
  %v2358 = vpop.f32.mrb[0].mxu0
  %v2359 = vadd.f32 0.0, %v2358
  %v2360 = vpop.f32.mrb[0].mxu0
  %2361 = vmatprep.mubr.f32.mxu0 0.0
  %2362 = vmatmul.mubr.f32.gmra.mrb[0].mxu0 %v2270
  %v2363 = vpop.f32.mrb[0].mxu0
  %v2364 = vadd.f32 0.0, %v2363
  %v2365 = vpop.f32.mrb[0].mxu0
  %2366 = vmatprep.mubr.f32.mxu0 0.0
  %2367 = vmatmul.mubr.f32.gmra.mrb[0].mxu0 %v2273
  %v2368 = vpop.f32.mrb[0].mxu0
  %v2369 = vadd.f32 0.0, %v2368
  %v2370 = vpop.f32.mrb[0].mxu0
  %2371 = vmatprep.mubr.f32.mxu0 0.0
  %2372 = vmatmul.mubr.f32.gmra.mrb[0].mxu0 %v2276
  %v2373 = vpop.f32.mrb[0].mxu0
  %v2374 = vadd.f32 0.0, %v2373
  %v2375 = vpop.f32.mrb[0].mxu0
  %2376 = vmatprep.mubr.f32.mxu0 0.0
  %2377 = vmatmul.mubr.f32.gmra.mrb[0].mxu0 %v2279
  %v2378 = vpop.f32.mrb[0].mxu0
  %v2379 = vadd.f32 0.0, %v2378
  %v2380 = vpop.f32.mrb[0].mxu0
  %2381 = vmatprep.mubr.f32.mxu0 0.0
  %2382 = vmatmul.mubr.f32.gmra.mrb[0].mxu0 %v2282
  %v2383 = vpop.f32.mrb[0].mxu0
  %v2384 = vadd.f32 0.0, %v2383
  %v2385 = vpop.f32.mrb[0].mxu0
  %2386 = vmatprep.mubr.f32.mxu0 0.0
  %2387 = vmatmul.mubr.f32.gmra.mrb[0].mxu0 %v2285
  %v2388 = vpop.f32.mrb[0].mxu0
  %v2389 = vadd.f32 0.0, %v2388
  %v2390 = vpop.f32.mrb[0].mxu0
  %2391 = vdwg.mxu0
  %v2392 = vadd.f32 %v2144, %v2354
  %v2393 = vadd.f32 %v2145, %v2359
  %v2394 = vadd.f32 %v2146, %v2364
  %v2395 = vadd.f32 %v2147, %v2369
  %v2396 = vadd.f32 %v2148, %v2374
  %v2397 = vadd.f32 %v2149, %v2379
  %v2398 = vadd.f32 %v2150, %v2384
  %v2399 = vadd.f32 %v2151, %v2389
  %s2400 = scalar_lea.vmem %s7, 1152
  %v2401 = vld [vmem:[%s2400] sm:$0xff]
  %v2402 = vld [vmem:[%s2400 + $0x8] sm:$0xff]
  %v2403 = vld [vmem:[%s2400 + $0x10] sm:$0xff]
  %v2404 = vld [vmem:[%s2400 + $0x18] sm:$0xff]
  %v2405 = vld [vmem:[%s2400 + $0x20] sm:$0xff]
  %v2406 = vld [vmem:[%s2400 + $0x28] sm:$0xff]
  %v2407 = vld [vmem:[%s2400 + $0x30] sm:$0xff]
  %v2408 = vld [vmem:[%s2400 + $0x38] sm:$0xff]
  %v2409 = vld [vmem:[%s2400 + $0x40] sm:$0xff]
  %v2410 = vld [vmem:[%s2400 + $0x48] sm:$0xff]
  %v2411 = vld [vmem:[%s2400 + $0x50] sm:$0xff]
  %v2412 = vld [vmem:[%s2400 + $0x58] sm:$0xff]
  %v2413 = vld [vmem:[%s2400 + $0x60] sm:$0xff]
  %v2414 = vld [vmem:[%s2400 + $0x68] sm:$0xff]
  %v2415 = vld [vmem:[%s2400 + $0x70] sm:$0xff]
  %v2416 = vld [vmem:[%s2400 + $0x78] sm:$0xff]
  %2417 = vmatprep.subr.mxu0 0.0
  %2418 = vmatpush1.msra.mxu0 %v2401
  %2419 = vmatprep.subr.mxu0 0.0
  %2420 = vmatpush1.msra.mxu0 %v2402
  %2421 = vmatprep.subr.mxu0 0.0
  %2422 = vmatpush1.msra.mxu0 %v2403
  %2423 = vmatprep.subr.mxu0 0.0
  %2424 = vmatpush1.msra.mxu0 %v2404
  %2425 = vmatprep.subr.mxu0 0.0
  %2426 = vmatpush1.msra.mxu0 %v2405
  %2427 = vmatprep.subr.mxu0 0.0
  %2428 = vmatpush1.msra.mxu0 %v2406
  %2429 = vmatprep.subr.mxu0 0.0
  %2430 = vmatpush1.msra.mxu0 %v2407
  %2431 = vmatprep.subr.mxu0 0.0
  %2432 = vmatpush1.msra.mxu0 %v2408
  %2433 = vmatprep.subr.mxu0 0.0
  %2434 = vmatpush1.msra.mxu0 %v2409
  %2435 = vmatprep.subr.mxu0 0.0
  %2436 = vmatpush1.msra.mxu0 %v2410
  %2437 = vmatprep.subr.mxu0 0.0
  %2438 = vmatpush1.msra.mxu0 %v2411
  %2439 = vmatprep.subr.mxu0 0.0
  %2440 = vmatpush1.msra.mxu0 %v2412
  %2441 = vmatprep.subr.mxu0 0.0
  %2442 = vmatpush1.msra.mxu0 %v2413
  %2443 = vmatprep.subr.mxu0 0.0
  %2444 = vmatpush1.msra.mxu0 %v2414
  %2445 = vmatprep.subr.mxu0 0.0
  %2446 = vmatpush1.msra.mxu0 %v2415
  %2447 = vmatprep.subr.mxu0 0.0
  %2448 = vmatpush1.msra.mxu0 %v2416
  %2449 = vmatprep.subr.mxu0 0.0
  %2450 = vmatpush1.msra.mxu0 0.0
  %2451 = vmatprep.subr.mxu0 0.0
  %2452 = vmatpush1.msra.mxu0 0.0
  %2453 = vmatprep.subr.mxu0 0.0
  %2454 = vmatpush1.msra.mxu0 0.0
  %2455 = vmatprep.subr.mxu0 0.0
  %2456 = vmatpush1.msra.mxu0 0.0
  %2457 = vmatprep.subr.mxu0 0.0
  %2458 = vmatpush1.msra.mxu0 0.0
  %2459 = vmatprep.subr.mxu0 0.0
  %2460 = vmatpush1.msra.mxu0 0.0
  %2461 = vmatprep.subr.mxu0 0.0
  %2462 = vmatpush1.msra.mxu0 0.0
  %2463 = vmatprep.subr.mxu0 0.0
  %2464 = vmatpush1.msra.mxu0 0.0
  %2465 = vmatprep.subr.mxu0 0.0
  %2466 = vmatpush1.msra.mxu0 0.0
  %2467 = vmatprep.subr.mxu0 0.0
  %2468 = vmatpush1.msra.mxu0 0.0
  %2469 = vmatprep.subr.mxu0 0.0
  %2470 = vmatpush1.msra.mxu0 0.0
  %2471 = vmatprep.subr.mxu0 0.0
  %2472 = vmatpush1.msra.mxu0 0.0
  %2473 = vmatprep.subr.mxu0 0.0
  %2474 = vmatpush1.msra.mxu0 0.0
  %2475 = vmatprep.subr.mxu0 0.0
  %2476 = vmatpush1.msra.mxu0 0.0
  %2477 = vmatprep.subr.mxu0 0.0
  %2478 = vmatpush1.msra.mxu0 0.0
  %2479 = vmatprep.subr.mxu0 0.0
  %2480 = vmatpush1.msra.mxu0 0.0
  %2481 = vmatprep.mubr.f32.mxu0 0.0
  %2482 = vmatmul.mubr.f32.gmra.mrb[0].mxu0 %v181
  %v2483 = vpop.f32.mrb[0].mxu0
  %v2484 = vadd.f32 0.0, %v2483
  %v2485 = vpop.f32.mrb[0].mxu0
  %2486 = vmatprep.mubr.f32.mxu0 0.0
  %2487 = vmatmul.mubr.f32.gmra.mrb[0].mxu0 %v182
  %v2488 = vpop.f32.mrb[0].mxu0
  %v2489 = vadd.f32 0.0, %v2488
  %v2490 = vpop.f32.mrb[0].mxu0
  %2491 = vmatprep.mubr.f32.mxu0 0.0
  %2492 = vmatmul.mubr.f32.gmra.mrb[0].mxu0 %v183
  %v2493 = vpop.f32.mrb[0].mxu0
  %v2494 = vadd.f32 0.0, %v2493
  %v2495 = vpop.f32.mrb[0].mxu0
  %2496 = vmatprep.mubr.f32.mxu0 0.0
  %2497 = vmatmul.mubr.f32.gmra.mrb[0].mxu0 %v184
  %v2498 = vpop.f32.mrb[0].mxu0
  %v2499 = vadd.f32 0.0, %v2498
  %v2500 = vpop.f32.mrb[0].mxu0
  %2501 = vdwg.mxu0
  %s2502 = scalar_lea.vmem %s5, 576
  %v2503 = vld [vmem:[%s2502] sm:$0xff]
  %v2504 = vld [vmem:[%s2502 + $0x8] sm:$0xff]
  %v2505 = vld [vmem:[%s2502 + $0x10] sm:$0xff]
  %v2506 = vld [vmem:[%s2502 + $0x18] sm:$0xff]
  %v2507 = vld [vmem:[%s2502 + $0x20] sm:$0xff]
  %v2508 = vld [vmem:[%s2502 + $0x28] sm:$0xff]
  %v2509 = vld [vmem:[%s2502 + $0x30] sm:$0xff]
  %v2510 = vld [vmem:[%s2502 + $0x38] sm:$0xff]
  %v2512 = vsel %vm405, %v2503, 0
  %v2515 = vsel %vm405, %v2504, 0
  %v2518 = vsel %vm405, %v2505, 0
  %v2521 = vsel %vm405, %v2506, 0
  %v2524 = vsel %vm405, %v2507, 0
  %v2527 = vsel %vm405, %v2508, 0
  %v2530 = vsel %vm405, %v2509, 0
  %v2533 = vsel %vm405, %v2510, 0
  %2535 = vmatprep.subr.mxu0 0.0
  %2536 = vmatpush1.msra.mxu0 %v2484
  %2537 = vmatprep.subr.mxu0 0.0
  %2538 = vmatpush1.msra.mxu0 %v2489
  %2539 = vmatprep.subr.mxu0 0.0
  %2540 = vmatpush1.msra.mxu0 %v2494
  %2541 = vmatprep.subr.mxu0 0.0
  %2542 = vmatpush1.msra.mxu0 %v2499
  %2543 = vmatprep.subr.mxu0 0.0
  %2544 = vmatpush1.msra.mxu0 0.0
  %2545 = vmatprep.subr.mxu0 0.0
  %2546 = vmatpush1.msra.mxu0 0.0
  %2547 = vmatprep.subr.mxu0 0.0
  %2548 = vmatpush1.msra.mxu0 0.0
  %2549 = vmatprep.subr.mxu0 0.0
  %2550 = vmatpush1.msra.mxu0 0.0
  %2551 = vmatprep.subr.mxu0 0.0
  %2552 = vmatpush1.msra.mxu0 0.0
  %2553 = vmatprep.subr.mxu0 0.0
  %2554 = vmatpush1.msra.mxu0 0.0
  %2555 = vmatprep.subr.mxu0 0.0
  %2556 = vmatpush1.msra.mxu0 0.0
  %2557 = vmatprep.subr.mxu0 0.0
  %2558 = vmatpush1.msra.mxu0 0.0
  %2559 = vmatprep.subr.mxu0 0.0
  %2560 = vmatpush1.msra.mxu0 0.0
  %2561 = vmatprep.subr.mxu0 0.0
  %2562 = vmatpush1.msra.mxu0 0.0
  %2563 = vmatprep.subr.mxu0 0.0
  %2564 = vmatpush1.msra.mxu0 0.0
  %2565 = vmatprep.subr.mxu0 0.0
  %2566 = vmatpush1.msra.mxu0 0.0
  %2567 = vmatprep.subr.mxu0 0.0
  %2568 = vmatpush1.msra.mxu0 0.0
  %2569 = vmatprep.subr.mxu0 0.0
  %2570 = vmatpush1.msra.mxu0 0.0
  %2571 = vmatprep.subr.mxu0 0.0
  %2572 = vmatpush1.msra.mxu0 0.0
  %2573 = vmatprep.subr.mxu0 0.0
  %2574 = vmatpush1.msra.mxu0 0.0
  %2575 = vmatprep.subr.mxu0 0.0
  %2576 = vmatpush1.msra.mxu0 0.0
  %2577 = vmatprep.subr.mxu0 0.0
  %2578 = vmatpush1.msra.mxu0 0.0
  %2579 = vmatprep.subr.mxu0 0.0
  %2580 = vmatpush1.msra.mxu0 0.0
  %2581 = vmatprep.subr.mxu0 0.0
  %2582 = vmatpush1.msra.mxu0 0.0
  %2583 = vmatprep.subr.mxu0 0.0
  %2584 = vmatpush1.msra.mxu0 0.0
  %2585 = vmatprep.subr.mxu0 0.0
  %2586 = vmatpush1.msra.mxu0 0.0
  %2587 = vmatprep.subr.mxu0 0.0
  %2588 = vmatpush1.msra.mxu0 0.0
  %2589 = vmatprep.subr.mxu0 0.0
  %2590 = vmatpush1.msra.mxu0 0.0
  %2591 = vmatprep.subr.mxu0 0.0
  %2592 = vmatpush1.msra.mxu0 0.0
  %2593 = vmatprep.subr.mxu0 0.0
  %2594 = vmatpush1.msra.mxu0 0.0
  %2595 = vmatprep.subr.mxu0 0.0
  %2596 = vmatpush1.msra.mxu0 0.0
  %2597 = vmatprep.subr.mxu0 0.0
  %2598 = vmatpush1.msra.mxu0 0.0
  %2599 = vmatprep.mubr.f32.mxu0 0.0
  %2600 = vmatmul.mubr.f32.gmra.mrb[0].mxu0 %v2512
  %v2601 = vpop.f32.mrb[0].mxu0
  %v2602 = vadd.f32 0.0, %v2601
  %v2603 = vpop.f32.mrb[0].mxu0
  %2604 = vmatprep.mubr.f32.mxu0 0.0
  %2605 = vmatmul.mubr.f32.gmra.mrb[0].mxu0 %v2515
  %v2606 = vpop.f32.mrb[0].mxu0
  %v2607 = vadd.f32 0.0, %v2606
  %v2608 = vpop.f32.mrb[0].mxu0
  %2609 = vmatprep.mubr.f32.mxu0 0.0
  %2610 = vmatmul.mubr.f32.gmra.mrb[0].mxu0 %v2518
  %v2611 = vpop.f32.mrb[0].mxu0
  %v2612 = vadd.f32 0.0, %v2611
  %v2613 = vpop.f32.mrb[0].mxu0
  %2614 = vmatprep.mubr.f32.mxu0 0.0
  %2615 = vmatmul.mubr.f32.gmra.mrb[0].mxu0 %v2521
  %v2616 = vpop.f32.mrb[0].mxu0
  %v2617 = vadd.f32 0.0, %v2616
  %v2618 = vpop.f32.mrb[0].mxu0
  %2619 = vmatprep.mubr.f32.mxu0 0.0
  %2620 = vmatmul.mubr.f32.gmra.mrb[0].mxu0 %v2524
  %v2621 = vpop.f32.mrb[0].mxu0
  %v2622 = vadd.f32 0.0, %v2621
  %v2623 = vpop.f32.mrb[0].mxu0
  %2624 = vmatprep.mubr.f32.mxu0 0.0
  %2625 = vmatmul.mubr.f32.gmra.mrb[0].mxu0 %v2527
  %v2626 = vpop.f32.mrb[0].mxu0
  %v2627 = vadd.f32 0.0, %v2626
  %v2628 = vpop.f32.mrb[0].mxu0
  %2629 = vmatprep.mubr.f32.mxu0 0.0
  %2630 = vmatmul.mubr.f32.gmra.mrb[0].mxu0 %v2530
  %v2631 = vpop.f32.mrb[0].mxu0
  %v2632 = vadd.f32 0.0, %v2631
  %v2633 = vpop.f32.mrb[0].mxu0
  %2634 = vmatprep.mubr.f32.mxu0 0.0
  %2635 = vmatmul.mubr.f32.gmra.mrb[0].mxu0 %v2533
  %v2636 = vpop.f32.mrb[0].mxu0
  %v2637 = vadd.f32 0.0, %v2636
  %v2638 = vpop.f32.mrb[0].mxu0
  %2639 = vdwg.mxu0
  %v2640 = vadd.f32 %v2392, %v2602
  %v2641 = vadd.f32 %v2393, %v2607
  %v2642 = vadd.f32 %v2394, %v2612
  %v2643 = vadd.f32 %v2395, %v2617
  %v2644 = vadd.f32 %v2396, %v2622
  %v2645 = vadd.f32 %v2397, %v2627
  %v2646 = vadd.f32 %v2398, %v2632
  %v2647 = vadd.f32 %v2399, %v2637
  %s2648 = scalar_lea.vmem %s7, 1280
  %v2649 = vld [vmem:[%s2648] sm:$0xff]
  %v2650 = vld [vmem:[%s2648 + $0x8] sm:$0xff]
  %v2651 = vld [vmem:[%s2648 + $0x10] sm:$0xff]
  %v2652 = vld [vmem:[%s2648 + $0x18] sm:$0xff]
  %v2653 = vld [vmem:[%s2648 + $0x20] sm:$0xff]
  %v2654 = vld [vmem:[%s2648 + $0x28] sm:$0xff]
  %v2655 = vld [vmem:[%s2648 + $0x30] sm:$0xff]
  %v2656 = vld [vmem:[%s2648 + $0x38] sm:$0xff]
  %v2657 = vld [vmem:[%s2648 + $0x40] sm:$0xff]
  %v2658 = vld [vmem:[%s2648 + $0x48] sm:$0xff]
  %v2659 = vld [vmem:[%s2648 + $0x50] sm:$0xff]
  %v2660 = vld [vmem:[%s2648 + $0x58] sm:$0xff]
  %v2661 = vld [vmem:[%s2648 + $0x60] sm:$0xff]
  %v2662 = vld [vmem:[%s2648 + $0x68] sm:$0xff]
  %v2663 = vld [vmem:[%s2648 + $0x70] sm:$0xff]
  %v2664 = vld [vmem:[%s2648 + $0x78] sm:$0xff]
  %2665 = vmatprep.subr.mxu0 0.0
  %2666 = vmatpush1.msra.mxu0 %v2649
  %2667 = vmatprep.subr.mxu0 0.0
  %2668 = vmatpush1.msra.mxu0 %v2650
  %2669 = vmatprep.subr.mxu0 0.0
  %2670 = vmatpush1.msra.mxu0 %v2651
  %2671 = vmatprep.subr.mxu0 0.0
  %2672 = vmatpush1.msra.mxu0 %v2652
  %2673 = vmatprep.subr.mxu0 0.0
  %2674 = vmatpush1.msra.mxu0 %v2653
  %2675 = vmatprep.subr.mxu0 0.0
  %2676 = vmatpush1.msra.mxu0 %v2654
  %2677 = vmatprep.subr.mxu0 0.0
  %2678 = vmatpush1.msra.mxu0 %v2655
  %2679 = vmatprep.subr.mxu0 0.0
  %2680 = vmatpush1.msra.mxu0 %v2656
  %2681 = vmatprep.subr.mxu0 0.0
  %2682 = vmatpush1.msra.mxu0 %v2657
  %2683 = vmatprep.subr.mxu0 0.0
  %2684 = vmatpush1.msra.mxu0 %v2658
  %2685 = vmatprep.subr.mxu0 0.0
  %2686 = vmatpush1.msra.mxu0 %v2659
  %2687 = vmatprep.subr.mxu0 0.0
  %2688 = vmatpush1.msra.mxu0 %v2660
  %2689 = vmatprep.subr.mxu0 0.0
  %2690 = vmatpush1.msra.mxu0 %v2661
  %2691 = vmatprep.subr.mxu0 0.0
  %2692 = vmatpush1.msra.mxu0 %v2662
  %2693 = vmatprep.subr.mxu0 0.0
  %2694 = vmatpush1.msra.mxu0 %v2663
  %2695 = vmatprep.subr.mxu0 0.0
  %2696 = vmatpush1.msra.mxu0 %v2664
  %2697 = vmatprep.subr.mxu0 0.0
  %2698 = vmatpush1.msra.mxu0 0.0
  %2699 = vmatprep.subr.mxu0 0.0
  %2700 = vmatpush1.msra.mxu0 0.0
  %2701 = vmatprep.subr.mxu0 0.0
  %2702 = vmatpush1.msra.mxu0 0.0
  %2703 = vmatprep.subr.mxu0 0.0
  %2704 = vmatpush1.msra.mxu0 0.0
  %2705 = vmatprep.subr.mxu0 0.0
  %2706 = vmatpush1.msra.mxu0 0.0
  %2707 = vmatprep.subr.mxu0 0.0
  %2708 = vmatpush1.msra.mxu0 0.0
  %2709 = vmatprep.subr.mxu0 0.0
  %2710 = vmatpush1.msra.mxu0 0.0
  %2711 = vmatprep.subr.mxu0 0.0
  %2712 = vmatpush1.msra.mxu0 0.0
  %2713 = vmatprep.subr.mxu0 0.0
  %2714 = vmatpush1.msra.mxu0 0.0
  %2715 = vmatprep.subr.mxu0 0.0
  %2716 = vmatpush1.msra.mxu0 0.0
  %2717 = vmatprep.subr.mxu0 0.0
  %2718 = vmatpush1.msra.mxu0 0.0
  %2719 = vmatprep.subr.mxu0 0.0
  %2720 = vmatpush1.msra.mxu0 0.0
  %2721 = vmatprep.subr.mxu0 0.0
  %2722 = vmatpush1.msra.mxu0 0.0
  %2723 = vmatprep.subr.mxu0 0.0
  %2724 = vmatpush1.msra.mxu0 0.0
  %2725 = vmatprep.subr.mxu0 0.0
  %2726 = vmatpush1.msra.mxu0 0.0
  %2727 = vmatprep.subr.mxu0 0.0
  %2728 = vmatpush1.msra.mxu0 0.0
  %2729 = vmatprep.mubr.f32.mxu0 0.0
  %2730 = vmatmul.mubr.f32.gmra.mrb[0].mxu0 %v181
  %v2731 = vpop.f32.mrb[0].mxu0
  %v2732 = vadd.f32 0.0, %v2731
  %v2733 = vpop.f32.mrb[0].mxu0
  %2734 = vmatprep.mubr.f32.mxu0 0.0
  %2735 = vmatmul.mubr.f32.gmra.mrb[0].mxu0 %v182
  %v2736 = vpop.f32.mrb[0].mxu0
  %v2737 = vadd.f32 0.0, %v2736
  %v2738 = vpop.f32.mrb[0].mxu0
  %2739 = vmatprep.mubr.f32.mxu0 0.0
  %2740 = vmatmul.mubr.f32.gmra.mrb[0].mxu0 %v183
  %v2741 = vpop.f32.mrb[0].mxu0
  %v2742 = vadd.f32 0.0, %v2741
  %v2743 = vpop.f32.mrb[0].mxu0
  %2744 = vmatprep.mubr.f32.mxu0 0.0
  %2745 = vmatmul.mubr.f32.gmra.mrb[0].mxu0 %v184
  %v2746 = vpop.f32.mrb[0].mxu0
  %v2747 = vadd.f32 0.0, %v2746
  %v2748 = vpop.f32.mrb[0].mxu0
  %2749 = vdwg.mxu0
  %s2750 = scalar_lea.vmem %s5, 640
  %v2751 = vld [vmem:[%s2750] sm:$0xff]
  %v2752 = vld [vmem:[%s2750 + $0x8] sm:$0xff]
  %v2753 = vld [vmem:[%s2750 + $0x10] sm:$0xff]
  %v2754 = vld [vmem:[%s2750 + $0x18] sm:$0xff]
  %v2755 = vld [vmem:[%s2750 + $0x20] sm:$0xff]
  %v2756 = vld [vmem:[%s2750 + $0x28] sm:$0xff]
  %v2757 = vld [vmem:[%s2750 + $0x30] sm:$0xff]
  %v2758 = vld [vmem:[%s2750 + $0x38] sm:$0xff]
  %v2760 = vsel %vm405, %v2751, 0
  %v2763 = vsel %vm405, %v2752, 0
  %v2766 = vsel %vm405, %v2753, 0
  %v2769 = vsel %vm405, %v2754, 0
  %v2772 = vsel %vm405, %v2755, 0
  %v2775 = vsel %vm405, %v2756, 0
  %v2778 = vsel %vm405, %v2757, 0
  %v2781 = vsel %vm405, %v2758, 0
  %2783 = vmatprep.subr.mxu0 0.0
  %2784 = vmatpush1.msra.mxu0 %v2732
  %2785 = vmatprep.subr.mxu0 0.0
  %2786 = vmatpush1.msra.mxu0 %v2737
  %2787 = vmatprep.subr.mxu0 0.0
  %2788 = vmatpush1.msra.mxu0 %v2742
  %2789 = vmatprep.subr.mxu0 0.0
  %2790 = vmatpush1.msra.mxu0 %v2747
  %2791 = vmatprep.subr.mxu0 0.0
  %2792 = vmatpush1.msra.mxu0 0.0
  %2793 = vmatprep.subr.mxu0 0.0
  %2794 = vmatpush1.msra.mxu0 0.0
  %2795 = vmatprep.subr.mxu0 0.0
  %2796 = vmatpush1.msra.mxu0 0.0
  %2797 = vmatprep.subr.mxu0 0.0
  %2798 = vmatpush1.msra.mxu0 0.0
  %2799 = vmatprep.subr.mxu0 0.0
  %2800 = vmatpush1.msra.mxu0 0.0
  %2801 = vmatprep.subr.mxu0 0.0
  %2802 = vmatpush1.msra.mxu0 0.0
  %2803 = vmatprep.subr.mxu0 0.0
  %2804 = vmatpush1.msra.mxu0 0.0
  %2805 = vmatprep.subr.mxu0 0.0
  %2806 = vmatpush1.msra.mxu0 0.0
  %2807 = vmatprep.subr.mxu0 0.0
  %2808 = vmatpush1.msra.mxu0 0.0
  %2809 = vmatprep.subr.mxu0 0.0
  %2810 = vmatpush1.msra.mxu0 0.0
  %2811 = vmatprep.subr.mxu0 0.0
  %2812 = vmatpush1.msra.mxu0 0.0
  %2813 = vmatprep.subr.mxu0 0.0
  %2814 = vmatpush1.msra.mxu0 0.0
  %2815 = vmatprep.subr.mxu0 0.0
  %2816 = vmatpush1.msra.mxu0 0.0
  %2817 = vmatprep.subr.mxu0 0.0
  %2818 = vmatpush1.msra.mxu0 0.0
  %2819 = vmatprep.subr.mxu0 0.0
  %2820 = vmatpush1.msra.mxu0 0.0
  %2821 = vmatprep.subr.mxu0 0.0
  %2822 = vmatpush1.msra.mxu0 0.0
  %2823 = vmatprep.subr.mxu0 0.0
  %2824 = vmatpush1.msra.mxu0 0.0
  %2825 = vmatprep.subr.mxu0 0.0
  %2826 = vmatpush1.msra.mxu0 0.0
  %2827 = vmatprep.subr.mxu0 0.0
  %2828 = vmatpush1.msra.mxu0 0.0
  %2829 = vmatprep.subr.mxu0 0.0
  %2830 = vmatpush1.msra.mxu0 0.0
  %2831 = vmatprep.subr.mxu0 0.0
  %2832 = vmatpush1.msra.mxu0 0.0
  %2833 = vmatprep.subr.mxu0 0.0
  %2834 = vmatpush1.msra.mxu0 0.0
  %2835 = vmatprep.subr.mxu0 0.0
  %2836 = vmatpush1.msra.mxu0 0.0
  %2837 = vmatprep.subr.mxu0 0.0
  %2838 = vmatpush1.msra.mxu0 0.0
  %2839 = vmatprep.subr.mxu0 0.0
  %2840 = vmatpush1.msra.mxu0 0.0
  %2841 = vmatprep.subr.mxu0 0.0
  %2842 = vmatpush1.msra.mxu0 0.0
  %2843 = vmatprep.subr.mxu0 0.0
  %2844 = vmatpush1.msra.mxu0 0.0
  %2845 = vmatprep.subr.mxu0 0.0
  %2846 = vmatpush1.msra.mxu0 0.0
  %2847 = vmatprep.mubr.f32.mxu0 0.0
  %2848 = vmatmul.mubr.f32.gmra.mrb[0].mxu0 %v2760
  %v2849 = vpop.f32.mrb[0].mxu0
  %v2850 = vadd.f32 0.0, %v2849
  %v2851 = vpop.f32.mrb[0].mxu0
  %2852 = vmatprep.mubr.f32.mxu0 0.0
  %2853 = vmatmul.mubr.f32.gmra.mrb[0].mxu0 %v2763
  %v2854 = vpop.f32.mrb[0].mxu0
  %v2855 = vadd.f32 0.0, %v2854
  %v2856 = vpop.f32.mrb[0].mxu0
  %2857 = vmatprep.mubr.f32.mxu0 0.0
  %2858 = vmatmul.mubr.f32.gmra.mrb[0].mxu0 %v2766
  %v2859 = vpop.f32.mrb[0].mxu0
  %v2860 = vadd.f32 0.0, %v2859
  %v2861 = vpop.f32.mrb[0].mxu0
  %2862 = vmatprep.mubr.f32.mxu0 0.0
  %2863 = vmatmul.mubr.f32.gmra.mrb[0].mxu0 %v2769
  %v2864 = vpop.f32.mrb[0].mxu0
  %v2865 = vadd.f32 0.0, %v2864
  %v2866 = vpop.f32.mrb[0].mxu0
  %2867 = vmatprep.mubr.f32.mxu0 0.0
  %2868 = vmatmul.mubr.f32.gmra.mrb[0].mxu0 %v2772
  %v2869 = vpop.f32.mrb[0].mxu0
  %v2870 = vadd.f32 0.0, %v2869
  %v2871 = vpop.f32.mrb[0].mxu0
  %2872 = vmatprep.mubr.f32.mxu0 0.0
  %2873 = vmatmul.mubr.f32.gmra.mrb[0].mxu0 %v2775
  %v2874 = vpop.f32.mrb[0].mxu0
  %v2875 = vadd.f32 0.0, %v2874
  %v2876 = vpop.f32.mrb[0].mxu0
  %2877 = vmatprep.mubr.f32.mxu0 0.0
  %2878 = vmatmul.mubr.f32.gmra.mrb[0].mxu0 %v2778
  %v2879 = vpop.f32.mrb[0].mxu0
  %v2880 = vadd.f32 0.0, %v2879
  %v2881 = vpop.f32.mrb[0].mxu0
  %2882 = vmatprep.mubr.f32.mxu0 0.0
  %2883 = vmatmul.mubr.f32.gmra.mrb[0].mxu0 %v2781
  %v2884 = vpop.f32.mrb[0].mxu0
  %v2885 = vadd.f32 0.0, %v2884
  %v2886 = vpop.f32.mrb[0].mxu0
  %2887 = vdwg.mxu0
  %v2888 = vadd.f32 %v2640, %v2850
  %v2889 = vadd.f32 %v2641, %v2855
  %v2890 = vadd.f32 %v2642, %v2860
  %v2891 = vadd.f32 %v2643, %v2865
  %v2892 = vadd.f32 %v2644, %v2870
  %v2893 = vadd.f32 %v2645, %v2875
  %v2894 = vadd.f32 %v2646, %v2880
  %v2895 = vadd.f32 %v2647, %v2885
  %s2896 = scalar_lea.vmem %s7, 1408
  %v2897 = vld [vmem:[%s2896] sm:$0xff]
  %v2898 = vld [vmem:[%s2896 + $0x8] sm:$0xff]
  %v2899 = vld [vmem:[%s2896 + $0x10] sm:$0xff]
  %v2900 = vld [vmem:[%s2896 + $0x18] sm:$0xff]
  %v2901 = vld [vmem:[%s2896 + $0x20] sm:$0xff]
  %v2902 = vld [vmem:[%s2896 + $0x28] sm:$0xff]
  %v2903 = vld [vmem:[%s2896 + $0x30] sm:$0xff]
  %v2904 = vld [vmem:[%s2896 + $0x38] sm:$0xff]
  %v2905 = vld [vmem:[%s2896 + $0x40] sm:$0xff]
  %v2906 = vld [vmem:[%s2896 + $0x48] sm:$0xff]
  %v2907 = vld [vmem:[%s2896 + $0x50] sm:$0xff]
  %v2908 = vld [vmem:[%s2896 + $0x58] sm:$0xff]
  %v2909 = vld [vmem:[%s2896 + $0x60] sm:$0xff]
  %v2910 = vld [vmem:[%s2896 + $0x68] sm:$0xff]
  %v2911 = vld [vmem:[%s2896 + $0x70] sm:$0xff]
  %v2912 = vld [vmem:[%s2896 + $0x78] sm:$0xff]
  %2913 = vmatprep.subr.mxu0 0.0
  %2914 = vmatpush1.msra.mxu0 %v2897
  %2915 = vmatprep.subr.mxu0 0.0
  %2916 = vmatpush1.msra.mxu0 %v2898
  %2917 = vmatprep.subr.mxu0 0.0
  %2918 = vmatpush1.msra.mxu0 %v2899
  %2919 = vmatprep.subr.mxu0 0.0
  %2920 = vmatpush1.msra.mxu0 %v2900
  %2921 = vmatprep.subr.mxu0 0.0
  %2922 = vmatpush1.msra.mxu0 %v2901
  %2923 = vmatprep.subr.mxu0 0.0
  %2924 = vmatpush1.msra.mxu0 %v2902
  %2925 = vmatprep.subr.mxu0 0.0
  %2926 = vmatpush1.msra.mxu0 %v2903
  %2927 = vmatprep.subr.mxu0 0.0
  %2928 = vmatpush1.msra.mxu0 %v2904
  %2929 = vmatprep.subr.mxu0 0.0
  %2930 = vmatpush1.msra.mxu0 %v2905
  %2931 = vmatprep.subr.mxu0 0.0
  %2932 = vmatpush1.msra.mxu0 %v2906
  %2933 = vmatprep.subr.mxu0 0.0
  %2934 = vmatpush1.msra.mxu0 %v2907
  %2935 = vmatprep.subr.mxu0 0.0
  %2936 = vmatpush1.msra.mxu0 %v2908
  %2937 = vmatprep.subr.mxu0 0.0
  %2938 = vmatpush1.msra.mxu0 %v2909
  %2939 = vmatprep.subr.mxu0 0.0
  %2940 = vmatpush1.msra.mxu0 %v2910
  %2941 = vmatprep.subr.mxu0 0.0
  %2942 = vmatpush1.msra.mxu0 %v2911
  %2943 = vmatprep.subr.mxu0 0.0
  %2944 = vmatpush1.msra.mxu0 %v2912
  %2945 = vmatprep.subr.mxu0 0.0
  %2946 = vmatpush1.msra.mxu0 0.0
  %2947 = vmatprep.subr.mxu0 0.0
  %2948 = vmatpush1.msra.mxu0 0.0
  %2949 = vmatprep.subr.mxu0 0.0
  %2950 = vmatpush1.msra.mxu0 0.0
  %2951 = vmatprep.subr.mxu0 0.0
  %2952 = vmatpush1.msra.mxu0 0.0
  %2953 = vmatprep.subr.mxu0 0.0
  %2954 = vmatpush1.msra.mxu0 0.0
  %2955 = vmatprep.subr.mxu0 0.0
  %2956 = vmatpush1.msra.mxu0 0.0
  %2957 = vmatprep.subr.mxu0 0.0
  %2958 = vmatpush1.msra.mxu0 0.0
  %2959 = vmatprep.subr.mxu0 0.0
  %2960 = vmatpush1.msra.mxu0 0.0
  %2961 = vmatprep.subr.mxu0 0.0
  %2962 = vmatpush1.msra.mxu0 0.0
  %2963 = vmatprep.subr.mxu0 0.0
  %2964 = vmatpush1.msra.mxu0 0.0
  %2965 = vmatprep.subr.mxu0 0.0
  %2966 = vmatpush1.msra.mxu0 0.0
  %2967 = vmatprep.subr.mxu0 0.0
  %2968 = vmatpush1.msra.mxu0 0.0
  %2969 = vmatprep.subr.mxu0 0.0
  %2970 = vmatpush1.msra.mxu0 0.0
  %2971 = vmatprep.subr.mxu0 0.0
  %2972 = vmatpush1.msra.mxu0 0.0
  %2973 = vmatprep.subr.mxu0 0.0
  %2974 = vmatpush1.msra.mxu0 0.0
  %2975 = vmatprep.subr.mxu0 0.0
  %2976 = vmatpush1.msra.mxu0 0.0
  %2977 = vmatprep.mubr.f32.mxu0 0.0
  %2978 = vmatmul.mubr.f32.gmra.mrb[0].mxu0 %v181
  %v2979 = vpop.f32.mrb[0].mxu0
  %v2980 = vadd.f32 0.0, %v2979
  %v2981 = vpop.f32.mrb[0].mxu0
  %2982 = vmatprep.mubr.f32.mxu0 0.0
  %2983 = vmatmul.mubr.f32.gmra.mrb[0].mxu0 %v182
  %v2984 = vpop.f32.mrb[0].mxu0
  %v2985 = vadd.f32 0.0, %v2984
  %v2986 = vpop.f32.mrb[0].mxu0
  %2987 = vmatprep.mubr.f32.mxu0 0.0
  %2988 = vmatmul.mubr.f32.gmra.mrb[0].mxu0 %v183
  %v2989 = vpop.f32.mrb[0].mxu0
  %v2990 = vadd.f32 0.0, %v2989
  %v2991 = vpop.f32.mrb[0].mxu0
  %2992 = vmatprep.mubr.f32.mxu0 0.0
  %2993 = vmatmul.mubr.f32.gmra.mrb[0].mxu0 %v184
  %v2994 = vpop.f32.mrb[0].mxu0
  %v2995 = vadd.f32 0.0, %v2994
  %v2996 = vpop.f32.mrb[0].mxu0
  %2997 = vdwg.mxu0
  %s2998 = scalar_lea.vmem %s5, 704
  %v2999 = vld [vmem:[%s2998] sm:$0xff]
  %v3000 = vld [vmem:[%s2998 + $0x8] sm:$0xff]
  %v3001 = vld [vmem:[%s2998 + $0x10] sm:$0xff]
  %v3002 = vld [vmem:[%s2998 + $0x18] sm:$0xff]
  %v3003 = vld [vmem:[%s2998 + $0x20] sm:$0xff]
  %v3004 = vld [vmem:[%s2998 + $0x28] sm:$0xff]
  %v3005 = vld [vmem:[%s2998 + $0x30] sm:$0xff]
  %v3006 = vld [vmem:[%s2998 + $0x38] sm:$0xff]
  %v3008 = vsel %vm405, %v2999, 0
  %v3011 = vsel %vm405, %v3000, 0
  %v3014 = vsel %vm405, %v3001, 0
  %v3017 = vsel %vm405, %v3002, 0
  %v3020 = vsel %vm405, %v3003, 0
  %v3023 = vsel %vm405, %v3004, 0
  %v3026 = vsel %vm405, %v3005, 0
  %v3029 = vsel %vm405, %v3006, 0
  %3031 = vmatprep.subr.mxu0 0.0
  %3032 = vmatpush1.msra.mxu0 %v2980
  %3033 = vmatprep.subr.mxu0 0.0
  %3034 = vmatpush1.msra.mxu0 %v2985
  %3035 = vmatprep.subr.mxu0 0.0
  %3036 = vmatpush1.msra.mxu0 %v2990
  %3037 = vmatprep.subr.mxu0 0.0
  %3038 = vmatpush1.msra.mxu0 %v2995
  %3039 = vmatprep.subr.mxu0 0.0
  %3040 = vmatpush1.msra.mxu0 0.0
  %3041 = vmatprep.subr.mxu0 0.0
  %3042 = vmatpush1.msra.mxu0 0.0
  %3043 = vmatprep.subr.mxu0 0.0
  %3044 = vmatpush1.msra.mxu0 0.0
  %3045 = vmatprep.subr.mxu0 0.0
  %3046 = vmatpush1.msra.mxu0 0.0
  %3047 = vmatprep.subr.mxu0 0.0
  %3048 = vmatpush1.msra.mxu0 0.0
  %3049 = vmatprep.subr.mxu0 0.0
  %3050 = vmatpush1.msra.mxu0 0.0
  %3051 = vmatprep.subr.mxu0 0.0
  %3052 = vmatpush1.msra.mxu0 0.0
  %3053 = vmatprep.subr.mxu0 0.0
  %3054 = vmatpush1.msra.mxu0 0.0
  %3055 = vmatprep.subr.mxu0 0.0
  %3056 = vmatpush1.msra.mxu0 0.0
  %3057 = vmatprep.subr.mxu0 0.0
  %3058 = vmatpush1.msra.mxu0 0.0
  %3059 = vmatprep.subr.mxu0 0.0
  %3060 = vmatpush1.msra.mxu0 0.0
  %3061 = vmatprep.subr.mxu0 0.0
  %3062 = vmatpush1.msra.mxu0 0.0
  %3063 = vmatprep.subr.mxu0 0.0
  %3064 = vmatpush1.msra.mxu0 0.0
  %3065 = vmatprep.subr.mxu0 0.0
  %3066 = vmatpush1.msra.mxu0 0.0
  %3067 = vmatprep.subr.mxu0 0.0
  %3068 = vmatpush1.msra.mxu0 0.0
  %3069 = vmatprep.subr.mxu0 0.0
  %3070 = vmatpush1.msra.mxu0 0.0
  %3071 = vmatprep.subr.mxu0 0.0
  %3072 = vmatpush1.msra.mxu0 0.0
  %3073 = vmatprep.subr.mxu0 0.0
  %3074 = vmatpush1.msra.mxu0 0.0
  %3075 = vmatprep.subr.mxu0 0.0
  %3076 = vmatpush1.msra.mxu0 0.0
  %3077 = vmatprep.subr.mxu0 0.0
  %3078 = vmatpush1.msra.mxu0 0.0
  %3079 = vmatprep.subr.mxu0 0.0
  %3080 = vmatpush1.msra.mxu0 0.0
  %3081 = vmatprep.subr.mxu0 0.0
  %3082 = vmatpush1.msra.mxu0 0.0
  %3083 = vmatprep.subr.mxu0 0.0
  %3084 = vmatpush1.msra.mxu0 0.0
  %3085 = vmatprep.subr.mxu0 0.0
  %3086 = vmatpush1.msra.mxu0 0.0
  %3087 = vmatprep.subr.mxu0 0.0
  %3088 = vmatpush1.msra.mxu0 0.0
  %3089 = vmatprep.subr.mxu0 0.0
  %3090 = vmatpush1.msra.mxu0 0.0
  %3091 = vmatprep.subr.mxu0 0.0
  %3092 = vmatpush1.msra.mxu0 0.0
  %3093 = vmatprep.subr.mxu0 0.0
  %3094 = vmatpush1.msra.mxu0 0.0
  %3095 = vmatprep.mubr.f32.mxu0 0.0
  %3096 = vmatmul.mubr.f32.gmra.mrb[0].mxu0 %v3008
  %v3097 = vpop.f32.mrb[0].mxu0
  %v3098 = vadd.f32 0.0, %v3097
  %v3099 = vpop.f32.mrb[0].mxu0
  %3100 = vmatprep.mubr.f32.mxu0 0.0
  %3101 = vmatmul.mubr.f32.gmra.mrb[0].mxu0 %v3011
  %v3102 = vpop.f32.mrb[0].mxu0
  %v3103 = vadd.f32 0.0, %v3102
  %v3104 = vpop.f32.mrb[0].mxu0
  %3105 = vmatprep.mubr.f32.mxu0 0.0
  %3106 = vmatmul.mubr.f32.gmra.mrb[0].mxu0 %v3014
  %v3107 = vpop.f32.mrb[0].mxu0
  %v3108 = vadd.f32 0.0, %v3107
  %v3109 = vpop.f32.mrb[0].mxu0
  %3110 = vmatprep.mubr.f32.mxu0 0.0
  %3111 = vmatmul.mubr.f32.gmra.mrb[0].mxu0 %v3017
  %v3112 = vpop.f32.mrb[0].mxu0
  %v3113 = vadd.f32 0.0, %v3112
  %v3114 = vpop.f32.mrb[0].mxu0
  %3115 = vmatprep.mubr.f32.mxu0 0.0
  %3116 = vmatmul.mubr.f32.gmra.mrb[0].mxu0 %v3020
  %v3117 = vpop.f32.mrb[0].mxu0
  %v3118 = vadd.f32 0.0, %v3117
  %v3119 = vpop.f32.mrb[0].mxu0
  %3120 = vmatprep.mubr.f32.mxu0 0.0
  %3121 = vmatmul.mubr.f32.gmra.mrb[0].mxu0 %v3023
  %v3122 = vpop.f32.mrb[0].mxu0
  %v3123 = vadd.f32 0.0, %v3122
  %v3124 = vpop.f32.mrb[0].mxu0
  %3125 = vmatprep.mubr.f32.mxu0 0.0
  %3126 = vmatmul.mubr.f32.gmra.mrb[0].mxu0 %v3026
  %v3127 = vpop.f32.mrb[0].mxu0
  %v3128 = vadd.f32 0.0, %v3127
  %v3129 = vpop.f32.mrb[0].mxu0
  %3130 = vmatprep.mubr.f32.mxu0 0.0
  %3131 = vmatmul.mubr.f32.gmra.mrb[0].mxu0 %v3029
  %v3132 = vpop.f32.mrb[0].mxu0
  %v3133 = vadd.f32 0.0, %v3132
  %v3134 = vpop.f32.mrb[0].mxu0
  %3135 = vdwg.mxu0
  %v3136 = vadd.f32 %v2888, %v3098
  %v3137 = vadd.f32 %v2889, %v3103
  %v3138 = vadd.f32 %v2890, %v3108
  %v3139 = vadd.f32 %v2891, %v3113
  %v3140 = vadd.f32 %v2892, %v3118
  %v3141 = vadd.f32 %v2893, %v3123
  %v3142 = vadd.f32 %v2894, %v3128
  %v3143 = vadd.f32 %v2895, %v3133
  %s3144 = scalar_lea.vmem %s7, 1536
  %v3145 = vld [vmem:[%s3144] sm:$0xff]
  %v3146 = vld [vmem:[%s3144 + $0x8] sm:$0xff]
  %v3147 = vld [vmem:[%s3144 + $0x10] sm:$0xff]
  %v3148 = vld [vmem:[%s3144 + $0x18] sm:$0xff]
  %v3149 = vld [vmem:[%s3144 + $0x20] sm:$0xff]
  %v3150 = vld [vmem:[%s3144 + $0x28] sm:$0xff]
  %v3151 = vld [vmem:[%s3144 + $0x30] sm:$0xff]
  %v3152 = vld [vmem:[%s3144 + $0x38] sm:$0xff]
  %v3153 = vld [vmem:[%s3144 + $0x40] sm:$0xff]
  %v3154 = vld [vmem:[%s3144 + $0x48] sm:$0xff]
  %v3155 = vld [vmem:[%s3144 + $0x50] sm:$0xff]
  %v3156 = vld [vmem:[%s3144 + $0x58] sm:$0xff]
  %v3157 = vld [vmem:[%s3144 + $0x60] sm:$0xff]
  %v3158 = vld [vmem:[%s3144 + $0x68] sm:$0xff]
  %v3159 = vld [vmem:[%s3144 + $0x70] sm:$0xff]
  %v3160 = vld [vmem:[%s3144 + $0x78] sm:$0xff]
  %3161 = vmatprep.subr.mxu0 0.0
  %3162 = vmatpush1.msra.mxu0 %v3145
  %3163 = vmatprep.subr.mxu0 0.0
  %3164 = vmatpush1.msra.mxu0 %v3146
  %3165 = vmatprep.subr.mxu0 0.0
  %3166 = vmatpush1.msra.mxu0 %v3147
  %3167 = vmatprep.subr.mxu0 0.0
  %3168 = vmatpush1.msra.mxu0 %v3148
  %3169 = vmatprep.subr.mxu0 0.0
  %3170 = vmatpush1.msra.mxu0 %v3149
  %3171 = vmatprep.subr.mxu0 0.0
  %3172 = vmatpush1.msra.mxu0 %v3150
  %3173 = vmatprep.subr.mxu0 0.0
  %3174 = vmatpush1.msra.mxu0 %v3151
  %3175 = vmatprep.subr.mxu0 0.0
  %3176 = vmatpush1.msra.mxu0 %v3152
  %3177 = vmatprep.subr.mxu0 0.0
  %3178 = vmatpush1.msra.mxu0 %v3153
  %3179 = vmatprep.subr.mxu0 0.0
  %3180 = vmatpush1.msra.mxu0 %v3154
  %3181 = vmatprep.subr.mxu0 0.0
  %3182 = vmatpush1.msra.mxu0 %v3155
  %3183 = vmatprep.subr.mxu0 0.0
  %3184 = vmatpush1.msra.mxu0 %v3156
  %3185 = vmatprep.subr.mxu0 0.0
  %3186 = vmatpush1.msra.mxu0 %v3157
  %3187 = vmatprep.subr.mxu0 0.0
  %3188 = vmatpush1.msra.mxu0 %v3158
  %3189 = vmatprep.subr.mxu0 0.0
  %3190 = vmatpush1.msra.mxu0 %v3159
  %3191 = vmatprep.subr.mxu0 0.0
  %3192 = vmatpush1.msra.mxu0 %v3160
  %3193 = vmatprep.subr.mxu0 0.0
  %3194 = vmatpush1.msra.mxu0 0.0
  %3195 = vmatprep.subr.mxu0 0.0
  %3196 = vmatpush1.msra.mxu0 0.0
  %3197 = vmatprep.subr.mxu0 0.0
  %3198 = vmatpush1.msra.mxu0 0.0
  %3199 = vmatprep.subr.mxu0 0.0
  %3200 = vmatpush1.msra.mxu0 0.0
  %3201 = vmatprep.subr.mxu0 0.0
  %3202 = vmatpush1.msra.mxu0 0.0
  %3203 = vmatprep.subr.mxu0 0.0
  %3204 = vmatpush1.msra.mxu0 0.0
  %3205 = vmatprep.subr.mxu0 0.0
  %3206 = vmatpush1.msra.mxu0 0.0
  %3207 = vmatprep.subr.mxu0 0.0
  %3208 = vmatpush1.msra.mxu0 0.0
  %3209 = vmatprep.subr.mxu0 0.0
  %3210 = vmatpush1.msra.mxu0 0.0
  %3211 = vmatprep.subr.mxu0 0.0
  %3212 = vmatpush1.msra.mxu0 0.0
  %3213 = vmatprep.subr.mxu0 0.0
  %3214 = vmatpush1.msra.mxu0 0.0
  %3215 = vmatprep.subr.mxu0 0.0
  %3216 = vmatpush1.msra.mxu0 0.0
  %3217 = vmatprep.subr.mxu0 0.0
  %3218 = vmatpush1.msra.mxu0 0.0
  %3219 = vmatprep.subr.mxu0 0.0
  %3220 = vmatpush1.msra.mxu0 0.0
  %3221 = vmatprep.subr.mxu0 0.0
  %3222 = vmatpush1.msra.mxu0 0.0
  %3223 = vmatprep.subr.mxu0 0.0
  %3224 = vmatpush1.msra.mxu0 0.0
  %3225 = vmatprep.mubr.f32.mxu0 0.0
  %3226 = vmatmul.mubr.f32.gmra.mrb[0].mxu0 %v181
  %v3227 = vpop.f32.mrb[0].mxu0
  %v3228 = vadd.f32 0.0, %v3227
  %v3229 = vpop.f32.mrb[0].mxu0
  %3230 = vmatprep.mubr.f32.mxu0 0.0
  %3231 = vmatmul.mubr.f32.gmra.mrb[0].mxu0 %v182
  %v3232 = vpop.f32.mrb[0].mxu0
  %v3233 = vadd.f32 0.0, %v3232
  %v3234 = vpop.f32.mrb[0].mxu0
  %3235 = vmatprep.mubr.f32.mxu0 0.0
  %3236 = vmatmul.mubr.f32.gmra.mrb[0].mxu0 %v183
  %v3237 = vpop.f32.mrb[0].mxu0
  %v3238 = vadd.f32 0.0, %v3237
  %v3239 = vpop.f32.mrb[0].mxu0
  %3240 = vmatprep.mubr.f32.mxu0 0.0
  %3241 = vmatmul.mubr.f32.gmra.mrb[0].mxu0 %v184
  %v3242 = vpop.f32.mrb[0].mxu0
  %v3243 = vadd.f32 0.0, %v3242
  %v3244 = vpop.f32.mrb[0].mxu0
  %3245 = vdwg.mxu0
  %s3246 = scalar_lea.vmem %s5, 768
  %v3247 = vld [vmem:[%s3246] sm:$0xff]
  %v3248 = vld [vmem:[%s3246 + $0x8] sm:$0xff]
  %v3249 = vld [vmem:[%s3246 + $0x10] sm:$0xff]
  %v3250 = vld [vmem:[%s3246 + $0x18] sm:$0xff]
  %v3251 = vld [vmem:[%s3246 + $0x20] sm:$0xff]
  %v3252 = vld [vmem:[%s3246 + $0x28] sm:$0xff]
  %v3253 = vld [vmem:[%s3246 + $0x30] sm:$0xff]
  %v3254 = vld [vmem:[%s3246 + $0x38] sm:$0xff]
  %v3256 = vsel %vm405, %v3247, 0
  %v3259 = vsel %vm405, %v3248, 0
  %v3262 = vsel %vm405, %v3249, 0
  %v3265 = vsel %vm405, %v3250, 0
  %v3268 = vsel %vm405, %v3251, 0
  %v3271 = vsel %vm405, %v3252, 0
  %v3274 = vsel %vm405, %v3253, 0
  %v3277 = vsel %vm405, %v3254, 0
  %3279 = vmatprep.subr.mxu0 0.0
  %3280 = vmatpush1.msra.mxu0 %v3228
  %3281 = vmatprep.subr.mxu0 0.0
  %3282 = vmatpush1.msra.mxu0 %v3233
  %3283 = vmatprep.subr.mxu0 0.0
  %3284 = vmatpush1.msra.mxu0 %v3238
  %3285 = vmatprep.subr.mxu0 0.0
  %3286 = vmatpush1.msra.mxu0 %v3243
  %3287 = vmatprep.subr.mxu0 0.0
  %3288 = vmatpush1.msra.mxu0 0.0
  %3289 = vmatprep.subr.mxu0 0.0
  %3290 = vmatpush1.msra.mxu0 0.0
  %3291 = vmatprep.subr.mxu0 0.0
  %3292 = vmatpush1.msra.mxu0 0.0
  %3293 = vmatprep.subr.mxu0 0.0
  %3294 = vmatpush1.msra.mxu0 0.0
  %3295 = vmatprep.subr.mxu0 0.0
  %3296 = vmatpush1.msra.mxu0 0.0
  %3297 = vmatprep.subr.mxu0 0.0
  %3298 = vmatpush1.msra.mxu0 0.0
  %3299 = vmatprep.subr.mxu0 0.0
  %3300 = vmatpush1.msra.mxu0 0.0
  %3301 = vmatprep.subr.mxu0 0.0
  %3302 = vmatpush1.msra.mxu0 0.0
  %3303 = vmatprep.subr.mxu0 0.0
  %3304 = vmatpush1.msra.mxu0 0.0
  %3305 = vmatprep.subr.mxu0 0.0
  %3306 = vmatpush1.msra.mxu0 0.0
  %3307 = vmatprep.subr.mxu0 0.0
  %3308 = vmatpush1.msra.mxu0 0.0
  %3309 = vmatprep.subr.mxu0 0.0
  %3310 = vmatpush1.msra.mxu0 0.0
  %3311 = vmatprep.subr.mxu0 0.0
  %3312 = vmatpush1.msra.mxu0 0.0
  %3313 = vmatprep.subr.mxu0 0.0
  %3314 = vmatpush1.msra.mxu0 0.0
  %3315 = vmatprep.subr.mxu0 0.0
  %3316 = vmatpush1.msra.mxu0 0.0
  %3317 = vmatprep.subr.mxu0 0.0
  %3318 = vmatpush1.msra.mxu0 0.0
  %3319 = vmatprep.subr.mxu0 0.0
  %3320 = vmatpush1.msra.mxu0 0.0
  %3321 = vmatprep.subr.mxu0 0.0
  %3322 = vmatpush1.msra.mxu0 0.0
  %3323 = vmatprep.subr.mxu0 0.0
  %3324 = vmatpush1.msra.mxu0 0.0
  %3325 = vmatprep.subr.mxu0 0.0
  %3326 = vmatpush1.msra.mxu0 0.0
  %3327 = vmatprep.subr.mxu0 0.0
  %3328 = vmatpush1.msra.mxu0 0.0
  %3329 = vmatprep.subr.mxu0 0.0
  %3330 = vmatpush1.msra.mxu0 0.0
  %3331 = vmatprep.subr.mxu0 0.0
  %3332 = vmatpush1.msra.mxu0 0.0
  %3333 = vmatprep.subr.mxu0 0.0
  %3334 = vmatpush1.msra.mxu0 0.0
  %3335 = vmatprep.subr.mxu0 0.0
  %3336 = vmatpush1.msra.mxu0 0.0
  %3337 = vmatprep.subr.mxu0 0.0
  %3338 = vmatpush1.msra.mxu0 0.0
  %3339 = vmatprep.subr.mxu0 0.0
  %3340 = vmatpush1.msra.mxu0 0.0
  %3341 = vmatprep.subr.mxu0 0.0
  %3342 = vmatpush1.msra.mxu0 0.0
  %3343 = vmatprep.mubr.f32.mxu0 0.0
  %3344 = vmatmul.mubr.f32.gmra.mrb[0].mxu0 %v3256
  %v3345 = vpop.f32.mrb[0].mxu0
  %v3346 = vadd.f32 0.0, %v3345
  %v3347 = vpop.f32.mrb[0].mxu0
  %3348 = vmatprep.mubr.f32.mxu0 0.0
  %3349 = vmatmul.mubr.f32.gmra.mrb[0].mxu0 %v3259
  %v3350 = vpop.f32.mrb[0].mxu0
  %v3351 = vadd.f32 0.0, %v3350
  %v3352 = vpop.f32.mrb[0].mxu0
  %3353 = vmatprep.mubr.f32.mxu0 0.0
  %3354 = vmatmul.mubr.f32.gmra.mrb[0].mxu0 %v3262
  %v3355 = vpop.f32.mrb[0].mxu0
  %v3356 = vadd.f32 0.0, %v3355
  %v3357 = vpop.f32.mrb[0].mxu0
  %3358 = vmatprep.mubr.f32.mxu0 0.0
  %3359 = vmatmul.mubr.f32.gmra.mrb[0].mxu0 %v3265
  %v3360 = vpop.f32.mrb[0].mxu0
  %v3361 = vadd.f32 0.0, %v3360
  %v3362 = vpop.f32.mrb[0].mxu0
  %3363 = vmatprep.mubr.f32.mxu0 0.0
  %3364 = vmatmul.mubr.f32.gmra.mrb[0].mxu0 %v3268
  %v3365 = vpop.f32.mrb[0].mxu0
  %v3366 = vadd.f32 0.0, %v3365
  %v3367 = vpop.f32.mrb[0].mxu0
  %3368 = vmatprep.mubr.f32.mxu0 0.0
  %3369 = vmatmul.mubr.f32.gmra.mrb[0].mxu0 %v3271
  %v3370 = vpop.f32.mrb[0].mxu0
  %v3371 = vadd.f32 0.0, %v3370
  %v3372 = vpop.f32.mrb[0].mxu0
  %3373 = vmatprep.mubr.f32.mxu0 0.0
  %3374 = vmatmul.mubr.f32.gmra.mrb[0].mxu0 %v3274
  %v3375 = vpop.f32.mrb[0].mxu0
  %v3376 = vadd.f32 0.0, %v3375
  %v3377 = vpop.f32.mrb[0].mxu0
  %3378 = vmatprep.mubr.f32.mxu0 0.0
  %3379 = vmatmul.mubr.f32.gmra.mrb[0].mxu0 %v3277
  %v3380 = vpop.f32.mrb[0].mxu0
  %v3381 = vadd.f32 0.0, %v3380
  %v3382 = vpop.f32.mrb[0].mxu0
  %3383 = vdwg.mxu0
  %v3384 = vadd.f32 %v3136, %v3346
  %v3385 = vadd.f32 %v3137, %v3351
  %v3386 = vadd.f32 %v3138, %v3356
  %v3387 = vadd.f32 %v3139, %v3361
  %v3388 = vadd.f32 %v3140, %v3366
  %v3389 = vadd.f32 %v3141, %v3371
  %v3390 = vadd.f32 %v3142, %v3376
  %v3391 = vadd.f32 %v3143, %v3381
  %s3392 = scalar_lea.vmem %s7, 1664
  %v3393 = vld [vmem:[%s3392] sm:$0xff]
  %v3394 = vld [vmem:[%s3392 + $0x8] sm:$0xff]
  %v3395 = vld [vmem:[%s3392 + $0x10] sm:$0xff]
  %v3396 = vld [vmem:[%s3392 + $0x18] sm:$0xff]
  %v3397 = vld [vmem:[%s3392 + $0x20] sm:$0xff]
  %v3398 = vld [vmem:[%s3392 + $0x28] sm:$0xff]
  %v3399 = vld [vmem:[%s3392 + $0x30] sm:$0xff]
  %v3400 = vld [vmem:[%s3392 + $0x38] sm:$0xff]
  %v3401 = vld [vmem:[%s3392 + $0x40] sm:$0xff]
  %v3402 = vld [vmem:[%s3392 + $0x48] sm:$0xff]
  %v3403 = vld [vmem:[%s3392 + $0x50] sm:$0xff]
  %v3404 = vld [vmem:[%s3392 + $0x58] sm:$0xff]
  %v3405 = vld [vmem:[%s3392 + $0x60] sm:$0xff]
  %v3406 = vld [vmem:[%s3392 + $0x68] sm:$0xff]
  %v3407 = vld [vmem:[%s3392 + $0x70] sm:$0xff]
  %v3408 = vld [vmem:[%s3392 + $0x78] sm:$0xff]
  %3409 = vmatprep.subr.mxu0 0.0
  %3410 = vmatpush1.msra.mxu0 %v3393
  %3411 = vmatprep.subr.mxu0 0.0
  %3412 = vmatpush1.msra.mxu0 %v3394
  %3413 = vmatprep.subr.mxu0 0.0
  %3414 = vmatpush1.msra.mxu0 %v3395
  %3415 = vmatprep.subr.mxu0 0.0
  %3416 = vmatpush1.msra.mxu0 %v3396
  %3417 = vmatprep.subr.mxu0 0.0
  %3418 = vmatpush1.msra.mxu0 %v3397
  %3419 = vmatprep.subr.mxu0 0.0
  %3420 = vmatpush1.msra.mxu0 %v3398
  %3421 = vmatprep.subr.mxu0 0.0
  %3422 = vmatpush1.msra.mxu0 %v3399
  %3423 = vmatprep.subr.mxu0 0.0
  %3424 = vmatpush1.msra.mxu0 %v3400
  %3425 = vmatprep.subr.mxu0 0.0
  %3426 = vmatpush1.msra.mxu0 %v3401
  %3427 = vmatprep.subr.mxu0 0.0
  %3428 = vmatpush1.msra.mxu0 %v3402
  %3429 = vmatprep.subr.mxu0 0.0
  %3430 = vmatpush1.msra.mxu0 %v3403
  %3431 = vmatprep.subr.mxu0 0.0
  %3432 = vmatpush1.msra.mxu0 %v3404
  %3433 = vmatprep.subr.mxu0 0.0
  %3434 = vmatpush1.msra.mxu0 %v3405
  %3435 = vmatprep.subr.mxu0 0.0
  %3436 = vmatpush1.msra.mxu0 %v3406
  %3437 = vmatprep.subr.mxu0 0.0
  %3438 = vmatpush1.msra.mxu0 %v3407
  %3439 = vmatprep.subr.mxu0 0.0
  %3440 = vmatpush1.msra.mxu0 %v3408
  %3441 = vmatprep.subr.mxu0 0.0
  %3442 = vmatpush1.msra.mxu0 0.0
  %3443 = vmatprep.subr.mxu0 0.0
  %3444 = vmatpush1.msra.mxu0 0.0
  %3445 = vmatprep.subr.mxu0 0.0
  %3446 = vmatpush1.msra.mxu0 0.0
  %3447 = vmatprep.subr.mxu0 0.0
  %3448 = vmatpush1.msra.mxu0 0.0
  %3449 = vmatprep.subr.mxu0 0.0
  %3450 = vmatpush1.msra.mxu0 0.0
  %3451 = vmatprep.subr.mxu0 0.0
  %3452 = vmatpush1.msra.mxu0 0.0
  %3453 = vmatprep.subr.mxu0 0.0
  %3454 = vmatpush1.msra.mxu0 0.0
  %3455 = vmatprep.subr.mxu0 0.0
  %3456 = vmatpush1.msra.mxu0 0.0
  %3457 = vmatprep.subr.mxu0 0.0
  %3458 = vmatpush1.msra.mxu0 0.0
  %3459 = vmatprep.subr.mxu0 0.0
  %3460 = vmatpush1.msra.mxu0 0.0
  %3461 = vmatprep.subr.mxu0 0.0
  %3462 = vmatpush1.msra.mxu0 0.0
  %3463 = vmatprep.subr.mxu0 0.0
  %3464 = vmatpush1.msra.mxu0 0.0
  %3465 = vmatprep.subr.mxu0 0.0
  %3466 = vmatpush1.msra.mxu0 0.0
  %3467 = vmatprep.subr.mxu0 0.0
  %3468 = vmatpush1.msra.mxu0 0.0
  %3469 = vmatprep.subr.mxu0 0.0
  %3470 = vmatpush1.msra.mxu0 0.0
  %3471 = vmatprep.subr.mxu0 0.0
  %3472 = vmatpush1.msra.mxu0 0.0
  %3473 = vmatprep.mubr.f32.mxu0 0.0
  %3474 = vmatmul.mubr.f32.gmra.mrb[0].mxu0 %v181
  %v3475 = vpop.f32.mrb[0].mxu0
  %v3476 = vadd.f32 0.0, %v3475
  %v3477 = vpop.f32.mrb[0].mxu0
  %3478 = vmatprep.mubr.f32.mxu0 0.0
  %3479 = vmatmul.mubr.f32.gmra.mrb[0].mxu0 %v182
  %v3480 = vpop.f32.mrb[0].mxu0
  %v3481 = vadd.f32 0.0, %v3480
  %v3482 = vpop.f32.mrb[0].mxu0
  %3483 = vmatprep.mubr.f32.mxu0 0.0
  %3484 = vmatmul.mubr.f32.gmra.mrb[0].mxu0 %v183
  %v3485 = vpop.f32.mrb[0].mxu0
  %v3486 = vadd.f32 0.0, %v3485
  %v3487 = vpop.f32.mrb[0].mxu0
  %3488 = vmatprep.mubr.f32.mxu0 0.0
  %3489 = vmatmul.mubr.f32.gmra.mrb[0].mxu0 %v184
  %v3490 = vpop.f32.mrb[0].mxu0
  %v3491 = vadd.f32 0.0, %v3490
  %v3492 = vpop.f32.mrb[0].mxu0
  %3493 = vdwg.mxu0
  %s3494 = scalar_lea.vmem %s5, 832
  %v3495 = vld [vmem:[%s3494] sm:$0xff]
  %v3496 = vld [vmem:[%s3494 + $0x8] sm:$0xff]
  %v3497 = vld [vmem:[%s3494 + $0x10] sm:$0xff]
  %v3498 = vld [vmem:[%s3494 + $0x18] sm:$0xff]
  %v3499 = vld [vmem:[%s3494 + $0x20] sm:$0xff]
  %v3500 = vld [vmem:[%s3494 + $0x28] sm:$0xff]
  %v3501 = vld [vmem:[%s3494 + $0x30] sm:$0xff]
  %v3502 = vld [vmem:[%s3494 + $0x38] sm:$0xff]
  %v3504 = vsel %vm405, %v3495, 0
  %v3507 = vsel %vm405, %v3496, 0
  %v3510 = vsel %vm405, %v3497, 0
  %v3513 = vsel %vm405, %v3498, 0
  %v3516 = vsel %vm405, %v3499, 0
  %v3519 = vsel %vm405, %v3500, 0
  %v3522 = vsel %vm405, %v3501, 0
  %v3525 = vsel %vm405, %v3502, 0
  %3527 = vmatprep.subr.mxu0 0.0
  %3528 = vmatpush1.msra.mxu0 %v3476
  %3529 = vmatprep.subr.mxu0 0.0
  %3530 = vmatpush1.msra.mxu0 %v3481
  %3531 = vmatprep.subr.mxu0 0.0
  %3532 = vmatpush1.msra.mxu0 %v3486
  %3533 = vmatprep.subr.mxu0 0.0
  %3534 = vmatpush1.msra.mxu0 %v3491
  %3535 = vmatprep.subr.mxu0 0.0
  %3536 = vmatpush1.msra.mxu0 0.0
  %3537 = vmatprep.subr.mxu0 0.0
  %3538 = vmatpush1.msra.mxu0 0.0
  %3539 = vmatprep.subr.mxu0 0.0
  %3540 = vmatpush1.msra.mxu0 0.0
  %3541 = vmatprep.subr.mxu0 0.0
  %3542 = vmatpush1.msra.mxu0 0.0
  %3543 = vmatprep.subr.mxu0 0.0
  %3544 = vmatpush1.msra.mxu0 0.0
  %3545 = vmatprep.subr.mxu0 0.0
  %3546 = vmatpush1.msra.mxu0 0.0
  %3547 = vmatprep.subr.mxu0 0.0
  %3548 = vmatpush1.msra.mxu0 0.0
  %3549 = vmatprep.subr.mxu0 0.0
  %3550 = vmatpush1.msra.mxu0 0.0
  %3551 = vmatprep.subr.mxu0 0.0
  %3552 = vmatpush1.msra.mxu0 0.0
  %3553 = vmatprep.subr.mxu0 0.0
  %3554 = vmatpush1.msra.mxu0 0.0
  %3555 = vmatprep.subr.mxu0 0.0
  %3556 = vmatpush1.msra.mxu0 0.0
  %3557 = vmatprep.subr.mxu0 0.0
  %3558 = vmatpush1.msra.mxu0 0.0
  %3559 = vmatprep.subr.mxu0 0.0
  %3560 = vmatpush1.msra.mxu0 0.0
  %3561 = vmatprep.subr.mxu0 0.0
  %3562 = vmatpush1.msra.mxu0 0.0
  %3563 = vmatprep.subr.mxu0 0.0
  %3564 = vmatpush1.msra.mxu0 0.0
  %3565 = vmatprep.subr.mxu0 0.0
  %3566 = vmatpush1.msra.mxu0 0.0
  %3567 = vmatprep.subr.mxu0 0.0
  %3568 = vmatpush1.msra.mxu0 0.0
  %3569 = vmatprep.subr.mxu0 0.0
  %3570 = vmatpush1.msra.mxu0 0.0
  %3571 = vmatprep.subr.mxu0 0.0
  %3572 = vmatpush1.msra.mxu0 0.0
  %3573 = vmatprep.subr.mxu0 0.0
  %3574 = vmatpush1.msra.mxu0 0.0
  %3575 = vmatprep.subr.mxu0 0.0
  %3576 = vmatpush1.msra.mxu0 0.0
  %3577 = vmatprep.subr.mxu0 0.0
  %3578 = vmatpush1.msra.mxu0 0.0
  %3579 = vmatprep.subr.mxu0 0.0
  %3580 = vmatpush1.msra.mxu0 0.0
  %3581 = vmatprep.subr.mxu0 0.0
  %3582 = vmatpush1.msra.mxu0 0.0
  %3583 = vmatprep.subr.mxu0 0.0
  %3584 = vmatpush1.msra.mxu0 0.0
  %3585 = vmatprep.subr.mxu0 0.0
  %3586 = vmatpush1.msra.mxu0 0.0
  %3587 = vmatprep.subr.mxu0 0.0
  %3588 = vmatpush1.msra.mxu0 0.0
  %3589 = vmatprep.subr.mxu0 0.0
  %3590 = vmatpush1.msra.mxu0 0.0
  %3591 = vmatprep.mubr.f32.mxu0 0.0
  %3592 = vmatmul.mubr.f32.gmra.mrb[0].mxu0 %v3504
  %v3593 = vpop.f32.mrb[0].mxu0
  %v3594 = vadd.f32 0.0, %v3593
  %v3595 = vpop.f32.mrb[0].mxu0
  %3596 = vmatprep.mubr.f32.mxu0 0.0
  %3597 = vmatmul.mubr.f32.gmra.mrb[0].mxu0 %v3507
  %v3598 = vpop.f32.mrb[0].mxu0
  %v3599 = vadd.f32 0.0, %v3598
  %v3600 = vpop.f32.mrb[0].mxu0
  %3601 = vmatprep.mubr.f32.mxu0 0.0
  %3602 = vmatmul.mubr.f32.gmra.mrb[0].mxu0 %v3510
  %v3603 = vpop.f32.mrb[0].mxu0
  %v3604 = vadd.f32 0.0, %v3603
  %v3605 = vpop.f32.mrb[0].mxu0
  %3606 = vmatprep.mubr.f32.mxu0 0.0
  %3607 = vmatmul.mubr.f32.gmra.mrb[0].mxu0 %v3513
  %v3608 = vpop.f32.mrb[0].mxu0
  %v3609 = vadd.f32 0.0, %v3608
  %v3610 = vpop.f32.mrb[0].mxu0
  %3611 = vmatprep.mubr.f32.mxu0 0.0
  %3612 = vmatmul.mubr.f32.gmra.mrb[0].mxu0 %v3516
  %v3613 = vpop.f32.mrb[0].mxu0
  %v3614 = vadd.f32 0.0, %v3613
  %v3615 = vpop.f32.mrb[0].mxu0
  %3616 = vmatprep.mubr.f32.mxu0 0.0
  %3617 = vmatmul.mubr.f32.gmra.mrb[0].mxu0 %v3519
  %v3618 = vpop.f32.mrb[0].mxu0
  %v3619 = vadd.f32 0.0, %v3618
  %v3620 = vpop.f32.mrb[0].mxu0
  %3621 = vmatprep.mubr.f32.mxu0 0.0
  %3622 = vmatmul.mubr.f32.gmra.mrb[0].mxu0 %v3522
  %v3623 = vpop.f32.mrb[0].mxu0
  %v3624 = vadd.f32 0.0, %v3623
  %v3625 = vpop.f32.mrb[0].mxu0
  %3626 = vmatprep.mubr.f32.mxu0 0.0
  %3627 = vmatmul.mubr.f32.gmra.mrb[0].mxu0 %v3525
  %v3628 = vpop.f32.mrb[0].mxu0
  %v3629 = vadd.f32 0.0, %v3628
  %v3630 = vpop.f32.mrb[0].mxu0
  %3631 = vdwg.mxu0
  %v3632 = vadd.f32 %v3384, %v3594
  %v3633 = vadd.f32 %v3385, %v3599
  %v3634 = vadd.f32 %v3386, %v3604
  %v3635 = vadd.f32 %v3387, %v3609
  %v3636 = vadd.f32 %v3388, %v3614
  %v3637 = vadd.f32 %v3389, %v3619
  %v3638 = vadd.f32 %v3390, %v3624
  %v3639 = vadd.f32 %v3391, %v3629
  %s3640 = scalar_lea.vmem %s7, 1792
  %v3641 = vld [vmem:[%s3640] sm:$0xff]
  %v3642 = vld [vmem:[%s3640 + $0x8] sm:$0xff]
  %v3643 = vld [vmem:[%s3640 + $0x10] sm:$0xff]
  %v3644 = vld [vmem:[%s3640 + $0x18] sm:$0xff]
  %v3645 = vld [vmem:[%s3640 + $0x20] sm:$0xff]
  %v3646 = vld [vmem:[%s3640 + $0x28] sm:$0xff]
  %v3647 = vld [vmem:[%s3640 + $0x30] sm:$0xff]
  %v3648 = vld [vmem:[%s3640 + $0x38] sm:$0xff]
  %v3649 = vld [vmem:[%s3640 + $0x40] sm:$0xff]
  %v3650 = vld [vmem:[%s3640 + $0x48] sm:$0xff]
  %v3651 = vld [vmem:[%s3640 + $0x50] sm:$0xff]
  %v3652 = vld [vmem:[%s3640 + $0x58] sm:$0xff]
  %v3653 = vld [vmem:[%s3640 + $0x60] sm:$0xff]
  %v3654 = vld [vmem:[%s3640 + $0x68] sm:$0xff]
  %v3655 = vld [vmem:[%s3640 + $0x70] sm:$0xff]
  %v3656 = vld [vmem:[%s3640 + $0x78] sm:$0xff]
  %3657 = vmatprep.subr.mxu0 0.0
  %3658 = vmatpush1.msra.mxu0 %v3641
  %3659 = vmatprep.subr.mxu0 0.0
  %3660 = vmatpush1.msra.mxu0 %v3642
  %3661 = vmatprep.subr.mxu0 0.0
  %3662 = vmatpush1.msra.mxu0 %v3643
  %3663 = vmatprep.subr.mxu0 0.0
  %3664 = vmatpush1.msra.mxu0 %v3644
  %3665 = vmatprep.subr.mxu0 0.0
  %3666 = vmatpush1.msra.mxu0 %v3645
  %3667 = vmatprep.subr.mxu0 0.0
  %3668 = vmatpush1.msra.mxu0 %v3646
  %3669 = vmatprep.subr.mxu0 0.0
  %3670 = vmatpush1.msra.mxu0 %v3647
  %3671 = vmatprep.subr.mxu0 0.0
  %3672 = vmatpush1.msra.mxu0 %v3648
  %3673 = vmatprep.subr.mxu0 0.0
  %3674 = vmatpush1.msra.mxu0 %v3649
  %3675 = vmatprep.subr.mxu0 0.0
  %3676 = vmatpush1.msra.mxu0 %v3650
  %3677 = vmatprep.subr.mxu0 0.0
  %3678 = vmatpush1.msra.mxu0 %v3651
  %3679 = vmatprep.subr.mxu0 0.0
  %3680 = vmatpush1.msra.mxu0 %v3652
  %3681 = vmatprep.subr.mxu0 0.0
  %3682 = vmatpush1.msra.mxu0 %v3653
  %3683 = vmatprep.subr.mxu0 0.0
  %3684 = vmatpush1.msra.mxu0 %v3654
  %3685 = vmatprep.subr.mxu0 0.0
  %3686 = vmatpush1.msra.mxu0 %v3655
  %3687 = vmatprep.subr.mxu0 0.0
  %3688 = vmatpush1.msra.mxu0 %v3656
  %3689 = vmatprep.subr.mxu0 0.0
  %3690 = vmatpush1.msra.mxu0 0.0
  %3691 = vmatprep.subr.mxu0 0.0
  %3692 = vmatpush1.msra.mxu0 0.0
  %3693 = vmatprep.subr.mxu0 0.0
  %3694 = vmatpush1.msra.mxu0 0.0
  %3695 = vmatprep.subr.mxu0 0.0
  %3696 = vmatpush1.msra.mxu0 0.0
  %3697 = vmatprep.subr.mxu0 0.0
  %3698 = vmatpush1.msra.mxu0 0.0
  %3699 = vmatprep.subr.mxu0 0.0
  %3700 = vmatpush1.msra.mxu0 0.0
  %3701 = vmatprep.subr.mxu0 0.0
  %3702 = vmatpush1.msra.mxu0 0.0
  %3703 = vmatprep.subr.mxu0 0.0
  %3704 = vmatpush1.msra.mxu0 0.0
  %3705 = vmatprep.subr.mxu0 0.0
  %3706 = vmatpush1.msra.mxu0 0.0
  %3707 = vmatprep.subr.mxu0 0.0
  %3708 = vmatpush1.msra.mxu0 0.0
  %3709 = vmatprep.subr.mxu0 0.0
  %3710 = vmatpush1.msra.mxu0 0.0
  %3711 = vmatprep.subr.mxu0 0.0
  %3712 = vmatpush1.msra.mxu0 0.0
  %3713 = vmatprep.subr.mxu0 0.0
  %3714 = vmatpush1.msra.mxu0 0.0
  %3715 = vmatprep.subr.mxu0 0.0
  %3716 = vmatpush1.msra.mxu0 0.0
  %3717 = vmatprep.subr.mxu0 0.0
  %3718 = vmatpush1.msra.mxu0 0.0
  %3719 = vmatprep.subr.mxu0 0.0
  %3720 = vmatpush1.msra.mxu0 0.0
  %3721 = vmatprep.mubr.f32.mxu0 0.0
  %3722 = vmatmul.mubr.f32.gmra.mrb[0].mxu0 %v181
  %v3723 = vpop.f32.mrb[0].mxu0
  %v3724 = vadd.f32 0.0, %v3723
  %v3725 = vpop.f32.mrb[0].mxu0
  %3726 = vmatprep.mubr.f32.mxu0 0.0
  %3727 = vmatmul.mubr.f32.gmra.mrb[0].mxu0 %v182
  %v3728 = vpop.f32.mrb[0].mxu0
  %v3729 = vadd.f32 0.0, %v3728
  %v3730 = vpop.f32.mrb[0].mxu0
  %3731 = vmatprep.mubr.f32.mxu0 0.0
  %3732 = vmatmul.mubr.f32.gmra.mrb[0].mxu0 %v183
  %v3733 = vpop.f32.mrb[0].mxu0
  %v3734 = vadd.f32 0.0, %v3733
  %v3735 = vpop.f32.mrb[0].mxu0
  %3736 = vmatprep.mubr.f32.mxu0 0.0
  %3737 = vmatmul.mubr.f32.gmra.mrb[0].mxu0 %v184
  %v3738 = vpop.f32.mrb[0].mxu0
  %v3739 = vadd.f32 0.0, %v3738
  %v3740 = vpop.f32.mrb[0].mxu0
  %3741 = vdwg.mxu0
  %s3742 = scalar_lea.vmem %s5, 896
  %v3743 = vld [vmem:[%s3742] sm:$0xff]
  %v3744 = vld [vmem:[%s3742 + $0x8] sm:$0xff]
  %v3745 = vld [vmem:[%s3742 + $0x10] sm:$0xff]
  %v3746 = vld [vmem:[%s3742 + $0x18] sm:$0xff]
  %v3747 = vld [vmem:[%s3742 + $0x20] sm:$0xff]
  %v3748 = vld [vmem:[%s3742 + $0x28] sm:$0xff]
  %v3749 = vld [vmem:[%s3742 + $0x30] sm:$0xff]
  %v3750 = vld [vmem:[%s3742 + $0x38] sm:$0xff]
  %v3752 = vsel %vm405, %v3743, 0
  %v3755 = vsel %vm405, %v3744, 0
  %v3758 = vsel %vm405, %v3745, 0
  %v3761 = vsel %vm405, %v3746, 0
  %v3764 = vsel %vm405, %v3747, 0
  %v3767 = vsel %vm405, %v3748, 0
  %v3770 = vsel %vm405, %v3749, 0
  %v3773 = vsel %vm405, %v3750, 0
  %3775 = vmatprep.subr.mxu0 0.0
  %3776 = vmatpush1.msra.mxu0 %v3724
  %3777 = vmatprep.subr.mxu0 0.0
  %3778 = vmatpush1.msra.mxu0 %v3729
  %3779 = vmatprep.subr.mxu0 0.0
  %3780 = vmatpush1.msra.mxu0 %v3734
  %3781 = vmatprep.subr.mxu0 0.0
  %3782 = vmatpush1.msra.mxu0 %v3739
  %3783 = vmatprep.subr.mxu0 0.0
  %3784 = vmatpush1.msra.mxu0 0.0
  %3785 = vmatprep.subr.mxu0 0.0
  %3786 = vmatpush1.msra.mxu0 0.0
  %3787 = vmatprep.subr.mxu0 0.0
  %3788 = vmatpush1.msra.mxu0 0.0
  %3789 = vmatprep.subr.mxu0 0.0
  %3790 = vmatpush1.msra.mxu0 0.0
  %3791 = vmatprep.subr.mxu0 0.0
  %3792 = vmatpush1.msra.mxu0 0.0
  %3793 = vmatprep.subr.mxu0 0.0
  %3794 = vmatpush1.msra.mxu0 0.0
  %3795 = vmatprep.subr.mxu0 0.0
  %3796 = vmatpush1.msra.mxu0 0.0
  %3797 = vmatprep.subr.mxu0 0.0
  %3798 = vmatpush1.msra.mxu0 0.0
  %3799 = vmatprep.subr.mxu0 0.0
  %3800 = vmatpush1.msra.mxu0 0.0
  %3801 = vmatprep.subr.mxu0 0.0
  %3802 = vmatpush1.msra.mxu0 0.0
  %3803 = vmatprep.subr.mxu0 0.0
  %3804 = vmatpush1.msra.mxu0 0.0
  %3805 = vmatprep.subr.mxu0 0.0
  %3806 = vmatpush1.msra.mxu0 0.0
  %3807 = vmatprep.subr.mxu0 0.0
  %3808 = vmatpush1.msra.mxu0 0.0
  %3809 = vmatprep.subr.mxu0 0.0
  %3810 = vmatpush1.msra.mxu0 0.0
  %3811 = vmatprep.subr.mxu0 0.0
  %3812 = vmatpush1.msra.mxu0 0.0
  %3813 = vmatprep.subr.mxu0 0.0
  %3814 = vmatpush1.msra.mxu0 0.0
  %3815 = vmatprep.subr.mxu0 0.0
  %3816 = vmatpush1.msra.mxu0 0.0
  %3817 = vmatprep.subr.mxu0 0.0
  %3818 = vmatpush1.msra.mxu0 0.0
  %3819 = vmatprep.subr.mxu0 0.0
  %3820 = vmatpush1.msra.mxu0 0.0
  %3821 = vmatprep.subr.mxu0 0.0
  %3822 = vmatpush1.msra.mxu0 0.0
  %3823 = vmatprep.subr.mxu0 0.0
  %3824 = vmatpush1.msra.mxu0 0.0
  %3825 = vmatprep.subr.mxu0 0.0
  %3826 = vmatpush1.msra.mxu0 0.0
  %3827 = vmatprep.subr.mxu0 0.0
  %3828 = vmatpush1.msra.mxu0 0.0
  %3829 = vmatprep.subr.mxu0 0.0
  %3830 = vmatpush1.msra.mxu0 0.0
  %3831 = vmatprep.subr.mxu0 0.0
  %3832 = vmatpush1.msra.mxu0 0.0
  %3833 = vmatprep.subr.mxu0 0.0
  %3834 = vmatpush1.msra.mxu0 0.0
  %3835 = vmatprep.subr.mxu0 0.0
  %3836 = vmatpush1.msra.mxu0 0.0
  %3837 = vmatprep.subr.mxu0 0.0
  %3838 = vmatpush1.msra.mxu0 0.0
  %3839 = vmatprep.mubr.f32.mxu0 0.0
  %3840 = vmatmul.mubr.f32.gmra.mrb[0].mxu0 %v3752
  %v3841 = vpop.f32.mrb[0].mxu0
  %v3842 = vadd.f32 0.0, %v3841
  %v3843 = vpop.f32.mrb[0].mxu0
  %3844 = vmatprep.mubr.f32.mxu0 0.0
  %3845 = vmatmul.mubr.f32.gmra.mrb[0].mxu0 %v3755
  %v3846 = vpop.f32.mrb[0].mxu0
  %v3847 = vadd.f32 0.0, %v3846
  %v3848 = vpop.f32.mrb[0].mxu0
  %3849 = vmatprep.mubr.f32.mxu0 0.0
  %3850 = vmatmul.mubr.f32.gmra.mrb[0].mxu0 %v3758
  %v3851 = vpop.f32.mrb[0].mxu0
  %v3852 = vadd.f32 0.0, %v3851
  %v3853 = vpop.f32.mrb[0].mxu0
  %3854 = vmatprep.mubr.f32.mxu0 0.0
  %3855 = vmatmul.mubr.f32.gmra.mrb[0].mxu0 %v3761
  %v3856 = vpop.f32.mrb[0].mxu0
  %v3857 = vadd.f32 0.0, %v3856
  %v3858 = vpop.f32.mrb[0].mxu0
  %3859 = vmatprep.mubr.f32.mxu0 0.0
  %3860 = vmatmul.mubr.f32.gmra.mrb[0].mxu0 %v3764
  %v3861 = vpop.f32.mrb[0].mxu0
  %v3862 = vadd.f32 0.0, %v3861
  %v3863 = vpop.f32.mrb[0].mxu0
  %3864 = vmatprep.mubr.f32.mxu0 0.0
  %3865 = vmatmul.mubr.f32.gmra.mrb[0].mxu0 %v3767
  %v3866 = vpop.f32.mrb[0].mxu0
  %v3867 = vadd.f32 0.0, %v3866
  %v3868 = vpop.f32.mrb[0].mxu0
  %3869 = vmatprep.mubr.f32.mxu0 0.0
  %3870 = vmatmul.mubr.f32.gmra.mrb[0].mxu0 %v3770
  %v3871 = vpop.f32.mrb[0].mxu0
  %v3872 = vadd.f32 0.0, %v3871
  %v3873 = vpop.f32.mrb[0].mxu0
  %3874 = vmatprep.mubr.f32.mxu0 0.0
  %3875 = vmatmul.mubr.f32.gmra.mrb[0].mxu0 %v3773
  %v3876 = vpop.f32.mrb[0].mxu0
  %v3877 = vadd.f32 0.0, %v3876
  %v3878 = vpop.f32.mrb[0].mxu0
  %3879 = vdwg.mxu0
  %v3880 = vadd.f32 %v3632, %v3842
  %v3881 = vadd.f32 %v3633, %v3847
  %v3882 = vadd.f32 %v3634, %v3852
  %v3883 = vadd.f32 %v3635, %v3857
  %v3884 = vadd.f32 %v3636, %v3862
  %v3885 = vadd.f32 %v3637, %v3867
  %v3886 = vadd.f32 %v3638, %v3872
  %v3887 = vadd.f32 %v3639, %v3877
  %s3888 = scalar_lea.vmem %s7, 1920
  %v3889 = vld [vmem:[%s3888] sm:$0xff]
  %v3890 = vld [vmem:[%s3888 + $0x8] sm:$0xff]
  %v3891 = vld [vmem:[%s3888 + $0x10] sm:$0xff]
  %v3892 = vld [vmem:[%s3888 + $0x18] sm:$0xff]
  %v3893 = vld [vmem:[%s3888 + $0x20] sm:$0xff]
  %v3894 = vld [vmem:[%s3888 + $0x28] sm:$0xff]
  %v3895 = vld [vmem:[%s3888 + $0x30] sm:$0xff]
  %v3896 = vld [vmem:[%s3888 + $0x38] sm:$0xff]
  %v3897 = vld [vmem:[%s3888 + $0x40] sm:$0xff]
  %v3898 = vld [vmem:[%s3888 + $0x48] sm:$0xff]
  %v3899 = vld [vmem:[%s3888 + $0x50] sm:$0xff]
  %v3900 = vld [vmem:[%s3888 + $0x58] sm:$0xff]
  %v3901 = vld [vmem:[%s3888 + $0x60] sm:$0xff]
  %v3902 = vld [vmem:[%s3888 + $0x68] sm:$0xff]
  %v3903 = vld [vmem:[%s3888 + $0x70] sm:$0xff]
  %v3904 = vld [vmem:[%s3888 + $0x78] sm:$0xff]
  %3905 = vmatprep.subr.mxu0 0.0
  %3906 = vmatpush1.msra.mxu0 %v3889
  %3907 = vmatprep.subr.mxu0 0.0
  %3908 = vmatpush1.msra.mxu0 %v3890
  %3909 = vmatprep.subr.mxu0 0.0
  %3910 = vmatpush1.msra.mxu0 %v3891
  %3911 = vmatprep.subr.mxu0 0.0
  %3912 = vmatpush1.msra.mxu0 %v3892
  %3913 = vmatprep.subr.mxu0 0.0
  %3914 = vmatpush1.msra.mxu0 %v3893
  %3915 = vmatprep.subr.mxu0 0.0
  %3916 = vmatpush1.msra.mxu0 %v3894
  %3917 = vmatprep.subr.mxu0 0.0
  %3918 = vmatpush1.msra.mxu0 %v3895
  %3919 = vmatprep.subr.mxu0 0.0
  %3920 = vmatpush1.msra.mxu0 %v3896
  %3921 = vmatprep.subr.mxu0 0.0
  %3922 = vmatpush1.msra.mxu0 %v3897
  %3923 = vmatprep.subr.mxu0 0.0
  %3924 = vmatpush1.msra.mxu0 %v3898
  %3925 = vmatprep.subr.mxu0 0.0
  %3926 = vmatpush1.msra.mxu0 %v3899
  %3927 = vmatprep.subr.mxu0 0.0
  %3928 = vmatpush1.msra.mxu0 %v3900
  %3929 = vmatprep.subr.mxu0 0.0
  %3930 = vmatpush1.msra.mxu0 %v3901
  %3931 = vmatprep.subr.mxu0 0.0
  %3932 = vmatpush1.msra.mxu0 %v3902
  %3933 = vmatprep.subr.mxu0 0.0
  %3934 = vmatpush1.msra.mxu0 %v3903
  %3935 = vmatprep.subr.mxu0 0.0
  %3936 = vmatpush1.msra.mxu0 %v3904
  %3937 = vmatprep.subr.mxu0 0.0
  %3938 = vmatpush1.msra.mxu0 0.0
  %3939 = vmatprep.subr.mxu0 0.0
  %3940 = vmatpush1.msra.mxu0 0.0
  %3941 = vmatprep.subr.mxu0 0.0
  %3942 = vmatpush1.msra.mxu0 0.0
  %3943 = vmatprep.subr.mxu0 0.0
  %3944 = vmatpush1.msra.mxu0 0.0
  %3945 = vmatprep.subr.mxu0 0.0
  %3946 = vmatpush1.msra.mxu0 0.0
  %3947 = vmatprep.subr.mxu0 0.0
  %3948 = vmatpush1.msra.mxu0 0.0
  %3949 = vmatprep.subr.mxu0 0.0
  %3950 = vmatpush1.msra.mxu0 0.0
  %3951 = vmatprep.subr.mxu0 0.0
  %3952 = vmatpush1.msra.mxu0 0.0
  %3953 = vmatprep.subr.mxu0 0.0
  %3954 = vmatpush1.msra.mxu0 0.0
  %3955 = vmatprep.subr.mxu0 0.0
  %3956 = vmatpush1.msra.mxu0 0.0
  %3957 = vmatprep.subr.mxu0 0.0
  %3958 = vmatpush1.msra.mxu0 0.0
  %3959 = vmatprep.subr.mxu0 0.0
  %3960 = vmatpush1.msra.mxu0 0.0
  %3961 = vmatprep.subr.mxu0 0.0
  %3962 = vmatpush1.msra.mxu0 0.0
  %3963 = vmatprep.subr.mxu0 0.0
  %3964 = vmatpush1.msra.mxu0 0.0
  %3965 = vmatprep.subr.mxu0 0.0
  %3966 = vmatpush1.msra.mxu0 0.0
  %3967 = vmatprep.subr.mxu0 0.0
  %3968 = vmatpush1.msra.mxu0 0.0
  %3969 = vmatprep.mubr.f32.mxu0 0.0
  %3970 = vmatmul.mubr.f32.gmra.mrb[0].mxu0 %v181
  %v3971 = vpop.f32.mrb[0].mxu0
  %v3972 = vadd.f32 0.0, %v3971
  %v3973 = vpop.f32.mrb[0].mxu0
  %3974 = vmatprep.mubr.f32.mxu0 0.0
  %3975 = vmatmul.mubr.f32.gmra.mrb[0].mxu0 %v182
  %v3976 = vpop.f32.mrb[0].mxu0
  %v3977 = vadd.f32 0.0, %v3976
  %v3978 = vpop.f32.mrb[0].mxu0
  %3979 = vmatprep.mubr.f32.mxu0 0.0
  %3980 = vmatmul.mubr.f32.gmra.mrb[0].mxu0 %v183
  %v3981 = vpop.f32.mrb[0].mxu0
  %v3982 = vadd.f32 0.0, %v3981
  %v3983 = vpop.f32.mrb[0].mxu0
  %3984 = vmatprep.mubr.f32.mxu0 0.0
  %3985 = vmatmul.mubr.f32.gmra.mrb[0].mxu0 %v184
  %v3986 = vpop.f32.mrb[0].mxu0
  %v3987 = vadd.f32 0.0, %v3986
  %v3988 = vpop.f32.mrb[0].mxu0
  %3989 = vdwg.mxu0
  %s3990 = scalar_lea.vmem %s5, 960
  %v3991 = vld [vmem:[%s3990] sm:$0xff]
  %v3992 = vld [vmem:[%s3990 + $0x8] sm:$0xff]
  %v3993 = vld [vmem:[%s3990 + $0x10] sm:$0xff]
  %v3994 = vld [vmem:[%s3990 + $0x18] sm:$0xff]
  %v3995 = vld [vmem:[%s3990 + $0x20] sm:$0xff]
  %v3996 = vld [vmem:[%s3990 + $0x28] sm:$0xff]
  %v3997 = vld [vmem:[%s3990 + $0x30] sm:$0xff]
  %v3998 = vld [vmem:[%s3990 + $0x38] sm:$0xff]
  %v4000 = vsel %vm405, %v3991, 0
  %v4003 = vsel %vm405, %v3992, 0
  %v4006 = vsel %vm405, %v3993, 0
  %v4009 = vsel %vm405, %v3994, 0
  %v4012 = vsel %vm405, %v3995, 0
  %v4015 = vsel %vm405, %v3996, 0
  %v4018 = vsel %vm405, %v3997, 0
  %v4021 = vsel %vm405, %v3998, 0
  %4023 = vmatprep.subr.mxu0 0.0
  %4024 = vmatpush1.msra.mxu0 %v3972
  %4025 = vmatprep.subr.mxu0 0.0
  %4026 = vmatpush1.msra.mxu0 %v3977
  %4027 = vmatprep.subr.mxu0 0.0
  %4028 = vmatpush1.msra.mxu0 %v3982
  %4029 = vmatprep.subr.mxu0 0.0
  %4030 = vmatpush1.msra.mxu0 %v3987
  %4031 = vmatprep.subr.mxu0 0.0
  %4032 = vmatpush1.msra.mxu0 0.0
  %4033 = vmatprep.subr.mxu0 0.0
  %4034 = vmatpush1.msra.mxu0 0.0
  %4035 = vmatprep.subr.mxu0 0.0
  %4036 = vmatpush1.msra.mxu0 0.0
  %4037 = vmatprep.subr.mxu0 0.0
  %4038 = vmatpush1.msra.mxu0 0.0
  %4039 = vmatprep.subr.mxu0 0.0
  %4040 = vmatpush1.msra.mxu0 0.0
  %4041 = vmatprep.subr.mxu0 0.0
  %4042 = vmatpush1.msra.mxu0 0.0
  %4043 = vmatprep.subr.mxu0 0.0
  %4044 = vmatpush1.msra.mxu0 0.0
  %4045 = vmatprep.subr.mxu0 0.0
  %4046 = vmatpush1.msra.mxu0 0.0
  %4047 = vmatprep.subr.mxu0 0.0
  %4048 = vmatpush1.msra.mxu0 0.0
  %4049 = vmatprep.subr.mxu0 0.0
  %4050 = vmatpush1.msra.mxu0 0.0
  %4051 = vmatprep.subr.mxu0 0.0
  %4052 = vmatpush1.msra.mxu0 0.0
  %4053 = vmatprep.subr.mxu0 0.0
  %4054 = vmatpush1.msra.mxu0 0.0
  %4055 = vmatprep.subr.mxu0 0.0
  %4056 = vmatpush1.msra.mxu0 0.0
  %4057 = vmatprep.subr.mxu0 0.0
  %4058 = vmatpush1.msra.mxu0 0.0
  %4059 = vmatprep.subr.mxu0 0.0
  %4060 = vmatpush1.msra.mxu0 0.0
  %4061 = vmatprep.subr.mxu0 0.0
  %4062 = vmatpush1.msra.mxu0 0.0
  %4063 = vmatprep.subr.mxu0 0.0
  %4064 = vmatpush1.msra.mxu0 0.0
  %4065 = vmatprep.subr.mxu0 0.0
  %4066 = vmatpush1.msra.mxu0 0.0
  %4067 = vmatprep.subr.mxu0 0.0
  %4068 = vmatpush1.msra.mxu0 0.0
  %4069 = vmatprep.subr.mxu0 0.0
  %4070 = vmatpush1.msra.mxu0 0.0
  %4071 = vmatprep.subr.mxu0 0.0
  %4072 = vmatpush1.msra.mxu0 0.0
  %4073 = vmatprep.subr.mxu0 0.0
  %4074 = vmatpush1.msra.mxu0 0.0
  %4075 = vmatprep.subr.mxu0 0.0
  %4076 = vmatpush1.msra.mxu0 0.0
  %4077 = vmatprep.subr.mxu0 0.0
  %4078 = vmatpush1.msra.mxu0 0.0
  %4079 = vmatprep.subr.mxu0 0.0
  %4080 = vmatpush1.msra.mxu0 0.0
  %4081 = vmatprep.subr.mxu0 0.0
  %4082 = vmatpush1.msra.mxu0 0.0
  %4083 = vmatprep.subr.mxu0 0.0
  %4084 = vmatpush1.msra.mxu0 0.0
  %4085 = vmatprep.subr.mxu0 0.0
  %4086 = vmatpush1.msra.mxu0 0.0
  %4087 = vmatprep.mubr.f32.mxu0 0.0
  %4088 = vmatmul.mubr.f32.gmra.mrb[0].mxu0 %v4000
  %v4089 = vpop.f32.mrb[0].mxu0
  %v4090 = vadd.f32 0.0, %v4089
  %v4091 = vpop.f32.mrb[0].mxu0
  %4092 = vmatprep.mubr.f32.mxu0 0.0
  %4093 = vmatmul.mubr.f32.gmra.mrb[0].mxu0 %v4003
  %v4094 = vpop.f32.mrb[0].mxu0
  %v4095 = vadd.f32 0.0, %v4094
  %v4096 = vpop.f32.mrb[0].mxu0
  %4097 = vmatprep.mubr.f32.mxu0 0.0
  %4098 = vmatmul.mubr.f32.gmra.mrb[0].mxu0 %v4006
  %v4099 = vpop.f32.mrb[0].mxu0
  %v4100 = vadd.f32 0.0, %v4099
  %v4101 = vpop.f32.mrb[0].mxu0
  %4102 = vmatprep.mubr.f32.mxu0 0.0
  %4103 = vmatmul.mubr.f32.gmra.mrb[0].mxu0 %v4009
  %v4104 = vpop.f32.mrb[0].mxu0
  %v4105 = vadd.f32 0.0, %v4104
  %v4106 = vpop.f32.mrb[0].mxu0
  %4107 = vmatprep.mubr.f32.mxu0 0.0
  %4108 = vmatmul.mubr.f32.gmra.mrb[0].mxu0 %v4012
  %v4109 = vpop.f32.mrb[0].mxu0
  %v4110 = vadd.f32 0.0, %v4109
  %v4111 = vpop.f32.mrb[0].mxu0
  %4112 = vmatprep.mubr.f32.mxu0 0.0
  %4113 = vmatmul.mubr.f32.gmra.mrb[0].mxu0 %v4015
  %v4114 = vpop.f32.mrb[0].mxu0
  %v4115 = vadd.f32 0.0, %v4114
  %v4116 = vpop.f32.mrb[0].mxu0
  %4117 = vmatprep.mubr.f32.mxu0 0.0
  %4118 = vmatmul.mubr.f32.gmra.mrb[0].mxu0 %v4018
  %v4119 = vpop.f32.mrb[0].mxu0
  %v4120 = vadd.f32 0.0, %v4119
  %v4121 = vpop.f32.mrb[0].mxu0
  %4122 = vmatprep.mubr.f32.mxu0 0.0
  %4123 = vmatmul.mubr.f32.gmra.mrb[0].mxu0 %v4021
  %v4124 = vpop.f32.mrb[0].mxu0
  %v4125 = vadd.f32 0.0, %v4124
  %v4126 = vpop.f32.mrb[0].mxu0
  %4127 = vdwg.mxu0
  %v4128 = vadd.f32 %v3880, %v4090
  %v4129 = vadd.f32 %v3881, %v4095
  %v4130 = vadd.f32 %v3882, %v4100
  %v4131 = vadd.f32 %v3883, %v4105
  %v4132 = vadd.f32 %v3884, %v4110
  %v4133 = vadd.f32 %v3885, %v4115
  %v4134 = vadd.f32 %v3886, %v4120
  %v4135 = vadd.f32 %v3887, %v4125
  %s4136 = scalar_lea.vmem %s7, 2048
  %v4137 = vld [vmem:[%s4136] sm:$0xff]
  %v4138 = vld [vmem:[%s4136 + $0x8] sm:$0xff]
  %v4139 = vld [vmem:[%s4136 + $0x10] sm:$0xff]
  %v4140 = vld [vmem:[%s4136 + $0x18] sm:$0xff]
  %v4141 = vld [vmem:[%s4136 + $0x20] sm:$0xff]
  %v4142 = vld [vmem:[%s4136 + $0x28] sm:$0xff]
  %v4143 = vld [vmem:[%s4136 + $0x30] sm:$0xff]
  %v4144 = vld [vmem:[%s4136 + $0x38] sm:$0xff]
  %v4145 = vld [vmem:[%s4136 + $0x40] sm:$0xff]
  %v4146 = vld [vmem:[%s4136 + $0x48] sm:$0xff]
  %v4147 = vld [vmem:[%s4136 + $0x50] sm:$0xff]
  %v4148 = vld [vmem:[%s4136 + $0x58] sm:$0xff]
  %v4149 = vld [vmem:[%s4136 + $0x60] sm:$0xff]
  %v4150 = vld [vmem:[%s4136 + $0x68] sm:$0xff]
  %v4151 = vld [vmem:[%s4136 + $0x70] sm:$0xff]
  %v4152 = vld [vmem:[%s4136 + $0x78] sm:$0xff]
  %4153 = vmatprep.subr.mxu0 0.0
  %4154 = vmatpush1.msra.mxu0 %v4137
  %4155 = vmatprep.subr.mxu0 0.0
  %4156 = vmatpush1.msra.mxu0 %v4138
  %4157 = vmatprep.subr.mxu0 0.0
  %4158 = vmatpush1.msra.mxu0 %v4139
  %4159 = vmatprep.subr.mxu0 0.0
  %4160 = vmatpush1.msra.mxu0 %v4140
  %4161 = vmatprep.subr.mxu0 0.0
  %4162 = vmatpush1.msra.mxu0 %v4141
  %4163 = vmatprep.subr.mxu0 0.0
  %4164 = vmatpush1.msra.mxu0 %v4142
  %4165 = vmatprep.subr.mxu0 0.0
  %4166 = vmatpush1.msra.mxu0 %v4143
  %4167 = vmatprep.subr.mxu0 0.0
  %4168 = vmatpush1.msra.mxu0 %v4144
  %4169 = vmatprep.subr.mxu0 0.0
  %4170 = vmatpush1.msra.mxu0 %v4145
  %4171 = vmatprep.subr.mxu0 0.0
  %4172 = vmatpush1.msra.mxu0 %v4146
  %4173 = vmatprep.subr.mxu0 0.0
  %4174 = vmatpush1.msra.mxu0 %v4147
  %4175 = vmatprep.subr.mxu0 0.0
  %4176 = vmatpush1.msra.mxu0 %v4148
  %4177 = vmatprep.subr.mxu0 0.0
  %4178 = vmatpush1.msra.mxu0 %v4149
  %4179 = vmatprep.subr.mxu0 0.0
  %4180 = vmatpush1.msra.mxu0 %v4150
  %4181 = vmatprep.subr.mxu0 0.0
  %4182 = vmatpush1.msra.mxu0 %v4151
  %4183 = vmatprep.subr.mxu0 0.0
  %4184 = vmatpush1.msra.mxu0 %v4152
  %4185 = vmatprep.subr.mxu0 0.0
  %4186 = vmatpush1.msra.mxu0 0.0
  %4187 = vmatprep.subr.mxu0 0.0
  %4188 = vmatpush1.msra.mxu0 0.0
  %4189 = vmatprep.subr.mxu0 0.0
  %4190 = vmatpush1.msra.mxu0 0.0
  %4191 = vmatprep.subr.mxu0 0.0
  %4192 = vmatpush1.msra.mxu0 0.0
  %4193 = vmatprep.subr.mxu0 0.0
  %4194 = vmatpush1.msra.mxu0 0.0
  %4195 = vmatprep.subr.mxu0 0.0
  %4196 = vmatpush1.msra.mxu0 0.0
  %4197 = vmatprep.subr.mxu0 0.0
  %4198 = vmatpush1.msra.mxu0 0.0
  %4199 = vmatprep.subr.mxu0 0.0
  %4200 = vmatpush1.msra.mxu0 0.0
  %4201 = vmatprep.subr.mxu0 0.0
  %4202 = vmatpush1.msra.mxu0 0.0
  %4203 = vmatprep.subr.mxu0 0.0
  %4204 = vmatpush1.msra.mxu0 0.0
  %4205 = vmatprep.subr.mxu0 0.0
  %4206 = vmatpush1.msra.mxu0 0.0
  %4207 = vmatprep.subr.mxu0 0.0
  %4208 = vmatpush1.msra.mxu0 0.0
  %4209 = vmatprep.subr.mxu0 0.0
  %4210 = vmatpush1.msra.mxu0 0.0
  %4211 = vmatprep.subr.mxu0 0.0
  %4212 = vmatpush1.msra.mxu0 0.0
  %4213 = vmatprep.subr.mxu0 0.0
  %4214 = vmatpush1.msra.mxu0 0.0
  %4215 = vmatprep.subr.mxu0 0.0
  %4216 = vmatpush1.msra.mxu0 0.0
  %4217 = vmatprep.mubr.f32.mxu0 0.0
  %4218 = vmatmul.mubr.f32.gmra.mrb[0].mxu0 %v181
  %v4219 = vpop.f32.mrb[0].mxu0
  %v4220 = vadd.f32 0.0, %v4219
  %v4221 = vpop.f32.mrb[0].mxu0
  %4222 = vmatprep.mubr.f32.mxu0 0.0
  %4223 = vmatmul.mubr.f32.gmra.mrb[0].mxu0 %v182
  %v4224 = vpop.f32.mrb[0].mxu0
  %v4225 = vadd.f32 0.0, %v4224
  %v4226 = vpop.f32.mrb[0].mxu0
  %4227 = vmatprep.mubr.f32.mxu0 0.0
  %4228 = vmatmul.mubr.f32.gmra.mrb[0].mxu0 %v183
  %v4229 = vpop.f32.mrb[0].mxu0
  %v4230 = vadd.f32 0.0, %v4229
  %v4231 = vpop.f32.mrb[0].mxu0
  %4232 = vmatprep.mubr.f32.mxu0 0.0
  %4233 = vmatmul.mubr.f32.gmra.mrb[0].mxu0 %v184
  %v4234 = vpop.f32.mrb[0].mxu0
  %v4235 = vadd.f32 0.0, %v4234
  %v4236 = vpop.f32.mrb[0].mxu0
  %4237 = vdwg.mxu0
  %s4238 = scalar_lea.vmem %s5, 1024
  %v4239 = vld [vmem:[%s4238] sm:$0xff]
  %v4240 = vld [vmem:[%s4238 + $0x8] sm:$0xff]
  %v4241 = vld [vmem:[%s4238 + $0x10] sm:$0xff]
  %v4242 = vld [vmem:[%s4238 + $0x18] sm:$0xff]
  %v4243 = vld [vmem:[%s4238 + $0x20] sm:$0xff]
  %v4244 = vld [vmem:[%s4238 + $0x28] sm:$0xff]
  %v4245 = vld [vmem:[%s4238 + $0x30] sm:$0xff]
  %v4246 = vld [vmem:[%s4238 + $0x38] sm:$0xff]
  %v4248 = vsel %vm405, %v4239, 0
  %v4251 = vsel %vm405, %v4240, 0
  %v4254 = vsel %vm405, %v4241, 0
  %v4257 = vsel %vm405, %v4242, 0
  %v4260 = vsel %vm405, %v4243, 0
  %v4263 = vsel %vm405, %v4244, 0
  %v4266 = vsel %vm405, %v4245, 0
  %v4269 = vsel %vm405, %v4246, 0
  %4271 = vmatprep.subr.mxu0 0.0
  %4272 = vmatpush1.msra.mxu0 %v4220
  %4273 = vmatprep.subr.mxu0 0.0
  %4274 = vmatpush1.msra.mxu0 %v4225
  %4275 = vmatprep.subr.mxu0 0.0
  %4276 = vmatpush1.msra.mxu0 %v4230
  %4277 = vmatprep.subr.mxu0 0.0
  %4278 = vmatpush1.msra.mxu0 %v4235
  %4279 = vmatprep.subr.mxu0 0.0
  %4280 = vmatpush1.msra.mxu0 0.0
  %4281 = vmatprep.subr.mxu0 0.0
  %4282 = vmatpush1.msra.mxu0 0.0
  %4283 = vmatprep.subr.mxu0 0.0
  %4284 = vmatpush1.msra.mxu0 0.0
  %4285 = vmatprep.subr.mxu0 0.0
  %4286 = vmatpush1.msra.mxu0 0.0
  %4287 = vmatprep.subr.mxu0 0.0
  %4288 = vmatpush1.msra.mxu0 0.0
  %4289 = vmatprep.subr.mxu0 0.0
  %4290 = vmatpush1.msra.mxu0 0.0
  %4291 = vmatprep.subr.mxu0 0.0
  %4292 = vmatpush1.msra.mxu0 0.0
  %4293 = vmatprep.subr.mxu0 0.0
  %4294 = vmatpush1.msra.mxu0 0.0
  %4295 = vmatprep.subr.mxu0 0.0
  %4296 = vmatpush1.msra.mxu0 0.0
  %4297 = vmatprep.subr.mxu0 0.0
  %4298 = vmatpush1.msra.mxu0 0.0
  %4299 = vmatprep.subr.mxu0 0.0
  %4300 = vmatpush1.msra.mxu0 0.0
  %4301 = vmatprep.subr.mxu0 0.0
  %4302 = vmatpush1.msra.mxu0 0.0
  %4303 = vmatprep.subr.mxu0 0.0
  %4304 = vmatpush1.msra.mxu0 0.0
  %4305 = vmatprep.subr.mxu0 0.0
  %4306 = vmatpush1.msra.mxu0 0.0
  %4307 = vmatprep.subr.mxu0 0.0
  %4308 = vmatpush1.msra.mxu0 0.0
  %4309 = vmatprep.subr.mxu0 0.0
  %4310 = vmatpush1.msra.mxu0 0.0
  %4311 = vmatprep.subr.mxu0 0.0
  %4312 = vmatpush1.msra.mxu0 0.0
  %4313 = vmatprep.subr.mxu0 0.0
  %4314 = vmatpush1.msra.mxu0 0.0
  %4315 = vmatprep.subr.mxu0 0.0
  %4316 = vmatpush1.msra.mxu0 0.0
  %4317 = vmatprep.subr.mxu0 0.0
  %4318 = vmatpush1.msra.mxu0 0.0
  %4319 = vmatprep.subr.mxu0 0.0
  %4320 = vmatpush1.msra.mxu0 0.0
  %4321 = vmatprep.subr.mxu0 0.0
  %4322 = vmatpush1.msra.mxu0 0.0
  %4323 = vmatprep.subr.mxu0 0.0
  %4324 = vmatpush1.msra.mxu0 0.0
  %4325 = vmatprep.subr.mxu0 0.0
  %4326 = vmatpush1.msra.mxu0 0.0
  %4327 = vmatprep.subr.mxu0 0.0
  %4328 = vmatpush1.msra.mxu0 0.0
  %4329 = vmatprep.subr.mxu0 0.0
  %4330 = vmatpush1.msra.mxu0 0.0
  %4331 = vmatprep.subr.mxu0 0.0
  %4332 = vmatpush1.msra.mxu0 0.0
  %4333 = vmatprep.subr.mxu0 0.0
  %4334 = vmatpush1.msra.mxu0 0.0
  %4335 = vmatprep.mubr.f32.mxu0 0.0
  %4336 = vmatmul.mubr.f32.gmra.mrb[0].mxu0 %v4248
  %v4337 = vpop.f32.mrb[0].mxu0
  %v4338 = vadd.f32 0.0, %v4337
  %v4339 = vpop.f32.mrb[0].mxu0
  %4340 = vmatprep.mubr.f32.mxu0 0.0
  %4341 = vmatmul.mubr.f32.gmra.mrb[0].mxu0 %v4251
  %v4342 = vpop.f32.mrb[0].mxu0
  %v4343 = vadd.f32 0.0, %v4342
  %v4344 = vpop.f32.mrb[0].mxu0
  %4345 = vmatprep.mubr.f32.mxu0 0.0
  %4346 = vmatmul.mubr.f32.gmra.mrb[0].mxu0 %v4254
  %v4347 = vpop.f32.mrb[0].mxu0
  %v4348 = vadd.f32 0.0, %v4347
  %v4349 = vpop.f32.mrb[0].mxu0
  %4350 = vmatprep.mubr.f32.mxu0 0.0
  %4351 = vmatmul.mubr.f32.gmra.mrb[0].mxu0 %v4257
  %v4352 = vpop.f32.mrb[0].mxu0
  %v4353 = vadd.f32 0.0, %v4352
  %v4354 = vpop.f32.mrb[0].mxu0
  %4355 = vmatprep.mubr.f32.mxu0 0.0
  %4356 = vmatmul.mubr.f32.gmra.mrb[0].mxu0 %v4260
  %v4357 = vpop.f32.mrb[0].mxu0
  %v4358 = vadd.f32 0.0, %v4357
  %v4359 = vpop.f32.mrb[0].mxu0
  %4360 = vmatprep.mubr.f32.mxu0 0.0
  %4361 = vmatmul.mubr.f32.gmra.mrb[0].mxu0 %v4263
  %v4362 = vpop.f32.mrb[0].mxu0
  %v4363 = vadd.f32 0.0, %v4362
  %v4364 = vpop.f32.mrb[0].mxu0
  %4365 = vmatprep.mubr.f32.mxu0 0.0
  %4366 = vmatmul.mubr.f32.gmra.mrb[0].mxu0 %v4266
  %v4367 = vpop.f32.mrb[0].mxu0
  %v4368 = vadd.f32 0.0, %v4367
  %v4369 = vpop.f32.mrb[0].mxu0
  %4370 = vmatprep.mubr.f32.mxu0 0.0
  %4371 = vmatmul.mubr.f32.gmra.mrb[0].mxu0 %v4269
  %v4372 = vpop.f32.mrb[0].mxu0
  %v4373 = vadd.f32 0.0, %v4372
  %v4374 = vpop.f32.mrb[0].mxu0
  %4375 = vdwg.mxu0
  %v4376 = vadd.f32 %v4128, %v4338
  %v4377 = vadd.f32 %v4129, %v4343
  %v4378 = vadd.f32 %v4130, %v4348
  %v4379 = vadd.f32 %v4131, %v4353
  %v4380 = vadd.f32 %v4132, %v4358
  %v4381 = vadd.f32 %v4133, %v4363
  %v4382 = vadd.f32 %v4134, %v4368
  %v4383 = vadd.f32 %v4135, %v4373
  %s4384 = scalar_lea.vmem %s7, 2176
  %v4385 = vld [vmem:[%s4384] sm:$0xff]
  %v4386 = vld [vmem:[%s4384 + $0x8] sm:$0xff]
  %v4387 = vld [vmem:[%s4384 + $0x10] sm:$0xff]
  %v4388 = vld [vmem:[%s4384 + $0x18] sm:$0xff]
  %v4389 = vld [vmem:[%s4384 + $0x20] sm:$0xff]
  %v4390 = vld [vmem:[%s4384 + $0x28] sm:$0xff]
  %v4391 = vld [vmem:[%s4384 + $0x30] sm:$0xff]
  %v4392 = vld [vmem:[%s4384 + $0x38] sm:$0xff]
  %v4393 = vld [vmem:[%s4384 + $0x40] sm:$0xff]
  %v4394 = vld [vmem:[%s4384 + $0x48] sm:$0xff]
  %v4395 = vld [vmem:[%s4384 + $0x50] sm:$0xff]
  %v4396 = vld [vmem:[%s4384 + $0x58] sm:$0xff]
  %v4397 = vld [vmem:[%s4384 + $0x60] sm:$0xff]
  %v4398 = vld [vmem:[%s4384 + $0x68] sm:$0xff]
  %v4399 = vld [vmem:[%s4384 + $0x70] sm:$0xff]
  %v4400 = vld [vmem:[%s4384 + $0x78] sm:$0xff]
  %4401 = vmatprep.subr.mxu0 0.0
  %4402 = vmatpush1.msra.mxu0 %v4385
  %4403 = vmatprep.subr.mxu0 0.0
  %4404 = vmatpush1.msra.mxu0 %v4386
  %4405 = vmatprep.subr.mxu0 0.0
  %4406 = vmatpush1.msra.mxu0 %v4387
  %4407 = vmatprep.subr.mxu0 0.0
  %4408 = vmatpush1.msra.mxu0 %v4388
  %4409 = vmatprep.subr.mxu0 0.0
  %4410 = vmatpush1.msra.mxu0 %v4389
  %4411 = vmatprep.subr.mxu0 0.0
  %4412 = vmatpush1.msra.mxu0 %v4390
  %4413 = vmatprep.subr.mxu0 0.0
  %4414 = vmatpush1.msra.mxu0 %v4391
  %4415 = vmatprep.subr.mxu0 0.0
  %4416 = vmatpush1.msra.mxu0 %v4392
  %4417 = vmatprep.subr.mxu0 0.0
  %4418 = vmatpush1.msra.mxu0 %v4393
  %4419 = vmatprep.subr.mxu0 0.0
  %4420 = vmatpush1.msra.mxu0 %v4394
  %4421 = vmatprep.subr.mxu0 0.0
  %4422 = vmatpush1.msra.mxu0 %v4395
  %4423 = vmatprep.subr.mxu0 0.0
  %4424 = vmatpush1.msra.mxu0 %v4396
  %4425 = vmatprep.subr.mxu0 0.0
  %4426 = vmatpush1.msra.mxu0 %v4397
  %4427 = vmatprep.subr.mxu0 0.0
  %4428 = vmatpush1.msra.mxu0 %v4398
  %4429 = vmatprep.subr.mxu0 0.0
  %4430 = vmatpush1.msra.mxu0 %v4399
  %4431 = vmatprep.subr.mxu0 0.0
  %4432 = vmatpush1.msra.mxu0 %v4400
  %4433 = vmatprep.subr.mxu0 0.0
  %4434 = vmatpush1.msra.mxu0 0.0
  %4435 = vmatprep.subr.mxu0 0.0
  %4436 = vmatpush1.msra.mxu0 0.0
  %4437 = vmatprep.subr.mxu0 0.0
  %4438 = vmatpush1.msra.mxu0 0.0
  %4439 = vmatprep.subr.mxu0 0.0
  %4440 = vmatpush1.msra.mxu0 0.0
  %4441 = vmatprep.subr.mxu0 0.0
  %4442 = vmatpush1.msra.mxu0 0.0
  %4443 = vmatprep.subr.mxu0 0.0
  %4444 = vmatpush1.msra.mxu0 0.0
  %4445 = vmatprep.subr.mxu0 0.0
  %4446 = vmatpush1.msra.mxu0 0.0
  %4447 = vmatprep.subr.mxu0 0.0
  %4448 = vmatpush1.msra.mxu0 0.0
  %4449 = vmatprep.subr.mxu0 0.0
  %4450 = vmatpush1.msra.mxu0 0.0
  %4451 = vmatprep.subr.mxu0 0.0
  %4452 = vmatpush1.msra.mxu0 0.0
  %4453 = vmatprep.subr.mxu0 0.0
  %4454 = vmatpush1.msra.mxu0 0.0
  %4455 = vmatprep.subr.mxu0 0.0
  %4456 = vmatpush1.msra.mxu0 0.0
  %4457 = vmatprep.subr.mxu0 0.0
  %4458 = vmatpush1.msra.mxu0 0.0
  %4459 = vmatprep.subr.mxu0 0.0
  %4460 = vmatpush1.msra.mxu0 0.0
  %4461 = vmatprep.subr.mxu0 0.0
  %4462 = vmatpush1.msra.mxu0 0.0
  %4463 = vmatprep.subr.mxu0 0.0
  %4464 = vmatpush1.msra.mxu0 0.0
  %4465 = vmatprep.mubr.f32.mxu0 0.0
  %4466 = vmatmul.mubr.f32.gmra.mrb[0].mxu0 %v181
  %v4467 = vpop.f32.mrb[0].mxu0
  %v4468 = vadd.f32 0.0, %v4467
  %v4469 = vpop.f32.mrb[0].mxu0
  %4470 = vmatprep.mubr.f32.mxu0 0.0
  %4471 = vmatmul.mubr.f32.gmra.mrb[0].mxu0 %v182
  %v4472 = vpop.f32.mrb[0].mxu0
  %v4473 = vadd.f32 0.0, %v4472
  %v4474 = vpop.f32.mrb[0].mxu0
  %4475 = vmatprep.mubr.f32.mxu0 0.0
  %4476 = vmatmul.mubr.f32.gmra.mrb[0].mxu0 %v183
  %v4477 = vpop.f32.mrb[0].mxu0
  %v4478 = vadd.f32 0.0, %v4477
  %v4479 = vpop.f32.mrb[0].mxu0
  %4480 = vmatprep.mubr.f32.mxu0 0.0
  %4481 = vmatmul.mubr.f32.gmra.mrb[0].mxu0 %v184
  %v4482 = vpop.f32.mrb[0].mxu0
  %v4483 = vadd.f32 0.0, %v4482
  %v4484 = vpop.f32.mrb[0].mxu0
  %4485 = vdwg.mxu0
  %s4486 = scalar_lea.vmem %s5, 1088
  %v4487 = vld [vmem:[%s4486] sm:$0xff]
  %v4488 = vld [vmem:[%s4486 + $0x8] sm:$0xff]
  %v4489 = vld [vmem:[%s4486 + $0x10] sm:$0xff]
  %v4490 = vld [vmem:[%s4486 + $0x18] sm:$0xff]
  %v4491 = vld [vmem:[%s4486 + $0x20] sm:$0xff]
  %v4492 = vld [vmem:[%s4486 + $0x28] sm:$0xff]
  %v4493 = vld [vmem:[%s4486 + $0x30] sm:$0xff]
  %v4494 = vld [vmem:[%s4486 + $0x38] sm:$0xff]
  %v4496 = vsel %vm405, %v4487, 0
  %v4499 = vsel %vm405, %v4488, 0
  %v4502 = vsel %vm405, %v4489, 0
  %v4505 = vsel %vm405, %v4490, 0
  %v4508 = vsel %vm405, %v4491, 0
  %v4511 = vsel %vm405, %v4492, 0
  %v4514 = vsel %vm405, %v4493, 0
  %v4517 = vsel %vm405, %v4494, 0
  %4519 = vmatprep.subr.mxu0 0.0
  %4520 = vmatpush1.msra.mxu0 %v4468
  %4521 = vmatprep.subr.mxu0 0.0
  %4522 = vmatpush1.msra.mxu0 %v4473
  %4523 = vmatprep.subr.mxu0 0.0
  %4524 = vmatpush1.msra.mxu0 %v4478
  %4525 = vmatprep.subr.mxu0 0.0
  %4526 = vmatpush1.msra.mxu0 %v4483
  %4527 = vmatprep.subr.mxu0 0.0
  %4528 = vmatpush1.msra.mxu0 0.0
  %4529 = vmatprep.subr.mxu0 0.0
  %4530 = vmatpush1.msra.mxu0 0.0
  %4531 = vmatprep.subr.mxu0 0.0
  %4532 = vmatpush1.msra.mxu0 0.0
  %4533 = vmatprep.subr.mxu0 0.0
  %4534 = vmatpush1.msra.mxu0 0.0
  %4535 = vmatprep.subr.mxu0 0.0
  %4536 = vmatpush1.msra.mxu0 0.0
  %4537 = vmatprep.subr.mxu0 0.0
  %4538 = vmatpush1.msra.mxu0 0.0
  %4539 = vmatprep.subr.mxu0 0.0
  %4540 = vmatpush1.msra.mxu0 0.0
  %4541 = vmatprep.subr.mxu0 0.0
  %4542 = vmatpush1.msra.mxu0 0.0
  %4543 = vmatprep.subr.mxu0 0.0
  %4544 = vmatpush1.msra.mxu0 0.0
  %4545 = vmatprep.subr.mxu0 0.0
  %4546 = vmatpush1.msra.mxu0 0.0
  %4547 = vmatprep.subr.mxu0 0.0
  %4548 = vmatpush1.msra.mxu0 0.0
  %4549 = vmatprep.subr.mxu0 0.0
  %4550 = vmatpush1.msra.mxu0 0.0
  %4551 = vmatprep.subr.mxu0 0.0
  %4552 = vmatpush1.msra.mxu0 0.0
  %4553 = vmatprep.subr.mxu0 0.0
  %4554 = vmatpush1.msra.mxu0 0.0
  %4555 = vmatprep.subr.mxu0 0.0
  %4556 = vmatpush1.msra.mxu0 0.0
  %4557 = vmatprep.subr.mxu0 0.0
  %4558 = vmatpush1.msra.mxu0 0.0
  %4559 = vmatprep.subr.mxu0 0.0
  %4560 = vmatpush1.msra.mxu0 0.0
  %4561 = vmatprep.subr.mxu0 0.0
  %4562 = vmatpush1.msra.mxu0 0.0
  %4563 = vmatprep.subr.mxu0 0.0
  %4564 = vmatpush1.msra.mxu0 0.0
  %4565 = vmatprep.subr.mxu0 0.0
  %4566 = vmatpush1.msra.mxu0 0.0
  %4567 = vmatprep.subr.mxu0 0.0
  %4568 = vmatpush1.msra.mxu0 0.0
  %4569 = vmatprep.subr.mxu0 0.0
  %4570 = vmatpush1.msra.mxu0 0.0
  %4571 = vmatprep.subr.mxu0 0.0
  %4572 = vmatpush1.msra.mxu0 0.0
  %4573 = vmatprep.subr.mxu0 0.0
  %4574 = vmatpush1.msra.mxu0 0.0
  %4575 = vmatprep.subr.mxu0 0.0
  %4576 = vmatpush1.msra.mxu0 0.0
  %4577 = vmatprep.subr.mxu0 0.0
  %4578 = vmatpush1.msra.mxu0 0.0
  %4579 = vmatprep.subr.mxu0 0.0
  %4580 = vmatpush1.msra.mxu0 0.0
  %4581 = vmatprep.subr.mxu0 0.0
  %4582 = vmatpush1.msra.mxu0 0.0
  %4583 = vmatprep.mubr.f32.mxu0 0.0
  %4584 = vmatmul.mubr.f32.gmra.mrb[0].mxu0 %v4496
  %v4585 = vpop.f32.mrb[0].mxu0
  %v4586 = vadd.f32 0.0, %v4585
  %v4587 = vpop.f32.mrb[0].mxu0
  %4588 = vmatprep.mubr.f32.mxu0 0.0
  %4589 = vmatmul.mubr.f32.gmra.mrb[0].mxu0 %v4499
  %v4590 = vpop.f32.mrb[0].mxu0
  %v4591 = vadd.f32 0.0, %v4590
  %v4592 = vpop.f32.mrb[0].mxu0
  %4593 = vmatprep.mubr.f32.mxu0 0.0
  %4594 = vmatmul.mubr.f32.gmra.mrb[0].mxu0 %v4502
  %v4595 = vpop.f32.mrb[0].mxu0
  %v4596 = vadd.f32 0.0, %v4595
  %v4597 = vpop.f32.mrb[0].mxu0
  %4598 = vmatprep.mubr.f32.mxu0 0.0
  %4599 = vmatmul.mubr.f32.gmra.mrb[0].mxu0 %v4505
  %v4600 = vpop.f32.mrb[0].mxu0
  %v4601 = vadd.f32 0.0, %v4600
  %v4602 = vpop.f32.mrb[0].mxu0
  %4603 = vmatprep.mubr.f32.mxu0 0.0
  %4604 = vmatmul.mubr.f32.gmra.mrb[0].mxu0 %v4508
  %v4605 = vpop.f32.mrb[0].mxu0
  %v4606 = vadd.f32 0.0, %v4605
  %v4607 = vpop.f32.mrb[0].mxu0
  %4608 = vmatprep.mubr.f32.mxu0 0.0
  %4609 = vmatmul.mubr.f32.gmra.mrb[0].mxu0 %v4511
  %v4610 = vpop.f32.mrb[0].mxu0
  %v4611 = vadd.f32 0.0, %v4610
  %v4612 = vpop.f32.mrb[0].mxu0
  %4613 = vmatprep.mubr.f32.mxu0 0.0
  %4614 = vmatmul.mubr.f32.gmra.mrb[0].mxu0 %v4514
  %v4615 = vpop.f32.mrb[0].mxu0
  %v4616 = vadd.f32 0.0, %v4615
  %v4617 = vpop.f32.mrb[0].mxu0
  %4618 = vmatprep.mubr.f32.mxu0 0.0
  %4619 = vmatmul.mubr.f32.gmra.mrb[0].mxu0 %v4517
  %v4620 = vpop.f32.mrb[0].mxu0
  %v4621 = vadd.f32 0.0, %v4620
  %v4622 = vpop.f32.mrb[0].mxu0
  %4623 = vdwg.mxu0
  %v4624 = vadd.f32 %v4376, %v4586
  %v4625 = vadd.f32 %v4377, %v4591
  %v4626 = vadd.f32 %v4378, %v4596
  %v4627 = vadd.f32 %v4379, %v4601
  %v4628 = vadd.f32 %v4380, %v4606
  %v4629 = vadd.f32 %v4381, %v4611
  %v4630 = vadd.f32 %v4382, %v4616
  %v4631 = vadd.f32 %v4383, %v4621
  %s4632 = scalar_lea.vmem %s7, 2304
  %v4633 = vld [vmem:[%s4632] sm:$0xff]
  %v4634 = vld [vmem:[%s4632 + $0x8] sm:$0xff]
  %v4635 = vld [vmem:[%s4632 + $0x10] sm:$0xff]
  %v4636 = vld [vmem:[%s4632 + $0x18] sm:$0xff]
  %v4637 = vld [vmem:[%s4632 + $0x20] sm:$0xff]
  %v4638 = vld [vmem:[%s4632 + $0x28] sm:$0xff]
  %v4639 = vld [vmem:[%s4632 + $0x30] sm:$0xff]
  %v4640 = vld [vmem:[%s4632 + $0x38] sm:$0xff]
  %v4641 = vld [vmem:[%s4632 + $0x40] sm:$0xff]
  %v4642 = vld [vmem:[%s4632 + $0x48] sm:$0xff]
  %v4643 = vld [vmem:[%s4632 + $0x50] sm:$0xff]
  %v4644 = vld [vmem:[%s4632 + $0x58] sm:$0xff]
  %v4645 = vld [vmem:[%s4632 + $0x60] sm:$0xff]
  %v4646 = vld [vmem:[%s4632 + $0x68] sm:$0xff]
  %v4647 = vld [vmem:[%s4632 + $0x70] sm:$0xff]
  %v4648 = vld [vmem:[%s4632 + $0x78] sm:$0xff]
  %4649 = vmatprep.subr.mxu0 0.0
  %4650 = vmatpush1.msra.mxu0 %v4633
  %4651 = vmatprep.subr.mxu0 0.0
  %4652 = vmatpush1.msra.mxu0 %v4634
  %4653 = vmatprep.subr.mxu0 0.0
  %4654 = vmatpush1.msra.mxu0 %v4635
  %4655 = vmatprep.subr.mxu0 0.0
  %4656 = vmatpush1.msra.mxu0 %v4636
  %4657 = vmatprep.subr.mxu0 0.0
  %4658 = vmatpush1.msra.mxu0 %v4637
  %4659 = vmatprep.subr.mxu0 0.0
  %4660 = vmatpush1.msra.mxu0 %v4638
  %4661 = vmatprep.subr.mxu0 0.0
  %4662 = vmatpush1.msra.mxu0 %v4639
  %4663 = vmatprep.subr.mxu0 0.0
  %4664 = vmatpush1.msra.mxu0 %v4640
  %4665 = vmatprep.subr.mxu0 0.0
  %4666 = vmatpush1.msra.mxu0 %v4641
  %4667 = vmatprep.subr.mxu0 0.0
  %4668 = vmatpush1.msra.mxu0 %v4642
  %4669 = vmatprep.subr.mxu0 0.0
  %4670 = vmatpush1.msra.mxu0 %v4643
  %4671 = vmatprep.subr.mxu0 0.0
  %4672 = vmatpush1.msra.mxu0 %v4644
  %4673 = vmatprep.subr.mxu0 0.0
  %4674 = vmatpush1.msra.mxu0 %v4645
  %4675 = vmatprep.subr.mxu0 0.0
  %4676 = vmatpush1.msra.mxu0 %v4646
  %4677 = vmatprep.subr.mxu0 0.0
  %4678 = vmatpush1.msra.mxu0 %v4647
  %4679 = vmatprep.subr.mxu0 0.0
  %4680 = vmatpush1.msra.mxu0 %v4648
  %4681 = vmatprep.subr.mxu0 0.0
  %4682 = vmatpush1.msra.mxu0 0.0
  %4683 = vmatprep.subr.mxu0 0.0
  %4684 = vmatpush1.msra.mxu0 0.0
  %4685 = vmatprep.subr.mxu0 0.0
  %4686 = vmatpush1.msra.mxu0 0.0
  %4687 = vmatprep.subr.mxu0 0.0
  %4688 = vmatpush1.msra.mxu0 0.0
  %4689 = vmatprep.subr.mxu0 0.0
  %4690 = vmatpush1.msra.mxu0 0.0
  %4691 = vmatprep.subr.mxu0 0.0
  %4692 = vmatpush1.msra.mxu0 0.0
  %4693 = vmatprep.subr.mxu0 0.0
  %4694 = vmatpush1.msra.mxu0 0.0
  %4695 = vmatprep.subr.mxu0 0.0
  %4696 = vmatpush1.msra.mxu0 0.0
  %4697 = vmatprep.subr.mxu0 0.0
  %4698 = vmatpush1.msra.mxu0 0.0
  %4699 = vmatprep.subr.mxu0 0.0
  %4700 = vmatpush1.msra.mxu0 0.0
  %4701 = vmatprep.subr.mxu0 0.0
  %4702 = vmatpush1.msra.mxu0 0.0
  %4703 = vmatprep.subr.mxu0 0.0
  %4704 = vmatpush1.msra.mxu0 0.0
  %4705 = vmatprep.subr.mxu0 0.0
  %4706 = vmatpush1.msra.mxu0 0.0
  %4707 = vmatprep.subr.mxu0 0.0
  %4708 = vmatpush1.msra.mxu0 0.0
  %4709 = vmatprep.subr.mxu0 0.0
  %4710 = vmatpush1.msra.mxu0 0.0
  %4711 = vmatprep.subr.mxu0 0.0
  %4712 = vmatpush1.msra.mxu0 0.0
  %4713 = vmatprep.mubr.f32.mxu0 0.0
  %4714 = vmatmul.mubr.f32.gmra.mrb[0].mxu0 %v181
  %v4715 = vpop.f32.mrb[0].mxu0
  %v4716 = vadd.f32 0.0, %v4715
  %v4717 = vpop.f32.mrb[0].mxu0
  %4718 = vmatprep.mubr.f32.mxu0 0.0
  %4719 = vmatmul.mubr.f32.gmra.mrb[0].mxu0 %v182
  %v4720 = vpop.f32.mrb[0].mxu0
  %v4721 = vadd.f32 0.0, %v4720
  %v4722 = vpop.f32.mrb[0].mxu0
  %4723 = vmatprep.mubr.f32.mxu0 0.0
  %4724 = vmatmul.mubr.f32.gmra.mrb[0].mxu0 %v183
  %v4725 = vpop.f32.mrb[0].mxu0
  %v4726 = vadd.f32 0.0, %v4725
  %v4727 = vpop.f32.mrb[0].mxu0
  %4728 = vmatprep.mubr.f32.mxu0 0.0
  %4729 = vmatmul.mubr.f32.gmra.mrb[0].mxu0 %v184
  %v4730 = vpop.f32.mrb[0].mxu0
  %v4731 = vadd.f32 0.0, %v4730
  %v4732 = vpop.f32.mrb[0].mxu0
  %4733 = vdwg.mxu0
  %s4734 = scalar_lea.vmem %s5, 1152
  %v4735 = vld [vmem:[%s4734] sm:$0xff]
  %v4736 = vld [vmem:[%s4734 + $0x8] sm:$0xff]
  %v4737 = vld [vmem:[%s4734 + $0x10] sm:$0xff]
  %v4738 = vld [vmem:[%s4734 + $0x18] sm:$0xff]
  %v4739 = vld [vmem:[%s4734 + $0x20] sm:$0xff]
  %v4740 = vld [vmem:[%s4734 + $0x28] sm:$0xff]
  %v4741 = vld [vmem:[%s4734 + $0x30] sm:$0xff]
  %v4742 = vld [vmem:[%s4734 + $0x38] sm:$0xff]
  %v4744 = vsel %vm405, %v4735, 0
  %v4747 = vsel %vm405, %v4736, 0
  %v4750 = vsel %vm405, %v4737, 0
  %v4753 = vsel %vm405, %v4738, 0
  %v4756 = vsel %vm405, %v4739, 0
  %v4759 = vsel %vm405, %v4740, 0
  %v4762 = vsel %vm405, %v4741, 0
  %v4765 = vsel %vm405, %v4742, 0
  %4767 = vmatprep.subr.mxu0 0.0
  %4768 = vmatpush1.msra.mxu0 %v4716
  %4769 = vmatprep.subr.mxu0 0.0
  %4770 = vmatpush1.msra.mxu0 %v4721
  %4771 = vmatprep.subr.mxu0 0.0
  %4772 = vmatpush1.msra.mxu0 %v4726
  %4773 = vmatprep.subr.mxu0 0.0
  %4774 = vmatpush1.msra.mxu0 %v4731
  %4775 = vmatprep.subr.mxu0 0.0
  %4776 = vmatpush1.msra.mxu0 0.0
  %4777 = vmatprep.subr.mxu0 0.0
  %4778 = vmatpush1.msra.mxu0 0.0
  %4779 = vmatprep.subr.mxu0 0.0
  %4780 = vmatpush1.msra.mxu0 0.0
  %4781 = vmatprep.subr.mxu0 0.0
  %4782 = vmatpush1.msra.mxu0 0.0
  %4783 = vmatprep.subr.mxu0 0.0
  %4784 = vmatpush1.msra.mxu0 0.0
  %4785 = vmatprep.subr.mxu0 0.0
  %4786 = vmatpush1.msra.mxu0 0.0
  %4787 = vmatprep.subr.mxu0 0.0
  %4788 = vmatpush1.msra.mxu0 0.0
  %4789 = vmatprep.subr.mxu0 0.0
  %4790 = vmatpush1.msra.mxu0 0.0
  %4791 = vmatprep.subr.mxu0 0.0
  %4792 = vmatpush1.msra.mxu0 0.0
  %4793 = vmatprep.subr.mxu0 0.0
  %4794 = vmatpush1.msra.mxu0 0.0
  %4795 = vmatprep.subr.mxu0 0.0
  %4796 = vmatpush1.msra.mxu0 0.0
  %4797 = vmatprep.subr.mxu0 0.0
  %4798 = vmatpush1.msra.mxu0 0.0
  %4799 = vmatprep.subr.mxu0 0.0
  %4800 = vmatpush1.msra.mxu0 0.0
  %4801 = vmatprep.subr.mxu0 0.0
  %4802 = vmatpush1.msra.mxu0 0.0
  %4803 = vmatprep.subr.mxu0 0.0
  %4804 = vmatpush1.msra.mxu0 0.0
  %4805 = vmatprep.subr.mxu0 0.0
  %4806 = vmatpush1.msra.mxu0 0.0
  %4807 = vmatprep.subr.mxu0 0.0
  %4808 = vmatpush1.msra.mxu0 0.0
  %4809 = vmatprep.subr.mxu0 0.0
  %4810 = vmatpush1.msra.mxu0 0.0
  %4811 = vmatprep.subr.mxu0 0.0
  %4812 = vmatpush1.msra.mxu0 0.0
  %4813 = vmatprep.subr.mxu0 0.0
  %4814 = vmatpush1.msra.mxu0 0.0
  %4815 = vmatprep.subr.mxu0 0.0
  %4816 = vmatpush1.msra.mxu0 0.0
  %4817 = vmatprep.subr.mxu0 0.0
  %4818 = vmatpush1.msra.mxu0 0.0
  %4819 = vmatprep.subr.mxu0 0.0
  %4820 = vmatpush1.msra.mxu0 0.0
  %4821 = vmatprep.subr.mxu0 0.0
  %4822 = vmatpush1.msra.mxu0 0.0
  %4823 = vmatprep.subr.mxu0 0.0
  %4824 = vmatpush1.msra.mxu0 0.0
  %4825 = vmatprep.subr.mxu0 0.0
  %4826 = vmatpush1.msra.mxu0 0.0
  %4827 = vmatprep.subr.mxu0 0.0
  %4828 = vmatpush1.msra.mxu0 0.0
  %4829 = vmatprep.subr.mxu0 0.0
  %4830 = vmatpush1.msra.mxu0 0.0
  %4831 = vmatprep.mubr.f32.mxu0 0.0
  %4832 = vmatmul.mubr.f32.gmra.mrb[0].mxu0 %v4744
  %v4833 = vpop.f32.mrb[0].mxu0
  %v4834 = vadd.f32 0.0, %v4833
  %v4835 = vpop.f32.mrb[0].mxu0
  %4836 = vmatprep.mubr.f32.mxu0 0.0
  %4837 = vmatmul.mubr.f32.gmra.mrb[0].mxu0 %v4747
  %v4838 = vpop.f32.mrb[0].mxu0
  %v4839 = vadd.f32 0.0, %v4838
  %v4840 = vpop.f32.mrb[0].mxu0
  %4841 = vmatprep.mubr.f32.mxu0 0.0
  %4842 = vmatmul.mubr.f32.gmra.mrb[0].mxu0 %v4750
  %v4843 = vpop.f32.mrb[0].mxu0
  %v4844 = vadd.f32 0.0, %v4843
  %v4845 = vpop.f32.mrb[0].mxu0
  %4846 = vmatprep.mubr.f32.mxu0 0.0
  %4847 = vmatmul.mubr.f32.gmra.mrb[0].mxu0 %v4753
  %v4848 = vpop.f32.mrb[0].mxu0
  %v4849 = vadd.f32 0.0, %v4848
  %v4850 = vpop.f32.mrb[0].mxu0
  %4851 = vmatprep.mubr.f32.mxu0 0.0
  %4852 = vmatmul.mubr.f32.gmra.mrb[0].mxu0 %v4756
  %v4853 = vpop.f32.mrb[0].mxu0
  %v4854 = vadd.f32 0.0, %v4853
  %v4855 = vpop.f32.mrb[0].mxu0
  %4856 = vmatprep.mubr.f32.mxu0 0.0
  %4857 = vmatmul.mubr.f32.gmra.mrb[0].mxu0 %v4759
  %v4858 = vpop.f32.mrb[0].mxu0
  %v4859 = vadd.f32 0.0, %v4858
  %v4860 = vpop.f32.mrb[0].mxu0
  %4861 = vmatprep.mubr.f32.mxu0 0.0
  %4862 = vmatmul.mubr.f32.gmra.mrb[0].mxu0 %v4762
  %v4863 = vpop.f32.mrb[0].mxu0
  %v4864 = vadd.f32 0.0, %v4863
  %v4865 = vpop.f32.mrb[0].mxu0
  %4866 = vmatprep.mubr.f32.mxu0 0.0
  %4867 = vmatmul.mubr.f32.gmra.mrb[0].mxu0 %v4765
  %v4868 = vpop.f32.mrb[0].mxu0
  %v4869 = vadd.f32 0.0, %v4868
  %v4870 = vpop.f32.mrb[0].mxu0
  %4871 = vdwg.mxu0
  %v4872 = vadd.f32 %v4624, %v4834
  %v4873 = vadd.f32 %v4625, %v4839
  %v4874 = vadd.f32 %v4626, %v4844
  %v4875 = vadd.f32 %v4627, %v4849
  %v4876 = vadd.f32 %v4628, %v4854
  %v4877 = vadd.f32 %v4629, %v4859
  %v4878 = vadd.f32 %v4630, %v4864
  %v4879 = vadd.f32 %v4631, %v4869
  %s4880 = scalar_lea.vmem %s7, 2432
  %v4881 = vld [vmem:[%s4880] sm:$0xff]
  %v4882 = vld [vmem:[%s4880 + $0x8] sm:$0xff]
  %v4883 = vld [vmem:[%s4880 + $0x10] sm:$0xff]
  %v4884 = vld [vmem:[%s4880 + $0x18] sm:$0xff]
  %v4885 = vld [vmem:[%s4880 + $0x20] sm:$0xff]
  %v4886 = vld [vmem:[%s4880 + $0x28] sm:$0xff]
  %v4887 = vld [vmem:[%s4880 + $0x30] sm:$0xff]
  %v4888 = vld [vmem:[%s4880 + $0x38] sm:$0xff]
  %v4889 = vld [vmem:[%s4880 + $0x40] sm:$0xff]
  %v4890 = vld [vmem:[%s4880 + $0x48] sm:$0xff]
  %v4891 = vld [vmem:[%s4880 + $0x50] sm:$0xff]
  %v4892 = vld [vmem:[%s4880 + $0x58] sm:$0xff]
  %v4893 = vld [vmem:[%s4880 + $0x60] sm:$0xff]
  %v4894 = vld [vmem:[%s4880 + $0x68] sm:$0xff]
  %v4895 = vld [vmem:[%s4880 + $0x70] sm:$0xff]
  %v4896 = vld [vmem:[%s4880 + $0x78] sm:$0xff]
  %4897 = vmatprep.subr.mxu0 0.0
  %4898 = vmatpush1.msra.mxu0 %v4881
  %4899 = vmatprep.subr.mxu0 0.0
  %4900 = vmatpush1.msra.mxu0 %v4882
  %4901 = vmatprep.subr.mxu0 0.0
  %4902 = vmatpush1.msra.mxu0 %v4883
  %4903 = vmatprep.subr.mxu0 0.0
  %4904 = vmatpush1.msra.mxu0 %v4884
  %4905 = vmatprep.subr.mxu0 0.0
  %4906 = vmatpush1.msra.mxu0 %v4885
  %4907 = vmatprep.subr.mxu0 0.0
  %4908 = vmatpush1.msra.mxu0 %v4886
  %4909 = vmatprep.subr.mxu0 0.0
  %4910 = vmatpush1.msra.mxu0 %v4887
  %4911 = vmatprep.subr.mxu0 0.0
  %4912 = vmatpush1.msra.mxu0 %v4888
  %4913 = vmatprep.subr.mxu0 0.0
  %4914 = vmatpush1.msra.mxu0 %v4889
  %4915 = vmatprep.subr.mxu0 0.0
  %4916 = vmatpush1.msra.mxu0 %v4890
  %4917 = vmatprep.subr.mxu0 0.0
  %4918 = vmatpush1.msra.mxu0 %v4891
  %4919 = vmatprep.subr.mxu0 0.0
  %4920 = vmatpush1.msra.mxu0 %v4892
  %4921 = vmatprep.subr.mxu0 0.0
  %4922 = vmatpush1.msra.mxu0 %v4893
  %4923 = vmatprep.subr.mxu0 0.0
  %4924 = vmatpush1.msra.mxu0 %v4894
  %4925 = vmatprep.subr.mxu0 0.0
  %4926 = vmatpush1.msra.mxu0 %v4895
  %4927 = vmatprep.subr.mxu0 0.0
  %4928 = vmatpush1.msra.mxu0 %v4896
  %4929 = vmatprep.subr.mxu0 0.0
  %4930 = vmatpush1.msra.mxu0 0.0
  %4931 = vmatprep.subr.mxu0 0.0
  %4932 = vmatpush1.msra.mxu0 0.0
  %4933 = vmatprep.subr.mxu0 0.0
  %4934 = vmatpush1.msra.mxu0 0.0
  %4935 = vmatprep.subr.mxu0 0.0
  %4936 = vmatpush1.msra.mxu0 0.0
  %4937 = vmatprep.subr.mxu0 0.0
  %4938 = vmatpush1.msra.mxu0 0.0
  %4939 = vmatprep.subr.mxu0 0.0
  %4940 = vmatpush1.msra.mxu0 0.0
  %4941 = vmatprep.subr.mxu0 0.0
  %4942 = vmatpush1.msra.mxu0 0.0
  %4943 = vmatprep.subr.mxu0 0.0
  %4944 = vmatpush1.msra.mxu0 0.0
  %4945 = vmatprep.subr.mxu0 0.0
  %4946 = vmatpush1.msra.mxu0 0.0
  %4947 = vmatprep.subr.mxu0 0.0
  %4948 = vmatpush1.msra.mxu0 0.0
  %4949 = vmatprep.subr.mxu0 0.0
  %4950 = vmatpush1.msra.mxu0 0.0
  %4951 = vmatprep.subr.mxu0 0.0
  %4952 = vmatpush1.msra.mxu0 0.0
  %4953 = vmatprep.subr.mxu0 0.0
  %4954 = vmatpush1.msra.mxu0 0.0
  %4955 = vmatprep.subr.mxu0 0.0
  %4956 = vmatpush1.msra.mxu0 0.0
  %4957 = vmatprep.subr.mxu0 0.0
  %4958 = vmatpush1.msra.mxu0 0.0
  %4959 = vmatprep.subr.mxu0 0.0
  %4960 = vmatpush1.msra.mxu0 0.0
  %4961 = vmatprep.mubr.f32.mxu0 0.0
  %4962 = vmatmul.mubr.f32.gmra.mrb[0].mxu0 %v181
  %v4963 = vpop.f32.mrb[0].mxu0
  %v4964 = vadd.f32 0.0, %v4963
  %v4965 = vpop.f32.mrb[0].mxu0
  %4966 = vmatprep.mubr.f32.mxu0 0.0
  %4967 = vmatmul.mubr.f32.gmra.mrb[0].mxu0 %v182
  %v4968 = vpop.f32.mrb[0].mxu0
  %v4969 = vadd.f32 0.0, %v4968
  %v4970 = vpop.f32.mrb[0].mxu0
  %4971 = vmatprep.mubr.f32.mxu0 0.0
  %4972 = vmatmul.mubr.f32.gmra.mrb[0].mxu0 %v183
  %v4973 = vpop.f32.mrb[0].mxu0
  %v4974 = vadd.f32 0.0, %v4973
  %v4975 = vpop.f32.mrb[0].mxu0
  %4976 = vmatprep.mubr.f32.mxu0 0.0
  %4977 = vmatmul.mubr.f32.gmra.mrb[0].mxu0 %v184
  %v4978 = vpop.f32.mrb[0].mxu0
  %v4979 = vadd.f32 0.0, %v4978
  %v4980 = vpop.f32.mrb[0].mxu0
  %4981 = vdwg.mxu0
  %s4982 = scalar_lea.vmem %s5, 1216
  %v4983 = vld [vmem:[%s4982] sm:$0xff]
  %v4984 = vld [vmem:[%s4982 + $0x8] sm:$0xff]
  %v4985 = vld [vmem:[%s4982 + $0x10] sm:$0xff]
  %v4986 = vld [vmem:[%s4982 + $0x18] sm:$0xff]
  %v4987 = vld [vmem:[%s4982 + $0x20] sm:$0xff]
  %v4988 = vld [vmem:[%s4982 + $0x28] sm:$0xff]
  %v4989 = vld [vmem:[%s4982 + $0x30] sm:$0xff]
  %v4990 = vld [vmem:[%s4982 + $0x38] sm:$0xff]
  %v4992 = vsel %vm405, %v4983, 0
  %v4995 = vsel %vm405, %v4984, 0
  %v4998 = vsel %vm405, %v4985, 0
  %v5001 = vsel %vm405, %v4986, 0
  %v5004 = vsel %vm405, %v4987, 0
  %v5007 = vsel %vm405, %v4988, 0
  %v5010 = vsel %vm405, %v4989, 0
  %v5013 = vsel %vm405, %v4990, 0
  %5015 = vmatprep.subr.mxu0 0.0
  %5016 = vmatpush1.msra.mxu0 %v4964
  %5017 = vmatprep.subr.mxu0 0.0
  %5018 = vmatpush1.msra.mxu0 %v4969
  %5019 = vmatprep.subr.mxu0 0.0
  %5020 = vmatpush1.msra.mxu0 %v4974
  %5021 = vmatprep.subr.mxu0 0.0
  %5022 = vmatpush1.msra.mxu0 %v4979
  %5023 = vmatprep.subr.mxu0 0.0
  %5024 = vmatpush1.msra.mxu0 0.0
  %5025 = vmatprep.subr.mxu0 0.0
  %5026 = vmatpush1.msra.mxu0 0.0
  %5027 = vmatprep.subr.mxu0 0.0
  %5028 = vmatpush1.msra.mxu0 0.0
  %5029 = vmatprep.subr.mxu0 0.0
  %5030 = vmatpush1.msra.mxu0 0.0
  %5031 = vmatprep.subr.mxu0 0.0
  %5032 = vmatpush1.msra.mxu0 0.0
  %5033 = vmatprep.subr.mxu0 0.0
  %5034 = vmatpush1.msra.mxu0 0.0
  %5035 = vmatprep.subr.mxu0 0.0
  %5036 = vmatpush1.msra.mxu0 0.0
  %5037 = vmatprep.subr.mxu0 0.0
  %5038 = vmatpush1.msra.mxu0 0.0
  %5039 = vmatprep.subr.mxu0 0.0
  %5040 = vmatpush1.msra.mxu0 0.0
  %5041 = vmatprep.subr.mxu0 0.0
  %5042 = vmatpush1.msra.mxu0 0.0
  %5043 = vmatprep.subr.mxu0 0.0
  %5044 = vmatpush1.msra.mxu0 0.0
  %5045 = vmatprep.subr.mxu0 0.0
  %5046 = vmatpush1.msra.mxu0 0.0
  %5047 = vmatprep.subr.mxu0 0.0
  %5048 = vmatpush1.msra.mxu0 0.0
  %5049 = vmatprep.subr.mxu0 0.0
  %5050 = vmatpush1.msra.mxu0 0.0
  %5051 = vmatprep.subr.mxu0 0.0
  %5052 = vmatpush1.msra.mxu0 0.0
  %5053 = vmatprep.subr.mxu0 0.0
  %5054 = vmatpush1.msra.mxu0 0.0
  %5055 = vmatprep.subr.mxu0 0.0
  %5056 = vmatpush1.msra.mxu0 0.0
  %5057 = vmatprep.subr.mxu0 0.0
  %5058 = vmatpush1.msra.mxu0 0.0
  %5059 = vmatprep.subr.mxu0 0.0
  %5060 = vmatpush1.msra.mxu0 0.0
  %5061 = vmatprep.subr.mxu0 0.0
  %5062 = vmatpush1.msra.mxu0 0.0
  %5063 = vmatprep.subr.mxu0 0.0
  %5064 = vmatpush1.msra.mxu0 0.0
  %5065 = vmatprep.subr.mxu0 0.0
  %5066 = vmatpush1.msra.mxu0 0.0
  %5067 = vmatprep.subr.mxu0 0.0
  %5068 = vmatpush1.msra.mxu0 0.0
  %5069 = vmatprep.subr.mxu0 0.0
  %5070 = vmatpush1.msra.mxu0 0.0
  %5071 = vmatprep.subr.mxu0 0.0
  %5072 = vmatpush1.msra.mxu0 0.0
  %5073 = vmatprep.subr.mxu0 0.0
  %5074 = vmatpush1.msra.mxu0 0.0
  %5075 = vmatprep.subr.mxu0 0.0
  %5076 = vmatpush1.msra.mxu0 0.0
  %5077 = vmatprep.subr.mxu0 0.0
  %5078 = vmatpush1.msra.mxu0 0.0
  %5079 = vmatprep.mubr.f32.mxu0 0.0
  %5080 = vmatmul.mubr.f32.gmra.mrb[0].mxu0 %v4992
  %v5081 = vpop.f32.mrb[0].mxu0
  %v5082 = vadd.f32 0.0, %v5081
  %v5083 = vpop.f32.mrb[0].mxu0
  %5084 = vmatprep.mubr.f32.mxu0 0.0
  %5085 = vmatmul.mubr.f32.gmra.mrb[0].mxu0 %v4995
  %v5086 = vpop.f32.mrb[0].mxu0
  %v5087 = vadd.f32 0.0, %v5086
  %v5088 = vpop.f32.mrb[0].mxu0
  %5089 = vmatprep.mubr.f32.mxu0 0.0
  %5090 = vmatmul.mubr.f32.gmra.mrb[0].mxu0 %v4998
  %v5091 = vpop.f32.mrb[0].mxu0
  %v5092 = vadd.f32 0.0, %v5091
  %v5093 = vpop.f32.mrb[0].mxu0
  %5094 = vmatprep.mubr.f32.mxu0 0.0
  %5095 = vmatmul.mubr.f32.gmra.mrb[0].mxu0 %v5001
  %v5096 = vpop.f32.mrb[0].mxu0
  %v5097 = vadd.f32 0.0, %v5096
  %v5098 = vpop.f32.mrb[0].mxu0
  %5099 = vmatprep.mubr.f32.mxu0 0.0
  %5100 = vmatmul.mubr.f32.gmra.mrb[0].mxu0 %v5004
  %v5101 = vpop.f32.mrb[0].mxu0
  %v5102 = vadd.f32 0.0, %v5101
  %v5103 = vpop.f32.mrb[0].mxu0
  %5104 = vmatprep.mubr.f32.mxu0 0.0
  %5105 = vmatmul.mubr.f32.gmra.mrb[0].mxu0 %v5007
  %v5106 = vpop.f32.mrb[0].mxu0
  %v5107 = vadd.f32 0.0, %v5106
  %v5108 = vpop.f32.mrb[0].mxu0
  %5109 = vmatprep.mubr.f32.mxu0 0.0
  %5110 = vmatmul.mubr.f32.gmra.mrb[0].mxu0 %v5010
  %v5111 = vpop.f32.mrb[0].mxu0
  %v5112 = vadd.f32 0.0, %v5111
  %v5113 = vpop.f32.mrb[0].mxu0
  %5114 = vmatprep.mubr.f32.mxu0 0.0
  %5115 = vmatmul.mubr.f32.gmra.mrb[0].mxu0 %v5013
  %v5116 = vpop.f32.mrb[0].mxu0
  %v5117 = vadd.f32 0.0, %v5116
  %v5118 = vpop.f32.mrb[0].mxu0
  %5119 = vdwg.mxu0
  %v5120 = vadd.f32 %v4872, %v5082
  %v5121 = vadd.f32 %v4873, %v5087
  %v5122 = vadd.f32 %v4874, %v5092
  %v5123 = vadd.f32 %v4875, %v5097
  %v5124 = vadd.f32 %v4876, %v5102
  %v5125 = vadd.f32 %v4877, %v5107
  %v5126 = vadd.f32 %v4878, %v5112
  %v5127 = vadd.f32 %v4879, %v5117
  %s5128 = scalar_lea.vmem %s7, 2560
  %v5129 = vld [vmem:[%s5128] sm:$0xff]
  %v5130 = vld [vmem:[%s5128 + $0x8] sm:$0xff]
  %v5131 = vld [vmem:[%s5128 + $0x10] sm:$0xff]
  %v5132 = vld [vmem:[%s5128 + $0x18] sm:$0xff]
  %v5133 = vld [vmem:[%s5128 + $0x20] sm:$0xff]
  %v5134 = vld [vmem:[%s5128 + $0x28] sm:$0xff]
  %v5135 = vld [vmem:[%s5128 + $0x30] sm:$0xff]
  %v5136 = vld [vmem:[%s5128 + $0x38] sm:$0xff]
  %v5137 = vld [vmem:[%s5128 + $0x40] sm:$0xff]
  %v5138 = vld [vmem:[%s5128 + $0x48] sm:$0xff]
  %v5139 = vld [vmem:[%s5128 + $0x50] sm:$0xff]
  %v5140 = vld [vmem:[%s5128 + $0x58] sm:$0xff]
  %v5141 = vld [vmem:[%s5128 + $0x60] sm:$0xff]
  %v5142 = vld [vmem:[%s5128 + $0x68] sm:$0xff]
  %v5143 = vld [vmem:[%s5128 + $0x70] sm:$0xff]
  %v5144 = vld [vmem:[%s5128 + $0x78] sm:$0xff]
  %5145 = vmatprep.subr.mxu0 0.0
  %5146 = vmatpush1.msra.mxu0 %v5129
  %5147 = vmatprep.subr.mxu0 0.0
  %5148 = vmatpush1.msra.mxu0 %v5130
  %5149 = vmatprep.subr.mxu0 0.0
  %5150 = vmatpush1.msra.mxu0 %v5131
  %5151 = vmatprep.subr.mxu0 0.0
  %5152 = vmatpush1.msra.mxu0 %v5132
  %5153 = vmatprep.subr.mxu0 0.0
  %5154 = vmatpush1.msra.mxu0 %v5133
  %5155 = vmatprep.subr.mxu0 0.0
  %5156 = vmatpush1.msra.mxu0 %v5134
  %5157 = vmatprep.subr.mxu0 0.0
  %5158 = vmatpush1.msra.mxu0 %v5135
  %5159 = vmatprep.subr.mxu0 0.0
  %5160 = vmatpush1.msra.mxu0 %v5136
  %5161 = vmatprep.subr.mxu0 0.0
  %5162 = vmatpush1.msra.mxu0 %v5137
  %5163 = vmatprep.subr.mxu0 0.0
  %5164 = vmatpush1.msra.mxu0 %v5138
  %5165 = vmatprep.subr.mxu0 0.0
  %5166 = vmatpush1.msra.mxu0 %v5139
  %5167 = vmatprep.subr.mxu0 0.0
  %5168 = vmatpush1.msra.mxu0 %v5140
  %5169 = vmatprep.subr.mxu0 0.0
  %5170 = vmatpush1.msra.mxu0 %v5141
  %5171 = vmatprep.subr.mxu0 0.0
  %5172 = vmatpush1.msra.mxu0 %v5142
  %5173 = vmatprep.subr.mxu0 0.0
  %5174 = vmatpush1.msra.mxu0 %v5143
  %5175 = vmatprep.subr.mxu0 0.0
  %5176 = vmatpush1.msra.mxu0 %v5144
  %5177 = vmatprep.subr.mxu0 0.0
  %5178 = vmatpush1.msra.mxu0 0.0
  %5179 = vmatprep.subr.mxu0 0.0
  %5180 = vmatpush1.msra.mxu0 0.0
  %5181 = vmatprep.subr.mxu0 0.0
  %5182 = vmatpush1.msra.mxu0 0.0
  %5183 = vmatprep.subr.mxu0 0.0
  %5184 = vmatpush1.msra.mxu0 0.0
  %5185 = vmatprep.subr.mxu0 0.0
  %5186 = vmatpush1.msra.mxu0 0.0
  %5187 = vmatprep.subr.mxu0 0.0
  %5188 = vmatpush1.msra.mxu0 0.0
  %5189 = vmatprep.subr.mxu0 0.0
  %5190 = vmatpush1.msra.mxu0 0.0
  %5191 = vmatprep.subr.mxu0 0.0
  %5192 = vmatpush1.msra.mxu0 0.0
  %5193 = vmatprep.subr.mxu0 0.0
  %5194 = vmatpush1.msra.mxu0 0.0
  %5195 = vmatprep.subr.mxu0 0.0
  %5196 = vmatpush1.msra.mxu0 0.0
  %5197 = vmatprep.subr.mxu0 0.0
  %5198 = vmatpush1.msra.mxu0 0.0
  %5199 = vmatprep.subr.mxu0 0.0
  %5200 = vmatpush1.msra.mxu0 0.0
  %5201 = vmatprep.subr.mxu0 0.0
  %5202 = vmatpush1.msra.mxu0 0.0
  %5203 = vmatprep.subr.mxu0 0.0
  %5204 = vmatpush1.msra.mxu0 0.0
  %5205 = vmatprep.subr.mxu0 0.0
  %5206 = vmatpush1.msra.mxu0 0.0
  %5207 = vmatprep.subr.mxu0 0.0
  %5208 = vmatpush1.msra.mxu0 0.0
  %5209 = vmatprep.mubr.f32.mxu0 0.0
  %5210 = vmatmul.mubr.f32.gmra.mrb[0].mxu0 %v181
  %v5211 = vpop.f32.mrb[0].mxu0
  %v5212 = vadd.f32 0.0, %v5211
  %v5213 = vpop.f32.mrb[0].mxu0
  %5214 = vmatprep.mubr.f32.mxu0 0.0
  %5215 = vmatmul.mubr.f32.gmra.mrb[0].mxu0 %v182
  %v5216 = vpop.f32.mrb[0].mxu0
  %v5217 = vadd.f32 0.0, %v5216
  %v5218 = vpop.f32.mrb[0].mxu0
  %5219 = vmatprep.mubr.f32.mxu0 0.0
  %5220 = vmatmul.mubr.f32.gmra.mrb[0].mxu0 %v183
  %v5221 = vpop.f32.mrb[0].mxu0
  %v5222 = vadd.f32 0.0, %v5221
  %v5223 = vpop.f32.mrb[0].mxu0
  %5224 = vmatprep.mubr.f32.mxu0 0.0
  %5225 = vmatmul.mubr.f32.gmra.mrb[0].mxu0 %v184
  %v5226 = vpop.f32.mrb[0].mxu0
  %v5227 = vadd.f32 0.0, %v5226
  %v5228 = vpop.f32.mrb[0].mxu0
  %5229 = vdwg.mxu0
  %s5230 = scalar_lea.vmem %s5, 1280
  %v5231 = vld [vmem:[%s5230] sm:$0xff]
  %v5232 = vld [vmem:[%s5230 + $0x8] sm:$0xff]
  %v5233 = vld [vmem:[%s5230 + $0x10] sm:$0xff]
  %v5234 = vld [vmem:[%s5230 + $0x18] sm:$0xff]
  %v5235 = vld [vmem:[%s5230 + $0x20] sm:$0xff]
  %v5236 = vld [vmem:[%s5230 + $0x28] sm:$0xff]
  %v5237 = vld [vmem:[%s5230 + $0x30] sm:$0xff]
  %v5238 = vld [vmem:[%s5230 + $0x38] sm:$0xff]
  %v5240 = vsel %vm405, %v5231, 0
  %v5243 = vsel %vm405, %v5232, 0
  %v5246 = vsel %vm405, %v5233, 0
  %v5249 = vsel %vm405, %v5234, 0
  %v5252 = vsel %vm405, %v5235, 0
  %v5255 = vsel %vm405, %v5236, 0
  %v5258 = vsel %vm405, %v5237, 0
  %v5261 = vsel %vm405, %v5238, 0
  %5263 = vmatprep.subr.mxu0 0.0
  %5264 = vmatpush1.msra.mxu0 %v5212
  %5265 = vmatprep.subr.mxu0 0.0
  %5266 = vmatpush1.msra.mxu0 %v5217
  %5267 = vmatprep.subr.mxu0 0.0
  %5268 = vmatpush1.msra.mxu0 %v5222
  %5269 = vmatprep.subr.mxu0 0.0
  %5270 = vmatpush1.msra.mxu0 %v5227
  %5271 = vmatprep.subr.mxu0 0.0
  %5272 = vmatpush1.msra.mxu0 0.0
  %5273 = vmatprep.subr.mxu0 0.0
  %5274 = vmatpush1.msra.mxu0 0.0
  %5275 = vmatprep.subr.mxu0 0.0
  %5276 = vmatpush1.msra.mxu0 0.0
  %5277 = vmatprep.subr.mxu0 0.0
  %5278 = vmatpush1.msra.mxu0 0.0
  %5279 = vmatprep.subr.mxu0 0.0
  %5280 = vmatpush1.msra.mxu0 0.0
  %5281 = vmatprep.subr.mxu0 0.0
  %5282 = vmatpush1.msra.mxu0 0.0
  %5283 = vmatprep.subr.mxu0 0.0
  %5284 = vmatpush1.msra.mxu0 0.0
  %5285 = vmatprep.subr.mxu0 0.0
  %5286 = vmatpush1.msra.mxu0 0.0
  %5287 = vmatprep.subr.mxu0 0.0
  %5288 = vmatpush1.msra.mxu0 0.0
  %5289 = vmatprep.subr.mxu0 0.0
  %5290 = vmatpush1.msra.mxu0 0.0
  %5291 = vmatprep.subr.mxu0 0.0
  %5292 = vmatpush1.msra.mxu0 0.0
  %5293 = vmatprep.subr.mxu0 0.0
  %5294 = vmatpush1.msra.mxu0 0.0
  %5295 = vmatprep.subr.mxu0 0.0
  %5296 = vmatpush1.msra.mxu0 0.0
  %5297 = vmatprep.subr.mxu0 0.0
  %5298 = vmatpush1.msra.mxu0 0.0
  %5299 = vmatprep.subr.mxu0 0.0
  %5300 = vmatpush1.msra.mxu0 0.0
  %5301 = vmatprep.subr.mxu0 0.0
  %5302 = vmatpush1.msra.mxu0 0.0
  %5303 = vmatprep.subr.mxu0 0.0
  %5304 = vmatpush1.msra.mxu0 0.0
  %5305 = vmatprep.subr.mxu0 0.0
  %5306 = vmatpush1.msra.mxu0 0.0
  %5307 = vmatprep.subr.mxu0 0.0
  %5308 = vmatpush1.msra.mxu0 0.0
  %5309 = vmatprep.subr.mxu0 0.0
  %5310 = vmatpush1.msra.mxu0 0.0
  %5311 = vmatprep.subr.mxu0 0.0
  %5312 = vmatpush1.msra.mxu0 0.0
  %5313 = vmatprep.subr.mxu0 0.0
  %5314 = vmatpush1.msra.mxu0 0.0
  %5315 = vmatprep.subr.mxu0 0.0
  %5316 = vmatpush1.msra.mxu0 0.0
  %5317 = vmatprep.subr.mxu0 0.0
  %5318 = vmatpush1.msra.mxu0 0.0
  %5319 = vmatprep.subr.mxu0 0.0
  %5320 = vmatpush1.msra.mxu0 0.0
  %5321 = vmatprep.subr.mxu0 0.0
  %5322 = vmatpush1.msra.mxu0 0.0
  %5323 = vmatprep.subr.mxu0 0.0
  %5324 = vmatpush1.msra.mxu0 0.0
  %5325 = vmatprep.subr.mxu0 0.0
  %5326 = vmatpush1.msra.mxu0 0.0
  %5327 = vmatprep.mubr.f32.mxu0 0.0
  %5328 = vmatmul.mubr.f32.gmra.mrb[0].mxu0 %v5240
  %v5329 = vpop.f32.mrb[0].mxu0
  %v5330 = vadd.f32 0.0, %v5329
  %v5331 = vpop.f32.mrb[0].mxu0
  %5332 = vmatprep.mubr.f32.mxu0 0.0
  %5333 = vmatmul.mubr.f32.gmra.mrb[0].mxu0 %v5243
  %v5334 = vpop.f32.mrb[0].mxu0
  %v5335 = vadd.f32 0.0, %v5334
  %v5336 = vpop.f32.mrb[0].mxu0
  %5337 = vmatprep.mubr.f32.mxu0 0.0
  %5338 = vmatmul.mubr.f32.gmra.mrb[0].mxu0 %v5246
  %v5339 = vpop.f32.mrb[0].mxu0
  %v5340 = vadd.f32 0.0, %v5339
  %v5341 = vpop.f32.mrb[0].mxu0
  %5342 = vmatprep.mubr.f32.mxu0 0.0
  %5343 = vmatmul.mubr.f32.gmra.mrb[0].mxu0 %v5249
  %v5344 = vpop.f32.mrb[0].mxu0
  %v5345 = vadd.f32 0.0, %v5344
  %v5346 = vpop.f32.mrb[0].mxu0
  %5347 = vmatprep.mubr.f32.mxu0 0.0
  %5348 = vmatmul.mubr.f32.gmra.mrb[0].mxu0 %v5252
  %v5349 = vpop.f32.mrb[0].mxu0
  %v5350 = vadd.f32 0.0, %v5349
  %v5351 = vpop.f32.mrb[0].mxu0
  %5352 = vmatprep.mubr.f32.mxu0 0.0
  %5353 = vmatmul.mubr.f32.gmra.mrb[0].mxu0 %v5255
  %v5354 = vpop.f32.mrb[0].mxu0
  %v5355 = vadd.f32 0.0, %v5354
  %v5356 = vpop.f32.mrb[0].mxu0
  %5357 = vmatprep.mubr.f32.mxu0 0.0
  %5358 = vmatmul.mubr.f32.gmra.mrb[0].mxu0 %v5258
  %v5359 = vpop.f32.mrb[0].mxu0
  %v5360 = vadd.f32 0.0, %v5359
  %v5361 = vpop.f32.mrb[0].mxu0
  %5362 = vmatprep.mubr.f32.mxu0 0.0
  %5363 = vmatmul.mubr.f32.gmra.mrb[0].mxu0 %v5261
  %v5364 = vpop.f32.mrb[0].mxu0
  %v5365 = vadd.f32 0.0, %v5364
  %v5366 = vpop.f32.mrb[0].mxu0
  %5367 = vdwg.mxu0
  %v5368 = vadd.f32 %v5120, %v5330
  %v5369 = vadd.f32 %v5121, %v5335
  %v5370 = vadd.f32 %v5122, %v5340
  %v5371 = vadd.f32 %v5123, %v5345
  %v5372 = vadd.f32 %v5124, %v5350
  %v5373 = vadd.f32 %v5125, %v5355
  %v5374 = vadd.f32 %v5126, %v5360
  %v5375 = vadd.f32 %v5127, %v5365
  %s5376 = scalar_lea.vmem %s7, 2688
  %v5377 = vld [vmem:[%s5376] sm:$0xff]
  %v5378 = vld [vmem:[%s5376 + $0x8] sm:$0xff]
  %v5379 = vld [vmem:[%s5376 + $0x10] sm:$0xff]
  %v5380 = vld [vmem:[%s5376 + $0x18] sm:$0xff]
  %v5381 = vld [vmem:[%s5376 + $0x20] sm:$0xff]
  %v5382 = vld [vmem:[%s5376 + $0x28] sm:$0xff]
  %v5383 = vld [vmem:[%s5376 + $0x30] sm:$0xff]
  %v5384 = vld [vmem:[%s5376 + $0x38] sm:$0xff]
  %v5385 = vld [vmem:[%s5376 + $0x40] sm:$0xff]
  %v5386 = vld [vmem:[%s5376 + $0x48] sm:$0xff]
  %v5387 = vld [vmem:[%s5376 + $0x50] sm:$0xff]
  %v5388 = vld [vmem:[%s5376 + $0x58] sm:$0xff]
  %v5389 = vld [vmem:[%s5376 + $0x60] sm:$0xff]
  %v5390 = vld [vmem:[%s5376 + $0x68] sm:$0xff]
  %v5391 = vld [vmem:[%s5376 + $0x70] sm:$0xff]
  %v5392 = vld [vmem:[%s5376 + $0x78] sm:$0xff]
  %5393 = vmatprep.subr.mxu0 0.0
  %5394 = vmatpush1.msra.mxu0 %v5377
  %5395 = vmatprep.subr.mxu0 0.0
  %5396 = vmatpush1.msra.mxu0 %v5378
  %5397 = vmatprep.subr.mxu0 0.0
  %5398 = vmatpush1.msra.mxu0 %v5379
  %5399 = vmatprep.subr.mxu0 0.0
  %5400 = vmatpush1.msra.mxu0 %v5380
  %5401 = vmatprep.subr.mxu0 0.0
  %5402 = vmatpush1.msra.mxu0 %v5381
  %5403 = vmatprep.subr.mxu0 0.0
  %5404 = vmatpush1.msra.mxu0 %v5382
  %5405 = vmatprep.subr.mxu0 0.0
  %5406 = vmatpush1.msra.mxu0 %v5383
  %5407 = vmatprep.subr.mxu0 0.0
  %5408 = vmatpush1.msra.mxu0 %v5384
  %5409 = vmatprep.subr.mxu0 0.0
  %5410 = vmatpush1.msra.mxu0 %v5385
  %5411 = vmatprep.subr.mxu0 0.0
  %5412 = vmatpush1.msra.mxu0 %v5386
  %5413 = vmatprep.subr.mxu0 0.0
  %5414 = vmatpush1.msra.mxu0 %v5387
  %5415 = vmatprep.subr.mxu0 0.0
  %5416 = vmatpush1.msra.mxu0 %v5388
  %5417 = vmatprep.subr.mxu0 0.0
  %5418 = vmatpush1.msra.mxu0 %v5389
  %5419 = vmatprep.subr.mxu0 0.0
  %5420 = vmatpush1.msra.mxu0 %v5390
  %5421 = vmatprep.subr.mxu0 0.0
  %5422 = vmatpush1.msra.mxu0 %v5391
  %5423 = vmatprep.subr.mxu0 0.0
  %5424 = vmatpush1.msra.mxu0 %v5392
  %5425 = vmatprep.subr.mxu0 0.0
  %5426 = vmatpush1.msra.mxu0 0.0
  %5427 = vmatprep.subr.mxu0 0.0
  %5428 = vmatpush1.msra.mxu0 0.0
  %5429 = vmatprep.subr.mxu0 0.0
  %5430 = vmatpush1.msra.mxu0 0.0
  %5431 = vmatprep.subr.mxu0 0.0
  %5432 = vmatpush1.msra.mxu0 0.0
  %5433 = vmatprep.subr.mxu0 0.0
  %5434 = vmatpush1.msra.mxu0 0.0
  %5435 = vmatprep.subr.mxu0 0.0
  %5436 = vmatpush1.msra.mxu0 0.0
  %5437 = vmatprep.subr.mxu0 0.0
  %5438 = vmatpush1.msra.mxu0 0.0
  %5439 = vmatprep.subr.mxu0 0.0
  %5440 = vmatpush1.msra.mxu0 0.0
  %5441 = vmatprep.subr.mxu0 0.0
  %5442 = vmatpush1.msra.mxu0 0.0
  %5443 = vmatprep.subr.mxu0 0.0
  %5444 = vmatpush1.msra.mxu0 0.0
  %5445 = vmatprep.subr.mxu0 0.0
  %5446 = vmatpush1.msra.mxu0 0.0
  %5447 = vmatprep.subr.mxu0 0.0
  %5448 = vmatpush1.msra.mxu0 0.0
  %5449 = vmatprep.subr.mxu0 0.0
  %5450 = vmatpush1.msra.mxu0 0.0
  %5451 = vmatprep.subr.mxu0 0.0
  %5452 = vmatpush1.msra.mxu0 0.0
  %5453 = vmatprep.subr.mxu0 0.0
  %5454 = vmatpush1.msra.mxu0 0.0
  %5455 = vmatprep.subr.mxu0 0.0
  %5456 = vmatpush1.msra.mxu0 0.0
  %5457 = vmatprep.mubr.f32.mxu0 0.0
  %5458 = vmatmul.mubr.f32.gmra.mrb[0].mxu0 %v181
  %v5459 = vpop.f32.mrb[0].mxu0
  %v5460 = vadd.f32 0.0, %v5459
  %v5461 = vpop.f32.mrb[0].mxu0
  %5462 = vmatprep.mubr.f32.mxu0 0.0
  %5463 = vmatmul.mubr.f32.gmra.mrb[0].mxu0 %v182
  %v5464 = vpop.f32.mrb[0].mxu0
  %v5465 = vadd.f32 0.0, %v5464
  %v5466 = vpop.f32.mrb[0].mxu0
  %5467 = vmatprep.mubr.f32.mxu0 0.0
  %5468 = vmatmul.mubr.f32.gmra.mrb[0].mxu0 %v183
  %v5469 = vpop.f32.mrb[0].mxu0
  %v5470 = vadd.f32 0.0, %v5469
  %v5471 = vpop.f32.mrb[0].mxu0
  %5472 = vmatprep.mubr.f32.mxu0 0.0
  %5473 = vmatmul.mubr.f32.gmra.mrb[0].mxu0 %v184
  %v5474 = vpop.f32.mrb[0].mxu0
  %v5475 = vadd.f32 0.0, %v5474
  %v5476 = vpop.f32.mrb[0].mxu0
  %5477 = vdwg.mxu0
  %s5478 = scalar_lea.vmem %s5, 1344
  %v5479 = vld [vmem:[%s5478] sm:$0xff]
  %v5480 = vld [vmem:[%s5478 + $0x8] sm:$0xff]
  %v5481 = vld [vmem:[%s5478 + $0x10] sm:$0xff]
  %v5482 = vld [vmem:[%s5478 + $0x18] sm:$0xff]
  %v5483 = vld [vmem:[%s5478 + $0x20] sm:$0xff]
  %v5484 = vld [vmem:[%s5478 + $0x28] sm:$0xff]
  %v5485 = vld [vmem:[%s5478 + $0x30] sm:$0xff]
  %v5486 = vld [vmem:[%s5478 + $0x38] sm:$0xff]
  %v5488 = vsel %vm405, %v5479, 0
  %v5491 = vsel %vm405, %v5480, 0
  %v5494 = vsel %vm405, %v5481, 0
  %v5497 = vsel %vm405, %v5482, 0
  %v5500 = vsel %vm405, %v5483, 0
  %v5503 = vsel %vm405, %v5484, 0
  %v5506 = vsel %vm405, %v5485, 0
  %v5509 = vsel %vm405, %v5486, 0
  %5511 = vmatprep.subr.mxu0 0.0
  %5512 = vmatpush1.msra.mxu0 %v5460
  %5513 = vmatprep.subr.mxu0 0.0
  %5514 = vmatpush1.msra.mxu0 %v5465
  %5515 = vmatprep.subr.mxu0 0.0
  %5516 = vmatpush1.msra.mxu0 %v5470
  %5517 = vmatprep.subr.mxu0 0.0
  %5518 = vmatpush1.msra.mxu0 %v5475
  %5519 = vmatprep.subr.mxu0 0.0
  %5520 = vmatpush1.msra.mxu0 0.0
  %5521 = vmatprep.subr.mxu0 0.0
  %5522 = vmatpush1.msra.mxu0 0.0
  %5523 = vmatprep.subr.mxu0 0.0
  %5524 = vmatpush1.msra.mxu0 0.0
  %5525 = vmatprep.subr.mxu0 0.0
  %5526 = vmatpush1.msra.mxu0 0.0
  %5527 = vmatprep.subr.mxu0 0.0
  %5528 = vmatpush1.msra.mxu0 0.0
  %5529 = vmatprep.subr.mxu0 0.0
  %5530 = vmatpush1.msra.mxu0 0.0
  %5531 = vmatprep.subr.mxu0 0.0
  %5532 = vmatpush1.msra.mxu0 0.0
  %5533 = vmatprep.subr.mxu0 0.0
  %5534 = vmatpush1.msra.mxu0 0.0
  %5535 = vmatprep.subr.mxu0 0.0
  %5536 = vmatpush1.msra.mxu0 0.0
  %5537 = vmatprep.subr.mxu0 0.0
  %5538 = vmatpush1.msra.mxu0 0.0
  %5539 = vmatprep.subr.mxu0 0.0
  %5540 = vmatpush1.msra.mxu0 0.0
  %5541 = vmatprep.subr.mxu0 0.0
  %5542 = vmatpush1.msra.mxu0 0.0
  %5543 = vmatprep.subr.mxu0 0.0
  %5544 = vmatpush1.msra.mxu0 0.0
  %5545 = vmatprep.subr.mxu0 0.0
  %5546 = vmatpush1.msra.mxu0 0.0
  %5547 = vmatprep.subr.mxu0 0.0
  %5548 = vmatpush1.msra.mxu0 0.0
  %5549 = vmatprep.subr.mxu0 0.0
  %5550 = vmatpush1.msra.mxu0 0.0
  %5551 = vmatprep.subr.mxu0 0.0
  %5552 = vmatpush1.msra.mxu0 0.0
  %5553 = vmatprep.subr.mxu0 0.0
  %5554 = vmatpush1.msra.mxu0 0.0
  %5555 = vmatprep.subr.mxu0 0.0
  %5556 = vmatpush1.msra.mxu0 0.0
  %5557 = vmatprep.subr.mxu0 0.0
  %5558 = vmatpush1.msra.mxu0 0.0
  %5559 = vmatprep.subr.mxu0 0.0
  %5560 = vmatpush1.msra.mxu0 0.0
  %5561 = vmatprep.subr.mxu0 0.0
  %5562 = vmatpush1.msra.mxu0 0.0
  %5563 = vmatprep.subr.mxu0 0.0
  %5564 = vmatpush1.msra.mxu0 0.0
  %5565 = vmatprep.subr.mxu0 0.0
  %5566 = vmatpush1.msra.mxu0 0.0
  %5567 = vmatprep.subr.mxu0 0.0
  %5568 = vmatpush1.msra.mxu0 0.0
  %5569 = vmatprep.subr.mxu0 0.0
  %5570 = vmatpush1.msra.mxu0 0.0
  %5571 = vmatprep.subr.mxu0 0.0
  %5572 = vmatpush1.msra.mxu0 0.0
  %5573 = vmatprep.subr.mxu0 0.0
  %5574 = vmatpush1.msra.mxu0 0.0
  %5575 = vmatprep.mubr.f32.mxu0 0.0
  %5576 = vmatmul.mubr.f32.gmra.mrb[0].mxu0 %v5488
  %v5577 = vpop.f32.mrb[0].mxu0
  %v5578 = vadd.f32 0.0, %v5577
  %v5579 = vpop.f32.mrb[0].mxu0
  %5580 = vmatprep.mubr.f32.mxu0 0.0
  %5581 = vmatmul.mubr.f32.gmra.mrb[0].mxu0 %v5491
  %v5582 = vpop.f32.mrb[0].mxu0
  %v5583 = vadd.f32 0.0, %v5582
  %v5584 = vpop.f32.mrb[0].mxu0
  %5585 = vmatprep.mubr.f32.mxu0 0.0
  %5586 = vmatmul.mubr.f32.gmra.mrb[0].mxu0 %v5494
  %v5587 = vpop.f32.mrb[0].mxu0
  %v5588 = vadd.f32 0.0, %v5587
  %v5589 = vpop.f32.mrb[0].mxu0
  %5590 = vmatprep.mubr.f32.mxu0 0.0
  %5591 = vmatmul.mubr.f32.gmra.mrb[0].mxu0 %v5497
  %v5592 = vpop.f32.mrb[0].mxu0
  %v5593 = vadd.f32 0.0, %v5592
  %v5594 = vpop.f32.mrb[0].mxu0
  %5595 = vmatprep.mubr.f32.mxu0 0.0
  %5596 = vmatmul.mubr.f32.gmra.mrb[0].mxu0 %v5500
  %v5597 = vpop.f32.mrb[0].mxu0
  %v5598 = vadd.f32 0.0, %v5597
  %v5599 = vpop.f32.mrb[0].mxu0
  %5600 = vmatprep.mubr.f32.mxu0 0.0
  %5601 = vmatmul.mubr.f32.gmra.mrb[0].mxu0 %v5503
  %v5602 = vpop.f32.mrb[0].mxu0
  %v5603 = vadd.f32 0.0, %v5602
  %v5604 = vpop.f32.mrb[0].mxu0
  %5605 = vmatprep.mubr.f32.mxu0 0.0
  %5606 = vmatmul.mubr.f32.gmra.mrb[0].mxu0 %v5506
  %v5607 = vpop.f32.mrb[0].mxu0
  %v5608 = vadd.f32 0.0, %v5607
  %v5609 = vpop.f32.mrb[0].mxu0
  %5610 = vmatprep.mubr.f32.mxu0 0.0
  %5611 = vmatmul.mubr.f32.gmra.mrb[0].mxu0 %v5509
  %v5612 = vpop.f32.mrb[0].mxu0
  %v5613 = vadd.f32 0.0, %v5612
  %v5614 = vpop.f32.mrb[0].mxu0
  %5615 = vdwg.mxu0
  %v5616 = vadd.f32 %v5368, %v5578
  %v5617 = vadd.f32 %v5369, %v5583
  %v5618 = vadd.f32 %v5370, %v5588
  %v5619 = vadd.f32 %v5371, %v5593
  %v5620 = vadd.f32 %v5372, %v5598
  %v5621 = vadd.f32 %v5373, %v5603
  %v5622 = vadd.f32 %v5374, %v5608
  %v5623 = vadd.f32 %v5375, %v5613
  %s5624 = scalar_lea.vmem %s7, 2816
  %v5625 = vld [vmem:[%s5624] sm:$0xff]
  %v5626 = vld [vmem:[%s5624 + $0x8] sm:$0xff]
  %v5627 = vld [vmem:[%s5624 + $0x10] sm:$0xff]
  %v5628 = vld [vmem:[%s5624 + $0x18] sm:$0xff]
  %v5629 = vld [vmem:[%s5624 + $0x20] sm:$0xff]
  %v5630 = vld [vmem:[%s5624 + $0x28] sm:$0xff]
  %v5631 = vld [vmem:[%s5624 + $0x30] sm:$0xff]
  %v5632 = vld [vmem:[%s5624 + $0x38] sm:$0xff]
  %v5633 = vld [vmem:[%s5624 + $0x40] sm:$0xff]
  %v5634 = vld [vmem:[%s5624 + $0x48] sm:$0xff]
  %v5635 = vld [vmem:[%s5624 + $0x50] sm:$0xff]
  %v5636 = vld [vmem:[%s5624 + $0x58] sm:$0xff]
  %v5637 = vld [vmem:[%s5624 + $0x60] sm:$0xff]
  %v5638 = vld [vmem:[%s5624 + $0x68] sm:$0xff]
  %v5639 = vld [vmem:[%s5624 + $0x70] sm:$0xff]
  %v5640 = vld [vmem:[%s5624 + $0x78] sm:$0xff]
  %5641 = vmatprep.subr.mxu0 0.0
  %5642 = vmatpush1.msra.mxu0 %v5625
  %5643 = vmatprep.subr.mxu0 0.0
  %5644 = vmatpush1.msra.mxu0 %v5626
  %5645 = vmatprep.subr.mxu0 0.0
  %5646 = vmatpush1.msra.mxu0 %v5627
  %5647 = vmatprep.subr.mxu0 0.0
  %5648 = vmatpush1.msra.mxu0 %v5628
  %5649 = vmatprep.subr.mxu0 0.0
  %5650 = vmatpush1.msra.mxu0 %v5629
  %5651 = vmatprep.subr.mxu0 0.0
  %5652 = vmatpush1.msra.mxu0 %v5630
  %5653 = vmatprep.subr.mxu0 0.0
  %5654 = vmatpush1.msra.mxu0 %v5631
  %5655 = vmatprep.subr.mxu0 0.0
  %5656 = vmatpush1.msra.mxu0 %v5632
  %5657 = vmatprep.subr.mxu0 0.0
  %5658 = vmatpush1.msra.mxu0 %v5633
  %5659 = vmatprep.subr.mxu0 0.0
  %5660 = vmatpush1.msra.mxu0 %v5634
  %5661 = vmatprep.subr.mxu0 0.0
  %5662 = vmatpush1.msra.mxu0 %v5635
  %5663 = vmatprep.subr.mxu0 0.0
  %5664 = vmatpush1.msra.mxu0 %v5636
  %5665 = vmatprep.subr.mxu0 0.0
  %5666 = vmatpush1.msra.mxu0 %v5637
  %5667 = vmatprep.subr.mxu0 0.0
  %5668 = vmatpush1.msra.mxu0 %v5638
  %5669 = vmatprep.subr.mxu0 0.0
  %5670 = vmatpush1.msra.mxu0 %v5639
  %5671 = vmatprep.subr.mxu0 0.0
  %5672 = vmatpush1.msra.mxu0 %v5640
  %5673 = vmatprep.subr.mxu0 0.0
  %5674 = vmatpush1.msra.mxu0 0.0
  %5675 = vmatprep.subr.mxu0 0.0
  %5676 = vmatpush1.msra.mxu0 0.0
  %5677 = vmatprep.subr.mxu0 0.0
  %5678 = vmatpush1.msra.mxu0 0.0
  %5679 = vmatprep.subr.mxu0 0.0
  %5680 = vmatpush1.msra.mxu0 0.0
  %5681 = vmatprep.subr.mxu0 0.0
  %5682 = vmatpush1.msra.mxu0 0.0
  %5683 = vmatprep.subr.mxu0 0.0
  %5684 = vmatpush1.msra.mxu0 0.0
  %5685 = vmatprep.subr.mxu0 0.0
  %5686 = vmatpush1.msra.mxu0 0.0
  %5687 = vmatprep.subr.mxu0 0.0
  %5688 = vmatpush1.msra.mxu0 0.0
  %5689 = vmatprep.subr.mxu0 0.0
  %5690 = vmatpush1.msra.mxu0 0.0
  %5691 = vmatprep.subr.mxu0 0.0
  %5692 = vmatpush1.msra.mxu0 0.0
  %5693 = vmatprep.subr.mxu0 0.0
  %5694 = vmatpush1.msra.mxu0 0.0
  %5695 = vmatprep.subr.mxu0 0.0
  %5696 = vmatpush1.msra.mxu0 0.0
  %5697 = vmatprep.subr.mxu0 0.0
  %5698 = vmatpush1.msra.mxu0 0.0
  %5699 = vmatprep.subr.mxu0 0.0
  %5700 = vmatpush1.msra.mxu0 0.0
  %5701 = vmatprep.subr.mxu0 0.0
  %5702 = vmatpush1.msra.mxu0 0.0
  %5703 = vmatprep.subr.mxu0 0.0
  %5704 = vmatpush1.msra.mxu0 0.0
  %5705 = vmatprep.mubr.f32.mxu0 0.0
  %5706 = vmatmul.mubr.f32.gmra.mrb[0].mxu0 %v181
  %v5707 = vpop.f32.mrb[0].mxu0
  %v5708 = vadd.f32 0.0, %v5707
  %v5709 = vpop.f32.mrb[0].mxu0
  %5710 = vmatprep.mubr.f32.mxu0 0.0
  %5711 = vmatmul.mubr.f32.gmra.mrb[0].mxu0 %v182
  %v5712 = vpop.f32.mrb[0].mxu0
  %v5713 = vadd.f32 0.0, %v5712
  %v5714 = vpop.f32.mrb[0].mxu0
  %5715 = vmatprep.mubr.f32.mxu0 0.0
  %5716 = vmatmul.mubr.f32.gmra.mrb[0].mxu0 %v183
  %v5717 = vpop.f32.mrb[0].mxu0
  %v5718 = vadd.f32 0.0, %v5717
  %v5719 = vpop.f32.mrb[0].mxu0
  %5720 = vmatprep.mubr.f32.mxu0 0.0
  %5721 = vmatmul.mubr.f32.gmra.mrb[0].mxu0 %v184
  %v5722 = vpop.f32.mrb[0].mxu0
  %v5723 = vadd.f32 0.0, %v5722
  %v5724 = vpop.f32.mrb[0].mxu0
  %5725 = vdwg.mxu0
  %s5726 = scalar_lea.vmem %s5, 1408
  %v5727 = vld [vmem:[%s5726] sm:$0xff]
  %v5728 = vld [vmem:[%s5726 + $0x8] sm:$0xff]
  %v5729 = vld [vmem:[%s5726 + $0x10] sm:$0xff]
  %v5730 = vld [vmem:[%s5726 + $0x18] sm:$0xff]
  %v5731 = vld [vmem:[%s5726 + $0x20] sm:$0xff]
  %v5732 = vld [vmem:[%s5726 + $0x28] sm:$0xff]
  %v5733 = vld [vmem:[%s5726 + $0x30] sm:$0xff]
  %v5734 = vld [vmem:[%s5726 + $0x38] sm:$0xff]
  %v5736 = vsel %vm405, %v5727, 0
  %v5739 = vsel %vm405, %v5728, 0
  %v5742 = vsel %vm405, %v5729, 0
  %v5745 = vsel %vm405, %v5730, 0
  %v5748 = vsel %vm405, %v5731, 0
  %v5751 = vsel %vm405, %v5732, 0
  %v5754 = vsel %vm405, %v5733, 0
  %v5757 = vsel %vm405, %v5734, 0
  %5759 = vmatprep.subr.mxu0 0.0
  %5760 = vmatpush1.msra.mxu0 %v5708
  %5761 = vmatprep.subr.mxu0 0.0
  %5762 = vmatpush1.msra.mxu0 %v5713
  %5763 = vmatprep.subr.mxu0 0.0
  %5764 = vmatpush1.msra.mxu0 %v5718
  %5765 = vmatprep.subr.mxu0 0.0
  %5766 = vmatpush1.msra.mxu0 %v5723
  %5767 = vmatprep.subr.mxu0 0.0
  %5768 = vmatpush1.msra.mxu0 0.0
  %5769 = vmatprep.subr.mxu0 0.0
  %5770 = vmatpush1.msra.mxu0 0.0
  %5771 = vmatprep.subr.mxu0 0.0
  %5772 = vmatpush1.msra.mxu0 0.0
  %5773 = vmatprep.subr.mxu0 0.0
  %5774 = vmatpush1.msra.mxu0 0.0
  %5775 = vmatprep.subr.mxu0 0.0
  %5776 = vmatpush1.msra.mxu0 0.0
  %5777 = vmatprep.subr.mxu0 0.0
  %5778 = vmatpush1.msra.mxu0 0.0
  %5779 = vmatprep.subr.mxu0 0.0
  %5780 = vmatpush1.msra.mxu0 0.0
  %5781 = vmatprep.subr.mxu0 0.0
  %5782 = vmatpush1.msra.mxu0 0.0
  %5783 = vmatprep.subr.mxu0 0.0
  %5784 = vmatpush1.msra.mxu0 0.0
  %5785 = vmatprep.subr.mxu0 0.0
  %5786 = vmatpush1.msra.mxu0 0.0
  %5787 = vmatprep.subr.mxu0 0.0
  %5788 = vmatpush1.msra.mxu0 0.0
  %5789 = vmatprep.subr.mxu0 0.0
  %5790 = vmatpush1.msra.mxu0 0.0
  %5791 = vmatprep.subr.mxu0 0.0
  %5792 = vmatpush1.msra.mxu0 0.0
  %5793 = vmatprep.subr.mxu0 0.0
  %5794 = vmatpush1.msra.mxu0 0.0
  %5795 = vmatprep.subr.mxu0 0.0
  %5796 = vmatpush1.msra.mxu0 0.0
  %5797 = vmatprep.subr.mxu0 0.0
  %5798 = vmatpush1.msra.mxu0 0.0
  %5799 = vmatprep.subr.mxu0 0.0
  %5800 = vmatpush1.msra.mxu0 0.0
  %5801 = vmatprep.subr.mxu0 0.0
  %5802 = vmatpush1.msra.mxu0 0.0
  %5803 = vmatprep.subr.mxu0 0.0
  %5804 = vmatpush1.msra.mxu0 0.0
  %5805 = vmatprep.subr.mxu0 0.0
  %5806 = vmatpush1.msra.mxu0 0.0
  %5807 = vmatprep.subr.mxu0 0.0
  %5808 = vmatpush1.msra.mxu0 0.0
  %5809 = vmatprep.subr.mxu0 0.0
  %5810 = vmatpush1.msra.mxu0 0.0
  %5811 = vmatprep.subr.mxu0 0.0
  %5812 = vmatpush1.msra.mxu0 0.0
  %5813 = vmatprep.subr.mxu0 0.0
  %5814 = vmatpush1.msra.mxu0 0.0
  %5815 = vmatprep.subr.mxu0 0.0
  %5816 = vmatpush1.msra.mxu0 0.0
  %5817 = vmatprep.subr.mxu0 0.0
  %5818 = vmatpush1.msra.mxu0 0.0
  %5819 = vmatprep.subr.mxu0 0.0
  %5820 = vmatpush1.msra.mxu0 0.0
  %5821 = vmatprep.subr.mxu0 0.0
  %5822 = vmatpush1.msra.mxu0 0.0
  %5823 = vmatprep.mubr.f32.mxu0 0.0
  %5824 = vmatmul.mubr.f32.gmra.mrb[0].mxu0 %v5736
  %v5825 = vpop.f32.mrb[0].mxu0
  %v5826 = vadd.f32 0.0, %v5825
  %v5827 = vpop.f32.mrb[0].mxu0
  %5828 = vmatprep.mubr.f32.mxu0 0.0
  %5829 = vmatmul.mubr.f32.gmra.mrb[0].mxu0 %v5739
  %v5830 = vpop.f32.mrb[0].mxu0
  %v5831 = vadd.f32 0.0, %v5830
  %v5832 = vpop.f32.mrb[0].mxu0
  %5833 = vmatprep.mubr.f32.mxu0 0.0
  %5834 = vmatmul.mubr.f32.gmra.mrb[0].mxu0 %v5742
  %v5835 = vpop.f32.mrb[0].mxu0
  %v5836 = vadd.f32 0.0, %v5835
  %v5837 = vpop.f32.mrb[0].mxu0
  %5838 = vmatprep.mubr.f32.mxu0 0.0
  %5839 = vmatmul.mubr.f32.gmra.mrb[0].mxu0 %v5745
  %v5840 = vpop.f32.mrb[0].mxu0
  %v5841 = vadd.f32 0.0, %v5840
  %v5842 = vpop.f32.mrb[0].mxu0
  %5843 = vmatprep.mubr.f32.mxu0 0.0
  %5844 = vmatmul.mubr.f32.gmra.mrb[0].mxu0 %v5748
  %v5845 = vpop.f32.mrb[0].mxu0
  %v5846 = vadd.f32 0.0, %v5845
  %v5847 = vpop.f32.mrb[0].mxu0
  %5848 = vmatprep.mubr.f32.mxu0 0.0
  %5849 = vmatmul.mubr.f32.gmra.mrb[0].mxu0 %v5751
  %v5850 = vpop.f32.mrb[0].mxu0
  %v5851 = vadd.f32 0.0, %v5850
  %v5852 = vpop.f32.mrb[0].mxu0
  %5853 = vmatprep.mubr.f32.mxu0 0.0
  %5854 = vmatmul.mubr.f32.gmra.mrb[0].mxu0 %v5754
  %v5855 = vpop.f32.mrb[0].mxu0
  %v5856 = vadd.f32 0.0, %v5855
  %v5857 = vpop.f32.mrb[0].mxu0
  %5858 = vmatprep.mubr.f32.mxu0 0.0
  %5859 = vmatmul.mubr.f32.gmra.mrb[0].mxu0 %v5757
  %v5860 = vpop.f32.mrb[0].mxu0
  %v5861 = vadd.f32 0.0, %v5860
  %v5862 = vpop.f32.mrb[0].mxu0
  %5863 = vdwg.mxu0
  %v5864 = vadd.f32 %v5616, %v5826
  %v5865 = vadd.f32 %v5617, %v5831
  %v5866 = vadd.f32 %v5618, %v5836
  %v5867 = vadd.f32 %v5619, %v5841
  %v5868 = vadd.f32 %v5620, %v5846
  %v5869 = vadd.f32 %v5621, %v5851
  %v5870 = vadd.f32 %v5622, %v5856
  %v5871 = vadd.f32 %v5623, %v5861
  %s5872 = scalar_lea.vmem %s7, 2944
  %v5873 = vld [vmem:[%s5872] sm:$0xff]
  %v5874 = vld [vmem:[%s5872 + $0x8] sm:$0xff]
  %v5875 = vld [vmem:[%s5872 + $0x10] sm:$0xff]
  %v5876 = vld [vmem:[%s5872 + $0x18] sm:$0xff]
  %v5877 = vld [vmem:[%s5872 + $0x20] sm:$0xff]
  %v5878 = vld [vmem:[%s5872 + $0x28] sm:$0xff]
  %v5879 = vld [vmem:[%s5872 + $0x30] sm:$0xff]
  %v5880 = vld [vmem:[%s5872 + $0x38] sm:$0xff]
  %v5881 = vld [vmem:[%s5872 + $0x40] sm:$0xff]
  %v5882 = vld [vmem:[%s5872 + $0x48] sm:$0xff]
  %v5883 = vld [vmem:[%s5872 + $0x50] sm:$0xff]
  %v5884 = vld [vmem:[%s5872 + $0x58] sm:$0xff]
  %v5885 = vld [vmem:[%s5872 + $0x60] sm:$0xff]
  %v5886 = vld [vmem:[%s5872 + $0x68] sm:$0xff]
  %v5887 = vld [vmem:[%s5872 + $0x70] sm:$0xff]
  %v5888 = vld [vmem:[%s5872 + $0x78] sm:$0xff]
  %5889 = vmatprep.subr.mxu0 0.0
  %5890 = vmatpush1.msra.mxu0 %v5873
  %5891 = vmatprep.subr.mxu0 0.0
  %5892 = vmatpush1.msra.mxu0 %v5874
  %5893 = vmatprep.subr.mxu0 0.0
  %5894 = vmatpush1.msra.mxu0 %v5875
  %5895 = vmatprep.subr.mxu0 0.0
  %5896 = vmatpush1.msra.mxu0 %v5876
  %5897 = vmatprep.subr.mxu0 0.0
  %5898 = vmatpush1.msra.mxu0 %v5877
  %5899 = vmatprep.subr.mxu0 0.0
  %5900 = vmatpush1.msra.mxu0 %v5878
  %5901 = vmatprep.subr.mxu0 0.0
  %5902 = vmatpush1.msra.mxu0 %v5879
  %5903 = vmatprep.subr.mxu0 0.0
  %5904 = vmatpush1.msra.mxu0 %v5880
  %5905 = vmatprep.subr.mxu0 0.0
  %5906 = vmatpush1.msra.mxu0 %v5881
  %5907 = vmatprep.subr.mxu0 0.0
  %5908 = vmatpush1.msra.mxu0 %v5882
  %5909 = vmatprep.subr.mxu0 0.0
  %5910 = vmatpush1.msra.mxu0 %v5883
  %5911 = vmatprep.subr.mxu0 0.0
  %5912 = vmatpush1.msra.mxu0 %v5884
  %5913 = vmatprep.subr.mxu0 0.0
  %5914 = vmatpush1.msra.mxu0 %v5885
  %5915 = vmatprep.subr.mxu0 0.0
  %5916 = vmatpush1.msra.mxu0 %v5886
  %5917 = vmatprep.subr.mxu0 0.0
  %5918 = vmatpush1.msra.mxu0 %v5887
  %5919 = vmatprep.subr.mxu0 0.0
  %5920 = vmatpush1.msra.mxu0 %v5888
  %5921 = vmatprep.subr.mxu0 0.0
  %5922 = vmatpush1.msra.mxu0 0.0
  %5923 = vmatprep.subr.mxu0 0.0
  %5924 = vmatpush1.msra.mxu0 0.0
  %5925 = vmatprep.subr.mxu0 0.0
  %5926 = vmatpush1.msra.mxu0 0.0
  %5927 = vmatprep.subr.mxu0 0.0
  %5928 = vmatpush1.msra.mxu0 0.0
  %5929 = vmatprep.subr.mxu0 0.0
  %5930 = vmatpush1.msra.mxu0 0.0
  %5931 = vmatprep.subr.mxu0 0.0
  %5932 = vmatpush1.msra.mxu0 0.0
  %5933 = vmatprep.subr.mxu0 0.0
  %5934 = vmatpush1.msra.mxu0 0.0
  %5935 = vmatprep.subr.mxu0 0.0
  %5936 = vmatpush1.msra.mxu0 0.0
  %5937 = vmatprep.subr.mxu0 0.0
  %5938 = vmatpush1.msra.mxu0 0.0
  %5939 = vmatprep.subr.mxu0 0.0
  %5940 = vmatpush1.msra.mxu0 0.0
  %5941 = vmatprep.subr.mxu0 0.0
  %5942 = vmatpush1.msra.mxu0 0.0
  %5943 = vmatprep.subr.mxu0 0.0
  %5944 = vmatpush1.msra.mxu0 0.0
  %5945 = vmatprep.subr.mxu0 0.0
  %5946 = vmatpush1.msra.mxu0 0.0
  %5947 = vmatprep.subr.mxu0 0.0
  %5948 = vmatpush1.msra.mxu0 0.0
  %5949 = vmatprep.subr.mxu0 0.0
  %5950 = vmatpush1.msra.mxu0 0.0
  %5951 = vmatprep.subr.mxu0 0.0
  %5952 = vmatpush1.msra.mxu0 0.0
  %5953 = vmatprep.mubr.f32.mxu0 0.0
  %5954 = vmatmul.mubr.f32.gmra.mrb[0].mxu0 %v181
  %v5955 = vpop.f32.mrb[0].mxu0
  %v5956 = vadd.f32 0.0, %v5955
  %v5957 = vpop.f32.mrb[0].mxu0
  %5958 = vmatprep.mubr.f32.mxu0 0.0
  %5959 = vmatmul.mubr.f32.gmra.mrb[0].mxu0 %v182
  %v5960 = vpop.f32.mrb[0].mxu0
  %v5961 = vadd.f32 0.0, %v5960
  %v5962 = vpop.f32.mrb[0].mxu0
  %5963 = vmatprep.mubr.f32.mxu0 0.0
  %5964 = vmatmul.mubr.f32.gmra.mrb[0].mxu0 %v183
  %v5965 = vpop.f32.mrb[0].mxu0
  %v5966 = vadd.f32 0.0, %v5965
  %v5967 = vpop.f32.mrb[0].mxu0
  %5968 = vmatprep.mubr.f32.mxu0 0.0
  %5969 = vmatmul.mubr.f32.gmra.mrb[0].mxu0 %v184
  %v5970 = vpop.f32.mrb[0].mxu0
  %v5971 = vadd.f32 0.0, %v5970
  %v5972 = vpop.f32.mrb[0].mxu0
  %5973 = vdwg.mxu0
  %s5974 = scalar_lea.vmem %s5, 1472
  %v5975 = vld [vmem:[%s5974] sm:$0xff]
  %v5976 = vld [vmem:[%s5974 + $0x8] sm:$0xff]
  %v5977 = vld [vmem:[%s5974 + $0x10] sm:$0xff]
  %v5978 = vld [vmem:[%s5974 + $0x18] sm:$0xff]
  %v5979 = vld [vmem:[%s5974 + $0x20] sm:$0xff]
  %v5980 = vld [vmem:[%s5974 + $0x28] sm:$0xff]
  %v5981 = vld [vmem:[%s5974 + $0x30] sm:$0xff]
  %v5982 = vld [vmem:[%s5974 + $0x38] sm:$0xff]
  %v5984 = vsel %vm405, %v5975, 0
  %v5987 = vsel %vm405, %v5976, 0
  %v5990 = vsel %vm405, %v5977, 0
  %v5993 = vsel %vm405, %v5978, 0
  %v5996 = vsel %vm405, %v5979, 0
  %v5999 = vsel %vm405, %v5980, 0
  %v6002 = vsel %vm405, %v5981, 0
  %v6005 = vsel %vm405, %v5982, 0
  %6007 = vmatprep.subr.mxu0 0.0
  %6008 = vmatpush1.msra.mxu0 %v5956
  %6009 = vmatprep.subr.mxu0 0.0
  %6010 = vmatpush1.msra.mxu0 %v5961
  %6011 = vmatprep.subr.mxu0 0.0
  %6012 = vmatpush1.msra.mxu0 %v5966
  %6013 = vmatprep.subr.mxu0 0.0
  %6014 = vmatpush1.msra.mxu0 %v5971
  %6015 = vmatprep.subr.mxu0 0.0
  %6016 = vmatpush1.msra.mxu0 0.0
  %6017 = vmatprep.subr.mxu0 0.0
  %6018 = vmatpush1.msra.mxu0 0.0
  %6019 = vmatprep.subr.mxu0 0.0
  %6020 = vmatpush1.msra.mxu0 0.0
  %6021 = vmatprep.subr.mxu0 0.0
  %6022 = vmatpush1.msra.mxu0 0.0
  %6023 = vmatprep.subr.mxu0 0.0
  %6024 = vmatpush1.msra.mxu0 0.0
  %6025 = vmatprep.subr.mxu0 0.0
  %6026 = vmatpush1.msra.mxu0 0.0
  %6027 = vmatprep.subr.mxu0 0.0
  %6028 = vmatpush1.msra.mxu0 0.0
  %6029 = vmatprep.subr.mxu0 0.0
  %6030 = vmatpush1.msra.mxu0 0.0
  %6031 = vmatprep.subr.mxu0 0.0
  %6032 = vmatpush1.msra.mxu0 0.0
  %6033 = vmatprep.subr.mxu0 0.0
  %6034 = vmatpush1.msra.mxu0 0.0
  %6035 = vmatprep.subr.mxu0 0.0
  %6036 = vmatpush1.msra.mxu0 0.0
  %6037 = vmatprep.subr.mxu0 0.0
  %6038 = vmatpush1.msra.mxu0 0.0
  %6039 = vmatprep.subr.mxu0 0.0
  %6040 = vmatpush1.msra.mxu0 0.0
  %6041 = vmatprep.subr.mxu0 0.0
  %6042 = vmatpush1.msra.mxu0 0.0
  %6043 = vmatprep.subr.mxu0 0.0
  %6044 = vmatpush1.msra.mxu0 0.0
  %6045 = vmatprep.subr.mxu0 0.0
  %6046 = vmatpush1.msra.mxu0 0.0
  %6047 = vmatprep.subr.mxu0 0.0
  %6048 = vmatpush1.msra.mxu0 0.0
  %6049 = vmatprep.subr.mxu0 0.0
  %6050 = vmatpush1.msra.mxu0 0.0
  %6051 = vmatprep.subr.mxu0 0.0
  %6052 = vmatpush1.msra.mxu0 0.0
  %6053 = vmatprep.subr.mxu0 0.0
  %6054 = vmatpush1.msra.mxu0 0.0
  %6055 = vmatprep.subr.mxu0 0.0
  %6056 = vmatpush1.msra.mxu0 0.0
  %6057 = vmatprep.subr.mxu0 0.0
  %6058 = vmatpush1.msra.mxu0 0.0
  %6059 = vmatprep.subr.mxu0 0.0
  %6060 = vmatpush1.msra.mxu0 0.0
  %6061 = vmatprep.subr.mxu0 0.0
  %6062 = vmatpush1.msra.mxu0 0.0
  %6063 = vmatprep.subr.mxu0 0.0
  %6064 = vmatpush1.msra.mxu0 0.0
  %6065 = vmatprep.subr.mxu0 0.0
  %6066 = vmatpush1.msra.mxu0 0.0
  %6067 = vmatprep.subr.mxu0 0.0
  %6068 = vmatpush1.msra.mxu0 0.0
  %6069 = vmatprep.subr.mxu0 0.0
  %6070 = vmatpush1.msra.mxu0 0.0
  %6071 = vmatprep.mubr.f32.mxu0 0.0
  %6072 = vmatmul.mubr.f32.gmra.mrb[0].mxu0 %v5984
  %v6073 = vpop.f32.mrb[0].mxu0
  %v6074 = vadd.f32 0.0, %v6073
  %v6075 = vpop.f32.mrb[0].mxu0
  %6076 = vmatprep.mubr.f32.mxu0 0.0
  %6077 = vmatmul.mubr.f32.gmra.mrb[0].mxu0 %v5987
  %v6078 = vpop.f32.mrb[0].mxu0
  %v6079 = vadd.f32 0.0, %v6078
  %v6080 = vpop.f32.mrb[0].mxu0
  %6081 = vmatprep.mubr.f32.mxu0 0.0
  %6082 = vmatmul.mubr.f32.gmra.mrb[0].mxu0 %v5990
  %v6083 = vpop.f32.mrb[0].mxu0
  %v6084 = vadd.f32 0.0, %v6083
  %v6085 = vpop.f32.mrb[0].mxu0
  %6086 = vmatprep.mubr.f32.mxu0 0.0
  %6087 = vmatmul.mubr.f32.gmra.mrb[0].mxu0 %v5993
  %v6088 = vpop.f32.mrb[0].mxu0
  %v6089 = vadd.f32 0.0, %v6088
  %v6090 = vpop.f32.mrb[0].mxu0
  %6091 = vmatprep.mubr.f32.mxu0 0.0
  %6092 = vmatmul.mubr.f32.gmra.mrb[0].mxu0 %v5996
  %v6093 = vpop.f32.mrb[0].mxu0
  %v6094 = vadd.f32 0.0, %v6093
  %v6095 = vpop.f32.mrb[0].mxu0
  %6096 = vmatprep.mubr.f32.mxu0 0.0
  %6097 = vmatmul.mubr.f32.gmra.mrb[0].mxu0 %v5999
  %v6098 = vpop.f32.mrb[0].mxu0
  %v6099 = vadd.f32 0.0, %v6098
  %v6100 = vpop.f32.mrb[0].mxu0
  %6101 = vmatprep.mubr.f32.mxu0 0.0
  %6102 = vmatmul.mubr.f32.gmra.mrb[0].mxu0 %v6002
  %v6103 = vpop.f32.mrb[0].mxu0
  %v6104 = vadd.f32 0.0, %v6103
  %v6105 = vpop.f32.mrb[0].mxu0
  %6106 = vmatprep.mubr.f32.mxu0 0.0
  %6107 = vmatmul.mubr.f32.gmra.mrb[0].mxu0 %v6005
  %v6108 = vpop.f32.mrb[0].mxu0
  %v6109 = vadd.f32 0.0, %v6108
  %v6110 = vpop.f32.mrb[0].mxu0
  %6111 = vdwg.mxu0
  %v6112 = vadd.f32 %v5864, %v6074
  %v6113 = vadd.f32 %v5865, %v6079
  %v6114 = vadd.f32 %v5866, %v6084
  %v6115 = vadd.f32 %v5867, %v6089
  %v6116 = vadd.f32 %v5868, %v6094
  %v6117 = vadd.f32 %v5869, %v6099
  %v6118 = vadd.f32 %v5870, %v6104
  %v6119 = vadd.f32 %v5871, %v6109
  %s6120 = scalar_lea.vmem %s7, 3072
  %v6121 = vld [vmem:[%s6120] sm:$0xff]
  %v6122 = vld [vmem:[%s6120 + $0x8] sm:$0xff]
  %v6123 = vld [vmem:[%s6120 + $0x10] sm:$0xff]
  %v6124 = vld [vmem:[%s6120 + $0x18] sm:$0xff]
  %v6125 = vld [vmem:[%s6120 + $0x20] sm:$0xff]
  %v6126 = vld [vmem:[%s6120 + $0x28] sm:$0xff]
  %v6127 = vld [vmem:[%s6120 + $0x30] sm:$0xff]
  %v6128 = vld [vmem:[%s6120 + $0x38] sm:$0xff]
  %v6129 = vld [vmem:[%s6120 + $0x40] sm:$0xff]
  %v6130 = vld [vmem:[%s6120 + $0x48] sm:$0xff]
  %v6131 = vld [vmem:[%s6120 + $0x50] sm:$0xff]
  %v6132 = vld [vmem:[%s6120 + $0x58] sm:$0xff]
  %v6133 = vld [vmem:[%s6120 + $0x60] sm:$0xff]
  %v6134 = vld [vmem:[%s6120 + $0x68] sm:$0xff]
  %v6135 = vld [vmem:[%s6120 + $0x70] sm:$0xff]
  %v6136 = vld [vmem:[%s6120 + $0x78] sm:$0xff]
  %6137 = vmatprep.subr.mxu0 0.0
  %6138 = vmatpush1.msra.mxu0 %v6121
  %6139 = vmatprep.subr.mxu0 0.0
  %6140 = vmatpush1.msra.mxu0 %v6122
  %6141 = vmatprep.subr.mxu0 0.0
  %6142 = vmatpush1.msra.mxu0 %v6123
  %6143 = vmatprep.subr.mxu0 0.0
  %6144 = vmatpush1.msra.mxu0 %v6124
  %6145 = vmatprep.subr.mxu0 0.0
  %6146 = vmatpush1.msra.mxu0 %v6125
  %6147 = vmatprep.subr.mxu0 0.0
  %6148 = vmatpush1.msra.mxu0 %v6126
  %6149 = vmatprep.subr.mxu0 0.0
  %6150 = vmatpush1.msra.mxu0 %v6127
  %6151 = vmatprep.subr.mxu0 0.0
  %6152 = vmatpush1.msra.mxu0 %v6128
  %6153 = vmatprep.subr.mxu0 0.0
  %6154 = vmatpush1.msra.mxu0 %v6129
  %6155 = vmatprep.subr.mxu0 0.0
  %6156 = vmatpush1.msra.mxu0 %v6130
  %6157 = vmatprep.subr.mxu0 0.0
  %6158 = vmatpush1.msra.mxu0 %v6131
  %6159 = vmatprep.subr.mxu0 0.0
  %6160 = vmatpush1.msra.mxu0 %v6132
  %6161 = vmatprep.subr.mxu0 0.0
  %6162 = vmatpush1.msra.mxu0 %v6133
  %6163 = vmatprep.subr.mxu0 0.0
  %6164 = vmatpush1.msra.mxu0 %v6134
  %6165 = vmatprep.subr.mxu0 0.0
  %6166 = vmatpush1.msra.mxu0 %v6135
  %6167 = vmatprep.subr.mxu0 0.0
  %6168 = vmatpush1.msra.mxu0 %v6136
  %6169 = vmatprep.subr.mxu0 0.0
  %6170 = vmatpush1.msra.mxu0 0.0
  %6171 = vmatprep.subr.mxu0 0.0
  %6172 = vmatpush1.msra.mxu0 0.0
  %6173 = vmatprep.subr.mxu0 0.0
  %6174 = vmatpush1.msra.mxu0 0.0
  %6175 = vmatprep.subr.mxu0 0.0
  %6176 = vmatpush1.msra.mxu0 0.0
  %6177 = vmatprep.subr.mxu0 0.0
  %6178 = vmatpush1.msra.mxu0 0.0
  %6179 = vmatprep.subr.mxu0 0.0
  %6180 = vmatpush1.msra.mxu0 0.0
  %6181 = vmatprep.subr.mxu0 0.0
  %6182 = vmatpush1.msra.mxu0 0.0
  %6183 = vmatprep.subr.mxu0 0.0
  %6184 = vmatpush1.msra.mxu0 0.0
  %6185 = vmatprep.subr.mxu0 0.0
  %6186 = vmatpush1.msra.mxu0 0.0
  %6187 = vmatprep.subr.mxu0 0.0
  %6188 = vmatpush1.msra.mxu0 0.0
  %6189 = vmatprep.subr.mxu0 0.0
  %6190 = vmatpush1.msra.mxu0 0.0
  %6191 = vmatprep.subr.mxu0 0.0
  %6192 = vmatpush1.msra.mxu0 0.0
  %6193 = vmatprep.subr.mxu0 0.0
  %6194 = vmatpush1.msra.mxu0 0.0
  %6195 = vmatprep.subr.mxu0 0.0
  %6196 = vmatpush1.msra.mxu0 0.0
  %6197 = vmatprep.subr.mxu0 0.0
  %6198 = vmatpush1.msra.mxu0 0.0
  %6199 = vmatprep.subr.mxu0 0.0
  %6200 = vmatpush1.msra.mxu0 0.0
  %6201 = vmatprep.mubr.f32.mxu0 0.0
  %6202 = vmatmul.mubr.f32.gmra.mrb[0].mxu0 %v181
  %v6203 = vpop.f32.mrb[0].mxu0
  %v6204 = vadd.f32 0.0, %v6203
  %v6205 = vpop.f32.mrb[0].mxu0
  %6206 = vmatprep.mubr.f32.mxu0 0.0
  %6207 = vmatmul.mubr.f32.gmra.mrb[0].mxu0 %v182
  %v6208 = vpop.f32.mrb[0].mxu0
  %v6209 = vadd.f32 0.0, %v6208
  %v6210 = vpop.f32.mrb[0].mxu0
  %6211 = vmatprep.mubr.f32.mxu0 0.0
  %6212 = vmatmul.mubr.f32.gmra.mrb[0].mxu0 %v183
  %v6213 = vpop.f32.mrb[0].mxu0
  %v6214 = vadd.f32 0.0, %v6213
  %v6215 = vpop.f32.mrb[0].mxu0
  %6216 = vmatprep.mubr.f32.mxu0 0.0
  %6217 = vmatmul.mubr.f32.gmra.mrb[0].mxu0 %v184
  %v6218 = vpop.f32.mrb[0].mxu0
  %v6219 = vadd.f32 0.0, %v6218
  %v6220 = vpop.f32.mrb[0].mxu0
  %6221 = vdwg.mxu0
  %s6222 = scalar_lea.vmem %s5, 1536
  %v6223 = vld [vmem:[%s6222] sm:$0xff]
  %v6224 = vld [vmem:[%s6222 + $0x8] sm:$0xff]
  %v6225 = vld [vmem:[%s6222 + $0x10] sm:$0xff]
  %v6226 = vld [vmem:[%s6222 + $0x18] sm:$0xff]
  %v6227 = vld [vmem:[%s6222 + $0x20] sm:$0xff]
  %v6228 = vld [vmem:[%s6222 + $0x28] sm:$0xff]
  %v6229 = vld [vmem:[%s6222 + $0x30] sm:$0xff]
  %v6230 = vld [vmem:[%s6222 + $0x38] sm:$0xff]
  %v6232 = vsel %vm405, %v6223, 0
  %v6235 = vsel %vm405, %v6224, 0
  %v6238 = vsel %vm405, %v6225, 0
  %v6241 = vsel %vm405, %v6226, 0
  %v6244 = vsel %vm405, %v6227, 0
  %v6247 = vsel %vm405, %v6228, 0
  %v6250 = vsel %vm405, %v6229, 0
  %v6253 = vsel %vm405, %v6230, 0
  %6255 = vmatprep.subr.mxu0 0.0
  %6256 = vmatpush1.msra.mxu0 %v6204
  %6257 = vmatprep.subr.mxu0 0.0
  %6258 = vmatpush1.msra.mxu0 %v6209
  %6259 = vmatprep.subr.mxu0 0.0
  %6260 = vmatpush1.msra.mxu0 %v6214
  %6261 = vmatprep.subr.mxu0 0.0
  %6262 = vmatpush1.msra.mxu0 %v6219
  %6263 = vmatprep.subr.mxu0 0.0
  %6264 = vmatpush1.msra.mxu0 0.0
  %6265 = vmatprep.subr.mxu0 0.0
  %6266 = vmatpush1.msra.mxu0 0.0
  %6267 = vmatprep.subr.mxu0 0.0
  %6268 = vmatpush1.msra.mxu0 0.0
  %6269 = vmatprep.subr.mxu0 0.0
  %6270 = vmatpush1.msra.mxu0 0.0
  %6271 = vmatprep.subr.mxu0 0.0
  %6272 = vmatpush1.msra.mxu0 0.0
  %6273 = vmatprep.subr.mxu0 0.0
  %6274 = vmatpush1.msra.mxu0 0.0
  %6275 = vmatprep.subr.mxu0 0.0
  %6276 = vmatpush1.msra.mxu0 0.0
  %6277 = vmatprep.subr.mxu0 0.0
  %6278 = vmatpush1.msra.mxu0 0.0
  %6279 = vmatprep.subr.mxu0 0.0
  %6280 = vmatpush1.msra.mxu0 0.0
  %6281 = vmatprep.subr.mxu0 0.0
  %6282 = vmatpush1.msra.mxu0 0.0
  %6283 = vmatprep.subr.mxu0 0.0
  %6284 = vmatpush1.msra.mxu0 0.0
  %6285 = vmatprep.subr.mxu0 0.0
  %6286 = vmatpush1.msra.mxu0 0.0
  %6287 = vmatprep.subr.mxu0 0.0
  %6288 = vmatpush1.msra.mxu0 0.0
  %6289 = vmatprep.subr.mxu0 0.0
  %6290 = vmatpush1.msra.mxu0 0.0
  %6291 = vmatprep.subr.mxu0 0.0
  %6292 = vmatpush1.msra.mxu0 0.0
  %6293 = vmatprep.subr.mxu0 0.0
  %6294 = vmatpush1.msra.mxu0 0.0
  %6295 = vmatprep.subr.mxu0 0.0
  %6296 = vmatpush1.msra.mxu0 0.0
  %6297 = vmatprep.subr.mxu0 0.0
  %6298 = vmatpush1.msra.mxu0 0.0
  %6299 = vmatprep.subr.mxu0 0.0
  %6300 = vmatpush1.msra.mxu0 0.0
  %6301 = vmatprep.subr.mxu0 0.0
  %6302 = vmatpush1.msra.mxu0 0.0
  %6303 = vmatprep.subr.mxu0 0.0
  %6304 = vmatpush1.msra.mxu0 0.0
  %6305 = vmatprep.subr.mxu0 0.0
  %6306 = vmatpush1.msra.mxu0 0.0
  %6307 = vmatprep.subr.mxu0 0.0
  %6308 = vmatpush1.msra.mxu0 0.0
  %6309 = vmatprep.subr.mxu0 0.0
  %6310 = vmatpush1.msra.mxu0 0.0
  %6311 = vmatprep.subr.mxu0 0.0
  %6312 = vmatpush1.msra.mxu0 0.0
  %6313 = vmatprep.subr.mxu0 0.0
  %6314 = vmatpush1.msra.mxu0 0.0
  %6315 = vmatprep.subr.mxu0 0.0
  %6316 = vmatpush1.msra.mxu0 0.0
  %6317 = vmatprep.subr.mxu0 0.0
  %6318 = vmatpush1.msra.mxu0 0.0
  %6319 = vmatprep.mubr.f32.mxu0 0.0
  %6320 = vmatmul.mubr.f32.gmra.mrb[0].mxu0 %v6232
  %v6321 = vpop.f32.mrb[0].mxu0
  %v6322 = vadd.f32 0.0, %v6321
  %v6323 = vpop.f32.mrb[0].mxu0
  %6324 = vmatprep.mubr.f32.mxu0 0.0
  %6325 = vmatmul.mubr.f32.gmra.mrb[0].mxu0 %v6235
  %v6326 = vpop.f32.mrb[0].mxu0
  %v6327 = vadd.f32 0.0, %v6326
  %v6328 = vpop.f32.mrb[0].mxu0
  %6329 = vmatprep.mubr.f32.mxu0 0.0
  %6330 = vmatmul.mubr.f32.gmra.mrb[0].mxu0 %v6238
  %v6331 = vpop.f32.mrb[0].mxu0
  %v6332 = vadd.f32 0.0, %v6331
  %v6333 = vpop.f32.mrb[0].mxu0
  %6334 = vmatprep.mubr.f32.mxu0 0.0
  %6335 = vmatmul.mubr.f32.gmra.mrb[0].mxu0 %v6241
  %v6336 = vpop.f32.mrb[0].mxu0
  %v6337 = vadd.f32 0.0, %v6336
  %v6338 = vpop.f32.mrb[0].mxu0
  %6339 = vmatprep.mubr.f32.mxu0 0.0
  %6340 = vmatmul.mubr.f32.gmra.mrb[0].mxu0 %v6244
  %v6341 = vpop.f32.mrb[0].mxu0
  %v6342 = vadd.f32 0.0, %v6341
  %v6343 = vpop.f32.mrb[0].mxu0
  %6344 = vmatprep.mubr.f32.mxu0 0.0
  %6345 = vmatmul.mubr.f32.gmra.mrb[0].mxu0 %v6247
  %v6346 = vpop.f32.mrb[0].mxu0
  %v6347 = vadd.f32 0.0, %v6346
  %v6348 = vpop.f32.mrb[0].mxu0
  %6349 = vmatprep.mubr.f32.mxu0 0.0
  %6350 = vmatmul.mubr.f32.gmra.mrb[0].mxu0 %v6250
  %v6351 = vpop.f32.mrb[0].mxu0
  %v6352 = vadd.f32 0.0, %v6351
  %v6353 = vpop.f32.mrb[0].mxu0
  %6354 = vmatprep.mubr.f32.mxu0 0.0
  %6355 = vmatmul.mubr.f32.gmra.mrb[0].mxu0 %v6253
  %v6356 = vpop.f32.mrb[0].mxu0
  %v6357 = vadd.f32 0.0, %v6356
  %v6358 = vpop.f32.mrb[0].mxu0
  %6359 = vdwg.mxu0
  %v6360 = vadd.f32 %v6112, %v6322
  %v6361 = vadd.f32 %v6113, %v6327
  %v6362 = vadd.f32 %v6114, %v6332
  %v6363 = vadd.f32 %v6115, %v6337
  %v6364 = vadd.f32 %v6116, %v6342
  %v6365 = vadd.f32 %v6117, %v6347
  %v6366 = vadd.f32 %v6118, %v6352
  %v6367 = vadd.f32 %v6119, %v6357
  %v6368 = vld [vmem:[%s6] sm:$0xff]
  %v6369 = vld [vmem:[%s6 + $0x8] sm:$0xff]
  %v6370 = vld [vmem:[%s6 + $0x10] sm:$0xff]
  %v6371 = vld [vmem:[%s6 + $0x18] sm:$0xff]
  %v6372 = vld [vmem:[%s6 + $0x20] sm:$0xff]
  %v6373 = vld [vmem:[%s6 + $0x28] sm:$0xff]
  %v6374 = vld [vmem:[%s6 + $0x30] sm:$0xff]
  %v6375 = vld [vmem:[%s6 + $0x38] sm:$0xff]
  %6377 = vset.pattern.permute.xlu0 0
  %6378 = vperm.xlu0 %6377, %v6368
  %v6379 = vpop.permute.xlu0 %6378
  %6382 = vset.pattern.permute.xlu0 0
  %6383 = vperm.xlu0 %6382, %v6369
  %v6384 = vpop.permute.xlu0 %6383
  %6387 = vset.pattern.permute.xlu0 0
  %6388 = vperm.xlu0 %6387, %v6370
  %v6389 = vpop.permute.xlu0 %6388
  %6392 = vset.pattern.permute.xlu0 0
  %6393 = vperm.xlu0 %6392, %v6371
  %v6394 = vpop.permute.xlu0 %6393
  %6397 = vset.pattern.permute.xlu0 0
  %6398 = vperm.xlu0 %6397, %v6372
  %v6399 = vpop.permute.xlu0 %6398
  %6402 = vset.pattern.permute.xlu0 0
  %6403 = vperm.xlu0 %6402, %v6373
  %v6404 = vpop.permute.xlu0 %6403
  %6407 = vset.pattern.permute.xlu0 0
  %6408 = vperm.xlu0 %6407, %v6374
  %v6409 = vpop.permute.xlu0 %6408
  %6412 = vset.pattern.permute.xlu0 0
  %6413 = vperm.xlu0 %6412, %v6375
  %v6414 = vpop.permute.xlu0 %6413
  %v6416 = vadd.f32 %v6360, %v6379
  %v6417 = vadd.f32 %v6361, %v6384
  %v6418 = vadd.f32 %v6362, %v6389
  %v6419 = vadd.f32 %v6363, %v6394
  %v6420 = vadd.f32 %v6364, %v6399
  %v6421 = vadd.f32 %v6365, %v6404
  %v6422 = vadd.f32 %v6366, %v6409
  %v6423 = vadd.f32 %v6367, %v6414
  %v6424 = vld [vmem:[%s8] sm:$0xff]
  %v6425 = vld [vmem:[%s8 + $0x8] sm:$0xff]
  %v6426 = vadd.f32 %v6420, 1.0
  %v6427 = vadd.f32 %v6421, 1.0
  %v6428 = vxor.u32 %v6426, 2147483648
  %v6429 = vxor.u32 %v6427, 2147483648
  %v6430 = vmul.f32 %v6428, 1.442695
  %v6431 = vpow.pop %v6430
  %v6432 = vmul.f32 %v6429, 1.442695
  %v6433 = vpow.pop %v6432
  %v6434 = vadd.f32 %v6431, 1.0
  %v6435 = vadd.f32 %v6433, 1.0
  %v6436 = vrcp.pop %v6434
  %v6437 = vmul.f32 1.0, %v6436
  %v6438 = vrcp.pop %v6435
  %v6439 = vmul.f32 1.0, %v6438
  %v6440 = vmul.f32 %v6424, %v6437
  %v6441 = vmul.f32 %v6425, %v6439
  %v6442 = vxor.u32 %v6416, 2147483648
  %v6443 = vxor.u32 %v6417, 2147483648
  %v6444 = vmul.f32 %v6442, 1.442695
  %v6445 = vpow.pop %v6444
  %v6446 = vmul.f32 %v6443, 1.442695
  %v6447 = vpow.pop %v6446
  %v6448 = vadd.f32 %v6445, 1.0
  %v6449 = vadd.f32 %v6447, 1.0
  %v6450 = vrcp.pop %v6448
  %v6451 = vmul.f32 1.0, %v6450
  %v6452 = vrcp.pop %v6449
  %v6453 = vmul.f32 1.0, %v6452
  %v6454 = vtanh.pop %v6418
  %v6455 = vtanh.pop %v6419
  %v6456 = vmul.f32 %v6451, %v6454
  %v6457 = vmul.f32 %v6453, %v6455
  %v6458 = vadd.f32 %v6440, %v6456
  %v6459 = vadd.f32 %v6441, %v6457
  %v6460 = vtanh.pop %v6458
  %v6461 = vtanh.pop %v6459
  %v6462 = vxor.u32 %v6422, 2147483648
  %v6463 = vxor.u32 %v6423, 2147483648
  %v6464 = vmul.f32 %v6462, 1.442695
  %v6465 = vpow.pop %v6464
  %v6466 = vmul.f32 %v6463, 1.442695
  %v6467 = vpow.pop %v6466
  %v6468 = vadd.f32 %v6465, 1.0
  %v6469 = vadd.f32 %v6467, 1.0
  %v6470 = vrcp.pop %v6468
  %v6471 = vmul.f32 1.0, %v6470
  %v6472 = vrcp.pop %v6469
  %v6473 = vmul.f32 1.0, %v6472
  %v6474 = vmul.f32 %v6460, %v6471
  %v6475 = vmul.f32 %v6461, %v6473
  %6476 = vst [vmem:[%s11] sm:$0xff] %v6458
  %6477 = vst [vmem:[%s11 + $0x8] sm:$0xff] %v6459
  %6478 = vst [vmem:[%s10] sm:$0xff] %v6474
  %6479 = vst [vmem:[%s10 + $0x8] sm:$0xff] %v6475
  // Predicated region
  $region42: #{_forward_impl.5} parent=0 // pred_check
    _
  $region43: #{_forward_impl.5} parent=0 // pred_check_branch
    %6481 = sbr.rel (0) target = $region45
  $region44: #{_forward_impl.5} parent=0 // pred_region
    _
  $region45: #{_forward_impl.5} parent=0 // pred_fallthru
    _
  // Predicated region
  $region46: #{_forward_impl.5} parent=0 // pred_check
    _
  $region47: #{_forward_impl.5} parent=0 // pred_check_branch
    %6483 = sbr.rel (0) target = $region49
  $region48: #{_forward_impl.5} parent=0 // pred_region
    _
  $region49: #{_forward_impl.5} parent=0 // pred_fallthru
    _
  // Predicated region
  $region50: #{_forward_impl.5} parent=0 // pred_check
    _
  $region51: #{_forward_impl.5} parent=0 // pred_check_branch
    %6485 = sbr.rel (0) target = $region53
  $region52: #{_forward_impl.5} parent=0 // pred_region
    _
  $region53: #{_forward_impl.5} parent=0 // pred_fallthru
    _
  // Predicated region
  $region54: #{_forward_impl.5} parent=0 // pred_check
    _
  $region55: #{_forward_impl.5} parent=0 // pred_check_branch
    %6487 = sbr.rel (0) target = $region57
  $region56: #{_forward_impl.5} parent=0 // pred_region
    _
  $region57: #{_forward_impl.5} parent=0 // pred_fallthru
    _

</llo_original>
